<compile_context>
chip_gen: v5e
topology: v5e:2x2
jax: 0.10.0
libtpu: 0.0.40
codegen_flags: <defaults>
</compile_context>

<pallas_src>
import functools

import numpy as np
import jax
import jax.numpy as jnp
from jax.experimental import pallas as pl
from jax.experimental.pallas import tpu as pltpu


# ----------------------------------------------------------------------------
# Small helpers used inside the kernel
# ----------------------------------------------------------------------------
def _prelu(y, a):
    return jnp.where(y > 0.0, y, a * y)


def _tree_sum(parts):
    parts = list(parts)
    while len(parts) > 1:
        nxt = [parts[i] + parts[i + 1] for i in range(0, len(parts) - 1, 2)]
        if len(parts) % 2:
            nxt.append(parts[-1])
        parts = nxt
    return parts[0]


# ----------------------------------------------------------------------------
# Pallas kernel: the whole Estimator forward for ONE image per grid step
# ----------------------------------------------------------------------------
def _estimator_kernel(x_ref,
                      wc1_ref, bc1_ref,
                      wc2_ref, bc2_ref, sel2_ref,
                      wc3_ref, bc3_ref, sel3_ref,
                      wf1_ref, bf1_ref,
                      wf2_ref, bf2_ref,
                      wf3_ref, bf3_ref,
                      alpha_ref, out_ref):
    a_c1 = alpha_ref[0]
    a_c2 = alpha_ref[1]
    a_c3 = alpha_ref[2]
    a_f1 = alpha_ref[3]
    a_f2 = alpha_ref[4]

    def conv_layer(a_f32, w_ref, b_ref, alpha, sel_ref):
        # a_f32  : (Hi, Wi*Cin)        f32 activations (VMEM/vregs)
        # w_ref  : (KH, Wi*Cin, Wo*Cout) bf16 width-folded band weights
        # b_ref  : (1, Wo*Cout)        f32 width-tiled bias
        # sel_ref: (Hi+2p, Hi)         bf16 exact 0/1 H-pad selector (or None)
        a = a_f32.astype(jnp.bfloat16)            # cast once per layer
        if sel_ref is not None:
            # Exact zero-padding of the H rows via a precomputed 0/1 matmul.
            a = jnp.dot(sel_ref[...], a,
                        preferred_element_type=jnp.float32).astype(jnp.bfloat16)
        kh_n = w_ref.shape[0]
        ho = a.shape[0] - kh_n + 1
        parts = [jnp.dot(a[kh:kh + ho, :], w_ref[kh],
                         preferred_element_type=jnp.float32)
                 for kh in range(kh_n)]           # independent MXU ops
        y = _tree_sum(parts) + b_ref[...]
        return _prelu(y, alpha)

    a0 = x_ref[0]                                           # (H,   W*6)  f32
    a1 = conv_layer(a0, wc1_ref, bc1_ref, a_c1, None)       # (H-4, (W-4)*16)
    a2 = conv_layer(a1, wc2_ref, bc2_ref, a_c2, sel2_ref)   # (H-6, (W-6)*32)
    a3 = conv_layer(a2, wc3_ref, bc3_ref, a_c3, sel3_ref)   # (H-8, (W-8)*64)

    # fc1 contracts the (h, w, c) features without materializing a flat
    # vector: one independent (1, W3*C3) @ (W3*C3, 256) dot per image row,
    # tree-reduced.  The NCHW flatten ordering of the PyTorch fc1 weight was
    # folded in at init, so no runtime transpose of the conv3 activations.
    a3b = a3.astype(jnp.bfloat16)
    h3 = a3b.shape[0]
    parts = [jnp.dot(a3b[hh:hh + 1, :], wf1_ref[hh],
                     preferred_element_type=jnp.float32) for hh in range(h3)]
    y = _prelu(_tree_sum(parts) + bf1_ref[...], a_f1)

    y = _prelu(jnp.dot(y.astype(jnp.bfloat16), wf2_ref[...],
                       preferred_element_type=jnp.float32) + bf2_ref[...],
               a_f2)
    y = jnp.dot(y.astype(jnp.bfloat16), wf3_ref[...],
                preferred_element_type=jnp.float32) + bf3_ref[...]
    out_ref[0] = y                                           # (1, out_dim)


# ----------------------------------------------------------------------------
# Parameter preparation (all static, done once at init)
# ----------------------------------------------------------------------------
def _fold_conv_width(w, wi, pad):
    """Fold the KW loop + W-padding of a 5x5 conv into KH band matrices.

    Returns (KH, Wi*Cin, Wo*Cout) such that, for an input held as (H, Wi*Cin),
    the conv is:  out = sum_kh  in_hpadded[kh:kh+Ho, :] @ folded[kh].
    """
    kh_n, kw_n, cin, cout = w.shape
    wo = wi + 2 * pad - kw_n + 1
    sel = np.zeros((kw_n, wi, wo), np.float32)
    for kw in range(kw_n):
        for y in range(wo):
            x = y + kw - pad
            if 0 <= x < wi:
                sel[kw, x, y] = 1.0
    folded = jnp.einsum("kxy,hkio->hxiyo", jnp.asarray(sel), w)
    return folded.reshape(kh_n, wi * cin, wo * cout)


def _hpad_selector(hi, pad):
    """Exact 0/1 selection matrix that zero-pads `pad` rows top/bottom."""
    hp = hi + 2 * pad
    s = np.zeros((hp, hi), np.float32)
    for r in range(hp):
        c = r - pad
        if 0 <= c < hi:
            s[r, c] = 1.0
    return jnp.asarray(s, jnp.bfloat16)


def init_params(key, input_size, output_size=4):
    """Deterministic synthetic parameters in PyTorch-equivalent layout."""
    _, c, h, w = input_size
    assert c == 6
    w1, w2 = input_size[-1], input_size[-2]
    n_feat = (w1 - 8) * (w2 - 8) * 64
    keys = jax.random.split(key, 6)

    def conv_w(k, kh, kw, cin, cout):
        fan_in = kh * kw * cin
        return (jax.random.normal(k, (kh, kw, cin, cout), jnp.float32)
                / np.sqrt(fan_in))

    def fc_w(k, fin, fout):
        return jax.random.normal(k, (fin, fout), jnp.float32) / np.sqrt(fin)

    def bias(m):
        return 0.01 * jnp.arange(m, dtype=jnp.float32)

    return {
        "conv1_w": conv_w(keys[0], 5, 5, 6, 16), "conv1_b": bias(16), "conv1_a": 0.25,
        "conv2_w": conv_w(keys[1], 5, 5, 16, 32), "conv2_b": bias(32), "conv2_a": 0.25,
        "conv3_w": conv_w(keys[2], 5, 5, 32, 64), "conv3_b": bias(64), "conv3_a": 0.25,
        "fc1_w": fc_w(keys[3], n_feat, 256), "fc1_b": bias(256), "fc1_a": 0.25,
        "fc2_w": fc_w(keys[4], 256, 256), "fc2_b": bias(256), "fc2_a": 0.25,
        "fc3_w": fc_w(keys[5], 256, output_size), "fc3_b": bias(output_size),
    }


def prepare_kernel_params(params, input_size):
    """Fold / permute / cast the PyTorch-layout params into kernel operands."""
    _, c, h, w = input_size
    w1o, h1o = w - 4, h - 4           # conv1: 5x5, pad 0
    w2o, h2o = w1o - 2, h1o - 2       # conv2: 5x5, pad 1
    w3o, h3o = w2o - 2, h2o - 2       # conv3: 5x5, pad 1
    cout3 = params["conv3_w"].shape[-1]
    fc1_out = params["fc1_w"].shape[-1]
    fc2_out = params["fc2_w"].shape[-1]
    out_dim = params["fc3_w"].shape[-1]

    def tile_bias(b, wo):
        return jnp.tile(b, (wo,)).reshape(1, -1).astype(jnp.float32)

    # fc1 rows are in PyTorch NCHW-flatten order (c, h, w); the kernel reads
    # features in (h, w, c) order -> permute statically, reshape per image row.
    wf1 = params["fc1_w"].reshape(cout3, h3o, w3o, fc1_out)
    wf1 = wf1.transpose(1, 2, 0, 3).reshape(h3o, w3o * cout3, fc1_out)

    kp = {
        "wc1": _fold_conv_width(params["conv1_w"], w, 0).astype(jnp.bfloat16),
        "bc1": tile_bias(params["conv1_b"], w1o),
        "wc2": _fold_conv_width(params["conv2_w"], w1o, 1).astype(jnp.bfloat16),
        "bc2": tile_bias(params["conv2_b"], w2o),
        "sel2": _hpad_selector(h1o, 1),
        "wc3": _fold_conv_width(params["conv3_w"], w2o, 1).astype(jnp.bfloat16),
        "bc3": tile_bias(params["conv3_b"], w3o),
        "sel3": _hpad_selector(h2o, 1),
        "wf1": wf1.astype(jnp.bfloat16),
        "bf1": params["fc1_b"].reshape(1, -1).astype(jnp.float32),
        "wf2": params["fc2_w"].astype(jnp.bfloat16),
        "bf2": params["fc2_b"].reshape(1, -1).astype(jnp.float32),
        "wf3": params["fc3_w"].astype(jnp.bfloat16),
        "bf3": params["fc3_b"].reshape(1, -1).astype(jnp.float32),
        "alphas": jnp.asarray(
            [params["conv1_a"], params["conv2_a"], params["conv3_a"],
             params["fc1_a"], params["fc2_a"]], jnp.float32),
    }

    def conv_flops(wc, ho):
        kh_n, k_dim, n_dim = wc.shape
        return 2 * kh_n * ho * k_dim * n_dim

    per_image_flops = int(
        conv_flops(kp["wc1"], h1o) + conv_flops(kp["wc2"], h2o)
        + conv_flops(kp["wc3"], h3o)
        + 2 * (h3o * w3o * cout3) * fc1_out
        + 2 * fc1_out * fc2_out
        + 2 * fc2_out * out_dim)
    const_bytes = int(sum(int(np.prod(v.shape)) * v.dtype.itemsize
                          for v in kp.values()))
    return kp, per_image_flops, const_bytes


# ----------------------------------------------------------------------------
# Forward pass wrapper (single pallas_call, batch grid)
# ----------------------------------------------------------------------------
@functools.partial(jax.jit, static_argnames=("per_image_flops", "const_bytes"))
def estimator_forward(kernel_params, x_nchw, *, per_image_flops=0,
                      const_bytes=0):
    kp = kernel_params
    x = jnp.asarray(x_nchw, jnp.float32)          # torch.tensor(x, float32)
    assert x.ndim == 4
    n, c, h, w = x.shape
    assert kp["wc1"].shape[1] == w * c, "input shape inconsistent with params"

    # NCHW -> per-image (H, W*C): rows = image rows, lanes = width x channel.
    x2d = jnp.transpose(x, (0, 2, 3, 1)).reshape(n, h, w * c)
    out_dim = kp["wf3"].shape[1]

    operands = (x2d,
                kp["wc1"], kp["bc1"],
                kp["wc2"], kp["bc2"], kp["sel2"],
                kp["wc3"], kp["bc3"], kp["sel3"],
                kp["wf1"], kp["bf1"],
                kp["wf2"], kp["bf2"],
                kp["wf3"], kp["bf3"],
                kp["alphas"])

    def resident(a):
        # Whole-array block + constant index_map: fetched once, stays
        # VMEM-resident across all batch-grid iterations (no per-image DMA).
        idx = (0,) * a.ndim
        return pl.BlockSpec(a.shape, lambda i, _idx=idx: _idx)

    in_specs = ([pl.BlockSpec((1, h, w * c), lambda i: (i, 0, 0))]
                + [resident(a) for a in operands[1:-1]]
                + [pl.BlockSpec(memory_space=pltpu.MemorySpace.SMEM)])

    flops = int(n * per_image_flops)
    bytes_accessed = int(const_bytes + x2d.size * 4 + n * out_dim * 4)

    out = pl.pallas_call(
        _estimator_kernel,
        out_shape=jax.ShapeDtypeStruct((n, 1, out_dim), jnp.float32),
        grid=(n,),
        in_specs=in_specs,
        out_specs=pl.BlockSpec((1, 1, out_dim), lambda i: (i, 0, 0)),
        compiler_params=pltpu.CompilerParams(
            dimension_semantics=("parallel",),
            vmem_limit_bytes=32 * 1024 * 1024),
        cost_estimate=pl.CostEstimate(flops=flops, transcendentals=0,
                                      bytes_accessed=bytes_accessed),
    )(*operands)
    return out.reshape(n, out_dim)


# ----------------------------------------------------------------------------
# Pure-XLA f32 reference (PyTorch semantics) for the correctness check
# ----------------------------------------------------------------------------
def reference_forward(params, x_nchw):
    x = jnp.asarray(x_nchw, jnp.float32)

    def conv_prelu(x, w, b, a, pad):
        y = jax.lax.conv_general_dilated(
            x, w, window_strides=(1, 1), padding=[(pad, pad), (pad, pad)],
            dimension_numbers=("NCHW", "HWIO", "NCHW"),
            precision=jax.lax.Precision.HIGHEST)
        y = y + b.reshape(1, -1, 1, 1)
        return jnp.where(y > 0, y, a * y)

    x = conv_prelu(x, params["conv1_w"], params["conv1_b"], params["conv1_a"], 0)
    x = conv_prelu(x, params["conv2_w"], params["conv2_b"], params["conv2_a"], 1)
    x = conv_prelu(x, params["conv3_w"], params["conv3_b"], params["conv3_a"], 1)
    x = x.reshape(x.shape[0], -1)                          # nn.Flatten on NCHW

    def fc(x, w, b):
        return jnp.dot(x, w, precision=jax.lax.Precision.HIGHEST) + b

    x = fc(x, params["fc1_w"], params["fc1_b"])
    x = jnp.where(x > 0, x, params["fc1_a"] * x)
    x = fc(x, params["fc2_w"], params["fc2_b"])
    x = jnp.where(x > 0, x, params["fc2_a"] * x)
    x = fc(x, params["fc3_w"], params["fc3_b"])
    return x


if __name__ == "__main__":
    input_size = (1, 6, 16, 16)   # (N*, C, H, W) convention used by the module
    output_size = 4

    key = jax.random.PRNGKey(0)
    pkey, xkey = jax.random.split(key)

    params = init_params(pkey, input_size, output_size)
    kp, per_image_flops, const_bytes = prepare_kernel_params(params, input_size)

    x = jax.random.normal(xkey, (2, 6, 16, 16), jnp.float32)  # batch = 2

    out = estimator_forward(kp, x, per_image_flops=per_image_flops,
                            const_bytes=const_bytes)
    out = jax.block_until_ready(out)

    assert out.shape == (2, output_size), out.shape
    assert out.dtype == jnp.float32
    assert bool(jnp.all(jnp.isfinite(out)))

    # Check against the pure-XLA f32 reference (validates the folded-band conv,
    # the H-pad selectors, the flatten/permutation and the fused FC stack);
    # tolerance covers only the bf16 matmul operands (tighter than before).
    ref = jax.block_until_ready(reference_forward(params, x))
    rel = float(jnp.linalg.norm(out - ref) / (jnp.linalg.norm(ref) + 1e-6))
    assert rel < 0.05, f"relative error too large: {rel}"

    print("KERNEL_OK")
</pallas_src>

<mosaic_0001>
module attributes {stable_mosaic.version = 11 : i64} {
  func.func @_estimator_kernel(%arg0: i32, %arg1: memref<1x16x96xf32, #tpu.memory_space<vmem>>, %arg2: memref<5x96x192xbf16, #tpu.memory_space<vmem>>, %arg3: memref<1x192xf32, #tpu.memory_space<vmem>>, %arg4: memref<5x192x320xbf16, #tpu.memory_space<vmem>>, %arg5: memref<1x320xf32, #tpu.memory_space<vmem>>, %arg6: memref<14x12xbf16, #tpu.memory_space<vmem>>, %arg7: memref<5x320x512xbf16, #tpu.memory_space<vmem>>, %arg8: memref<1x512xf32, #tpu.memory_space<vmem>>, %arg9: memref<12x10xbf16, #tpu.memory_space<vmem>>, %arg10: memref<8x512x256xbf16, #tpu.memory_space<vmem>>, %arg11: memref<1x256xf32, #tpu.memory_space<vmem>>, %arg12: memref<256x256xbf16, #tpu.memory_space<vmem>>, %arg13: memref<1x256xf32, #tpu.memory_space<vmem>>, %arg14: memref<256x4xbf16, #tpu.memory_space<vmem>>, %arg15: memref<1x4xf32, #tpu.memory_space<vmem>>, %arg16: memref<5xf32, #tpu.memory_space<smem>>, %arg17: memref<1x1x4xf32, #tpu.memory_space<vmem>>) attributes {dimension_semantics = [#tpu.dimension_semantics<parallel>], iteration_bounds = array<i64: 2>, scalar_prefetch = 0 : i64, scratch_operands = 0 : i64, tpu.core_type = #tpu.core_type<tc>, window_params = [{transform_indices = @transform_0, window_bounds = array<i64: 1, 16, 96>}, {pipeline_mode = #tpu.pipeline_mode<synchronous>, transform_indices = @transform_1, window_bounds = array<i64: 5, 96, 192>}, {pipeline_mode = #tpu.pipeline_mode<synchronous>, transform_indices = @transform_2, window_bounds = array<i64: 1, 192>}, {pipeline_mode = #tpu.pipeline_mode<synchronous>, transform_indices = @transform_3, window_bounds = array<i64: 5, 192, 320>}, {pipeline_mode = #tpu.pipeline_mode<synchronous>, transform_indices = @transform_4, window_bounds = array<i64: 1, 320>}, {pipeline_mode = #tpu.pipeline_mode<synchronous>, transform_indices = @transform_5, window_bounds = array<i64: 14, 12>}, {pipeline_mode = #tpu.pipeline_mode<synchronous>, transform_indices = @transform_6, window_bounds = array<i64: 5, 320, 512>}, {pipeline_mode = #tpu.pipeline_mode<synchronous>, transform_indices = @transform_7, window_bounds = array<i64: 1, 512>}, {pipeline_mode = #tpu.pipeline_mode<synchronous>, transform_indices = @transform_8, window_bounds = array<i64: 12, 10>}, {pipeline_mode = #tpu.pipeline_mode<synchronous>, transform_indices = @transform_9, window_bounds = array<i64: 8, 512, 256>}, {pipeline_mode = #tpu.pipeline_mode<synchronous>, transform_indices = @transform_10, window_bounds = array<i64: 1, 256>}, {pipeline_mode = #tpu.pipeline_mode<synchronous>, transform_indices = @transform_11, window_bounds = array<i64: 256, 256>}, {pipeline_mode = #tpu.pipeline_mode<synchronous>, transform_indices = @transform_12, window_bounds = array<i64: 1, 256>}, {pipeline_mode = #tpu.pipeline_mode<synchronous>, transform_indices = @transform_13, window_bounds = array<i64: 256, 4>}, {pipeline_mode = #tpu.pipeline_mode<synchronous>, transform_indices = @transform_14, window_bounds = array<i64: 1, 4>}, {transform_indices = @transform_15, window_bounds = array<i64: 5>}, {transform_indices = @transform_16, window_bounds = array<i64: 1, 1, 4>}]} {
    %c0 = arith.constant 0 : index
    %0 = memref.load %arg16[%c0] : memref<5xf32, #tpu.memory_space<smem>>
    %c1 = arith.constant 1 : index
    %1 = memref.load %arg16[%c1] : memref<5xf32, #tpu.memory_space<smem>>
    %c2 = arith.constant 2 : index
    %2 = memref.load %arg16[%c2] : memref<5xf32, #tpu.memory_space<smem>>
    %c3 = arith.constant 3 : index
    %3 = memref.load %arg16[%c3] : memref<5xf32, #tpu.memory_space<smem>>
    %c4 = arith.constant 4 : index
    %4 = memref.load %arg16[%c4] : memref<5xf32, #tpu.memory_space<smem>>
    %c0_0 = arith.constant 0 : index
    %c0_1 = arith.constant 0 : index
    %c0_2 = arith.constant 0 : index
    %5 = vector.load %arg1[%c0_0, %c0_1, %c0_2] : memref<1x16x96xf32, #tpu.memory_space<vmem>>, vector<1x16x96xf32>
    %6 = vector.shape_cast %5 : vector<1x16x96xf32> to vector<16x96xf32>
    %7 = arith.truncf %6 : vector<16x96xf32> to vector<16x96xbf16>
    %8 = vector.extract_strided_slice %7 {offsets = [0, 0], sizes = [12, 96], strides = [1, 1]} : vector<16x96xbf16> to vector<12x96xbf16>
    %c0_3 = arith.constant 0 : index
    %c0_4 = arith.constant 0 : index
    %c0_5 = arith.constant 0 : index
    %9 = vector.load %arg2[%c0_3, %c0_4, %c0_5] : memref<5x96x192xbf16, #tpu.memory_space<vmem>>, vector<1x96x192xbf16>
    %10 = vector.shape_cast %9 : vector<1x96x192xbf16> to vector<96x192xbf16>
    %cst = arith.constant dense<0.000000e+00> : vector<12x192xf32>
    %11 = tpu.matmul %8, %10, %cst {dimension_numbers = #tpu.dot_dimension_numbers<[1], [0], [0], [1], [0, 0, 1, 1], [], []>} : vector<12x96xbf16>, vector<96x192xbf16>, vector<12x192xf32> -> vector<12x192xf32>
    %12 = vector.extract_strided_slice %7 {offsets = [1, 0], sizes = [12, 96], strides = [1, 1]} : vector<16x96xbf16> to vector<12x96xbf16>
    %c1_6 = arith.constant 1 : index
    %c0_7 = arith.constant 0 : index
    %c0_8 = arith.constant 0 : index
    %13 = vector.load %arg2[%c1_6, %c0_7, %c0_8] : memref<5x96x192xbf16, #tpu.memory_space<vmem>>, vector<1x96x192xbf16>
    %14 = vector.shape_cast %13 : vector<1x96x192xbf16> to vector<96x192xbf16>
    %cst_9 = arith.constant dense<0.000000e+00> : vector<12x192xf32>
    %15 = tpu.matmul %12, %14, %cst_9 {dimension_numbers = #tpu.dot_dimension_numbers<[1], [0], [0], [1], [0, 0, 1, 1], [], []>} : vector<12x96xbf16>, vector<96x192xbf16>, vector<12x192xf32> -> vector<12x192xf32>
    %16 = vector.extract_strided_slice %7 {offsets = [2, 0], sizes = [12, 96], strides = [1, 1]} : vector<16x96xbf16> to vector<12x96xbf16>
    %c2_10 = arith.constant 2 : index
    %c0_11 = arith.constant 0 : index
    %c0_12 = arith.constant 0 : index
    %17 = vector.load %arg2[%c2_10, %c0_11, %c0_12] : memref<5x96x192xbf16, #tpu.memory_space<vmem>>, vector<1x96x192xbf16>
    %18 = vector.shape_cast %17 : vector<1x96x192xbf16> to vector<96x192xbf16>
    %cst_13 = arith.constant dense<0.000000e+00> : vector<12x192xf32>
    %19 = tpu.matmul %16, %18, %cst_13 {dimension_numbers = #tpu.dot_dimension_numbers<[1], [0], [0], [1], [0, 0, 1, 1], [], []>} : vector<12x96xbf16>, vector<96x192xbf16>, vector<12x192xf32> -> vector<12x192xf32>
    %20 = vector.extract_strided_slice %7 {offsets = [3, 0], sizes = [12, 96], strides = [1, 1]} : vector<16x96xbf16> to vector<12x96xbf16>
    %c3_14 = arith.constant 3 : index
    %c0_15 = arith.constant 0 : index
    %c0_16 = arith.constant 0 : index
    %21 = vector.load %arg2[%c3_14, %c0_15, %c0_16] : memref<5x96x192xbf16, #tpu.memory_space<vmem>>, vector<1x96x192xbf16>
    %22 = vector.shape_cast %21 : vector<1x96x192xbf16> to vector<96x192xbf16>
    %cst_17 = arith.constant dense<0.000000e+00> : vector<12x192xf32>
    %23 = tpu.matmul %20, %22, %cst_17 {dimension_numbers = #tpu.dot_dimension_numbers<[1], [0], [0], [1], [0, 0, 1, 1], [], []>} : vector<12x96xbf16>, vector<96x192xbf16>, vector<12x192xf32> -> vector<12x192xf32>
    %24 = vector.extract_strided_slice %7 {offsets = [4, 0], sizes = [12, 96], strides = [1, 1]} : vector<16x96xbf16> to vector<12x96xbf16>
    %c4_18 = arith.constant 4 : index
    %c0_19 = arith.constant 0 : index
    %c0_20 = arith.constant 0 : index
    %25 = vector.load %arg2[%c4_18, %c0_19, %c0_20] : memref<5x96x192xbf16, #tpu.memory_space<vmem>>, vector<1x96x192xbf16>
    %26 = vector.shape_cast %25 : vector<1x96x192xbf16> to vector<96x192xbf16>
    %cst_21 = arith.constant dense<0.000000e+00> : vector<12x192xf32>
    %27 = tpu.matmul %24, %26, %cst_21 {dimension_numbers = #tpu.dot_dimension_numbers<[1], [0], [0], [1], [0, 0, 1, 1], [], []>} : vector<12x96xbf16>, vector<96x192xbf16>, vector<12x192xf32> -> vector<12x192xf32>
    %28 = arith.addf %11, %15 : vector<12x192xf32>
    %29 = arith.addf %19, %23 : vector<12x192xf32>
    %30 = arith.addf %28, %29 : vector<12x192xf32>
    %31 = arith.addf %30, %27 : vector<12x192xf32>
    %c0_22 = arith.constant 0 : index
    %c0_23 = arith.constant 0 : index
    %32 = vector.load %arg3[%c0_22, %c0_23] : memref<1x192xf32, #tpu.memory_space<vmem>>, vector<1x192xf32>
    %33 = vector.broadcast %32 : vector<1x192xf32> to vector<12x192xf32>
    %34 = arith.addf %31, %33 : vector<12x192xf32>
    %cst_24 = arith.constant 0.000000e+00 : f32
    %35 = vector.broadcast %cst_24 : f32 to vector<12x192xf32>
    %36 = arith.cmpf ogt, %34, %35 : vector<12x192xf32>
    %37 = vector.broadcast %0 : f32 to vector<12x192xf32>
    %38 = arith.mulf %37, %34 : vector<12x192xf32>
    %39 = arith.select %36, %34, %38 : vector<12x192xi1>, vector<12x192xf32>
    %40 = arith.truncf %39 : vector<12x192xf32> to vector<12x192xbf16>
    %c0_25 = arith.constant 0 : index
    %c0_26 = arith.constant 0 : index
    %41 = vector.load %arg6[%c0_25, %c0_26] : memref<14x12xbf16, #tpu.memory_space<vmem>>, vector<14x12xbf16>
    %cst_27 = arith.constant dense<0.000000e+00> : vector<14x192xf32>
    %42 = tpu.matmul %41, %40, %cst_27 {dimension_numbers = #tpu.dot_dimension_numbers<[1], [0], [0], [1], [0, 0, 1, 1], [], []>} : vector<14x12xbf16>, vector<12x192xbf16>, vector<14x192xf32> -> vector<14x192xf32>
    %43 = arith.truncf %42 : vector<14x192xf32> to vector<14x192xbf16>
    %44 = vector.extract_strided_slice %43 {offsets = [0, 0], sizes = [10, 192], strides = [1, 1]} : vector<14x192xbf16> to vector<10x192xbf16>
    %c0_28 = arith.constant 0 : index
    %c0_29 = arith.constant 0 : index
    %c0_30 = arith.constant 0 : index
    %45 = vector.load %arg4[%c0_28, %c0_29, %c0_30] : memref<5x192x320xbf16, #tpu.memory_space<vmem>>, vector<1x192x320xbf16>
    %46 = vector.shape_cast %45 : vector<1x192x320xbf16> to vector<192x320xbf16>
    %cst_31 = arith.constant dense<0.000000e+00> : vector<10x320xf32>
    %47 = tpu.matmul %44, %46, %cst_31 {dimension_numbers = #tpu.dot_dimension_numbers<[1], [0], [0], [1], [0, 0, 1, 1], [], []>} : vector<10x192xbf16>, vector<192x320xbf16>, vector<10x320xf32> -> vector<10x320xf32>
    %48 = vector.extract_strided_slice %43 {offsets = [1, 0], sizes = [10, 192], strides = [1, 1]} : vector<14x192xbf16> to vector<10x192xbf16>
    %c1_32 = arith.constant 1 : index
    %c0_33 = arith.constant 0 : index
    %c0_34 = arith.constant 0 : index
    %49 = vector.load %arg4[%c1_32, %c0_33, %c0_34] : memref<5x192x320xbf16, #tpu.memory_space<vmem>>, vector<1x192x320xbf16>
    %50 = vector.shape_cast %49 : vector<1x192x320xbf16> to vector<192x320xbf16>
    %cst_35 = arith.constant dense<0.000000e+00> : vector<10x320xf32>
    %51 = tpu.matmul %48, %50, %cst_35 {dimension_numbers = #tpu.dot_dimension_numbers<[1], [0], [0], [1], [0, 0, 1, 1], [], []>} : vector<10x192xbf16>, vector<192x320xbf16>, vector<10x320xf32> -> vector<10x320xf32>
    %52 = vector.extract_strided_slice %43 {offsets = [2, 0], sizes = [10, 192], strides = [1, 1]} : vector<14x192xbf16> to vector<10x192xbf16>
    %c2_36 = arith.constant 2 : index
    %c0_37 = arith.constant 0 : index
    %c0_38 = arith.constant 0 : index
    %53 = vector.load %arg4[%c2_36, %c0_37, %c0_38] : memref<5x192x320xbf16, #tpu.memory_space<vmem>>, vector<1x192x320xbf16>
    %54 = vector.shape_cast %53 : vector<1x192x320xbf16> to vector<192x320xbf16>
    %cst_39 = arith.constant dense<0.000000e+00> : vector<10x320xf32>
    %55 = tpu.matmul %52, %54, %cst_39 {dimension_numbers = #tpu.dot_dimension_numbers<[1], [0], [0], [1], [0, 0, 1, 1], [], []>} : vector<10x192xbf16>, vector<192x320xbf16>, vector<10x320xf32> -> vector<10x320xf32>
    %56 = vector.extract_strided_slice %43 {offsets = [3, 0], sizes = [10, 192], strides = [1, 1]} : vector<14x192xbf16> to vector<10x192xbf16>
    %c3_40 = arith.constant 3 : index
    %c0_41 = arith.constant 0 : index
    %c0_42 = arith.constant 0 : index
    %57 = vector.load %arg4[%c3_40, %c0_41, %c0_42] : memref<5x192x320xbf16, #tpu.memory_space<vmem>>, vector<1x192x320xbf16>
    %58 = vector.shape_cast %57 : vector<1x192x320xbf16> to vector<192x320xbf16>
    %cst_43 = arith.constant dense<0.000000e+00> : vector<10x320xf32>
    %59 = tpu.matmul %56, %58, %cst_43 {dimension_numbers = #tpu.dot_dimension_numbers<[1], [0], [0], [1], [0, 0, 1, 1], [], []>} : vector<10x192xbf16>, vector<192x320xbf16>, vector<10x320xf32> -> vector<10x320xf32>
    %60 = vector.extract_strided_slice %43 {offsets = [4, 0], sizes = [10, 192], strides = [1, 1]} : vector<14x192xbf16> to vector<10x192xbf16>
    %c4_44 = arith.constant 4 : index
    %c0_45 = arith.constant 0 : index
    %c0_46 = arith.constant 0 : index
    %61 = vector.load %arg4[%c4_44, %c0_45, %c0_46] : memref<5x192x320xbf16, #tpu.memory_space<vmem>>, vector<1x192x320xbf16>
    %62 = vector.shape_cast %61 : vector<1x192x320xbf16> to vector<192x320xbf16>
    %cst_47 = arith.constant dense<0.000000e+00> : vector<10x320xf32>
    %63 = tpu.matmul %60, %62, %cst_47 {dimension_numbers = #tpu.dot_dimension_numbers<[1], [0], [0], [1], [0, 0, 1, 1], [], []>} : vector<10x192xbf16>, vector<192x320xbf16>, vector<10x320xf32> -> vector<10x320xf32>
    %64 = arith.addf %47, %51 : vector<10x320xf32>
    %65 = arith.addf %55, %59 : vector<10x320xf32>
    %66 = arith.addf %64, %65 : vector<10x320xf32>
    %67 = arith.addf %66, %63 : vector<10x320xf32>
    %c0_48 = arith.constant 0 : index
    %c0_49 = arith.constant 0 : index
    %68 = vector.load %arg5[%c0_48, %c0_49] : memref<1x320xf32, #tpu.memory_space<vmem>>, vector<1x320xf32>
    %69 = vector.broadcast %68 : vector<1x320xf32> to vector<10x320xf32>
    %70 = arith.addf %67, %69 : vector<10x320xf32>
    %cst_50 = arith.constant 0.000000e+00 : f32
    %71 = vector.broadcast %cst_50 : f32 to vector<10x320xf32>
    %72 = arith.cmpf ogt, %70, %71 : vector<10x320xf32>
    %73 = vector.broadcast %1 : f32 to vector<10x320xf32>
    %74 = arith.mulf %73, %70 : vector<10x320xf32>
    %75 = arith.select %72, %70, %74 : vector<10x320xi1>, vector<10x320xf32>
    %76 = arith.truncf %75 : vector<10x320xf32> to vector<10x320xbf16>
    %c0_51 = arith.constant 0 : index
    %c0_52 = arith.constant 0 : index
    %77 = vector.load %arg9[%c0_51, %c0_52] : memref<12x10xbf16, #tpu.memory_space<vmem>>, vector<12x10xbf16>
    %cst_53 = arith.constant dense<0.000000e+00> : vector<12x320xf32>
    %78 = tpu.matmul %77, %76, %cst_53 {dimension_numbers = #tpu.dot_dimension_numbers<[1], [0], [0], [1], [0, 0, 1, 1], [], []>} : vector<12x10xbf16>, vector<10x320xbf16>, vector<12x320xf32> -> vector<12x320xf32>
    %79 = arith.truncf %78 : vector<12x320xf32> to vector<12x320xbf16>
    %80 = vector.extract_strided_slice %79 {offsets = [0, 0], sizes = [8, 320], strides = [1, 1]} : vector<12x320xbf16> to vector<8x320xbf16>
    %c0_54 = arith.constant 0 : index
    %c0_55 = arith.constant 0 : index
    %c0_56 = arith.constant 0 : index
    %81 = vector.load %arg7[%c0_54, %c0_55, %c0_56] : memref<5x320x512xbf16, #tpu.memory_space<vmem>>, vector<1x320x512xbf16>
    %82 = vector.shape_cast %81 : vector<1x320x512xbf16> to vector<320x512xbf16>
    %cst_57 = arith.constant dense<0.000000e+00> : vector<8x512xf32>
    %83 = tpu.matmul %80, %82, %cst_57 {dimension_numbers = #tpu.dot_dimension_numbers<[1], [0], [0], [1], [0, 0, 1, 1], [], []>} : vector<8x320xbf16>, vector<320x512xbf16>, vector<8x512xf32> -> vector<8x512xf32>
    %84 = vector.extract_strided_slice %79 {offsets = [1, 0], sizes = [8, 320], strides = [1, 1]} : vector<12x320xbf16> to vector<8x320xbf16>
    %c1_58 = arith.constant 1 : index
    %c0_59 = arith.constant 0 : index
    %c0_60 = arith.constant 0 : index
    %85 = vector.load %arg7[%c1_58, %c0_59, %c0_60] : memref<5x320x512xbf16, #tpu.memory_space<vmem>>, vector<1x320x512xbf16>
    %86 = vector.shape_cast %85 : vector<1x320x512xbf16> to vector<320x512xbf16>
    %cst_61 = arith.constant dense<0.000000e+00> : vector<8x512xf32>
    %87 = tpu.matmul %84, %86, %cst_61 {dimension_numbers = #tpu.dot_dimension_numbers<[1], [0], [0], [1], [0, 0, 1, 1], [], []>} : vector<8x320xbf16>, vector<320x512xbf16>, vector<8x512xf32> -> vector<8x512xf32>
    %88 = vector.extract_strided_slice %79 {offsets = [2, 0], sizes = [8, 320], strides = [1, 1]} : vector<12x320xbf16> to vector<8x320xbf16>
    %c2_62 = arith.constant 2 : index
    %c0_63 = arith.constant 0 : index
    %c0_64 = arith.constant 0 : index
    %89 = vector.load %arg7[%c2_62, %c0_63, %c0_64] : memref<5x320x512xbf16, #tpu.memory_space<vmem>>, vector<1x320x512xbf16>
    %90 = vector.shape_cast %89 : vector<1x320x512xbf16> to vector<320x512xbf16>
    %cst_65 = arith.constant dense<0.000000e+00> : vector<8x512xf32>
    %91 = tpu.matmul %88, %90, %cst_65 {dimension_numbers = #tpu.dot_dimension_numbers<[1], [0], [0], [1], [0, 0, 1, 1], [], []>} : vector<8x320xbf16>, vector<320x512xbf16>, vector<8x512xf32> -> vector<8x512xf32>
    %92 = vector.extract_strided_slice %79 {offsets = [3, 0], sizes = [8, 320], strides = [1, 1]} : vector<12x320xbf16> to vector<8x320xbf16>
    %c3_66 = arith.constant 3 : index
    %c0_67 = arith.constant 0 : index
    %c0_68 = arith.constant 0 : index
    %93 = vector.load %arg7[%c3_66, %c0_67, %c0_68] : memref<5x320x512xbf16, #tpu.memory_space<vmem>>, vector<1x320x512xbf16>
    %94 = vector.shape_cast %93 : vector<1x320x512xbf16> to vector<320x512xbf16>
    %cst_69 = arith.constant dense<0.000000e+00> : vector<8x512xf32>
    %95 = tpu.matmul %92, %94, %cst_69 {dimension_numbers = #tpu.dot_dimension_numbers<[1], [0], [0], [1], [0, 0, 1, 1], [], []>} : vector<8x320xbf16>, vector<320x512xbf16>, vector<8x512xf32> -> vector<8x512xf32>
    %96 = vector.extract_strided_slice %79 {offsets = [4, 0], sizes = [8, 320], strides = [1, 1]} : vector<12x320xbf16> to vector<8x320xbf16>
    %c4_70 = arith.constant 4 : index
    %c0_71 = arith.constant 0 : index
    %c0_72 = arith.constant 0 : index
    %97 = vector.load %arg7[%c4_70, %c0_71, %c0_72] : memref<5x320x512xbf16, #tpu.memory_space<vmem>>, vector<1x320x512xbf16>
    %98 = vector.shape_cast %97 : vector<1x320x512xbf16> to vector<320x512xbf16>
    %cst_73 = arith.constant dense<0.000000e+00> : vector<8x512xf32>
    %99 = tpu.matmul %96, %98, %cst_73 {dimension_numbers = #tpu.dot_dimension_numbers<[1], [0], [0], [1], [0, 0, 1, 1], [], []>} : vector<8x320xbf16>, vector<320x512xbf16>, vector<8x512xf32> -> vector<8x512xf32>
    %100 = arith.addf %83, %87 : vector<8x512xf32>
    %101 = arith.addf %91, %95 : vector<8x512xf32>
    %102 = arith.addf %100, %101 : vector<8x512xf32>
    %103 = arith.addf %102, %99 : vector<8x512xf32>
    %c0_74 = arith.constant 0 : index
    %c0_75 = arith.constant 0 : index
    %104 = vector.load %arg8[%c0_74, %c0_75] : memref<1x512xf32, #tpu.memory_space<vmem>>, vector<1x512xf32>
    %105 = vector.broadcast %104 : vector<1x512xf32> to vector<8x512xf32>
    %106 = arith.addf %103, %105 : vector<8x512xf32>
    %cst_76 = arith.constant 0.000000e+00 : f32
    %107 = vector.broadcast %cst_76 : f32 to vector<8x512xf32>
    %108 = arith.cmpf ogt, %106, %107 : vector<8x512xf32>
    %109 = vector.broadcast %2 : f32 to vector<8x512xf32>
    %110 = arith.mulf %109, %106 : vector<8x512xf32>
    %111 = arith.select %108, %106, %110 : vector<8x512xi1>, vector<8x512xf32>
    %112 = arith.truncf %111 : vector<8x512xf32> to vector<8x512xbf16>
    %113 = vector.extract_strided_slice %112 {offsets = [0, 0], sizes = [1, 512], strides = [1, 1]} : vector<8x512xbf16> to vector<1x512xbf16>
    %c0_77 = arith.constant 0 : index
    %c0_78 = arith.constant 0 : index
    %c0_79 = arith.constant 0 : index
    %114 = vector.load %arg10[%c0_77, %c0_78, %c0_79] : memref<8x512x256xbf16, #tpu.memory_space<vmem>>, vector<1x512x256xbf16>
    %115 = vector.shape_cast %114 : vector<1x512x256xbf16> to vector<512x256xbf16>
    %cst_80 = arith.constant dense<0.000000e+00> : vector<1x256xf32>
    %116 = tpu.matmul %113, %115, %cst_80 {dimension_numbers = #tpu.dot_dimension_numbers<[1], [0], [0], [1], [0, 0, 1, 1], [], []>} : vector<1x512xbf16>, vector<512x256xbf16>, vector<1x256xf32> -> vector<1x256xf32>
    %117 = vector.extract_strided_slice %112 {offsets = [1, 0], sizes = [1, 512], strides = [1, 1]} : vector<8x512xbf16> to vector<1x512xbf16>
    %c1_81 = arith.constant 1 : index
    %c0_82 = arith.constant 0 : index
    %c0_83 = arith.constant 0 : index
    %118 = vector.load %arg10[%c1_81, %c0_82, %c0_83] : memref<8x512x256xbf16, #tpu.memory_space<vmem>>, vector<1x512x256xbf16>
    %119 = vector.shape_cast %118 : vector<1x512x256xbf16> to vector<512x256xbf16>
    %cst_84 = arith.constant dense<0.000000e+00> : vector<1x256xf32>
    %120 = tpu.matmul %117, %119, %cst_84 {dimension_numbers = #tpu.dot_dimension_numbers<[1], [0], [0], [1], [0, 0, 1, 1], [], []>} : vector<1x512xbf16>, vector<512x256xbf16>, vector<1x256xf32> -> vector<1x256xf32>
    %121 = vector.extract_strided_slice %112 {offsets = [2, 0], sizes = [1, 512], strides = [1, 1]} : vector<8x512xbf16> to vector<1x512xbf16>
    %c2_85 = arith.constant 2 : index
    %c0_86 = arith.constant 0 : index
    %c0_87 = arith.constant 0 : index
    %122 = vector.load %arg10[%c2_85, %c0_86, %c0_87] : memref<8x512x256xbf16, #tpu.memory_space<vmem>>, vector<1x512x256xbf16>
    %123 = vector.shape_cast %122 : vector<1x512x256xbf16> to vector<512x256xbf16>
    %cst_88 = arith.constant dense<0.000000e+00> : vector<1x256xf32>
    %124 = tpu.matmul %121, %123, %cst_88 {dimension_numbers = #tpu.dot_dimension_numbers<[1], [0], [0], [1], [0, 0, 1, 1], [], []>} : vector<1x512xbf16>, vector<512x256xbf16>, vector<1x256xf32> -> vector<1x256xf32>
    %125 = vector.extract_strided_slice %112 {offsets = [3, 0], sizes = [1, 512], strides = [1, 1]} : vector<8x512xbf16> to vector<1x512xbf16>
    %c3_89 = arith.constant 3 : index
    %c0_90 = arith.constant 0 : index
    %c0_91 = arith.constant 0 : index
    %126 = vector.load %arg10[%c3_89, %c0_90, %c0_91] : memref<8x512x256xbf16, #tpu.memory_space<vmem>>, vector<1x512x256xbf16>
    %127 = vector.shape_cast %126 : vector<1x512x256xbf16> to vector<512x256xbf16>
    %cst_92 = arith.constant dense<0.000000e+00> : vector<1x256xf32>
    %128 = tpu.matmul %125, %127, %cst_92 {dimension_numbers = #tpu.dot_dimension_numbers<[1], [0], [0], [1], [0, 0, 1, 1], [], []>} : vector<1x512xbf16>, vector<512x256xbf16>, vector<1x256xf32> -> vector<1x256xf32>
    %129 = vector.extract_strided_slice %112 {offsets = [4, 0], sizes = [1, 512], strides = [1, 1]} : vector<8x512xbf16> to vector<1x512xbf16>
    %c4_93 = arith.constant 4 : index
    %c0_94 = arith.constant 0 : index
    %c0_95 = arith.constant 0 : index
    %130 = vector.load %arg10[%c4_93, %c0_94, %c0_95] : memref<8x512x256xbf16, #tpu.memory_space<vmem>>, vector<1x512x256xbf16>
    %131 = vector.shape_cast %130 : vector<1x512x256xbf16> to vector<512x256xbf16>
    %cst_96 = arith.constant dense<0.000000e+00> : vector<1x256xf32>
    %132 = tpu.matmul %129, %131, %cst_96 {dimension_numbers = #tpu.dot_dimension_numbers<[1], [0], [0], [1], [0, 0, 1, 1], [], []>} : vector<1x512xbf16>, vector<512x256xbf16>, vector<1x256xf32> -> vector<1x256xf32>
    %133 = vector.extract_strided_slice %112 {offsets = [5, 0], sizes = [1, 512], strides = [1, 1]} : vector<8x512xbf16> to vector<1x512xbf16>
    %c5 = arith.constant 5 : index
    %c0_97 = arith.constant 0 : index
    %c0_98 = arith.constant 0 : index
    %134 = vector.load %arg10[%c5, %c0_97, %c0_98] : memref<8x512x256xbf16, #tpu.memory_space<vmem>>, vector<1x512x256xbf16>
    %135 = vector.shape_cast %134 : vector<1x512x256xbf16> to vector<512x256xbf16>
    %cst_99 = arith.constant dense<0.000000e+00> : vector<1x256xf32>
    %136 = tpu.matmul %133, %135, %cst_99 {dimension_numbers = #tpu.dot_dimension_numbers<[1], [0], [0], [1], [0, 0, 1, 1], [], []>} : vector<1x512xbf16>, vector<512x256xbf16>, vector<1x256xf32> -> vector<1x256xf32>
    %137 = vector.extract_strided_slice %112 {offsets = [6, 0], sizes = [1, 512], strides = [1, 1]} : vector<8x512xbf16> to vector<1x512xbf16>
    %c6 = arith.constant 6 : index
    %c0_100 = arith.constant 0 : index
    %c0_101 = arith.constant 0 : index
    %138 = vector.load %arg10[%c6, %c0_100, %c0_101] : memref<8x512x256xbf16, #tpu.memory_space<vmem>>, vector<1x512x256xbf16>
    %139 = vector.shape_cast %138 : vector<1x512x256xbf16> to vector<512x256xbf16>
    %cst_102 = arith.constant dense<0.000000e+00> : vector<1x256xf32>
    %140 = tpu.matmul %137, %139, %cst_102 {dimension_numbers = #tpu.dot_dimension_numbers<[1], [0], [0], [1], [0, 0, 1, 1], [], []>} : vector<1x512xbf16>, vector<512x256xbf16>, vector<1x256xf32> -> vector<1x256xf32>
    %141 = vector.extract_strided_slice %112 {offsets = [7, 0], sizes = [1, 512], strides = [1, 1]} : vector<8x512xbf16> to vector<1x512xbf16>
    %c7 = arith.constant 7 : index
    %c0_103 = arith.constant 0 : index
    %c0_104 = arith.constant 0 : index
    %142 = vector.load %arg10[%c7, %c0_103, %c0_104] : memref<8x512x256xbf16, #tpu.memory_space<vmem>>, vector<1x512x256xbf16>
    %143 = vector.shape_cast %142 : vector<1x512x256xbf16> to vector<512x256xbf16>
    %cst_105 = arith.constant dense<0.000000e+00> : vector<1x256xf32>
    %144 = tpu.matmul %141, %143, %cst_105 {dimension_numbers = #tpu.dot_dimension_numbers<[1], [0], [0], [1], [0, 0, 1, 1], [], []>} : vector<1x512xbf16>, vector<512x256xbf16>, vector<1x256xf32> -> vector<1x256xf32>
    %145 = arith.addf %116, %120 : vector<1x256xf32>
    %146 = arith.addf %124, %128 : vector<1x256xf32>
    %147 = arith.addf %132, %136 : vector<1x256xf32>
    %148 = arith.addf %140, %144 : vector<1x256xf32>
    %149 = arith.addf %145, %146 : vector<1x256xf32>
    %150 = arith.addf %147, %148 : vector<1x256xf32>
    %151 = arith.addf %149, %150 : vector<1x256xf32>
    %c0_106 = arith.constant 0 : index
    %c0_107 = arith.constant 0 : index
    %152 = vector.load %arg11[%c0_106, %c0_107] : memref<1x256xf32, #tpu.memory_space<vmem>>, vector<1x256xf32>
    %153 = arith.addf %151, %152 : vector<1x256xf32>
    %cst_108 = arith.constant 0.000000e+00 : f32
    %154 = vector.broadcast %cst_108 : f32 to vector<1x256xf32>
    %155 = arith.cmpf ogt, %153, %154 : vector<1x256xf32>
    %156 = vector.broadcast %3 : f32 to vector<1x256xf32>
    %157 = arith.mulf %156, %153 : vector<1x256xf32>
    %158 = arith.select %155, %153, %157 : vector<1x256xi1>, vector<1x256xf32>
    %159 = arith.truncf %158 : vector<1x256xf32> to vector<1x256xbf16>
    %c0_109 = arith.constant 0 : index
    %c0_110 = arith.constant 0 : index
    %160 = vector.load %arg12[%c0_109, %c0_110] : memref<256x256xbf16, #tpu.memory_space<vmem>>, vector<256x256xbf16>
    %cst_111 = arith.constant dense<0.000000e+00> : vector<1x256xf32>
    %161 = tpu.matmul %159, %160, %cst_111 {dimension_numbers = #tpu.dot_dimension_numbers<[1], [0], [0], [1], [0, 0, 1, 1], [], []>} : vector<1x256xbf16>, vector<256x256xbf16>, vector<1x256xf32> -> vector<1x256xf32>
    %c0_112 = arith.constant 0 : index
    %c0_113 = arith.constant 0 : index
    %162 = vector.load %arg13[%c0_112, %c0_113] : memref<1x256xf32, #tpu.memory_space<vmem>>, vector<1x256xf32>
    %163 = arith.addf %161, %162 : vector<1x256xf32>
    %cst_114 = arith.constant 0.000000e+00 : f32
    %164 = vector.broadcast %cst_114 : f32 to vector<1x256xf32>
    %165 = arith.cmpf ogt, %163, %164 : vector<1x256xf32>
    %166 = vector.broadcast %4 : f32 to vector<1x256xf32>
    %167 = arith.mulf %166, %163 : vector<1x256xf32>
    %168 = arith.select %165, %163, %167 : vector<1x256xi1>, vector<1x256xf32>
    %169 = arith.truncf %168 : vector<1x256xf32> to vector<1x256xbf16>
    %c0_115 = arith.constant 0 : index
    %c0_116 = arith.constant 0 : index
    %170 = vector.load %arg14[%c0_115, %c0_116] : memref<256x4xbf16, #tpu.memory_space<vmem>>, vector<256x4xbf16>
    %cst_117 = arith.constant dense<0.000000e+00> : vector<1x4xf32>
    %171 = tpu.matmul %169, %170, %cst_117 {dimension_numbers = #tpu.dot_dimension_numbers<[1], [0], [0], [1], [0, 0, 1, 1], [], []>} : vector<1x256xbf16>, vector<256x4xbf16>, vector<1x4xf32> -> vector<1x4xf32>
    %c0_118 = arith.constant 0 : index
    %c0_119 = arith.constant 0 : index
    %172 = vector.load %arg15[%c0_118, %c0_119] : memref<1x4xf32, #tpu.memory_space<vmem>>, vector<1x4xf32>
    %173 = arith.addf %171, %172 : vector<1x4xf32>
    %c0_120 = arith.constant 0 : index
    %c0_121 = arith.constant 0 : index
    %c0_122 = arith.constant 0 : index
    %174 = vector.load %arg17[%c0_120, %c0_121, %c0_122] : memref<1x1x4xf32, #tpu.memory_space<vmem>>, vector<1x1x4xf32>
    %175 = vector.shape_cast %174 : vector<1x1x4xf32> to vector<1x4xf32>
    %176 = vector.shape_cast %173 : vector<1x4xf32> to vector<1x1x4xf32>
    tpu.vector_store %arg17[%c0_120, %c0_121, %c0_122], %176 {strides = array<i32>} : memref<1x1x4xf32, #tpu.memory_space<vmem>>, vector<1x1x4xf32>,
    return
  }
  func.func @transform_0(%arg0: i32) -> (i32, i32, i32) {
    %c0_i32 = arith.constant 0 : i32
    %c0_i32_0 = arith.constant 0 : i32
    %c0_i32_1 = arith.constant 0 : i32
    return %arg0, %c0_i32, %c0_i32_0 : i32, i32, i32
  }
  func.func @transform_1(%arg0: i32) -> (i32, i32, i32) {
    %c0_i32 = arith.constant 0 : i32
    %c0_i32_0 = arith.constant 0 : i32
    %c0_i32_1 = arith.constant 0 : i32
    %c0_i32_2 = arith.constant 0 : i32
    return %c0_i32, %c0_i32_0, %c0_i32_1 : i32, i32, i32
  }
  func.func @transform_2(%arg0: i32) -> (i32, i32) {
    %c0_i32 = arith.constant 0 : i32
    %c0_i32_0 = arith.constant 0 : i32
    %c0_i32_1 = arith.constant 0 : i32
    return %c0_i32, %c0_i32_0 : i32, i32
  }
  func.func @transform_3(%arg0: i32) -> (i32, i32, i32) {
    %c0_i32 = arith.constant 0 : i32
    %c0_i32_0 = arith.constant 0 : i32
    %c0_i32_1 = arith.constant 0 : i32
    %c0_i32_2 = arith.constant 0 : i32
    return %c0_i32, %c0_i32_0, %c0_i32_1 : i32, i32, i32
  }
  func.func @transform_4(%arg0: i32) -> (i32, i32) {
    %c0_i32 = arith.constant 0 : i32
    %c0_i32_0 = arith.constant 0 : i32
    %c0_i32_1 = arith.constant 0 : i32
    return %c0_i32, %c0_i32_0 : i32, i32
  }
  func.func @transform_5(%arg0: i32) -> (i32, i32) {
    %c0_i32 = arith.constant 0 : i32
    %c0_i32_0 = arith.constant 0 : i32
    %c0_i32_1 = arith.constant 0 : i32
    return %c0_i32, %c0_i32_0 : i32, i32
  }
  func.func @transform_6(%arg0: i32) -> (i32, i32, i32) {
    %c0_i32 = arith.constant 0 : i32
    %c0_i32_0 = arith.constant 0 : i32
    %c0_i32_1 = arith.constant 0 : i32
    %c0_i32_2 = arith.constant 0 : i32
    return %c0_i32, %c0_i32_0, %c0_i32_1 : i32, i32, i32
  }
  func.func @transform_7(%arg0: i32) -> (i32, i32) {
    %c0_i32 = arith.constant 0 : i32
    %c0_i32_0 = arith.constant 0 : i32
    %c0_i32_1 = arith.constant 0 : i32
    return %c0_i32, %c0_i32_0 : i32, i32
  }
  func.func @transform_8(%arg0: i32) -> (i32, i32) {
    %c0_i32 = arith.constant 0 : i32
    %c0_i32_0 = arith.constant 0 : i32
    %c0_i32_1 = arith.constant 0 : i32
    return %c0_i32, %c0_i32_0 : i32, i32
  }
  func.func @transform_9(%arg0: i32) -> (i32, i32, i32) {
    %c0_i32 = arith.constant 0 : i32
    %c0_i32_0 = arith.constant 0 : i32
    %c0_i32_1 = arith.constant 0 : i32
    %c0_i32_2 = arith.constant 0 : i32
    return %c0_i32, %c0_i32_0, %c0_i32_1 : i32, i32, i32
  }
  func.func @transform_10(%arg0: i32) -> (i32, i32) {
    %c0_i32 = arith.constant 0 : i32
    %c0_i32_0 = arith.constant 0 : i32
    %c0_i32_1 = arith.constant 0 : i32
    return %c0_i32, %c0_i32_0 : i32, i32
  }
  func.func @transform_11(%arg0: i32) -> (i32, i32) {
    %c0_i32 = arith.constant 0 : i32
    %c0_i32_0 = arith.constant 0 : i32
    %c0_i32_1 = arith.constant 0 : i32
    return %c0_i32, %c0_i32_0 : i32, i32
  }
  func.func @transform_12(%arg0: i32) -> (i32, i32) {
    %c0_i32 = arith.constant 0 : i32
    %c0_i32_0 = arith.constant 0 : i32
    %c0_i32_1 = arith.constant 0 : i32
    return %c0_i32, %c0_i32_0 : i32, i32
  }
  func.func @transform_13(%arg0: i32) -> (i32, i32) {
    %c0_i32 = arith.constant 0 : i32
    %c0_i32_0 = arith.constant 0 : i32
    %c0_i32_1 = arith.constant 0 : i32
    return %c0_i32, %c0_i32_0 : i32, i32
  }
  func.func @transform_14(%arg0: i32) -> (i32, i32) {
    %c0_i32 = arith.constant 0 : i32
    %c0_i32_0 = arith.constant 0 : i32
    %c0_i32_1 = arith.constant 0 : i32
    return %c0_i32, %c0_i32_0 : i32, i32
  }
  func.func @transform_15(%arg0: i32) -> i32 {
    %c0_i32 = arith.constant 0 : i32
    %c0_i32_0 = arith.constant 0 : i32
    return %c0_i32 : i32
  }
  func.func @transform_16(%arg0: i32) -> (i32, i32, i32) {
    %c0_i32 = arith.constant 0 : i32
    %c0_i32_0 = arith.constant 0 : i32
    %c0_i32_1 = arith.constant 0 : i32
    return %arg0, %c0_i32, %c0_i32_0 : i32, i32, i32
  }
}

</mosaic_0001>

<llo_original>
// kernel: estimator_forward.1
$region0: #{estimator_forward.1}
  #allocation0 [shape = 'u32[]', space=smem, size = 0x4, offset = 0x4, fixed_abs, tag = 'smem constant byte address 0x4 - core index']
  #allocation1 [shape = 'u32[72,128]{1,0:T(1,128)}', space=vmem, size = 0x9000, scoped, tag = 'internal scratch']
  %s0 = inlined_call_operand.vmem [shape: f32[2,16,96], index: 0, kind: input, shape index: {}]
  %s1 = inlined_call_operand.hbm [shape: bf16[5,96,192], index: 1, kind: input, shape index: {}]
  %s2 = inlined_call_operand.hbm [shape: f32[1,192], index: 2, kind: input, shape index: {}]
  %s3 = inlined_call_operand.hbm [shape: bf16[5,192,320], index: 3, kind: input, shape index: {}]
  %s4 = inlined_call_operand.hbm [shape: f32[1,320], index: 4, kind: input, shape index: {}]
  %s5 = inlined_call_operand.hbm [shape: bf16[14,12], index: 5, kind: input, shape index: {}]
  %s6 = inlined_call_operand.hbm [shape: bf16[5,320,512], index: 6, kind: input, shape index: {}]
  %s7 = inlined_call_operand.hbm [shape: f32[1,512], index: 7, kind: input, shape index: {}]
  %s8 = inlined_call_operand.hbm [shape: bf16[12,10], index: 8, kind: input, shape index: {}]
  %s9 = inlined_call_operand.hbm [shape: bf16[8,512,256], index: 9, kind: input, shape index: {}]
  %s10 = inlined_call_operand.hbm [shape: f32[1,256], index: 10, kind: input, shape index: {}]
  %s11 = inlined_call_operand.hbm [shape: bf16[256,256], index: 11, kind: input, shape index: {}]
  %s12 = inlined_call_operand.hbm [shape: f32[1,256], index: 12, kind: input, shape index: {}]
  %s13 = inlined_call_operand.vmem [shape: bf16[256,4], index: 13, kind: input, shape index: {}]
  %s14 = inlined_call_operand.hbm [shape: f32[1,4], index: 14, kind: input, shape index: {}]
  %s15 = inlined_call_operand.hbm [shape: f32[5], index: 15, kind: input, shape index: {}]
  %s16 = inlined_call_operand.hbm [shape: f32[2,1,4], index: 16, kind: output, shape index: {}]
  %s17 = sld [smem:[#allocation0]]
  $region153: #{estimator_forward.1} parent=0
    _
  %s19 = ssub.s32 1, %s17
  %s20 = scalar_select 0, %s19, %s17
  $region1: #{estimator_forward.1} parent=0
    #allocation2 [shape = 'u8[245760]{0}', space=vmem, size = 0x3c000, scoped, tag = 'input window, operand 1, single buffered']
    #allocation3 [shape = 's32[2]{0}', space=sflag, size = 0x8, scoped, tag = 'scoped memory for estimator_forward.1']
    #allocation4 [shape = 's32[2]{0}', space=sflag, size = 0x8, scoped, tag = 'scoped memory for estimator_forward.1']
    #allocation5 [shape = 's32[2]{0}', space=sflag, size = 0x8, scoped, tag = 'scoped memory for estimator_forward.1']
    #allocation6 [shape = 'u8[1024]{0}', space=vmem, size = 0x400, scoped, tag = 'input window, operand 2, single buffered']
    #allocation7 [shape = 's32[1]{0}', space=sflag, size = 0x4, scoped, tag = 'scoped memory for estimator_forward.1']
    #allocation8 [shape = 'u8[737280]{0}', space=vmem, size = 0xb4000, scoped, tag = 'input window, operand 3, single buffered']
    #allocation9 [shape = 'u8[1536]{0}', space=vmem, size = 0x800, scoped, tag = 'input window, operand 4, single buffered']
    #allocation10 [shape = 's32[1]{0}', space=sflag, size = 0x4, scoped, tag = 'scoped memory for estimator_forward.1']
    #allocation11 [shape = 'u8[4096]{0}', space=vmem, size = 0x1000, scoped, tag = 'input window, operand 5, single buffered']
    #allocation12 [shape = 'u8[1638400]{0}', space=vmem, size = 0x190000, scoped, tag = 'input window, operand 6, single buffered']
    #allocation13 [shape = 's32[1]{0}', space=sflag, size = 0x4, scoped, tag = 'scoped memory for estimator_forward.1']
    #allocation14 [shape = 'u8[2048]{0}', space=vmem, size = 0x800, scoped, tag = 'input window, operand 7, single buffered']
    #allocation15 [shape = 'u8[4096]{0}', space=vmem, size = 0x1000, scoped, tag = 'input window, operand 8, single buffered']
    #allocation16 [shape = 's32[1]{0}', space=sflag, size = 0x4, scoped, tag = 'scoped memory for estimator_forward.1']
    #allocation17 [shape = 'u8[2097152]{0}', space=vmem, size = 0x200000, scoped, tag = 'input window, operand 9, single buffered']
    #allocation18 [shape = 'u8[1024]{0}', space=vmem, size = 0x400, scoped, tag = 'input window, operand 10, single buffered']
    #allocation19 [shape = 's32[1]{0}', space=sflag, size = 0x4, scoped, tag = 'scoped memory for estimator_forward.1']
    #allocation20 [shape = 'u8[131072]{0}', space=vmem, size = 0x20000, scoped, tag = 'input window, operand 11, single buffered']
    #allocation21 [shape = 'u8[1024]{0}', space=vmem, size = 0x400, scoped, tag = 'input window, operand 12, single buffered']
    #allocation22 [shape = 's32[1]{0}', space=sflag, size = 0x4, scoped, tag = 'scoped memory for estimator_forward.1']
    #allocation23 [shape = 'u8[512]{0}', space=vmem, size = 0x400, scoped, tag = 'input window, operand 14, single buffered']
    #allocation24 [shape = 'u8[512]{0}', space=smem, size = 0x200, scoped, tag = 'input window, operand 15, single buffered']
    #allocation25 [shape = 'u8[1024]{0}', space=vmem, size = 0x400, scoped, tag = 'output window, operand 0']
    %21 = vsyncpa [#allocation3], 0
    %22 = vsyncpa [#allocation7], 0
    %23 = vsyncpa [#allocation10], 0
    %24 = vsyncpa [#allocation13], 0
    %25 = vsyncpa [#allocation16], 0
    %26 = vsyncpa [#allocation19], 0
    %27 = vsyncpa [#allocation22], 0
    %28 = vsyncpa [#allocation5], 0
    %29 = vsyncpa [#allocation4], 0
    %s30 = scalar_lea.sflag [#allocation4], 1
    %31 = vsyncpa %s30, 0
    loop: start=0, step=1, limit=4
    $region2: #{estimator_forward.1} parent=1 // loop_pre_header
      _
    $region3: #{estimator_forward.1} parent=1 // loop_header
      %s33 = sphi 0, %s37
      %p34 = scmp.ge.s32.totalorder %s33, 4
      %s43 = sphi 0, %s45
      %s46 = sphi 0, %s43
      %s47 = sphi 0, %s46
      %s63 = sphi 0, %s47
      %s67 = sphi 0, %s67
      %s69 = sphi 0, %s67
      %s70 = sphi 0, %s69
      %s84 = sphi 0, %s70
      %s88 = sphi 0, %s88
      %s90 = sphi 0, %s88
      %s91 = sphi 0, %s90
      %s105 = sphi 0, %s91
      %s109 = sphi 0, %s109
      %s111 = sphi 0, %s109
      %s112 = sphi 0, %s111
      %s126 = sphi 0, %s112
      %s130 = sphi 0, %s130
      %s132 = sphi 0, %s130
      %s133 = sphi 0, %s132
      %s147 = sphi 0, %s133
      %s151 = sphi 0, %s151
      %s153 = sphi 0, %s151
      %s154 = sphi 0, %s153
      %s168 = sphi 0, %s154
      %s172 = sphi 0, %s172
      %s174 = sphi 0, %s172
      %s175 = sphi 0, %s174
      %s189 = sphi 0, %s175
      %s193 = sphi 0, %s193
      %s195 = sphi 0, %s193
      %s196 = sphi 0, %s195
      %s210 = sphi 0, %s196
      %s214 = sphi 0, %s214
      %s216 = sphi 0, %s214
      %s217 = sphi 0, %s216
      %s231 = sphi 0, %s217
      %s235 = sphi 0, %s235
      %s237 = sphi 0, %s235
      %s238 = sphi 0, %s237
      %s252 = sphi 0, %s238
      %s256 = sphi 0, %s256
      %s258 = sphi 0, %s256
      %s259 = sphi 0, %s258
      %s273 = sphi 0, %s259
      %s277 = sphi 0, %s277
      %s279 = sphi 0, %s277
      %s280 = sphi 0, %s279
      %s294 = sphi 0, %s280
      %s298 = sphi 0, %s298
      %s300 = sphi 0, %s298
      %s301 = sphi 0, %s300
      %s315 = sphi 0, %s301
      %s319 = sphi 0, %s319
      %s321 = sphi 0, %s319
      %s322 = sphi 0, %s321
      %s336 = sphi 0, %s322
      %s340 = sphi 0, %s340
      %s342 = sphi 0, %s340
      %s343 = sphi 0, %s342
      %s357 = sphi 0, %s343
      %s361 = sphi 0, %s361
      %s363 = sphi 0, %s361
      %s364 = sphi 0, %s363
      %s378 = sphi 0, %s364
      %s384 = sphi 0, %s386
      %s387 = sphi 0, %s384
      %s388 = sphi 0, %s387
      %s404 = sphi 0, %s388
    $region4: #{estimator_forward.1} parent=1 // loop_header_branch
      %36 = sbr.rel (%p34) target = $region8
    $region5: #{estimator_forward.1} parent=1 // loop_body
      %s38 = ssub.s32 %s33, 1
      %s39 = ssub.s32 %s33, 2
      %s40 = sadd.s32 %s33, 1
      %s41 = ssub.s32 %s33, %s40
      %p42 = scmp.eq.s32.totalorder %s41, 0
      %s44 = sadd.s32 %s43, 1
      %s45 = scalar_select %p42, %s43, %s44
      %p48 = pneg %p42
      %p49 = scmp.eq.s32.totalorder %s33, 1
      %p50 = por %p48, %p49
      %p51 = scmp.ne.s32.totalorder %s43, %s46
      %p52 = scmp.eq.s32.totalorder %s33, 0
      %p53 = por %p51, %p52
      %p54 = scmp.ne.s32.totalorder %s43, %s46
      %p55 = scmp.eq.s32.totalorder %s38, 1
      %p56 = por %p54, %p55
      %p57 = scmp.ne.s32.totalorder %s46, %s47
      %p58 = scmp.eq.s32.totalorder %s38, 0
      %p59 = por %p57, %p58
      %p60 = scmp.ne.s32.totalorder %s46, %s47
      %p61 = scmp.eq.s32.totalorder %s39, 1
      %p62 = por %p60, %p61
      %p64 = scmp.ne.s32.totalorder %s47, %s63
      %p65 = scmp.eq.s32.totalorder %s39, 0
      %p66 = por %p64, %p65
      %s68 = sadd.s32 %s67, 1
      %p71 = scmp.eq.s32.totalorder %s33, 1
      %p72 = scmp.ne.s32.totalorder %s67, %s69
      %p73 = scmp.eq.s32.totalorder %s33, 0
      %p74 = por %p72, %p73
      %p75 = scmp.ne.s32.totalorder %s67, %s69
      %p76 = scmp.eq.s32.totalorder %s38, 1
      %p77 = por %p75, %p76
      %p78 = scmp.ne.s32.totalorder %s69, %s70
      %p79 = scmp.eq.s32.totalorder %s38, 0
      %p80 = por %p78, %p79
      %p81 = scmp.ne.s32.totalorder %s69, %s70
      %p82 = scmp.eq.s32.totalorder %s39, 1
      %p83 = por %p81, %p82
      %p85 = scmp.ne.s32.totalorder %s70, %s84
      %p86 = scmp.eq.s32.totalorder %s39, 0
      %p87 = por %p85, %p86
      %s89 = sadd.s32 %s88, 1
      %p92 = scmp.eq.s32.totalorder %s33, 1
      %p93 = scmp.ne.s32.totalorder %s88, %s90
      %p94 = scmp.eq.s32.totalorder %s33, 0
      %p95 = por %p93, %p94
      %p96 = scmp.ne.s32.totalorder %s88, %s90
      %p97 = scmp.eq.s32.totalorder %s38, 1
      %p98 = por %p96, %p97
      %p99 = scmp.ne.s32.totalorder %s90, %s91
      %p100 = scmp.eq.s32.totalorder %s38, 0
      %p101 = por %p99, %p100
      %p102 = scmp.ne.s32.totalorder %s90, %s91
      %p103 = scmp.eq.s32.totalorder %s39, 1
      %p104 = por %p102, %p103
      %p106 = scmp.ne.s32.totalorder %s91, %s105
      %p107 = scmp.eq.s32.totalorder %s39, 0
      %p108 = por %p106, %p107
      %s110 = sadd.s32 %s109, 1
      %p113 = scmp.eq.s32.totalorder %s33, 1
      %p114 = scmp.ne.s32.totalorder %s109, %s111
      %p115 = scmp.eq.s32.totalorder %s33, 0
      %p116 = por %p114, %p115
      %p117 = scmp.ne.s32.totalorder %s109, %s111
      %p118 = scmp.eq.s32.totalorder %s38, 1
      %p119 = por %p117, %p118
      %p120 = scmp.ne.s32.totalorder %s111, %s112
      %p121 = scmp.eq.s32.totalorder %s38, 0
      %p122 = por %p120, %p121
      %p123 = scmp.ne.s32.totalorder %s111, %s112
      %p124 = scmp.eq.s32.totalorder %s39, 1
      %p125 = por %p123, %p124
      %p127 = scmp.ne.s32.totalorder %s112, %s126
      %p128 = scmp.eq.s32.totalorder %s39, 0
      %p129 = por %p127, %p128
      %s131 = sadd.s32 %s130, 1
      %p134 = scmp.eq.s32.totalorder %s33, 1
      %p135 = scmp.ne.s32.totalorder %s130, %s132
      %p136 = scmp.eq.s32.totalorder %s33, 0
      %p137 = por %p135, %p136
      %p138 = scmp.ne.s32.totalorder %s130, %s132
      %p139 = scmp.eq.s32.totalorder %s38, 1
      %p140 = por %p138, %p139
      %p141 = scmp.ne.s32.totalorder %s132, %s133
      %p142 = scmp.eq.s32.totalorder %s38, 0
      %p143 = por %p141, %p142
      %p144 = scmp.ne.s32.totalorder %s132, %s133
      %p145 = scmp.eq.s32.totalorder %s39, 1
      %p146 = por %p144, %p145
      %p148 = scmp.ne.s32.totalorder %s133, %s147
      %p149 = scmp.eq.s32.totalorder %s39, 0
      %p150 = por %p148, %p149
      %s152 = sadd.s32 %s151, 1
      %p155 = scmp.eq.s32.totalorder %s33, 1
      %p156 = scmp.ne.s32.totalorder %s151, %s153
      %p157 = scmp.eq.s32.totalorder %s33, 0
      %p158 = por %p156, %p157
      %p159 = scmp.ne.s32.totalorder %s151, %s153
      %p160 = scmp.eq.s32.totalorder %s38, 1
      %p161 = por %p159, %p160
      %p162 = scmp.ne.s32.totalorder %s153, %s154
      %p163 = scmp.eq.s32.totalorder %s38, 0
      %p164 = por %p162, %p163
      %p165 = scmp.ne.s32.totalorder %s153, %s154
      %p166 = scmp.eq.s32.totalorder %s39, 1
      %p167 = por %p165, %p166
      %p169 = scmp.ne.s32.totalorder %s154, %s168
      %p170 = scmp.eq.s32.totalorder %s39, 0
      %p171 = por %p169, %p170
      %s173 = sadd.s32 %s172, 1
      %p176 = scmp.eq.s32.totalorder %s33, 1
      %p177 = scmp.ne.s32.totalorder %s172, %s174
      %p178 = scmp.eq.s32.totalorder %s33, 0
      %p179 = por %p177, %p178
      %p180 = scmp.ne.s32.totalorder %s172, %s174
      %p181 = scmp.eq.s32.totalorder %s38, 1
      %p182 = por %p180, %p181
      %p183 = scmp.ne.s32.totalorder %s174, %s175
      %p184 = scmp.eq.s32.totalorder %s38, 0
      %p185 = por %p183, %p184
      %p186 = scmp.ne.s32.totalorder %s174, %s175
      %p187 = scmp.eq.s32.totalorder %s39, 1
      %p188 = por %p186, %p187
      %p190 = scmp.ne.s32.totalorder %s175, %s189
      %p191 = scmp.eq.s32.totalorder %s39, 0
      %p192 = por %p190, %p191
      %s194 = sadd.s32 %s193, 1
      %p197 = scmp.eq.s32.totalorder %s33, 1
      %p198 = scmp.ne.s32.totalorder %s193, %s195
      %p199 = scmp.eq.s32.totalorder %s33, 0
      %p200 = por %p198, %p199
      %p201 = scmp.ne.s32.totalorder %s193, %s195
      %p202 = scmp.eq.s32.totalorder %s38, 1
      %p203 = por %p201, %p202
      %p204 = scmp.ne.s32.totalorder %s195, %s196
      %p205 = scmp.eq.s32.totalorder %s38, 0
      %p206 = por %p204, %p205
      %p207 = scmp.ne.s32.totalorder %s195, %s196
      %p208 = scmp.eq.s32.totalorder %s39, 1
      %p209 = por %p207, %p208
      %p211 = scmp.ne.s32.totalorder %s196, %s210
      %p212 = scmp.eq.s32.totalorder %s39, 0
      %p213 = por %p211, %p212
      %s215 = sadd.s32 %s214, 1
      %p218 = scmp.eq.s32.totalorder %s33, 1
      %p219 = scmp.ne.s32.totalorder %s214, %s216
      %p220 = scmp.eq.s32.totalorder %s33, 0
      %p221 = por %p219, %p220
      %p222 = scmp.ne.s32.totalorder %s214, %s216
      %p223 = scmp.eq.s32.totalorder %s38, 1
      %p224 = por %p222, %p223
      %p225 = scmp.ne.s32.totalorder %s216, %s217
      %p226 = scmp.eq.s32.totalorder %s38, 0
      %p227 = por %p225, %p226
      %p228 = scmp.ne.s32.totalorder %s216, %s217
      %p229 = scmp.eq.s32.totalorder %s39, 1
      %p230 = por %p228, %p229
      %p232 = scmp.ne.s32.totalorder %s217, %s231
      %p233 = scmp.eq.s32.totalorder %s39, 0
      %p234 = por %p232, %p233
      %s236 = sadd.s32 %s235, 1
      %p239 = scmp.eq.s32.totalorder %s33, 1
      %p240 = scmp.ne.s32.totalorder %s235, %s237
      %p241 = scmp.eq.s32.totalorder %s33, 0
      %p242 = por %p240, %p241
      %p243 = scmp.ne.s32.totalorder %s235, %s237
      %p244 = scmp.eq.s32.totalorder %s38, 1
      %p245 = por %p243, %p244
      %p246 = scmp.ne.s32.totalorder %s237, %s238
      %p247 = scmp.eq.s32.totalorder %s38, 0
      %p248 = por %p246, %p247
      %p249 = scmp.ne.s32.totalorder %s237, %s238
      %p250 = scmp.eq.s32.totalorder %s39, 1
      %p251 = por %p249, %p250
      %p253 = scmp.ne.s32.totalorder %s238, %s252
      %p254 = scmp.eq.s32.totalorder %s39, 0
      %p255 = por %p253, %p254
      %s257 = sadd.s32 %s256, 1
      %p260 = scmp.eq.s32.totalorder %s33, 1
      %p261 = scmp.ne.s32.totalorder %s256, %s258
      %p262 = scmp.eq.s32.totalorder %s33, 0
      %p263 = por %p261, %p262
      %p264 = scmp.ne.s32.totalorder %s256, %s258
      %p265 = scmp.eq.s32.totalorder %s38, 1
      %p266 = por %p264, %p265
      %p267 = scmp.ne.s32.totalorder %s258, %s259
      %p268 = scmp.eq.s32.totalorder %s38, 0
      %p269 = por %p267, %p268
      %p270 = scmp.ne.s32.totalorder %s258, %s259
      %p271 = scmp.eq.s32.totalorder %s39, 1
      %p272 = por %p270, %p271
      %p274 = scmp.ne.s32.totalorder %s259, %s273
      %p275 = scmp.eq.s32.totalorder %s39, 0
      %p276 = por %p274, %p275
      %s278 = sadd.s32 %s277, 1
      %p281 = scmp.eq.s32.totalorder %s33, 1
      %p282 = scmp.ne.s32.totalorder %s277, %s279
      %p283 = scmp.eq.s32.totalorder %s33, 0
      %p284 = por %p282, %p283
      %p285 = scmp.ne.s32.totalorder %s277, %s279
      %p286 = scmp.eq.s32.totalorder %s38, 1
      %p287 = por %p285, %p286
      %p288 = scmp.ne.s32.totalorder %s279, %s280
      %p289 = scmp.eq.s32.totalorder %s38, 0
      %p290 = por %p288, %p289
      %p291 = scmp.ne.s32.totalorder %s279, %s280
      %p292 = scmp.eq.s32.totalorder %s39, 1
      %p293 = por %p291, %p292
      %p295 = scmp.ne.s32.totalorder %s280, %s294
      %p296 = scmp.eq.s32.totalorder %s39, 0
      %p297 = por %p295, %p296
      %s299 = sadd.s32 %s298, 1
      %p302 = scmp.eq.s32.totalorder %s33, 1
      %p303 = scmp.ne.s32.totalorder %s298, %s300
      %p304 = scmp.eq.s32.totalorder %s33, 0
      %p305 = por %p303, %p304
      %p306 = scmp.ne.s32.totalorder %s298, %s300
      %p307 = scmp.eq.s32.totalorder %s38, 1
      %p308 = por %p306, %p307
      %p309 = scmp.ne.s32.totalorder %s300, %s301
      %p310 = scmp.eq.s32.totalorder %s38, 0
      %p311 = por %p309, %p310
      %p312 = scmp.ne.s32.totalorder %s300, %s301
      %p313 = scmp.eq.s32.totalorder %s39, 1
      %p314 = por %p312, %p313
      %p316 = scmp.ne.s32.totalorder %s301, %s315
      %p317 = scmp.eq.s32.totalorder %s39, 0
      %p318 = por %p316, %p317
      %s320 = sadd.s32 %s319, 1
      %p323 = scmp.eq.s32.totalorder %s33, 1
      %p324 = scmp.ne.s32.totalorder %s319, %s321
      %p325 = scmp.eq.s32.totalorder %s33, 0
      %p326 = por %p324, %p325
      %p327 = scmp.ne.s32.totalorder %s319, %s321
      %p328 = scmp.eq.s32.totalorder %s38, 1
      %p329 = por %p327, %p328
      %p330 = scmp.ne.s32.totalorder %s321, %s322
      %p331 = scmp.eq.s32.totalorder %s38, 0
      %p332 = por %p330, %p331
      %p333 = scmp.ne.s32.totalorder %s321, %s322
      %p334 = scmp.eq.s32.totalorder %s39, 1
      %p335 = por %p333, %p334
      %p337 = scmp.ne.s32.totalorder %s322, %s336
      %p338 = scmp.eq.s32.totalorder %s39, 0
      %p339 = por %p337, %p338
      %s341 = sadd.s32 %s340, 1
      %p344 = scmp.eq.s32.totalorder %s33, 1
      %p345 = scmp.ne.s32.totalorder %s340, %s342
      %p346 = scmp.eq.s32.totalorder %s33, 0
      %p347 = por %p345, %p346
      %p348 = scmp.ne.s32.totalorder %s340, %s342
      %p349 = scmp.eq.s32.totalorder %s38, 1
      %p350 = por %p348, %p349
      %p351 = scmp.ne.s32.totalorder %s342, %s343
      %p352 = scmp.eq.s32.totalorder %s38, 0
      %p353 = por %p351, %p352
      %p354 = scmp.ne.s32.totalorder %s342, %s343
      %p355 = scmp.eq.s32.totalorder %s39, 1
      %p356 = por %p354, %p355
      %p358 = scmp.ne.s32.totalorder %s343, %s357
      %p359 = scmp.eq.s32.totalorder %s39, 0
      %p360 = por %p358, %p359
      %s362 = sadd.s32 %s361, 1
      %p365 = scmp.eq.s32.totalorder %s33, 1
      %p366 = scmp.ne.s32.totalorder %s361, %s363
      %p367 = scmp.eq.s32.totalorder %s33, 0
      %p368 = por %p366, %p367
      %p369 = scmp.ne.s32.totalorder %s361, %s363
      %p370 = scmp.eq.s32.totalorder %s38, 1
      %p371 = por %p369, %p370
      %p372 = scmp.ne.s32.totalorder %s363, %s364
      %p373 = scmp.eq.s32.totalorder %s38, 0
      %p374 = por %p372, %p373
      %p375 = scmp.ne.s32.totalorder %s363, %s364
      %p376 = scmp.eq.s32.totalorder %s39, 1
      %p377 = por %p375, %p376
      %p379 = scmp.ne.s32.totalorder %s364, %s378
      %p380 = scmp.eq.s32.totalorder %s39, 0
      %p381 = por %p379, %p380
      %s382 = ssub.s32 %s33, %s40
      %p383 = scmp.eq.s32.totalorder %s382, 0
      %s385 = sadd.s32 %s384, 1
      %s386 = scalar_select %p383, %s384, %s385
      %p389 = pneg %p383
      %p390 = scmp.eq.s32.totalorder %s33, 1
      %p391 = por %p389, %p390
      %p392 = scmp.ne.s32.totalorder %s384, %s387
      %p393 = scmp.eq.s32.totalorder %s33, 0
      %p394 = por %p392, %p393
      %p395 = scmp.ne.s32.totalorder %s384, %s387
      %p396 = scmp.eq.s32.totalorder %s38, 1
      %p397 = por %p395, %p396
      %p398 = scmp.ne.s32.totalorder %s387, %s388
      %p399 = scmp.eq.s32.totalorder %s38, 0
      %p400 = por %p398, %p399
      %p401 = scmp.ne.s32.totalorder %s387, %s388
      %p402 = scmp.eq.s32.totalorder %s39, 1
      %p403 = por %p401, %p402
      %p405 = scmp.ne.s32.totalorder %s388, %s404
      %p406 = scmp.eq.s32.totalorder %s39, 0
      %p407 = por %p405, %p406
      %p408 = scmp.le.s32.totalorder 1, %s33
      %p409 = scmp.lt.s32.totalorder %s33, 3
      %p410 = pnand %p408, %p409
      %p411 = pneg %p410
      // Predicated region
      $region9: #{estimator_forward.1} parent=5 // pred_check
        _
      $region10: #{estimator_forward.1} parent=5 // pred_check_branch
        %413 = sbr.rel (%p410) target = $region12
      $region11: #{estimator_forward.1} parent=5 // pred_region
        %s414 = ssub.s32 %s33, 1
        // Predicated region
        $region13: #{estimator_forward.1} parent=11 // pred_check
          %p415 = pneg %p80
        $region14: #{estimator_forward.1} parent=11 // pred_check_branch
          %417 = sbr.rel (%p415) target = $region16
        $region15: #{estimator_forward.1} parent=11 // pred_region
          %419 = vsyncadd [#allocation3], 0
          %s420 = sshll.u32 %s1, 4
          %s421 = int_to_ptr.hbm [resolvable:$true] %s420
          %s422 = sshll.u32 [#allocation2], 4
          %s423 = int_to_ptr.vmem [resolvable:$true] %s422
          %428 = dma.hbm_to_vmem [thread:$0]  %s421, 7680, %s423, [#allocation3], 128, 128, 8
        $region16: #{estimator_forward.1} parent=11 // pred_fallthru
          _
        // Predicated region
        $region17: #{estimator_forward.1} parent=11 // pred_check
          %p429 = pneg %p101
        $region18: #{estimator_forward.1} parent=11 // pred_check_branch
          %431 = sbr.rel (%p429) target = $region20
        $region19: #{estimator_forward.1} parent=11 // pred_region
          %433 = vsyncadd [#allocation7], 0
          %s435 = sshll.u32 %s2, 4
          %s436 = int_to_ptr.hbm [resolvable:$true] %s435
          %s437 = sshll.u32 [#allocation6], 4
          %s438 = int_to_ptr.vmem [resolvable:$true] %s437
          %440 = dma.hbm_to_vmem [thread:$0]  %s436, 32, %s438, [#allocation7]
        $region20: #{estimator_forward.1} parent=11 // pred_fallthru
          _
        // Predicated region
        $region21: #{estimator_forward.1} parent=11 // pred_check
          %p441 = pneg %p122
        $region22: #{estimator_forward.1} parent=11 // pred_check_branch
          %443 = sbr.rel (%p441) target = $region24
        $region23: #{estimator_forward.1} parent=11 // pred_region
          %445 = vsyncadd [#allocation7], 0
          %s446 = sshll.u32 %s3, 4
          %s447 = int_to_ptr.hbm [resolvable:$true] %s446
          %s448 = sshll.u32 [#allocation8], 4
          %s449 = int_to_ptr.vmem [resolvable:$true] %s448
          %454 = dma.hbm_to_vmem [thread:$0]  %s447, 23040, %s449, [#allocation7], 192, 192, 12
        $region24: #{estimator_forward.1} parent=11 // pred_fallthru
          _
        // Predicated region
        $region25: #{estimator_forward.1} parent=11 // pred_check
          %p455 = pneg %p143
        $region26: #{estimator_forward.1} parent=11 // pred_check_branch
          %457 = sbr.rel (%p455) target = $region28
        $region27: #{estimator_forward.1} parent=11 // pred_region
          %459 = vsyncadd [#allocation10], 0
          %s461 = sshll.u32 %s4, 4
          %s462 = int_to_ptr.hbm [resolvable:$true] %s461
          %s463 = sshll.u32 [#allocation9], 4
          %s464 = int_to_ptr.vmem [resolvable:$true] %s463
          %466 = dma.hbm_to_vmem [thread:$0]  %s462, 48, %s464, [#allocation10]
        $region28: #{estimator_forward.1} parent=11 // pred_fallthru
          _
        // Predicated region
        $region29: #{estimator_forward.1} parent=11 // pred_check
          %p467 = pneg %p164
        $region30: #{estimator_forward.1} parent=11 // pred_check_branch
          %469 = sbr.rel (%p467) target = $region32
        $region31: #{estimator_forward.1} parent=11 // pred_region
          %471 = vsyncadd [#allocation10], 0
          %s472 = sshll.u32 %s5, 4
          %s473 = int_to_ptr.hbm [resolvable:$true] %s472
          %s474 = sshll.u32 [#allocation11], 4
          %s475 = int_to_ptr.vmem [resolvable:$true] %s474
          %480 = dma.hbm_to_vmem [thread:$0]  %s473, 128, %s475, [#allocation10], 64, 64, 4
        $region32: #{estimator_forward.1} parent=11 // pred_fallthru
          _
        // Predicated region
        $region33: #{estimator_forward.1} parent=11 // pred_check
          %p481 = pneg %p185
        $region34: #{estimator_forward.1} parent=11 // pred_check_branch
          %483 = sbr.rel (%p481) target = $region36
        $region35: #{estimator_forward.1} parent=11 // pred_region
          %485 = vsyncadd [#allocation13], 0
          %s486 = sshll.u32 %s6, 4
          %s487 = int_to_ptr.hbm [resolvable:$true] %s486
          %s488 = sshll.u32 [#allocation12], 4
          %s489 = int_to_ptr.vmem [resolvable:$true] %s488
          %494 = dma.hbm_to_vmem [thread:$0]  %s487, 51200, %s489, [#allocation13], 256, 256, 16
        $region36: #{estimator_forward.1} parent=11 // pred_fallthru
          _
        // Predicated region
        $region37: #{estimator_forward.1} parent=11 // pred_check
          %p495 = pneg %p206
        $region38: #{estimator_forward.1} parent=11 // pred_check_branch
          %497 = sbr.rel (%p495) target = $region40
        $region39: #{estimator_forward.1} parent=11 // pred_region
          %499 = vsyncadd [#allocation13], 0
          %s501 = sshll.u32 %s7, 4
          %s502 = int_to_ptr.hbm [resolvable:$true] %s501
          %s503 = sshll.u32 [#allocation14], 4
          %s504 = int_to_ptr.vmem [resolvable:$true] %s503
          %506 = dma.hbm_to_vmem [thread:$0]  %s502, 64, %s504, [#allocation13]
        $region40: #{estimator_forward.1} parent=11 // pred_fallthru
          _
        // Predicated region
        $region41: #{estimator_forward.1} parent=11 // pred_check
          %p507 = pneg %p227
        $region42: #{estimator_forward.1} parent=11 // pred_check_branch
          %509 = sbr.rel (%p507) target = $region44
        $region43: #{estimator_forward.1} parent=11 // pred_region
          %511 = vsyncadd [#allocation16], 0
          %s512 = sshll.u32 %s8, 4
          %s513 = int_to_ptr.hbm [resolvable:$true] %s512
          %s514 = sshll.u32 [#allocation15], 4
          %s515 = int_to_ptr.vmem [resolvable:$true] %s514
          %520 = dma.hbm_to_vmem [thread:$0]  %s513, 128, %s515, [#allocation16], 64, 64, 4
        $region44: #{estimator_forward.1} parent=11 // pred_fallthru
          _
        // Predicated region
        $region45: #{estimator_forward.1} parent=11 // pred_check
          %p521 = pneg %p248
        $region46: #{estimator_forward.1} parent=11 // pred_check_branch
          %523 = sbr.rel (%p521) target = $region48
        $region47: #{estimator_forward.1} parent=11 // pred_region
          %525 = vsyncadd [#allocation16], 0
          %s526 = sshll.u32 %s9, 4
          %s527 = int_to_ptr.hbm [resolvable:$true] %s526
          %s528 = sshll.u32 [#allocation17], 4
          %s529 = int_to_ptr.vmem [resolvable:$true] %s528
          %534 = dma.hbm_to_vmem [thread:$0]  %s527, 65536, %s529, [#allocation16], 128, 128, 8
        $region48: #{estimator_forward.1} parent=11 // pred_fallthru
          _
        // Predicated region
        $region49: #{estimator_forward.1} parent=11 // pred_check
          %p535 = pneg %p269
        $region50: #{estimator_forward.1} parent=11 // pred_check_branch
          %537 = sbr.rel (%p535) target = $region52
        $region51: #{estimator_forward.1} parent=11 // pred_region
          %539 = vsyncadd [#allocation19], 0
          %s541 = sshll.u32 %s10, 4
          %s542 = int_to_ptr.hbm [resolvable:$true] %s541
          %s543 = sshll.u32 [#allocation18], 4
          %s544 = int_to_ptr.vmem [resolvable:$true] %s543
          %546 = dma.hbm_to_vmem [thread:$0]  %s542, 32, %s544, [#allocation19]
        $region52: #{estimator_forward.1} parent=11 // pred_fallthru
          _
        // Predicated region
        $region53: #{estimator_forward.1} parent=11 // pred_check
          %p547 = pneg %p290
        $region54: #{estimator_forward.1} parent=11 // pred_check_branch
          %549 = sbr.rel (%p547) target = $region56
        $region55: #{estimator_forward.1} parent=11 // pred_region
          %551 = vsyncadd [#allocation19], 0
          %s552 = sshll.u32 %s11, 4
          %s553 = int_to_ptr.hbm [resolvable:$true] %s552
          %s554 = sshll.u32 [#allocation20], 4
          %s555 = int_to_ptr.vmem [resolvable:$true] %s554
          %560 = dma.hbm_to_vmem [thread:$0]  %s553, 4096, %s555, [#allocation19], 128, 128, 8
        $region56: #{estimator_forward.1} parent=11 // pred_fallthru
          _
        // Predicated region
        $region57: #{estimator_forward.1} parent=11 // pred_check
          %p561 = pneg %p311
        $region58: #{estimator_forward.1} parent=11 // pred_check_branch
          %563 = sbr.rel (%p561) target = $region60
        $region59: #{estimator_forward.1} parent=11 // pred_region
          %565 = vsyncadd [#allocation22], 0
          %s567 = sshll.u32 %s12, 4
          %s568 = int_to_ptr.hbm [resolvable:$true] %s567
          %s569 = sshll.u32 [#allocation21], 4
          %s570 = int_to_ptr.vmem [resolvable:$true] %s569
          %572 = dma.hbm_to_vmem [thread:$0]  %s568, 32, %s570, [#allocation22]
        $region60: #{estimator_forward.1} parent=11 // pred_fallthru
          _
        // Predicated region
        $region61: #{estimator_forward.1} parent=11 // pred_check
          %p573 = pneg %p332
        $region62: #{estimator_forward.1} parent=11 // pred_check_branch
          %575 = sbr.rel (%p573) target = $region64
        $region63: #{estimator_forward.1} parent=11 // pred_region
          _
        $region64: #{estimator_forward.1} parent=11 // pred_fallthru
          _
        // Predicated region
        $region65: #{estimator_forward.1} parent=11 // pred_check
          %p576 = pneg %p353
        $region66: #{estimator_forward.1} parent=11 // pred_check_branch
          %578 = sbr.rel (%p576) target = $region68
        $region67: #{estimator_forward.1} parent=11 // pred_region
          %580 = vsyncadd [#allocation22], 0
          %s582 = sshll.u32 %s14, 4
          %s583 = int_to_ptr.hbm [resolvable:$true] %s582
          %s584 = sshll.u32 [#allocation23], 4
          %s585 = int_to_ptr.vmem [resolvable:$true] %s584
          %587 = dma.hbm_to_vmem [thread:$0]  %s583, 16, %s585, [#allocation22]
        $region68: #{estimator_forward.1} parent=11 // pred_fallthru
          _
        // Predicated region
        $region69: #{estimator_forward.1} parent=11 // pred_check
          %p588 = pneg %p374
        $region70: #{estimator_forward.1} parent=11 // pred_check_branch
          %590 = sbr.rel (%p588) target = $region72
        $region71: #{estimator_forward.1} parent=11 // pred_region
          %592 = vsyncadd [#allocation5], 0
          %s594 = sshll.u32 %s15, 4
          %s595 = int_to_ptr.hbm [resolvable:$true] %s594
          %597 = dma.hbm_to_smem %s595, 16, [#allocation24], [#allocation5]
        $region72: #{estimator_forward.1} parent=11 // pred_fallthru
          _
      $region12: #{estimator_forward.1} parent=5 // pred_fallthru
        _
      %p598 = scmp.lt.s32.totalorder %s33, 2
      // Predicated region
      $region73: #{estimator_forward.1} parent=5 // pred_check
        %p599 = pneg %p598
      $region74: #{estimator_forward.1} parent=5 // pred_check_branch
        %601 = sbr.rel (%p599) target = $region76
      $region75: #{estimator_forward.1} parent=5 // pred_region
        // Predicated region
        $region77: #{estimator_forward.1} parent=75 // pred_check
          %p602 = pneg %p53
        $region78: #{estimator_forward.1} parent=75 // pred_check_branch
          %604 = sbr.rel (%p602) target = $region80
        $region79: #{estimator_forward.1} parent=75 // pred_region
          %p605 = scmp.lt.s32.totalorder %s33, 1
          %s606 = scalar_select %p605, %s33, 1
          %s607 = smul.addr %s606, 2
          %s608 = smul.addr %s607, 8
          %s609 = scalar_lea.vmem %s0, %s608
        $region80: #{estimator_forward.1} parent=75 // pred_fallthru
          _
      $region76: #{estimator_forward.1} parent=5 // pred_fallthru
        _
      %p610 = scmp.le.s32.totalorder 1, %s33
      %p611 = scmp.lt.s32.totalorder %s33, 3
      %p612 = pnand %p610, %p611
      %p613 = pneg %p612
      // Predicated region
      $region81: #{estimator_forward.1} parent=5 // pred_check
        _
      $region82: #{estimator_forward.1} parent=5 // pred_check_branch
        %615 = sbr.rel (%p612) target = $region84
      $region83: #{estimator_forward.1} parent=5 // pred_region
        %s616 = ssub.s32 %s33, 1
        // Predicated region
        $region85: #{estimator_forward.1} parent=83 // pred_check
          %p617 = pneg %p80
        $region86: #{estimator_forward.1} parent=83 // pred_check_branch
          %619 = sbr.rel (%p617) target = $region88
        $region87: #{estimator_forward.1} parent=83 // pred_region
          %621 = dma.done [#allocation3], 7680
        $region88: #{estimator_forward.1} parent=83 // pred_fallthru
          _
        // Predicated region
        $region89: #{estimator_forward.1} parent=83 // pred_check
          %p622 = pneg %p101
        $region90: #{estimator_forward.1} parent=83 // pred_check_branch
          %624 = sbr.rel (%p622) target = $region92
        $region91: #{estimator_forward.1} parent=83 // pred_region
          %626 = dma.done [#allocation7], 32
        $region92: #{estimator_forward.1} parent=83 // pred_fallthru
          _
        // Predicated region
        $region93: #{estimator_forward.1} parent=83 // pred_check
          %p627 = pneg %p122
        $region94: #{estimator_forward.1} parent=83 // pred_check_branch
          %629 = sbr.rel (%p627) target = $region96
        $region95: #{estimator_forward.1} parent=83 // pred_region
          %631 = dma.done [#allocation7], 23040
        $region96: #{estimator_forward.1} parent=83 // pred_fallthru
          _
        // Predicated region
        $region97: #{estimator_forward.1} parent=83 // pred_check
          %p632 = pneg %p143
        $region98: #{estimator_forward.1} parent=83 // pred_check_branch
          %634 = sbr.rel (%p632) target = $region100
        $region99: #{estimator_forward.1} parent=83 // pred_region
          %636 = dma.done [#allocation10], 48
        $region100: #{estimator_forward.1} parent=83 // pred_fallthru
          _
        // Predicated region
        $region101: #{estimator_forward.1} parent=83 // pred_check
          %p637 = pneg %p164
        $region102: #{estimator_forward.1} parent=83 // pred_check_branch
          %639 = sbr.rel (%p637) target = $region104
        $region103: #{estimator_forward.1} parent=83 // pred_region
          %641 = dma.done [#allocation10], 128
        $region104: #{estimator_forward.1} parent=83 // pred_fallthru
          _
        // Predicated region
        $region105: #{estimator_forward.1} parent=83 // pred_check
          %p642 = pneg %p185
        $region106: #{estimator_forward.1} parent=83 // pred_check_branch
          %644 = sbr.rel (%p642) target = $region108
        $region107: #{estimator_forward.1} parent=83 // pred_region
          %646 = dma.done [#allocation13], 51200
        $region108: #{estimator_forward.1} parent=83 // pred_fallthru
          _
        // Predicated region
        $region109: #{estimator_forward.1} parent=83 // pred_check
          %p647 = pneg %p206
        $region110: #{estimator_forward.1} parent=83 // pred_check_branch
          %649 = sbr.rel (%p647) target = $region112
        $region111: #{estimator_forward.1} parent=83 // pred_region
          %651 = dma.done [#allocation13], 64
        $region112: #{estimator_forward.1} parent=83 // pred_fallthru
          _
        // Predicated region
        $region113: #{estimator_forward.1} parent=83 // pred_check
          %p652 = pneg %p227
        $region114: #{estimator_forward.1} parent=83 // pred_check_branch
          %654 = sbr.rel (%p652) target = $region116
        $region115: #{estimator_forward.1} parent=83 // pred_region
          %656 = dma.done [#allocation16], 128
        $region116: #{estimator_forward.1} parent=83 // pred_fallthru
          _
        // Predicated region
        $region117: #{estimator_forward.1} parent=83 // pred_check
          %p657 = pneg %p248
        $region118: #{estimator_forward.1} parent=83 // pred_check_branch
          %659 = sbr.rel (%p657) target = $region120
        $region119: #{estimator_forward.1} parent=83 // pred_region
          %661 = dma.done [#allocation16], 65536
        $region120: #{estimator_forward.1} parent=83 // pred_fallthru
          _
        // Predicated region
        $region121: #{estimator_forward.1} parent=83 // pred_check
          %p662 = pneg %p269
        $region122: #{estimator_forward.1} parent=83 // pred_check_branch
          %664 = sbr.rel (%p662) target = $region124
        $region123: #{estimator_forward.1} parent=83 // pred_region
          %666 = dma.done [#allocation19], 32
        $region124: #{estimator_forward.1} parent=83 // pred_fallthru
          _
        // Predicated region
        $region125: #{estimator_forward.1} parent=83 // pred_check
          %p667 = pneg %p290
        $region126: #{estimator_forward.1} parent=83 // pred_check_branch
          %669 = sbr.rel (%p667) target = $region128
        $region127: #{estimator_forward.1} parent=83 // pred_region
          %671 = dma.done [#allocation19], 4096
        $region128: #{estimator_forward.1} parent=83 // pred_fallthru
          _
        // Predicated region
        $region129: #{estimator_forward.1} parent=83 // pred_check
          %p672 = pneg %p311
        $region130: #{estimator_forward.1} parent=83 // pred_check_branch
          %674 = sbr.rel (%p672) target = $region132
        $region131: #{estimator_forward.1} parent=83 // pred_region
          %676 = dma.done [#allocation22], 32
        $region132: #{estimator_forward.1} parent=83 // pred_fallthru
          _
        // Predicated region
        $region133: #{estimator_forward.1} parent=83 // pred_check
          %p677 = pneg %p353
        $region134: #{estimator_forward.1} parent=83 // pred_check_branch
          %679 = sbr.rel (%p677) target = $region136
        $region135: #{estimator_forward.1} parent=83 // pred_region
          %681 = dma.done [#allocation22], 16
        $region136: #{estimator_forward.1} parent=83 // pred_fallthru
          _
        // Predicated region
        $region137: #{estimator_forward.1} parent=83 // pred_check
          %p682 = pneg %p374
        $region138: #{estimator_forward.1} parent=83 // pred_check_branch
          %684 = sbr.rel (%p682) target = $region140
        $region139: #{estimator_forward.1} parent=83 // pred_region
          %686 = dma.done [#allocation5], 16
        $region140: #{estimator_forward.1} parent=83 // pred_fallthru
          _
        %687 = sfence
        %p688 = scmp.lt.s32.totalorder %s38, 1
        %s689 = scalar_select %p688, %s38, 1
        %s690 = smul.addr %s689, 2
        %s691 = smul.addr %s690, 8
        %s692 = scalar_lea.vmem %s0, %s691
        %p693 = pneg %p59
        %p694 = pneg %p56
        %p695 = pneg %p80
        %p696 = pneg %p77
        %p697 = pneg %p101
        %p698 = pneg %p98
        %p699 = pneg %p122
        %p700 = pneg %p119
        %p701 = pneg %p143
        %p702 = pneg %p140
        %p703 = pneg %p164
        %p704 = pneg %p161
        %p705 = pneg %p185
        %p706 = pneg %p182
        %p707 = pneg %p206
        %p708 = pneg %p203
        %p709 = pneg %p227
        %p710 = pneg %p224
        %p711 = pneg %p248
        %p712 = pneg %p245
        %p713 = pneg %p269
        %p714 = pneg %p266
        %p715 = pneg %p290
        %p716 = pneg %p287
        %p717 = pneg %p311
        %p718 = pneg %p308
        %p719 = pneg %p332
        %p720 = pneg %p329
        %p721 = pneg %p353
        %p722 = pneg %p350
        %p723 = pneg %p374
        %p724 = pneg %p371
        %p725 = pneg %p400
        %p726 = pneg %p397
        %s727 = sand.u32 %s387, 1
        %s728 = scalar_lea.sflag [#allocation4], %s727
        %s729 = sand.u32 %s387, 1
        %s730 = scalar_lea.vmem [#allocation25], %s729
        %p731 = scmp.lt.s32.totalorder %s38, 1
        %s732 = scalar_select %p731, %s38, 1
        %s733 = smul.addr %s732, 2
        %s734 = smul.addr %s733, 8
        %s735 = scalar_lea.vmem %s0, %s734
        %s737 = sld [smem:[#allocation24]]
        %s738 = sld [smem:[#allocation24 + $0x1]]
        %s739 = sld [smem:[#allocation24 + $0x2]]
        %s740 = sld [smem:[#allocation24 + $0x3]]
        %s741 = sld [smem:[#allocation24 + $0x4]]
        %v742 = vld [vmem:[%s735] sm:$0xff]
        %v743 = vld [vmem:[%s735 + $0x8] sm:$0xff]
        %v744 = vpack.c.bf16 %v742, %v742
        %v745 = vpack.c.bf16 %v743, %v743
        %v746 = vld [vmem:[#allocation2] sm:$0xff]
        %v747 = vld [vmem:[#allocation2 + $0x8] sm:$0xff]
        %v748 = vld [vmem:[#allocation2 + $0x10] sm:$0xff]
        %v749 = vld [vmem:[#allocation2 + $0x18] sm:$0xff]
        %v750 = vld [vmem:[#allocation2 + $0x20] sm:$0xff]
        %v751 = vld [vmem:[#allocation2 + $0x28] sm:$0xff]
        %v752 = vld [vmem:[#allocation2 + $0x30] sm:$0xff]
        %v753 = vld [vmem:[#allocation2 + $0x38] sm:$0xff]
        %v754 = vld [vmem:[#allocation2 + $0x40] sm:$0xff]
        %v755 = vld [vmem:[#allocation2 + $0x48] sm:$0xff]
        %v756 = vld [vmem:[#allocation2 + $0x50] sm:$0xff]
        %v757 = vld [vmem:[#allocation2 + $0x58] sm:$0xff]
        %s758 = scalar_lea.vmem [#allocation2], 96
        %v759 = vld [vmem:[%s758] sm:$0xff]
        %v760 = vld [vmem:[%s758 + $0x8] sm:$0xff]
        %v761 = vld [vmem:[%s758 + $0x10] sm:$0xff]
        %v762 = vld [vmem:[%s758 + $0x18] sm:$0xff]
        %v763 = vld [vmem:[%s758 + $0x20] sm:$0xff]
        %v764 = vld [vmem:[%s758 + $0x28] sm:$0xff]
        %v765 = vld [vmem:[%s758 + $0x30] sm:$0xff]
        %v766 = vld [vmem:[%s758 + $0x38] sm:$0xff]
        %v767 = vld [vmem:[%s758 + $0x40] sm:$0xff]
        %v768 = vld [vmem:[%s758 + $0x48] sm:$0xff]
        %v769 = vld [vmem:[%s758 + $0x50] sm:$0xff]
        %v770 = vld [vmem:[%s758 + $0x58] sm:$0xff]
        %v773 = vunpack.c.l.b16 %v744
        %v774 = vunpack.c.l.b16 %v745
        %v775 = vpack.c.b16 %v774, %v773
        %v777 = vshrl.u32 %v775, 16
        %v779 = vshll.u32 %v775, 16
        %v781 = vrot.slane %v779, 1
        %v782 = vor.u32 %v777, %v781
        %v795 = vunpack.c.l.b16 %v759
        %v796 = vunpack.c.h.b16 %v759
        %v797 = vunpack.c.l.b16 %v760
        %v798 = vunpack.c.h.b16 %v760
        %v799 = vunpack.c.l.b16 %v761
        %v800 = vunpack.c.h.b16 %v761
        %v801 = vunpack.c.l.b16 %v762
        %v802 = vunpack.c.h.b16 %v762
        %v803 = vunpack.c.l.b16 %v763
        %v804 = vunpack.c.h.b16 %v763
        %v805 = vunpack.c.l.b16 %v764
        %v806 = vunpack.c.h.b16 %v764
        %v807 = vunpack.c.l.b16 %v765
        %v808 = vunpack.c.h.b16 %v765
        %v809 = vunpack.c.l.b16 %v766
        %v810 = vunpack.c.h.b16 %v766
        %v811 = vunpack.c.l.b16 %v767
        %v812 = vunpack.c.h.b16 %v767
        %v813 = vunpack.c.l.b16 %v768
        %v814 = vunpack.c.h.b16 %v768
        %v815 = vunpack.c.l.b16 %v769
        %v816 = vunpack.c.h.b16 %v769
        %v817 = vunpack.c.l.b16 %v770
        %v818 = vunpack.c.h.b16 %v770
        %v819 = vpack.c.b16 %v797, %v795
        %v820 = vpack.c.b16 %v798, %v796
        %v821 = vpack.c.b16 %v801, %v799
        %v822 = vpack.c.b16 %v802, %v800
        %v823 = vpack.c.b16 %v805, %v803
        %v824 = vpack.c.b16 %v806, %v804
        %v825 = vpack.c.b16 %v809, %v807
        %v826 = vpack.c.b16 %v810, %v808
        %v827 = vpack.c.b16 %v813, %v811
        %v828 = vpack.c.b16 %v814, %v812
        %v829 = vpack.c.b16 %v817, %v815
        %v830 = vpack.c.b16 %v818, %v816
        %vm843 = vcmask 785408
        %v845 = vsel %vm843, %v782, 0
        %847 = vmatpush.bf16.msra.mxu0 0
        %848 = vmatpush.bf16.msra.mxu0 0
        %849 = vmatpush.bf16.msra.mxu0 %v829
        %850 = vmatpush.bf16.msra.mxu0 %v827
        %851 = vmatpush.bf16.msra.mxu0 %v825
        %852 = vmatpush.bf16.msra.mxu0 %v823
        %853 = vmatpush.bf16.msra.mxu0 %v821
        %854 = vmatpush.bf16.msra.mxu0 %v819
        %855 = vmatmul.bf16.gmra.mxu0 %v845
        %v856 = vpop.f32.mrf.mxu0
        %v857 = vadd.f32 0.0, %v856
        %v858 = vpop.f32.mrf.mxu0
        %v859 = vadd.f32 0.0, %v858
        %860 = vdwg.mxu0
        %861 = vmatpush.bf16.msra.mxu0 0
        %862 = vmatpush.bf16.msra.mxu0 0
        %863 = vmatpush.bf16.msra.mxu0 %v830
        %864 = vmatpush.bf16.msra.mxu0 %v828
        %865 = vmatpush.bf16.msra.mxu0 %v826
        %866 = vmatpush.bf16.msra.mxu0 %v824
        %867 = vmatpush.bf16.msra.mxu0 %v822
        %868 = vmatpush.bf16.msra.mxu0 %v820
        %869 = vmatmul.bf16.gmra.mxu0 %v845
        %v870 = vpop.f32.mrf.mxu0
        %v871 = vadd.f32 0.0, %v870
        %v872 = vpop.f32.mrf.mxu0
        %v873 = vadd.f32 0.0, %v872
        %874 = vdwg.mxu0
        %s875 = scalar_lea.vmem [#allocation2], 192
        %v876 = vld [vmem:[%s875] sm:$0xff]
        %v877 = vld [vmem:[%s875 + $0x8] sm:$0xff]
        %v878 = vld [vmem:[%s875 + $0x10] sm:$0xff]
        %v879 = vld [vmem:[%s875 + $0x18] sm:$0xff]
        %v880 = vld [vmem:[%s875 + $0x20] sm:$0xff]
        %v881 = vld [vmem:[%s875 + $0x28] sm:$0xff]
        %v882 = vld [vmem:[%s875 + $0x30] sm:$0xff]
        %v883 = vld [vmem:[%s875 + $0x38] sm:$0xff]
        %v884 = vld [vmem:[%s875 + $0x40] sm:$0xff]
        %v885 = vld [vmem:[%s875 + $0x48] sm:$0xff]
        %v886 = vld [vmem:[%s875 + $0x50] sm:$0xff]
        %v887 = vld [vmem:[%s875 + $0x58] sm:$0xff]
        %s888 = scalar_lea.vmem [#allocation2], 288
        %v889 = vld [vmem:[%s888] sm:$0xff]
        %v890 = vld [vmem:[%s888 + $0x8] sm:$0xff]
        %v891 = vld [vmem:[%s888 + $0x10] sm:$0xff]
        %v892 = vld [vmem:[%s888 + $0x18] sm:$0xff]
        %v893 = vld [vmem:[%s888 + $0x20] sm:$0xff]
        %v894 = vld [vmem:[%s888 + $0x28] sm:$0xff]
        %v895 = vld [vmem:[%s888 + $0x30] sm:$0xff]
        %v896 = vld [vmem:[%s888 + $0x38] sm:$0xff]
        %v897 = vld [vmem:[%s888 + $0x40] sm:$0xff]
        %v898 = vld [vmem:[%s888 + $0x48] sm:$0xff]
        %v899 = vld [vmem:[%s888 + $0x50] sm:$0xff]
        %v900 = vld [vmem:[%s888 + $0x58] sm:$0xff]
        %v901 = vrot.slane %v777, 1
        %v902 = vrot.slane %v779, 2
        %v903 = vor.u32 %v901, %v902
        %v916 = vunpack.c.l.b16 %v889
        %v917 = vunpack.c.h.b16 %v889
        %v918 = vunpack.c.l.b16 %v890
        %v919 = vunpack.c.h.b16 %v890
        %v920 = vunpack.c.l.b16 %v891
        %v921 = vunpack.c.h.b16 %v891
        %v922 = vunpack.c.l.b16 %v892
        %v923 = vunpack.c.h.b16 %v892
        %v924 = vunpack.c.l.b16 %v893
        %v925 = vunpack.c.h.b16 %v893
        %v926 = vunpack.c.l.b16 %v894
        %v927 = vunpack.c.h.b16 %v894
        %v928 = vunpack.c.l.b16 %v895
        %v929 = vunpack.c.h.b16 %v895
        %v930 = vunpack.c.l.b16 %v896
        %v931 = vunpack.c.h.b16 %v896
        %v932 = vunpack.c.l.b16 %v897
        %v933 = vunpack.c.h.b16 %v897
        %v934 = vunpack.c.l.b16 %v898
        %v935 = vunpack.c.h.b16 %v898
        %v936 = vunpack.c.l.b16 %v899
        %v937 = vunpack.c.h.b16 %v899
        %v938 = vunpack.c.l.b16 %v900
        %v939 = vunpack.c.h.b16 %v900
        %v940 = vpack.c.b16 %v918, %v916
        %v941 = vpack.c.b16 %v919, %v917
        %v942 = vpack.c.b16 %v922, %v920
        %v943 = vpack.c.b16 %v923, %v921
        %v944 = vpack.c.b16 %v926, %v924
        %v945 = vpack.c.b16 %v927, %v925
        %v946 = vpack.c.b16 %v930, %v928
        %v947 = vpack.c.b16 %v931, %v929
        %v948 = vpack.c.b16 %v934, %v932
        %v949 = vpack.c.b16 %v935, %v933
        %v950 = vpack.c.b16 %v938, %v936
        %v951 = vpack.c.b16 %v939, %v937
        %v965 = vsel %vm843, %v903, 0
        %967 = vmatpush.bf16.msra.mxu0 0
        %968 = vmatpush.bf16.msra.mxu0 0
        %969 = vmatpush.bf16.msra.mxu0 %v950
        %970 = vmatpush.bf16.msra.mxu0 %v948
        %971 = vmatpush.bf16.msra.mxu0 %v946
        %972 = vmatpush.bf16.msra.mxu0 %v944
        %973 = vmatpush.bf16.msra.mxu0 %v942
        %974 = vmatpush.bf16.msra.mxu0 %v940
        %975 = vmatmul.bf16.gmra.mxu0 %v965
        %v976 = vpop.f32.mrf.mxu0
        %v977 = vadd.f32 0.0, %v976
        %v978 = vpop.f32.mrf.mxu0
        %v979 = vadd.f32 0.0, %v978
        %980 = vdwg.mxu0
        %981 = vmatpush.bf16.msra.mxu0 0
        %982 = vmatpush.bf16.msra.mxu0 0
        %983 = vmatpush.bf16.msra.mxu0 %v951
        %984 = vmatpush.bf16.msra.mxu0 %v949
        %985 = vmatpush.bf16.msra.mxu0 %v947
        %986 = vmatpush.bf16.msra.mxu0 %v945
        %987 = vmatpush.bf16.msra.mxu0 %v943
        %988 = vmatpush.bf16.msra.mxu0 %v941
        %989 = vmatmul.bf16.gmra.mxu0 %v965
        %v990 = vpop.f32.mrf.mxu0
        %v991 = vadd.f32 0.0, %v990
        %v992 = vpop.f32.mrf.mxu0
        %v993 = vadd.f32 0.0, %v992
        %994 = vdwg.mxu0
        %s995 = scalar_lea.vmem [#allocation2], 384
        %v996 = vld [vmem:[%s995] sm:$0xff]
        %v997 = vld [vmem:[%s995 + $0x8] sm:$0xff]
        %v998 = vld [vmem:[%s995 + $0x10] sm:$0xff]
        %v999 = vld [vmem:[%s995 + $0x18] sm:$0xff]
        %v1000 = vld [vmem:[%s995 + $0x20] sm:$0xff]
        %v1001 = vld [vmem:[%s995 + $0x28] sm:$0xff]
        %v1002 = vld [vmem:[%s995 + $0x30] sm:$0xff]
        %v1003 = vld [vmem:[%s995 + $0x38] sm:$0xff]
        %v1004 = vld [vmem:[%s995 + $0x40] sm:$0xff]
        %v1005 = vld [vmem:[%s995 + $0x48] sm:$0xff]
        %v1006 = vld [vmem:[%s995 + $0x50] sm:$0xff]
        %v1007 = vld [vmem:[%s995 + $0x58] sm:$0xff]
        %v1008 = vrot.slane %v775, 2
        %v1021 = vunpack.c.l.b16 %v996
        %v1022 = vunpack.c.h.b16 %v996
        %v1023 = vunpack.c.l.b16 %v997
        %v1024 = vunpack.c.h.b16 %v997
        %v1025 = vunpack.c.l.b16 %v998
        %v1026 = vunpack.c.h.b16 %v998
        %v1027 = vunpack.c.l.b16 %v999
        %v1028 = vunpack.c.h.b16 %v999
        %v1029 = vunpack.c.l.b16 %v1000
        %v1030 = vunpack.c.h.b16 %v1000
        %v1031 = vunpack.c.l.b16 %v1001
        %v1032 = vunpack.c.h.b16 %v1001
        %v1033 = vunpack.c.l.b16 %v1002
        %v1034 = vunpack.c.h.b16 %v1002
        %v1035 = vunpack.c.l.b16 %v1003
        %v1036 = vunpack.c.h.b16 %v1003
        %v1037 = vunpack.c.l.b16 %v1004
        %v1038 = vunpack.c.h.b16 %v1004
        %v1039 = vunpack.c.l.b16 %v1005
        %v1040 = vunpack.c.h.b16 %v1005
        %v1041 = vunpack.c.l.b16 %v1006
        %v1042 = vunpack.c.h.b16 %v1006
        %v1043 = vunpack.c.l.b16 %v1007
        %v1044 = vunpack.c.h.b16 %v1007
        %v1045 = vpack.c.b16 %v1023, %v1021
        %v1046 = vpack.c.b16 %v1024, %v1022
        %v1047 = vpack.c.b16 %v1027, %v1025
        %v1048 = vpack.c.b16 %v1028, %v1026
        %v1049 = vpack.c.b16 %v1031, %v1029
        %v1050 = vpack.c.b16 %v1032, %v1030
        %v1051 = vpack.c.b16 %v1035, %v1033
        %v1052 = vpack.c.b16 %v1036, %v1034
        %v1053 = vpack.c.b16 %v1039, %v1037
        %v1054 = vpack.c.b16 %v1040, %v1038
        %v1055 = vpack.c.b16 %v1043, %v1041
        %v1056 = vpack.c.b16 %v1044, %v1042
        %v1070 = vsel %vm843, %v1008, 0
        %1072 = vmatpush.bf16.msra.mxu0 0
        %1073 = vmatpush.bf16.msra.mxu0 0
        %1074 = vmatpush.bf16.msra.mxu0 %v1055
        %1075 = vmatpush.bf16.msra.mxu0 %v1053
        %1076 = vmatpush.bf16.msra.mxu0 %v1051
        %1077 = vmatpush.bf16.msra.mxu0 %v1049
        %1078 = vmatpush.bf16.msra.mxu0 %v1047
        %1079 = vmatpush.bf16.msra.mxu0 %v1045
        %1080 = vmatmul.bf16.gmra.mxu0 %v1070
        %v1081 = vpop.f32.mrf.mxu0
        %v1082 = vadd.f32 0.0, %v1081
        %v1083 = vpop.f32.mrf.mxu0
        %v1084 = vadd.f32 0.0, %v1083
        %1085 = vdwg.mxu0
        %1086 = vmatpush.bf16.msra.mxu0 0
        %1087 = vmatpush.bf16.msra.mxu0 0
        %1088 = vmatpush.bf16.msra.mxu0 %v1056
        %1089 = vmatpush.bf16.msra.mxu0 %v1054
        %1090 = vmatpush.bf16.msra.mxu0 %v1052
        %1091 = vmatpush.bf16.msra.mxu0 %v1050
        %1092 = vmatpush.bf16.msra.mxu0 %v1048
        %1093 = vmatpush.bf16.msra.mxu0 %v1046
        %1094 = vmatmul.bf16.gmra.mxu0 %v1070
        %v1095 = vpop.f32.mrf.mxu0
        %v1096 = vadd.f32 0.0, %v1095
        %v1097 = vpop.f32.mrf.mxu0
        %v1098 = vadd.f32 0.0, %v1097
        %1099 = vdwg.mxu0
        %v1112 = vunpack.c.l.b16 %v746
        %v1113 = vunpack.c.h.b16 %v746
        %v1114 = vunpack.c.l.b16 %v747
        %v1115 = vunpack.c.h.b16 %v747
        %v1116 = vunpack.c.l.b16 %v748
        %v1117 = vunpack.c.h.b16 %v748
        %v1118 = vunpack.c.l.b16 %v749
        %v1119 = vunpack.c.h.b16 %v749
        %v1120 = vunpack.c.l.b16 %v750
        %v1121 = vunpack.c.h.b16 %v750
        %v1122 = vunpack.c.l.b16 %v751
        %v1123 = vunpack.c.h.b16 %v751
        %v1124 = vunpack.c.l.b16 %v752
        %v1125 = vunpack.c.h.b16 %v752
        %v1126 = vunpack.c.l.b16 %v753
        %v1127 = vunpack.c.h.b16 %v753
        %v1128 = vunpack.c.l.b16 %v754
        %v1129 = vunpack.c.h.b16 %v754
        %v1130 = vunpack.c.l.b16 %v755
        %v1131 = vunpack.c.h.b16 %v755
        %v1132 = vunpack.c.l.b16 %v756
        %v1133 = vunpack.c.h.b16 %v756
        %v1134 = vunpack.c.l.b16 %v757
        %v1135 = vunpack.c.h.b16 %v757
        %v1136 = vpack.c.b16 %v1114, %v1112
        %v1137 = vpack.c.b16 %v1115, %v1113
        %v1138 = vpack.c.b16 %v1118, %v1116
        %v1139 = vpack.c.b16 %v1119, %v1117
        %v1140 = vpack.c.b16 %v1122, %v1120
        %v1141 = vpack.c.b16 %v1123, %v1121
        %v1142 = vpack.c.b16 %v1126, %v1124
        %v1143 = vpack.c.b16 %v1127, %v1125
        %v1144 = vpack.c.b16 %v1130, %v1128
        %v1145 = vpack.c.b16 %v1131, %v1129
        %v1146 = vpack.c.b16 %v1134, %v1132
        %v1147 = vpack.c.b16 %v1135, %v1133
        %v1160 = vsel %vm843, %v775, 0
        %1162 = vmatpush.bf16.msra.mxu0 0
        %1163 = vmatpush.bf16.msra.mxu0 0
        %1164 = vmatpush.bf16.msra.mxu0 %v1146
        %1165 = vmatpush.bf16.msra.mxu0 %v1144
        %1166 = vmatpush.bf16.msra.mxu0 %v1142
        %1167 = vmatpush.bf16.msra.mxu0 %v1140
        %1168 = vmatpush.bf16.msra.mxu0 %v1138
        %1169 = vmatpush.bf16.msra.mxu0 %v1136
        %1170 = vmatmul.bf16.gmra.mxu0 %v1160
        %v1171 = vpop.f32.mrf.mxu0
        %v1172 = vadd.f32 %v857, %v1171
        %v1173 = vpop.f32.mrf.mxu0
        %v1174 = vadd.f32 %v859, %v1173
        %1175 = vdwg.mxu0
        %1176 = vmatpush.bf16.msra.mxu0 0
        %1177 = vmatpush.bf16.msra.mxu0 0
        %1178 = vmatpush.bf16.msra.mxu0 %v1147
        %1179 = vmatpush.bf16.msra.mxu0 %v1145
        %1180 = vmatpush.bf16.msra.mxu0 %v1143
        %1181 = vmatpush.bf16.msra.mxu0 %v1141
        %1182 = vmatpush.bf16.msra.mxu0 %v1139
        %1183 = vmatpush.bf16.msra.mxu0 %v1137
        %1184 = vmatmul.bf16.gmra.mxu0 %v1160
        %v1185 = vpop.f32.mrf.mxu0
        %v1186 = vadd.f32 %v871, %v1185
        %v1187 = vpop.f32.mrf.mxu0
        %v1188 = vadd.f32 %v873, %v1187
        %1189 = vdwg.mxu0
        %v1190 = vrot.slane %v775, 1
        %v1203 = vunpack.c.l.b16 %v876
        %v1204 = vunpack.c.h.b16 %v876
        %v1205 = vunpack.c.l.b16 %v877
        %v1206 = vunpack.c.h.b16 %v877
        %v1207 = vunpack.c.l.b16 %v878
        %v1208 = vunpack.c.h.b16 %v878
        %v1209 = vunpack.c.l.b16 %v879
        %v1210 = vunpack.c.h.b16 %v879
        %v1211 = vunpack.c.l.b16 %v880
        %v1212 = vunpack.c.h.b16 %v880
        %v1213 = vunpack.c.l.b16 %v881
        %v1214 = vunpack.c.h.b16 %v881
        %v1215 = vunpack.c.l.b16 %v882
        %v1216 = vunpack.c.h.b16 %v882
        %v1217 = vunpack.c.l.b16 %v883
        %v1218 = vunpack.c.h.b16 %v883
        %v1219 = vunpack.c.l.b16 %v884
        %v1220 = vunpack.c.h.b16 %v884
        %v1221 = vunpack.c.l.b16 %v885
        %v1222 = vunpack.c.h.b16 %v885
        %v1223 = vunpack.c.l.b16 %v886
        %v1224 = vunpack.c.h.b16 %v886
        %v1225 = vunpack.c.l.b16 %v887
        %v1226 = vunpack.c.h.b16 %v887
        %v1227 = vpack.c.b16 %v1205, %v1203
        %v1228 = vpack.c.b16 %v1206, %v1204
        %v1229 = vpack.c.b16 %v1209, %v1207
        %v1230 = vpack.c.b16 %v1210, %v1208
        %v1231 = vpack.c.b16 %v1213, %v1211
        %v1232 = vpack.c.b16 %v1214, %v1212
        %v1233 = vpack.c.b16 %v1217, %v1215
        %v1234 = vpack.c.b16 %v1218, %v1216
        %v1235 = vpack.c.b16 %v1221, %v1219
        %v1236 = vpack.c.b16 %v1222, %v1220
        %v1237 = vpack.c.b16 %v1225, %v1223
        %v1238 = vpack.c.b16 %v1226, %v1224
        %v1252 = vsel %vm843, %v1190, 0
        %1254 = vmatpush.bf16.msra.mxu0 0
        %1255 = vmatpush.bf16.msra.mxu0 0
        %1256 = vmatpush.bf16.msra.mxu0 %v1237
        %1257 = vmatpush.bf16.msra.mxu0 %v1235
        %1258 = vmatpush.bf16.msra.mxu0 %v1233
        %1259 = vmatpush.bf16.msra.mxu0 %v1231
        %1260 = vmatpush.bf16.msra.mxu0 %v1229
        %1261 = vmatpush.bf16.msra.mxu0 %v1227
        %1262 = vmatmul.bf16.gmra.mxu0 %v1252
        %v1263 = vpop.f32.mrf.mxu0
        %v1264 = vadd.f32 %v977, %v1263
        %v1265 = vpop.f32.mrf.mxu0
        %v1266 = vadd.f32 %v979, %v1265
        %1267 = vdwg.mxu0
        %1268 = vmatpush.bf16.msra.mxu0 0
        %1269 = vmatpush.bf16.msra.mxu0 0
        %1270 = vmatpush.bf16.msra.mxu0 %v1238
        %1271 = vmatpush.bf16.msra.mxu0 %v1236
        %1272 = vmatpush.bf16.msra.mxu0 %v1234
        %1273 = vmatpush.bf16.msra.mxu0 %v1232
        %1274 = vmatpush.bf16.msra.mxu0 %v1230
        %1275 = vmatpush.bf16.msra.mxu0 %v1228
        %1276 = vmatmul.bf16.gmra.mxu0 %v1252
        %v1277 = vpop.f32.mrf.mxu0
        %v1278 = vadd.f32 %v991, %v1277
        %v1279 = vpop.f32.mrf.mxu0
        %v1280 = vadd.f32 %v993, %v1279
        %1281 = vdwg.mxu0
        %v1282 = vadd.f32 %v1172, %v1264
        %v1283 = vadd.f32 %v1186, %v1278
        %v1284 = vadd.f32 %v1174, %v1266
        %v1285 = vadd.f32 %v1188, %v1280
        %v1286 = vadd.f32 %v1282, %v1082
        %v1287 = vadd.f32 %v1283, %v1096
        %v1288 = vadd.f32 %v1284, %v1084
        %v1289 = vadd.f32 %v1285, %v1098
        %v1290 = vld [vmem:[#allocation6] sm:$0x3]
        %v1292 = vperm.slane %v1290, 0
        %v1293 = vperm.slane %v1290, 1
        %v1296 = vadd.f32 %v1286, %v1292
        %v1297 = vadd.f32 %v1287, %v1293
        %v1298 = vadd.f32 %v1288, %v1292
        %v1299 = vadd.f32 %v1289, %v1293
        %vm1300 = vcmp.gt.f32.partialorder %v1296, 0.0
        %vm1301 = vcmp.gt.f32.partialorder %v1297, 0.0
        %vm1302 = vcmp.gt.f32.partialorder %v1298, 0.0
        %vm1303 = vcmp.gt.f32.partialorder %v1299, 0.0
        %v1304 = vstv %s737
        %v1305 = vmul.f32 %v1304, %v1296
        %v1306 = vmul.f32 %v1304, %v1297
        %v1307 = vmul.f32 %v1304, %v1298
        %v1308 = vmul.f32 %v1304, %v1299
        %v1309 = vsel %vm1300, %v1296, %v1305
        %v1310 = vsel %vm1301, %v1297, %v1306
        %v1311 = vsel %vm1302, %v1298, %v1307
        %v1312 = vsel %vm1303, %v1299, %v1308
        %v1313 = vpack.c.bf16 %v1311, %v1309
        %v1314 = vpack.c.bf16 %v1312, %v1310
        %v1315 = vld [vmem:[#allocation11] sm:$0xf]
        %v1316 = vld [vmem:[#allocation11 + $0x4] sm:$0x7]
        %v1319 = vunpack.c.l.b16 %v1315
        %v1320 = vunpack.c.l.b16 %v1316
        %v1321 = vpack.c.b16 %v1320, %v1319
        %vm1322 = vcmask 97280
        %v1324 = vsel %vm1322, %v1321, 0
        %vm1326 = vcmask 1045504
        %v1328 = vsel %vm1326, %v1313, 0
        %v1331 = vsel %vm1326, %v1314, 0
        %1333 = vmatpush.bf16.msra.mxu0 0
        %1334 = vmatpush.bf16.msra.mxu0 0
        %1335 = vmatpush.bf16.msra.mxu0 0
        %1336 = vmatpush.bf16.msra.mxu0 0
        %1337 = vmatpush.bf16.msra.mxu0 0
        %1338 = vmatpush.bf16.msra.mxu0 0
        %1339 = vmatpush.bf16.msra.mxu0 0
        %1340 = vmatpush.bf16.msra.mxu0 %v1328
        %1341 = vmatmul.bf16.gmra.mxu0 %v1324
        %v1342 = vpop.f32.mrf.mxu0
        %v1343 = vadd.f32 0.0, %v1342
        %v1344 = vpop.f32.mrf.mxu0
        %v1345 = vadd.f32 0.0, %v1344
        %1346 = vdwg.mxu0
        %1347 = vmatpush.bf16.msra.mxu0 0
        %1348 = vmatpush.bf16.msra.mxu0 0
        %1349 = vmatpush.bf16.msra.mxu0 0
        %1350 = vmatpush.bf16.msra.mxu0 0
        %1351 = vmatpush.bf16.msra.mxu0 0
        %1352 = vmatpush.bf16.msra.mxu0 0
        %1353 = vmatpush.bf16.msra.mxu0 0
        %1354 = vmatpush.bf16.msra.mxu0 %v1331
        %1355 = vmatmul.bf16.gmra.mxu0 %v1324
        %v1356 = vpop.f32.mrf.mxu0
        %v1357 = vadd.f32 0.0, %v1356
        %v1358 = vpop.f32.mrf.mxu0
        %v1359 = vadd.f32 0.0, %v1358
        %1360 = vdwg.mxu0
        %v1361 = vpack.c.bf16 %v1357, %v1343
        %v1362 = vpack.c.bf16 %v1359, %v1345
        %v1363 = vld [vmem:[#allocation8] sm:$0xff]
        %v1364 = vld [vmem:[#allocation8 + $0x8] sm:$0xf]
        %v1365 = vld [vmem:[#allocation8 + $0xc] sm:$0xff]
        %v1366 = vld [vmem:[#allocation8 + $0x14] sm:$0xf]
        %v1367 = vld [vmem:[#allocation8 + $0x18] sm:$0xff]
        %v1368 = vld [vmem:[#allocation8 + $0x20] sm:$0xf]
        %v1369 = vld [vmem:[#allocation8 + $0x24] sm:$0xff]
        %v1370 = vld [vmem:[#allocation8 + $0x2c] sm:$0xf]
        %v1371 = vld [vmem:[#allocation8 + $0x30] sm:$0xff]
        %v1372 = vld [vmem:[#allocation8 + $0x38] sm:$0xf]
        %v1373 = vld [vmem:[#allocation8 + $0x3c] sm:$0xff]
        %v1374 = vld [vmem:[#allocation8 + $0x44] sm:$0xf]
        %v1375 = vld [vmem:[#allocation8 + $0x48] sm:$0xff]
        %v1376 = vld [vmem:[#allocation8 + $0x50] sm:$0xf]
        %v1377 = vld [vmem:[#allocation8 + $0x54] sm:$0xff]
        %v1378 = vld [vmem:[#allocation8 + $0x5c] sm:$0xf]
        %v1379 = vld [vmem:[#allocation8 + $0x60] sm:$0xff]
        %v1380 = vld [vmem:[#allocation8 + $0x68] sm:$0xf]
        %v1381 = vld [vmem:[#allocation8 + $0x6c] sm:$0xff]
        %v1382 = vld [vmem:[#allocation8 + $0x74] sm:$0xf]
        %v1383 = vld [vmem:[#allocation8 + $0x78] sm:$0xff]
        %v1384 = vld [vmem:[#allocation8 + $0x80] sm:$0xf]
        %v1385 = vld [vmem:[#allocation8 + $0x84] sm:$0xff]
        %v1386 = vld [vmem:[#allocation8 + $0x8c] sm:$0xf]
        %v1387 = vld [vmem:[#allocation8 + $0x90] sm:$0xff]
        %v1388 = vld [vmem:[#allocation8 + $0x98] sm:$0xf]
        %v1389 = vld [vmem:[#allocation8 + $0x9c] sm:$0xff]
        %v1390 = vld [vmem:[#allocation8 + $0xa4] sm:$0xf]
        %v1391 = vld [vmem:[#allocation8 + $0xa8] sm:$0xff]
        %v1392 = vld [vmem:[#allocation8 + $0xb0] sm:$0xf]
        %v1393 = vld [vmem:[#allocation8 + $0xb4] sm:$0xff]
        %v1394 = vld [vmem:[#allocation8 + $0xbc] sm:$0xf]
        %v1395 = vld [vmem:[#allocation8 + $0xc0] sm:$0xff]
        %v1396 = vld [vmem:[#allocation8 + $0xc8] sm:$0xf]
        %v1397 = vld [vmem:[#allocation8 + $0xcc] sm:$0xff]
        %v1398 = vld [vmem:[#allocation8 + $0xd4] sm:$0xf]
        %v1399 = vld [vmem:[#allocation8 + $0xd8] sm:$0xff]
        %v1400 = vld [vmem:[#allocation8 + $0xe0] sm:$0xf]
        %v1401 = vld [vmem:[#allocation8 + $0xe4] sm:$0xff]
        %v1402 = vld [vmem:[#allocation8 + $0xec] sm:$0xf]
        %v1403 = vld [vmem:[#allocation8 + $0xf0] sm:$0xff]
        %v1404 = vld [vmem:[#allocation8 + $0xf8] sm:$0xf]
        %v1405 = vld [vmem:[#allocation8 + $0xfc] sm:$0xff]
        %v1406 = vld [vmem:[#allocation8 + $0x104] sm:$0xf]
        %v1407 = vld [vmem:[#allocation8 + $0x108] sm:$0xff]
        %v1408 = vld [vmem:[#allocation8 + $0x110] sm:$0xf]
        %v1409 = vld [vmem:[#allocation8 + $0x114] sm:$0xff]
        %v1410 = vld [vmem:[#allocation8 + $0x11c] sm:$0xf]
        %s1411 = scalar_lea.vmem [#allocation8], 288
        %v1412 = vld [vmem:[%s1411] sm:$0xff]
        %v1413 = vld [vmem:[%s1411 + $0x8] sm:$0xf]
        %v1414 = vld [vmem:[%s1411 + $0xc] sm:$0xff]
        %v1415 = vld [vmem:[%s1411 + $0x14] sm:$0xf]
        %v1416 = vld [vmem:[%s1411 + $0x18] sm:$0xff]
        %v1417 = vld [vmem:[%s1411 + $0x20] sm:$0xf]
        %v1418 = vld [vmem:[%s1411 + $0x24] sm:$0xff]
        %v1419 = vld [vmem:[%s1411 + $0x2c] sm:$0xf]
        %v1420 = vld [vmem:[%s1411 + $0x30] sm:$0xff]
        %v1421 = vld [vmem:[%s1411 + $0x38] sm:$0xf]
        %v1422 = vld [vmem:[%s1411 + $0x3c] sm:$0xff]
        %v1423 = vld [vmem:[%s1411 + $0x44] sm:$0xf]
        %v1424 = vld [vmem:[%s1411 + $0x48] sm:$0xff]
        %v1425 = vld [vmem:[%s1411 + $0x50] sm:$0xf]
        %v1426 = vld [vmem:[%s1411 + $0x54] sm:$0xff]
        %v1427 = vld [vmem:[%s1411 + $0x5c] sm:$0xf]
        %v1428 = vld [vmem:[%s1411 + $0x60] sm:$0xff]
        %v1429 = vld [vmem:[%s1411 + $0x68] sm:$0xf]
        %v1430 = vld [vmem:[%s1411 + $0x6c] sm:$0xff]
        %v1431 = vld [vmem:[%s1411 + $0x74] sm:$0xf]
        %v1432 = vld [vmem:[%s1411 + $0x78] sm:$0xff]
        %v1433 = vld [vmem:[%s1411 + $0x80] sm:$0xf]
        %v1434 = vld [vmem:[%s1411 + $0x84] sm:$0xff]
        %v1435 = vld [vmem:[%s1411 + $0x8c] sm:$0xf]
        %v1436 = vld [vmem:[%s1411 + $0x90] sm:$0xff]
        %v1437 = vld [vmem:[%s1411 + $0x98] sm:$0xf]
        %v1438 = vld [vmem:[%s1411 + $0x9c] sm:$0xff]
        %v1439 = vld [vmem:[%s1411 + $0xa4] sm:$0xf]
        %v1440 = vld [vmem:[%s1411 + $0xa8] sm:$0xff]
        %v1441 = vld [vmem:[%s1411 + $0xb0] sm:$0xf]
        %v1442 = vld [vmem:[%s1411 + $0xb4] sm:$0xff]
        %v1443 = vld [vmem:[%s1411 + $0xbc] sm:$0xf]
        %v1444 = vld [vmem:[%s1411 + $0xc0] sm:$0xff]
        %v1445 = vld [vmem:[%s1411 + $0xc8] sm:$0xf]
        %v1446 = vld [vmem:[%s1411 + $0xcc] sm:$0xff]
        %v1447 = vld [vmem:[%s1411 + $0xd4] sm:$0xf]
        %v1448 = vld [vmem:[%s1411 + $0xd8] sm:$0xff]
        %v1449 = vld [vmem:[%s1411 + $0xe0] sm:$0xf]
        %v1450 = vld [vmem:[%s1411 + $0xe4] sm:$0xff]
        %v1451 = vld [vmem:[%s1411 + $0xec] sm:$0xf]
        %v1452 = vld [vmem:[%s1411 + $0xf0] sm:$0xff]
        %v1453 = vld [vmem:[%s1411 + $0xf8] sm:$0xf]
        %v1454 = vld [vmem:[%s1411 + $0xfc] sm:$0xff]
        %v1455 = vld [vmem:[%s1411 + $0x104] sm:$0xf]
        %v1456 = vld [vmem:[%s1411 + $0x108] sm:$0xff]
        %v1457 = vld [vmem:[%s1411 + $0x110] sm:$0xf]
        %v1458 = vld [vmem:[%s1411 + $0x114] sm:$0xff]
        %v1459 = vld [vmem:[%s1411 + $0x11c] sm:$0xf]
        %v1462 = vunpack.c.l.b16 %v1361
        %v1463 = vunpack.c.h.b16 %v1361
        %v1464 = vunpack.c.l.b16 %v1362
        %v1465 = vunpack.c.h.b16 %v1362
        %v1466 = vpack.c.b16 %v1464, %v1462
        %v1467 = vpack.c.b16 %v1465, %v1463
        %v1469 = vshrl.u32 %v1466, 16
        %v1471 = vshll.u32 %v1466, 16
        %v1473 = vrot.slane %v1471, 1
        %v1474 = vor.u32 %v1469, %v1473
        %v1476 = vshrl.u32 %v1467, 16
        %v1478 = vshll.u32 %v1467, 16
        %v1480 = vrot.slane %v1478, 1
        %v1481 = vor.u32 %v1476, %v1480
        %v1531 = vunpack.c.l.b16 %v1412
        %v1532 = vunpack.c.h.b16 %v1412
        %v1533 = vunpack.c.l.b16 %v1413
        %v1534 = vunpack.c.l.b16 %v1414
        %v1535 = vunpack.c.h.b16 %v1414
        %v1536 = vunpack.c.l.b16 %v1415
        %v1537 = vunpack.c.l.b16 %v1416
        %v1538 = vunpack.c.h.b16 %v1416
        %v1539 = vunpack.c.l.b16 %v1417
        %v1540 = vunpack.c.l.b16 %v1418
        %v1541 = vunpack.c.h.b16 %v1418
        %v1542 = vunpack.c.l.b16 %v1419
        %v1543 = vunpack.c.l.b16 %v1420
        %v1544 = vunpack.c.h.b16 %v1420
        %v1545 = vunpack.c.l.b16 %v1421
        %v1546 = vunpack.c.l.b16 %v1422
        %v1547 = vunpack.c.h.b16 %v1422
        %v1548 = vunpack.c.l.b16 %v1423
        %v1549 = vunpack.c.l.b16 %v1424
        %v1550 = vunpack.c.h.b16 %v1424
        %v1551 = vunpack.c.l.b16 %v1425
        %v1552 = vunpack.c.l.b16 %v1426
        %v1553 = vunpack.c.h.b16 %v1426
        %v1554 = vunpack.c.l.b16 %v1427
        %v1555 = vunpack.c.l.b16 %v1428
        %v1556 = vunpack.c.h.b16 %v1428
        %v1557 = vunpack.c.l.b16 %v1429
        %v1558 = vunpack.c.l.b16 %v1430
        %v1559 = vunpack.c.h.b16 %v1430
        %v1560 = vunpack.c.l.b16 %v1431
        %v1561 = vunpack.c.l.b16 %v1432
        %v1562 = vunpack.c.h.b16 %v1432
        %v1563 = vunpack.c.l.b16 %v1433
        %v1564 = vunpack.c.l.b16 %v1434
        %v1565 = vunpack.c.h.b16 %v1434
        %v1566 = vunpack.c.l.b16 %v1435
        %v1567 = vunpack.c.l.b16 %v1436
        %v1568 = vunpack.c.h.b16 %v1436
        %v1569 = vunpack.c.l.b16 %v1437
        %v1570 = vunpack.c.l.b16 %v1438
        %v1571 = vunpack.c.h.b16 %v1438
        %v1572 = vunpack.c.l.b16 %v1439
        %v1573 = vunpack.c.l.b16 %v1440
        %v1574 = vunpack.c.h.b16 %v1440
        %v1575 = vunpack.c.l.b16 %v1441
        %v1576 = vunpack.c.l.b16 %v1442
        %v1577 = vunpack.c.h.b16 %v1442
        %v1578 = vunpack.c.l.b16 %v1443
        %v1579 = vunpack.c.l.b16 %v1444
        %v1580 = vunpack.c.h.b16 %v1444
        %v1581 = vunpack.c.l.b16 %v1445
        %v1582 = vunpack.c.l.b16 %v1446
        %v1583 = vunpack.c.h.b16 %v1446
        %v1584 = vunpack.c.l.b16 %v1447
        %v1585 = vunpack.c.l.b16 %v1448
        %v1586 = vunpack.c.h.b16 %v1448
        %v1587 = vunpack.c.l.b16 %v1449
        %v1588 = vunpack.c.l.b16 %v1450
        %v1589 = vunpack.c.h.b16 %v1450
        %v1590 = vunpack.c.l.b16 %v1451
        %v1591 = vunpack.c.l.b16 %v1452
        %v1592 = vunpack.c.h.b16 %v1452
        %v1593 = vunpack.c.l.b16 %v1453
        %v1594 = vunpack.c.l.b16 %v1454
        %v1595 = vunpack.c.h.b16 %v1454
        %v1596 = vunpack.c.l.b16 %v1455
        %v1597 = vunpack.c.l.b16 %v1456
        %v1598 = vunpack.c.h.b16 %v1456
        %v1599 = vunpack.c.l.b16 %v1457
        %v1600 = vunpack.c.l.b16 %v1458
        %v1601 = vunpack.c.h.b16 %v1458
        %v1602 = vunpack.c.l.b16 %v1459
        %v1603 = vpack.c.b16 %v1534, %v1531
        %v1604 = vpack.c.b16 %v1535, %v1532
        %v1605 = vpack.c.b16 %v1536, %v1533
        %v1606 = vpack.c.b16 %v1540, %v1537
        %v1607 = vpack.c.b16 %v1541, %v1538
        %v1608 = vpack.c.b16 %v1542, %v1539
        %v1609 = vpack.c.b16 %v1546, %v1543
        %v1610 = vpack.c.b16 %v1547, %v1544
        %v1611 = vpack.c.b16 %v1548, %v1545
        %v1612 = vpack.c.b16 %v1552, %v1549
        %v1613 = vpack.c.b16 %v1553, %v1550
        %v1614 = vpack.c.b16 %v1554, %v1551
        %v1615 = vpack.c.b16 %v1558, %v1555
        %v1616 = vpack.c.b16 %v1559, %v1556
        %v1617 = vpack.c.b16 %v1560, %v1557
        %v1618 = vpack.c.b16 %v1564, %v1561
        %v1619 = vpack.c.b16 %v1565, %v1562
        %v1620 = vpack.c.b16 %v1566, %v1563
        %v1621 = vpack.c.b16 %v1570, %v1567
        %v1622 = vpack.c.b16 %v1571, %v1568
        %v1623 = vpack.c.b16 %v1572, %v1569
        %v1624 = vpack.c.b16 %v1576, %v1573
        %v1625 = vpack.c.b16 %v1577, %v1574
        %v1626 = vpack.c.b16 %v1578, %v1575
        %v1627 = vpack.c.b16 %v1582, %v1579
        %v1628 = vpack.c.b16 %v1583, %v1580
        %v1629 = vpack.c.b16 %v1584, %v1581
        %v1630 = vpack.c.b16 %v1588, %v1585
        %v1631 = vpack.c.b16 %v1589, %v1586
        %v1632 = vpack.c.b16 %v1590, %v1587
        %v1633 = vpack.c.b16 %v1594, %v1591
        %v1634 = vpack.c.b16 %v1595, %v1592
        %v1635 = vpack.c.b16 %v1596, %v1593
        %v1636 = vpack.c.b16 %v1600, %v1597
        %v1637 = vpack.c.b16 %v1601, %v1598
        %v1638 = vpack.c.b16 %v1602, %v1599
        %vm1675 = vcmask 523264
        %v1677 = vsel %vm1675, %v1481, 0
        %1679 = vmatpush.bf16.msra.mxu0 %v1624
        %1680 = vmatpush.bf16.msra.mxu0 %v1621
        %1681 = vmatpush.bf16.msra.mxu0 %v1618
        %1682 = vmatpush.bf16.msra.mxu0 %v1615
        %1683 = vmatpush.bf16.msra.mxu0 %v1612
        %1684 = vmatpush.bf16.msra.mxu0 %v1609
        %1685 = vmatpush.bf16.msra.mxu0 %v1606
        %1686 = vmatpush.bf16.msra.mxu0 %v1603
        %1687 = vmatmul.bf16.gmra.mxu0 %v1474
        %v1688 = vpop.f32.mrf.mxu0
        %v1689 = vadd.f32 0.0, %v1688
        %v1690 = vpop.f32.mrf.mxu0
        %v1691 = vadd.f32 0.0, %v1690
        %1692 = vdwg.mxu0
        %1693 = vmatpush.bf16.msra.mxu0 0
        %1694 = vmatpush.bf16.msra.mxu0 0
        %1695 = vmatpush.bf16.msra.mxu0 0
        %1696 = vmatpush.bf16.msra.mxu0 0
        %1697 = vmatpush.bf16.msra.mxu0 %v1636
        %1698 = vmatpush.bf16.msra.mxu0 %v1633
        %1699 = vmatpush.bf16.msra.mxu0 %v1630
        %1700 = vmatpush.bf16.msra.mxu0 %v1627
        %1701 = vmatmul.bf16.gmra.mxu0 %v1677
        %v1702 = vpop.f32.mrf.mxu0
        %v1703 = vadd.f32 %v1689, %v1702
        %v1704 = vpop.f32.mrf.mxu0
        %v1705 = vadd.f32 %v1691, %v1704
        %1706 = vdwg.mxu0
        %1707 = vmatpush.bf16.msra.mxu0 %v1625
        %1708 = vmatpush.bf16.msra.mxu0 %v1622
        %1709 = vmatpush.bf16.msra.mxu0 %v1619
        %1710 = vmatpush.bf16.msra.mxu0 %v1616
        %1711 = vmatpush.bf16.msra.mxu0 %v1613
        %1712 = vmatpush.bf16.msra.mxu0 %v1610
        %1713 = vmatpush.bf16.msra.mxu0 %v1607
        %1714 = vmatpush.bf16.msra.mxu0 %v1604
        %1715 = vmatmul.bf16.gmra.mxu0 %v1474
        %v1716 = vpop.f32.mrf.mxu0
        %v1717 = vadd.f32 0.0, %v1716
        %v1718 = vpop.f32.mrf.mxu0
        %v1719 = vadd.f32 0.0, %v1718
        %1720 = vdwg.mxu0
        %1721 = vmatpush.bf16.msra.mxu0 0
        %1722 = vmatpush.bf16.msra.mxu0 0
        %1723 = vmatpush.bf16.msra.mxu0 0
        %1724 = vmatpush.bf16.msra.mxu0 0
        %1725 = vmatpush.bf16.msra.mxu0 %v1637
        %1726 = vmatpush.bf16.msra.mxu0 %v1634
        %1727 = vmatpush.bf16.msra.mxu0 %v1631
        %1728 = vmatpush.bf16.msra.mxu0 %v1628
        %1729 = vmatmul.bf16.gmra.mxu0 %v1677
        %v1730 = vpop.f32.mrf.mxu0
        %v1731 = vadd.f32 %v1717, %v1730
        %v1732 = vpop.f32.mrf.mxu0
        %v1733 = vadd.f32 %v1719, %v1732
        %1734 = vdwg.mxu0
        %1735 = vmatpush.bf16.msra.mxu0 %v1626
        %1736 = vmatpush.bf16.msra.mxu0 %v1623
        %1737 = vmatpush.bf16.msra.mxu0 %v1620
        %1738 = vmatpush.bf16.msra.mxu0 %v1617
        %1739 = vmatpush.bf16.msra.mxu0 %v1614
        %1740 = vmatpush.bf16.msra.mxu0 %v1611
        %1741 = vmatpush.bf16.msra.mxu0 %v1608
        %1742 = vmatpush.bf16.msra.mxu0 %v1605
        %1743 = vmatmul.bf16.gmra.mxu0 %v1474
        %v1744 = vpop.f32.mrf.mxu0
        %v1745 = vadd.f32 0.0, %v1744
        %v1746 = vpop.f32.mrf.mxu0
        %v1747 = vadd.f32 0.0, %v1746
        %1748 = vdwg.mxu0
        %1749 = vmatpush.bf16.msra.mxu0 0
        %1750 = vmatpush.bf16.msra.mxu0 0
        %1751 = vmatpush.bf16.msra.mxu0 0
        %1752 = vmatpush.bf16.msra.mxu0 0
        %1753 = vmatpush.bf16.msra.mxu0 %v1638
        %1754 = vmatpush.bf16.msra.mxu0 %v1635
        %1755 = vmatpush.bf16.msra.mxu0 %v1632
        %1756 = vmatpush.bf16.msra.mxu0 %v1629
        %1757 = vmatmul.bf16.gmra.mxu0 %v1677
        %v1758 = vpop.f32.mrf.mxu0
        %v1759 = vadd.f32 %v1745, %v1758
        %v1760 = vpop.f32.mrf.mxu0
        %v1761 = vadd.f32 %v1747, %v1760
        %1762 = vdwg.mxu0
        %s1763 = scalar_lea.vmem [#allocation8], 576
        %v1764 = vld [vmem:[%s1763] sm:$0xff]
        %v1765 = vld [vmem:[%s1763 + $0x8] sm:$0xf]
        %v1766 = vld [vmem:[%s1763 + $0xc] sm:$0xff]
        %v1767 = vld [vmem:[%s1763 + $0x14] sm:$0xf]
        %v1768 = vld [vmem:[%s1763 + $0x18] sm:$0xff]
        %v1769 = vld [vmem:[%s1763 + $0x20] sm:$0xf]
        %v1770 = vld [vmem:[%s1763 + $0x24] sm:$0xff]
        %v1771 = vld [vmem:[%s1763 + $0x2c] sm:$0xf]
        %v1772 = vld [vmem:[%s1763 + $0x30] sm:$0xff]
        %v1773 = vld [vmem:[%s1763 + $0x38] sm:$0xf]
        %v1774 = vld [vmem:[%s1763 + $0x3c] sm:$0xff]
        %v1775 = vld [vmem:[%s1763 + $0x44] sm:$0xf]
        %v1776 = vld [vmem:[%s1763 + $0x48] sm:$0xff]
        %v1777 = vld [vmem:[%s1763 + $0x50] sm:$0xf]
        %v1778 = vld [vmem:[%s1763 + $0x54] sm:$0xff]
        %v1779 = vld [vmem:[%s1763 + $0x5c] sm:$0xf]
        %v1780 = vld [vmem:[%s1763 + $0x60] sm:$0xff]
        %v1781 = vld [vmem:[%s1763 + $0x68] sm:$0xf]
        %v1782 = vld [vmem:[%s1763 + $0x6c] sm:$0xff]
        %v1783 = vld [vmem:[%s1763 + $0x74] sm:$0xf]
        %v1784 = vld [vmem:[%s1763 + $0x78] sm:$0xff]
        %v1785 = vld [vmem:[%s1763 + $0x80] sm:$0xf]
        %v1786 = vld [vmem:[%s1763 + $0x84] sm:$0xff]
        %v1787 = vld [vmem:[%s1763 + $0x8c] sm:$0xf]
        %v1788 = vld [vmem:[%s1763 + $0x90] sm:$0xff]
        %v1789 = vld [vmem:[%s1763 + $0x98] sm:$0xf]
        %v1790 = vld [vmem:[%s1763 + $0x9c] sm:$0xff]
        %v1791 = vld [vmem:[%s1763 + $0xa4] sm:$0xf]
        %v1792 = vld [vmem:[%s1763 + $0xa8] sm:$0xff]
        %v1793 = vld [vmem:[%s1763 + $0xb0] sm:$0xf]
        %v1794 = vld [vmem:[%s1763 + $0xb4] sm:$0xff]
        %v1795 = vld [vmem:[%s1763 + $0xbc] sm:$0xf]
        %v1796 = vld [vmem:[%s1763 + $0xc0] sm:$0xff]
        %v1797 = vld [vmem:[%s1763 + $0xc8] sm:$0xf]
        %v1798 = vld [vmem:[%s1763 + $0xcc] sm:$0xff]
        %v1799 = vld [vmem:[%s1763 + $0xd4] sm:$0xf]
        %v1800 = vld [vmem:[%s1763 + $0xd8] sm:$0xff]
        %v1801 = vld [vmem:[%s1763 + $0xe0] sm:$0xf]
        %v1802 = vld [vmem:[%s1763 + $0xe4] sm:$0xff]
        %v1803 = vld [vmem:[%s1763 + $0xec] sm:$0xf]
        %v1804 = vld [vmem:[%s1763 + $0xf0] sm:$0xff]
        %v1805 = vld [vmem:[%s1763 + $0xf8] sm:$0xf]
        %v1806 = vld [vmem:[%s1763 + $0xfc] sm:$0xff]
        %v1807 = vld [vmem:[%s1763 + $0x104] sm:$0xf]
        %v1808 = vld [vmem:[%s1763 + $0x108] sm:$0xff]
        %v1809 = vld [vmem:[%s1763 + $0x110] sm:$0xf]
        %v1810 = vld [vmem:[%s1763 + $0x114] sm:$0xff]
        %v1811 = vld [vmem:[%s1763 + $0x11c] sm:$0xf]
        %s1812 = scalar_lea.vmem [#allocation8], 864
        %v1813 = vld [vmem:[%s1812] sm:$0xff]
        %v1814 = vld [vmem:[%s1812 + $0x8] sm:$0xf]
        %v1815 = vld [vmem:[%s1812 + $0xc] sm:$0xff]
        %v1816 = vld [vmem:[%s1812 + $0x14] sm:$0xf]
        %v1817 = vld [vmem:[%s1812 + $0x18] sm:$0xff]
        %v1818 = vld [vmem:[%s1812 + $0x20] sm:$0xf]
        %v1819 = vld [vmem:[%s1812 + $0x24] sm:$0xff]
        %v1820 = vld [vmem:[%s1812 + $0x2c] sm:$0xf]
        %v1821 = vld [vmem:[%s1812 + $0x30] sm:$0xff]
        %v1822 = vld [vmem:[%s1812 + $0x38] sm:$0xf]
        %v1823 = vld [vmem:[%s1812 + $0x3c] sm:$0xff]
        %v1824 = vld [vmem:[%s1812 + $0x44] sm:$0xf]
        %v1825 = vld [vmem:[%s1812 + $0x48] sm:$0xff]
        %v1826 = vld [vmem:[%s1812 + $0x50] sm:$0xf]
        %v1827 = vld [vmem:[%s1812 + $0x54] sm:$0xff]
        %v1828 = vld [vmem:[%s1812 + $0x5c] sm:$0xf]
        %v1829 = vld [vmem:[%s1812 + $0x60] sm:$0xff]
        %v1830 = vld [vmem:[%s1812 + $0x68] sm:$0xf]
        %v1831 = vld [vmem:[%s1812 + $0x6c] sm:$0xff]
        %v1832 = vld [vmem:[%s1812 + $0x74] sm:$0xf]
        %v1833 = vld [vmem:[%s1812 + $0x78] sm:$0xff]
        %v1834 = vld [vmem:[%s1812 + $0x80] sm:$0xf]
        %v1835 = vld [vmem:[%s1812 + $0x84] sm:$0xff]
        %v1836 = vld [vmem:[%s1812 + $0x8c] sm:$0xf]
        %v1837 = vld [vmem:[%s1812 + $0x90] sm:$0xff]
        %v1838 = vld [vmem:[%s1812 + $0x98] sm:$0xf]
        %v1839 = vld [vmem:[%s1812 + $0x9c] sm:$0xff]
        %v1840 = vld [vmem:[%s1812 + $0xa4] sm:$0xf]
        %v1841 = vld [vmem:[%s1812 + $0xa8] sm:$0xff]
        %v1842 = vld [vmem:[%s1812 + $0xb0] sm:$0xf]
        %v1843 = vld [vmem:[%s1812 + $0xb4] sm:$0xff]
        %v1844 = vld [vmem:[%s1812 + $0xbc] sm:$0xf]
        %v1845 = vld [vmem:[%s1812 + $0xc0] sm:$0xff]
        %v1846 = vld [vmem:[%s1812 + $0xc8] sm:$0xf]
        %v1847 = vld [vmem:[%s1812 + $0xcc] sm:$0xff]
        %v1848 = vld [vmem:[%s1812 + $0xd4] sm:$0xf]
        %v1849 = vld [vmem:[%s1812 + $0xd8] sm:$0xff]
        %v1850 = vld [vmem:[%s1812 + $0xe0] sm:$0xf]
        %v1851 = vld [vmem:[%s1812 + $0xe4] sm:$0xff]
        %v1852 = vld [vmem:[%s1812 + $0xec] sm:$0xf]
        %v1853 = vld [vmem:[%s1812 + $0xf0] sm:$0xff]
        %v1854 = vld [vmem:[%s1812 + $0xf8] sm:$0xf]
        %v1855 = vld [vmem:[%s1812 + $0xfc] sm:$0xff]
        %v1856 = vld [vmem:[%s1812 + $0x104] sm:$0xf]
        %v1857 = vld [vmem:[%s1812 + $0x108] sm:$0xff]
        %v1858 = vld [vmem:[%s1812 + $0x110] sm:$0xf]
        %v1859 = vld [vmem:[%s1812 + $0x114] sm:$0xff]
        %v1860 = vld [vmem:[%s1812 + $0x11c] sm:$0xf]
        %v1861 = vrot.slane %v1469, 1
        %v1862 = vrot.slane %v1471, 2
        %v1863 = vor.u32 %v1861, %v1862
        %v1864 = vrot.slane %v1476, 1
        %v1865 = vrot.slane %v1478, 2
        %v1866 = vor.u32 %v1864, %v1865
        %v1916 = vunpack.c.l.b16 %v1813
        %v1917 = vunpack.c.h.b16 %v1813
        %v1918 = vunpack.c.l.b16 %v1814
        %v1919 = vunpack.c.l.b16 %v1815
        %v1920 = vunpack.c.h.b16 %v1815
        %v1921 = vunpack.c.l.b16 %v1816
        %v1922 = vunpack.c.l.b16 %v1817
        %v1923 = vunpack.c.h.b16 %v1817
        %v1924 = vunpack.c.l.b16 %v1818
        %v1925 = vunpack.c.l.b16 %v1819
        %v1926 = vunpack.c.h.b16 %v1819
        %v1927 = vunpack.c.l.b16 %v1820
        %v1928 = vunpack.c.l.b16 %v1821
        %v1929 = vunpack.c.h.b16 %v1821
        %v1930 = vunpack.c.l.b16 %v1822
        %v1931 = vunpack.c.l.b16 %v1823
        %v1932 = vunpack.c.h.b16 %v1823
        %v1933 = vunpack.c.l.b16 %v1824
        %v1934 = vunpack.c.l.b16 %v1825
        %v1935 = vunpack.c.h.b16 %v1825
        %v1936 = vunpack.c.l.b16 %v1826
        %v1937 = vunpack.c.l.b16 %v1827
        %v1938 = vunpack.c.h.b16 %v1827
        %v1939 = vunpack.c.l.b16 %v1828
        %v1940 = vunpack.c.l.b16 %v1829
        %v1941 = vunpack.c.h.b16 %v1829
        %v1942 = vunpack.c.l.b16 %v1830
        %v1943 = vunpack.c.l.b16 %v1831
        %v1944 = vunpack.c.h.b16 %v1831
        %v1945 = vunpack.c.l.b16 %v1832
        %v1946 = vunpack.c.l.b16 %v1833
        %v1947 = vunpack.c.h.b16 %v1833
        %v1948 = vunpack.c.l.b16 %v1834
        %v1949 = vunpack.c.l.b16 %v1835
        %v1950 = vunpack.c.h.b16 %v1835
        %v1951 = vunpack.c.l.b16 %v1836
        %v1952 = vunpack.c.l.b16 %v1837
        %v1953 = vunpack.c.h.b16 %v1837
        %v1954 = vunpack.c.l.b16 %v1838
        %v1955 = vunpack.c.l.b16 %v1839
        %v1956 = vunpack.c.h.b16 %v1839
        %v1957 = vunpack.c.l.b16 %v1840
        %v1958 = vunpack.c.l.b16 %v1841
        %v1959 = vunpack.c.h.b16 %v1841
        %v1960 = vunpack.c.l.b16 %v1842
        %v1961 = vunpack.c.l.b16 %v1843
        %v1962 = vunpack.c.h.b16 %v1843
        %v1963 = vunpack.c.l.b16 %v1844
        %v1964 = vunpack.c.l.b16 %v1845
        %v1965 = vunpack.c.h.b16 %v1845
        %v1966 = vunpack.c.l.b16 %v1846
        %v1967 = vunpack.c.l.b16 %v1847
        %v1968 = vunpack.c.h.b16 %v1847
        %v1969 = vunpack.c.l.b16 %v1848
        %v1970 = vunpack.c.l.b16 %v1849
        %v1971 = vunpack.c.h.b16 %v1849
        %v1972 = vunpack.c.l.b16 %v1850
        %v1973 = vunpack.c.l.b16 %v1851
        %v1974 = vunpack.c.h.b16 %v1851
        %v1975 = vunpack.c.l.b16 %v1852
        %v1976 = vunpack.c.l.b16 %v1853
        %v1977 = vunpack.c.h.b16 %v1853
        %v1978 = vunpack.c.l.b16 %v1854
        %v1979 = vunpack.c.l.b16 %v1855
        %v1980 = vunpack.c.h.b16 %v1855
        %v1981 = vunpack.c.l.b16 %v1856
        %v1982 = vunpack.c.l.b16 %v1857
        %v1983 = vunpack.c.h.b16 %v1857
        %v1984 = vunpack.c.l.b16 %v1858
        %v1985 = vunpack.c.l.b16 %v1859
        %v1986 = vunpack.c.h.b16 %v1859
        %v1987 = vunpack.c.l.b16 %v1860
        %v1988 = vpack.c.b16 %v1919, %v1916
        %v1989 = vpack.c.b16 %v1920, %v1917
        %v1990 = vpack.c.b16 %v1921, %v1918
        %v1991 = vpack.c.b16 %v1925, %v1922
        %v1992 = vpack.c.b16 %v1926, %v1923
        %v1993 = vpack.c.b16 %v1927, %v1924
        %v1994 = vpack.c.b16 %v1931, %v1928
        %v1995 = vpack.c.b16 %v1932, %v1929
        %v1996 = vpack.c.b16 %v1933, %v1930
        %v1997 = vpack.c.b16 %v1937, %v1934
        %v1998 = vpack.c.b16 %v1938, %v1935
        %v1999 = vpack.c.b16 %v1939, %v1936
        %v2000 = vpack.c.b16 %v1943, %v1940
        %v2001 = vpack.c.b16 %v1944, %v1941
        %v2002 = vpack.c.b16 %v1945, %v1942
        %v2003 = vpack.c.b16 %v1949, %v1946
        %v2004 = vpack.c.b16 %v1950, %v1947
        %v2005 = vpack.c.b16 %v1951, %v1948
        %v2006 = vpack.c.b16 %v1955, %v1952
        %v2007 = vpack.c.b16 %v1956, %v1953
        %v2008 = vpack.c.b16 %v1957, %v1954
        %v2009 = vpack.c.b16 %v1961, %v1958
        %v2010 = vpack.c.b16 %v1962, %v1959
        %v2011 = vpack.c.b16 %v1963, %v1960
        %v2012 = vpack.c.b16 %v1967, %v1964
        %v2013 = vpack.c.b16 %v1968, %v1965
        %v2014 = vpack.c.b16 %v1969, %v1966
        %v2015 = vpack.c.b16 %v1973, %v1970
        %v2016 = vpack.c.b16 %v1974, %v1971
        %v2017 = vpack.c.b16 %v1975, %v1972
        %v2018 = vpack.c.b16 %v1979, %v1976
        %v2019 = vpack.c.b16 %v1980, %v1977
        %v2020 = vpack.c.b16 %v1981, %v1978
        %v2021 = vpack.c.b16 %v1985, %v1982
        %v2022 = vpack.c.b16 %v1986, %v1983
        %v2023 = vpack.c.b16 %v1987, %v1984
        %v2061 = vsel %vm1675, %v1866, 0
        %2063 = vmatpush.bf16.msra.mxu0 %v2009
        %2064 = vmatpush.bf16.msra.mxu0 %v2006
        %2065 = vmatpush.bf16.msra.mxu0 %v2003
        %2066 = vmatpush.bf16.msra.mxu0 %v2000
        %2067 = vmatpush.bf16.msra.mxu0 %v1997
        %2068 = vmatpush.bf16.msra.mxu0 %v1994
        %2069 = vmatpush.bf16.msra.mxu0 %v1991
        %2070 = vmatpush.bf16.msra.mxu0 %v1988
        %2071 = vmatmul.bf16.gmra.mxu0 %v1863
        %v2072 = vpop.f32.mrf.mxu0
        %v2073 = vadd.f32 0.0, %v2072
        %v2074 = vpop.f32.mrf.mxu0
        %v2075 = vadd.f32 0.0, %v2074
        %2076 = vdwg.mxu0
        %2077 = vmatpush.bf16.msra.mxu0 0
        %2078 = vmatpush.bf16.msra.mxu0 0
        %2079 = vmatpush.bf16.msra.mxu0 0
        %2080 = vmatpush.bf16.msra.mxu0 0
        %2081 = vmatpush.bf16.msra.mxu0 %v2021
        %2082 = vmatpush.bf16.msra.mxu0 %v2018
        %2083 = vmatpush.bf16.msra.mxu0 %v2015
        %2084 = vmatpush.bf16.msra.mxu0 %v2012
        %2085 = vmatmul.bf16.gmra.mxu0 %v2061
        %v2086 = vpop.f32.mrf.mxu0
        %v2087 = vadd.f32 %v2073, %v2086
        %v2088 = vpop.f32.mrf.mxu0
        %v2089 = vadd.f32 %v2075, %v2088
        %2090 = vdwg.mxu0
        %2091 = vmatpush.bf16.msra.mxu0 %v2010
        %2092 = vmatpush.bf16.msra.mxu0 %v2007
        %2093 = vmatpush.bf16.msra.mxu0 %v2004
        %2094 = vmatpush.bf16.msra.mxu0 %v2001
        %2095 = vmatpush.bf16.msra.mxu0 %v1998
        %2096 = vmatpush.bf16.msra.mxu0 %v1995
        %2097 = vmatpush.bf16.msra.mxu0 %v1992
        %2098 = vmatpush.bf16.msra.mxu0 %v1989
        %2099 = vmatmul.bf16.gmra.mxu0 %v1863
        %v2100 = vpop.f32.mrf.mxu0
        %v2101 = vadd.f32 0.0, %v2100
        %v2102 = vpop.f32.mrf.mxu0
        %v2103 = vadd.f32 0.0, %v2102
        %2104 = vdwg.mxu0
        %2105 = vmatpush.bf16.msra.mxu0 0
        %2106 = vmatpush.bf16.msra.mxu0 0
        %2107 = vmatpush.bf16.msra.mxu0 0
        %2108 = vmatpush.bf16.msra.mxu0 0
        %2109 = vmatpush.bf16.msra.mxu0 %v2022
        %2110 = vmatpush.bf16.msra.mxu0 %v2019
        %2111 = vmatpush.bf16.msra.mxu0 %v2016
        %2112 = vmatpush.bf16.msra.mxu0 %v2013
        %2113 = vmatmul.bf16.gmra.mxu0 %v2061
        %v2114 = vpop.f32.mrf.mxu0
        %v2115 = vadd.f32 %v2101, %v2114
        %v2116 = vpop.f32.mrf.mxu0
        %v2117 = vadd.f32 %v2103, %v2116
        %2118 = vdwg.mxu0
        %2119 = vmatpush.bf16.msra.mxu0 %v2011
        %2120 = vmatpush.bf16.msra.mxu0 %v2008
        %2121 = vmatpush.bf16.msra.mxu0 %v2005
        %2122 = vmatpush.bf16.msra.mxu0 %v2002
        %2123 = vmatpush.bf16.msra.mxu0 %v1999
        %2124 = vmatpush.bf16.msra.mxu0 %v1996
        %2125 = vmatpush.bf16.msra.mxu0 %v1993
        %2126 = vmatpush.bf16.msra.mxu0 %v1990
        %2127 = vmatmul.bf16.gmra.mxu0 %v1863
        %v2128 = vpop.f32.mrf.mxu0
        %v2129 = vadd.f32 0.0, %v2128
        %v2130 = vpop.f32.mrf.mxu0
        %v2131 = vadd.f32 0.0, %v2130
        %2132 = vdwg.mxu0
        %2133 = vmatpush.bf16.msra.mxu0 0
        %2134 = vmatpush.bf16.msra.mxu0 0
        %2135 = vmatpush.bf16.msra.mxu0 0
        %2136 = vmatpush.bf16.msra.mxu0 0
        %2137 = vmatpush.bf16.msra.mxu0 %v2023
        %2138 = vmatpush.bf16.msra.mxu0 %v2020
        %2139 = vmatpush.bf16.msra.mxu0 %v2017
        %2140 = vmatpush.bf16.msra.mxu0 %v2014
        %2141 = vmatmul.bf16.gmra.mxu0 %v2061
        %v2142 = vpop.f32.mrf.mxu0
        %v2143 = vadd.f32 %v2129, %v2142
        %v2144 = vpop.f32.mrf.mxu0
        %v2145 = vadd.f32 %v2131, %v2144
        %2146 = vdwg.mxu0
        %s2147 = scalar_lea.vmem [#allocation8], 1152
        %v2148 = vld [vmem:[%s2147] sm:$0xff]
        %v2149 = vld [vmem:[%s2147 + $0x8] sm:$0xf]
        %v2150 = vld [vmem:[%s2147 + $0xc] sm:$0xff]
        %v2151 = vld [vmem:[%s2147 + $0x14] sm:$0xf]
        %v2152 = vld [vmem:[%s2147 + $0x18] sm:$0xff]
        %v2153 = vld [vmem:[%s2147 + $0x20] sm:$0xf]
        %v2154 = vld [vmem:[%s2147 + $0x24] sm:$0xff]
        %v2155 = vld [vmem:[%s2147 + $0x2c] sm:$0xf]
        %v2156 = vld [vmem:[%s2147 + $0x30] sm:$0xff]
        %v2157 = vld [vmem:[%s2147 + $0x38] sm:$0xf]
        %v2158 = vld [vmem:[%s2147 + $0x3c] sm:$0xff]
        %v2159 = vld [vmem:[%s2147 + $0x44] sm:$0xf]
        %v2160 = vld [vmem:[%s2147 + $0x48] sm:$0xff]
        %v2161 = vld [vmem:[%s2147 + $0x50] sm:$0xf]
        %v2162 = vld [vmem:[%s2147 + $0x54] sm:$0xff]
        %v2163 = vld [vmem:[%s2147 + $0x5c] sm:$0xf]
        %v2164 = vld [vmem:[%s2147 + $0x60] sm:$0xff]
        %v2165 = vld [vmem:[%s2147 + $0x68] sm:$0xf]
        %v2166 = vld [vmem:[%s2147 + $0x6c] sm:$0xff]
        %v2167 = vld [vmem:[%s2147 + $0x74] sm:$0xf]
        %v2168 = vld [vmem:[%s2147 + $0x78] sm:$0xff]
        %v2169 = vld [vmem:[%s2147 + $0x80] sm:$0xf]
        %v2170 = vld [vmem:[%s2147 + $0x84] sm:$0xff]
        %v2171 = vld [vmem:[%s2147 + $0x8c] sm:$0xf]
        %v2172 = vld [vmem:[%s2147 + $0x90] sm:$0xff]
        %v2173 = vld [vmem:[%s2147 + $0x98] sm:$0xf]
        %v2174 = vld [vmem:[%s2147 + $0x9c] sm:$0xff]
        %v2175 = vld [vmem:[%s2147 + $0xa4] sm:$0xf]
        %v2176 = vld [vmem:[%s2147 + $0xa8] sm:$0xff]
        %v2177 = vld [vmem:[%s2147 + $0xb0] sm:$0xf]
        %v2178 = vld [vmem:[%s2147 + $0xb4] sm:$0xff]
        %v2179 = vld [vmem:[%s2147 + $0xbc] sm:$0xf]
        %v2180 = vld [vmem:[%s2147 + $0xc0] sm:$0xff]
        %v2181 = vld [vmem:[%s2147 + $0xc8] sm:$0xf]
        %v2182 = vld [vmem:[%s2147 + $0xcc] sm:$0xff]
        %v2183 = vld [vmem:[%s2147 + $0xd4] sm:$0xf]
        %v2184 = vld [vmem:[%s2147 + $0xd8] sm:$0xff]
        %v2185 = vld [vmem:[%s2147 + $0xe0] sm:$0xf]
        %v2186 = vld [vmem:[%s2147 + $0xe4] sm:$0xff]
        %v2187 = vld [vmem:[%s2147 + $0xec] sm:$0xf]
        %v2188 = vld [vmem:[%s2147 + $0xf0] sm:$0xff]
        %v2189 = vld [vmem:[%s2147 + $0xf8] sm:$0xf]
        %v2190 = vld [vmem:[%s2147 + $0xfc] sm:$0xff]
        %v2191 = vld [vmem:[%s2147 + $0x104] sm:$0xf]
        %v2192 = vld [vmem:[%s2147 + $0x108] sm:$0xff]
        %v2193 = vld [vmem:[%s2147 + $0x110] sm:$0xf]
        %v2194 = vld [vmem:[%s2147 + $0x114] sm:$0xff]
        %v2195 = vld [vmem:[%s2147 + $0x11c] sm:$0xf]
        %v2196 = vrot.slane %v1466, 2
        %v2197 = vrot.slane %v1467, 2
        %v2247 = vunpack.c.l.b16 %v2148
        %v2248 = vunpack.c.h.b16 %v2148
        %v2249 = vunpack.c.l.b16 %v2149
        %v2250 = vunpack.c.l.b16 %v2150
        %v2251 = vunpack.c.h.b16 %v2150
        %v2252 = vunpack.c.l.b16 %v2151
        %v2253 = vunpack.c.l.b16 %v2152
        %v2254 = vunpack.c.h.b16 %v2152
        %v2255 = vunpack.c.l.b16 %v2153
        %v2256 = vunpack.c.l.b16 %v2154
        %v2257 = vunpack.c.h.b16 %v2154
        %v2258 = vunpack.c.l.b16 %v2155
        %v2259 = vunpack.c.l.b16 %v2156
        %v2260 = vunpack.c.h.b16 %v2156
        %v2261 = vunpack.c.l.b16 %v2157
        %v2262 = vunpack.c.l.b16 %v2158
        %v2263 = vunpack.c.h.b16 %v2158
        %v2264 = vunpack.c.l.b16 %v2159
        %v2265 = vunpack.c.l.b16 %v2160
        %v2266 = vunpack.c.h.b16 %v2160
        %v2267 = vunpack.c.l.b16 %v2161
        %v2268 = vunpack.c.l.b16 %v2162
        %v2269 = vunpack.c.h.b16 %v2162
        %v2270 = vunpack.c.l.b16 %v2163
        %v2271 = vunpack.c.l.b16 %v2164
        %v2272 = vunpack.c.h.b16 %v2164
        %v2273 = vunpack.c.l.b16 %v2165
        %v2274 = vunpack.c.l.b16 %v2166
        %v2275 = vunpack.c.h.b16 %v2166
        %v2276 = vunpack.c.l.b16 %v2167
        %v2277 = vunpack.c.l.b16 %v2168
        %v2278 = vunpack.c.h.b16 %v2168
        %v2279 = vunpack.c.l.b16 %v2169
        %v2280 = vunpack.c.l.b16 %v2170
        %v2281 = vunpack.c.h.b16 %v2170
        %v2282 = vunpack.c.l.b16 %v2171
        %v2283 = vunpack.c.l.b16 %v2172
        %v2284 = vunpack.c.h.b16 %v2172
        %v2285 = vunpack.c.l.b16 %v2173
        %v2286 = vunpack.c.l.b16 %v2174
        %v2287 = vunpack.c.h.b16 %v2174
        %v2288 = vunpack.c.l.b16 %v2175
        %v2289 = vunpack.c.l.b16 %v2176
        %v2290 = vunpack.c.h.b16 %v2176
        %v2291 = vunpack.c.l.b16 %v2177
        %v2292 = vunpack.c.l.b16 %v2178
        %v2293 = vunpack.c.h.b16 %v2178
        %v2294 = vunpack.c.l.b16 %v2179
        %v2295 = vunpack.c.l.b16 %v2180
        %v2296 = vunpack.c.h.b16 %v2180
        %v2297 = vunpack.c.l.b16 %v2181
        %v2298 = vunpack.c.l.b16 %v2182
        %v2299 = vunpack.c.h.b16 %v2182
        %v2300 = vunpack.c.l.b16 %v2183
        %v2301 = vunpack.c.l.b16 %v2184
        %v2302 = vunpack.c.h.b16 %v2184
        %v2303 = vunpack.c.l.b16 %v2185
        %v2304 = vunpack.c.l.b16 %v2186
        %v2305 = vunpack.c.h.b16 %v2186
        %v2306 = vunpack.c.l.b16 %v2187
        %v2307 = vunpack.c.l.b16 %v2188
        %v2308 = vunpack.c.h.b16 %v2188
        %v2309 = vunpack.c.l.b16 %v2189
        %v2310 = vunpack.c.l.b16 %v2190
        %v2311 = vunpack.c.h.b16 %v2190
        %v2312 = vunpack.c.l.b16 %v2191
        %v2313 = vunpack.c.l.b16 %v2192
        %v2314 = vunpack.c.h.b16 %v2192
        %v2315 = vunpack.c.l.b16 %v2193
        %v2316 = vunpack.c.l.b16 %v2194
        %v2317 = vunpack.c.h.b16 %v2194
        %v2318 = vunpack.c.l.b16 %v2195
        %v2319 = vpack.c.b16 %v2250, %v2247
        %v2320 = vpack.c.b16 %v2251, %v2248
        %v2321 = vpack.c.b16 %v2252, %v2249
        %v2322 = vpack.c.b16 %v2256, %v2253
        %v2323 = vpack.c.b16 %v2257, %v2254
        %v2324 = vpack.c.b16 %v2258, %v2255
        %v2325 = vpack.c.b16 %v2262, %v2259
        %v2326 = vpack.c.b16 %v2263, %v2260
        %v2327 = vpack.c.b16 %v2264, %v2261
        %v2328 = vpack.c.b16 %v2268, %v2265
        %v2329 = vpack.c.b16 %v2269, %v2266
        %v2330 = vpack.c.b16 %v2270, %v2267
        %v2331 = vpack.c.b16 %v2274, %v2271
        %v2332 = vpack.c.b16 %v2275, %v2272
        %v2333 = vpack.c.b16 %v2276, %v2273
        %v2334 = vpack.c.b16 %v2280, %v2277
        %v2335 = vpack.c.b16 %v2281, %v2278
        %v2336 = vpack.c.b16 %v2282, %v2279
        %v2337 = vpack.c.b16 %v2286, %v2283
        %v2338 = vpack.c.b16 %v2287, %v2284
        %v2339 = vpack.c.b16 %v2288, %v2285
        %v2340 = vpack.c.b16 %v2292, %v2289
        %v2341 = vpack.c.b16 %v2293, %v2290
        %v2342 = vpack.c.b16 %v2294, %v2291
        %v2343 = vpack.c.b16 %v2298, %v2295
        %v2344 = vpack.c.b16 %v2299, %v2296
        %v2345 = vpack.c.b16 %v2300, %v2297
        %v2346 = vpack.c.b16 %v2304, %v2301
        %v2347 = vpack.c.b16 %v2305, %v2302
        %v2348 = vpack.c.b16 %v2306, %v2303
        %v2349 = vpack.c.b16 %v2310, %v2307
        %v2350 = vpack.c.b16 %v2311, %v2308
        %v2351 = vpack.c.b16 %v2312, %v2309
        %v2352 = vpack.c.b16 %v2316, %v2313
        %v2353 = vpack.c.b16 %v2317, %v2314
        %v2354 = vpack.c.b16 %v2318, %v2315
        %v2392 = vsel %vm1675, %v2197, 0
        %2394 = vmatpush.bf16.msra.mxu0 %v2340
        %2395 = vmatpush.bf16.msra.mxu0 %v2337
        %2396 = vmatpush.bf16.msra.mxu0 %v2334
        %2397 = vmatpush.bf16.msra.mxu0 %v2331
        %2398 = vmatpush.bf16.msra.mxu0 %v2328
        %2399 = vmatpush.bf16.msra.mxu0 %v2325
        %2400 = vmatpush.bf16.msra.mxu0 %v2322
        %2401 = vmatpush.bf16.msra.mxu0 %v2319
        %2402 = vmatmul.bf16.gmra.mxu0 %v2196
        %v2403 = vpop.f32.mrf.mxu0
        %v2404 = vadd.f32 0.0, %v2403
        %v2405 = vpop.f32.mrf.mxu0
        %v2406 = vadd.f32 0.0, %v2405
        %2407 = vdwg.mxu0
        %2408 = vmatpush.bf16.msra.mxu0 0
        %2409 = vmatpush.bf16.msra.mxu0 0
        %2410 = vmatpush.bf16.msra.mxu0 0
        %2411 = vmatpush.bf16.msra.mxu0 0
        %2412 = vmatpush.bf16.msra.mxu0 %v2352
        %2413 = vmatpush.bf16.msra.mxu0 %v2349
        %2414 = vmatpush.bf16.msra.mxu0 %v2346
        %2415 = vmatpush.bf16.msra.mxu0 %v2343
        %2416 = vmatmul.bf16.gmra.mxu0 %v2392
        %v2417 = vpop.f32.mrf.mxu0
        %v2418 = vadd.f32 %v2404, %v2417
        %v2419 = vpop.f32.mrf.mxu0
        %v2420 = vadd.f32 %v2406, %v2419
        %2421 = vdwg.mxu0
        %2422 = vmatpush.bf16.msra.mxu0 %v2341
        %2423 = vmatpush.bf16.msra.mxu0 %v2338
        %2424 = vmatpush.bf16.msra.mxu0 %v2335
        %2425 = vmatpush.bf16.msra.mxu0 %v2332
        %2426 = vmatpush.bf16.msra.mxu0 %v2329
        %2427 = vmatpush.bf16.msra.mxu0 %v2326
        %2428 = vmatpush.bf16.msra.mxu0 %v2323
        %2429 = vmatpush.bf16.msra.mxu0 %v2320
        %2430 = vmatmul.bf16.gmra.mxu0 %v2196
        %v2431 = vpop.f32.mrf.mxu0
        %v2432 = vadd.f32 0.0, %v2431
        %v2433 = vpop.f32.mrf.mxu0
        %v2434 = vadd.f32 0.0, %v2433
        %2435 = vdwg.mxu0
        %2436 = vmatpush.bf16.msra.mxu0 0
        %2437 = vmatpush.bf16.msra.mxu0 0
        %2438 = vmatpush.bf16.msra.mxu0 0
        %2439 = vmatpush.bf16.msra.mxu0 0
        %2440 = vmatpush.bf16.msra.mxu0 %v2353
        %2441 = vmatpush.bf16.msra.mxu0 %v2350
        %2442 = vmatpush.bf16.msra.mxu0 %v2347
        %2443 = vmatpush.bf16.msra.mxu0 %v2344
        %2444 = vmatmul.bf16.gmra.mxu0 %v2392
        %v2445 = vpop.f32.mrf.mxu0
        %v2446 = vadd.f32 %v2432, %v2445
        %v2447 = vpop.f32.mrf.mxu0
        %v2448 = vadd.f32 %v2434, %v2447
        %2449 = vdwg.mxu0
        %2450 = vmatpush.bf16.msra.mxu0 %v2342
        %2451 = vmatpush.bf16.msra.mxu0 %v2339
        %2452 = vmatpush.bf16.msra.mxu0 %v2336
        %2453 = vmatpush.bf16.msra.mxu0 %v2333
        %2454 = vmatpush.bf16.msra.mxu0 %v2330
        %2455 = vmatpush.bf16.msra.mxu0 %v2327
        %2456 = vmatpush.bf16.msra.mxu0 %v2324
        %2457 = vmatpush.bf16.msra.mxu0 %v2321
        %2458 = vmatmul.bf16.gmra.mxu0 %v2196
        %v2459 = vpop.f32.mrf.mxu0
        %v2460 = vadd.f32 0.0, %v2459
        %v2461 = vpop.f32.mrf.mxu0
        %v2462 = vadd.f32 0.0, %v2461
        %2463 = vdwg.mxu0
        %2464 = vmatpush.bf16.msra.mxu0 0
        %2465 = vmatpush.bf16.msra.mxu0 0
        %2466 = vmatpush.bf16.msra.mxu0 0
        %2467 = vmatpush.bf16.msra.mxu0 0
        %2468 = vmatpush.bf16.msra.mxu0 %v2354
        %2469 = vmatpush.bf16.msra.mxu0 %v2351
        %2470 = vmatpush.bf16.msra.mxu0 %v2348
        %2471 = vmatpush.bf16.msra.mxu0 %v2345
        %2472 = vmatmul.bf16.gmra.mxu0 %v2392
        %v2473 = vpop.f32.mrf.mxu0
        %v2474 = vadd.f32 %v2460, %v2473
        %v2475 = vpop.f32.mrf.mxu0
        %v2476 = vadd.f32 %v2462, %v2475
        %2477 = vdwg.mxu0
        %v2527 = vunpack.c.l.b16 %v1363
        %v2528 = vunpack.c.h.b16 %v1363
        %v2529 = vunpack.c.l.b16 %v1364
        %v2530 = vunpack.c.l.b16 %v1365
        %v2531 = vunpack.c.h.b16 %v1365
        %v2532 = vunpack.c.l.b16 %v1366
        %v2533 = vunpack.c.l.b16 %v1367
        %v2534 = vunpack.c.h.b16 %v1367
        %v2535 = vunpack.c.l.b16 %v1368
        %v2536 = vunpack.c.l.b16 %v1369
        %v2537 = vunpack.c.h.b16 %v1369
        %v2538 = vunpack.c.l.b16 %v1370
        %v2539 = vunpack.c.l.b16 %v1371
        %v2540 = vunpack.c.h.b16 %v1371
        %v2541 = vunpack.c.l.b16 %v1372
        %v2542 = vunpack.c.l.b16 %v1373
        %v2543 = vunpack.c.h.b16 %v1373
        %v2544 = vunpack.c.l.b16 %v1374
        %v2545 = vunpack.c.l.b16 %v1375
        %v2546 = vunpack.c.h.b16 %v1375
        %v2547 = vunpack.c.l.b16 %v1376
        %v2548 = vunpack.c.l.b16 %v1377
        %v2549 = vunpack.c.h.b16 %v1377
        %v2550 = vunpack.c.l.b16 %v1378
        %v2551 = vunpack.c.l.b16 %v1379
        %v2552 = vunpack.c.h.b16 %v1379
        %v2553 = vunpack.c.l.b16 %v1380
        %v2554 = vunpack.c.l.b16 %v1381
        %v2555 = vunpack.c.h.b16 %v1381
        %v2556 = vunpack.c.l.b16 %v1382
        %v2557 = vunpack.c.l.b16 %v1383
        %v2558 = vunpack.c.h.b16 %v1383
        %v2559 = vunpack.c.l.b16 %v1384
        %v2560 = vunpack.c.l.b16 %v1385
        %v2561 = vunpack.c.h.b16 %v1385
        %v2562 = vunpack.c.l.b16 %v1386
        %v2563 = vunpack.c.l.b16 %v1387
        %v2564 = vunpack.c.h.b16 %v1387
        %v2565 = vunpack.c.l.b16 %v1388
        %v2566 = vunpack.c.l.b16 %v1389
        %v2567 = vunpack.c.h.b16 %v1389
        %v2568 = vunpack.c.l.b16 %v1390
        %v2569 = vunpack.c.l.b16 %v1391
        %v2570 = vunpack.c.h.b16 %v1391
        %v2571 = vunpack.c.l.b16 %v1392
        %v2572 = vunpack.c.l.b16 %v1393
        %v2573 = vunpack.c.h.b16 %v1393
        %v2574 = vunpack.c.l.b16 %v1394
        %v2575 = vunpack.c.l.b16 %v1395
        %v2576 = vunpack.c.h.b16 %v1395
        %v2577 = vunpack.c.l.b16 %v1396
        %v2578 = vunpack.c.l.b16 %v1397
        %v2579 = vunpack.c.h.b16 %v1397
        %v2580 = vunpack.c.l.b16 %v1398
        %v2581 = vunpack.c.l.b16 %v1399
        %v2582 = vunpack.c.h.b16 %v1399
        %v2583 = vunpack.c.l.b16 %v1400
        %v2584 = vunpack.c.l.b16 %v1401
        %v2585 = vunpack.c.h.b16 %v1401
        %v2586 = vunpack.c.l.b16 %v1402
        %v2587 = vunpack.c.l.b16 %v1403
        %v2588 = vunpack.c.h.b16 %v1403
        %v2589 = vunpack.c.l.b16 %v1404
        %v2590 = vunpack.c.l.b16 %v1405
        %v2591 = vunpack.c.h.b16 %v1405
        %v2592 = vunpack.c.l.b16 %v1406
        %v2593 = vunpack.c.l.b16 %v1407
        %v2594 = vunpack.c.h.b16 %v1407
        %v2595 = vunpack.c.l.b16 %v1408
        %v2596 = vunpack.c.l.b16 %v1409
        %v2597 = vunpack.c.h.b16 %v1409
        %v2598 = vunpack.c.l.b16 %v1410
        %v2599 = vpack.c.b16 %v2530, %v2527
        %v2600 = vpack.c.b16 %v2531, %v2528
        %v2601 = vpack.c.b16 %v2532, %v2529
        %v2602 = vpack.c.b16 %v2536, %v2533
        %v2603 = vpack.c.b16 %v2537, %v2534
        %v2604 = vpack.c.b16 %v2538, %v2535
        %v2605 = vpack.c.b16 %v2542, %v2539
        %v2606 = vpack.c.b16 %v2543, %v2540
        %v2607 = vpack.c.b16 %v2544, %v2541
        %v2608 = vpack.c.b16 %v2548, %v2545
        %v2609 = vpack.c.b16 %v2549, %v2546
        %v2610 = vpack.c.b16 %v2550, %v2547
        %v2611 = vpack.c.b16 %v2554, %v2551
        %v2612 = vpack.c.b16 %v2555, %v2552
        %v2613 = vpack.c.b16 %v2556, %v2553
        %v2614 = vpack.c.b16 %v2560, %v2557
        %v2615 = vpack.c.b16 %v2561, %v2558
        %v2616 = vpack.c.b16 %v2562, %v2559
        %v2617 = vpack.c.b16 %v2566, %v2563
        %v2618 = vpack.c.b16 %v2567, %v2564
        %v2619 = vpack.c.b16 %v2568, %v2565
        %v2620 = vpack.c.b16 %v2572, %v2569
        %v2621 = vpack.c.b16 %v2573, %v2570
        %v2622 = vpack.c.b16 %v2574, %v2571
        %v2623 = vpack.c.b16 %v2578, %v2575
        %v2624 = vpack.c.b16 %v2579, %v2576
        %v2625 = vpack.c.b16 %v2580, %v2577
        %v2626 = vpack.c.b16 %v2584, %v2581
        %v2627 = vpack.c.b16 %v2585, %v2582
        %v2628 = vpack.c.b16 %v2586, %v2583
        %v2629 = vpack.c.b16 %v2590, %v2587
        %v2630 = vpack.c.b16 %v2591, %v2588
        %v2631 = vpack.c.b16 %v2592, %v2589
        %v2632 = vpack.c.b16 %v2596, %v2593
        %v2633 = vpack.c.b16 %v2597, %v2594
        %v2634 = vpack.c.b16 %v2598, %v2595
        %v2671 = vsel %vm1675, %v1467, 0
        %2673 = vmatpush.bf16.msra.mxu0 %v2620
        %2674 = vmatpush.bf16.msra.mxu0 %v2617
        %2675 = vmatpush.bf16.msra.mxu0 %v2614
        %2676 = vmatpush.bf16.msra.mxu0 %v2611
        %2677 = vmatpush.bf16.msra.mxu0 %v2608
        %2678 = vmatpush.bf16.msra.mxu0 %v2605
        %2679 = vmatpush.bf16.msra.mxu0 %v2602
        %2680 = vmatpush.bf16.msra.mxu0 %v2599
        %2681 = vmatmul.bf16.gmra.mxu0 %v1466
        %v2682 = vpop.f32.mrf.mxu0
        %v2683 = vadd.f32 %v1703, %v2682
        %v2684 = vpop.f32.mrf.mxu0
        %v2685 = vadd.f32 %v1705, %v2684
        %2686 = vdwg.mxu0
        %2687 = vmatpush.bf16.msra.mxu0 0
        %2688 = vmatpush.bf16.msra.mxu0 0
        %2689 = vmatpush.bf16.msra.mxu0 0
        %2690 = vmatpush.bf16.msra.mxu0 0
        %2691 = vmatpush.bf16.msra.mxu0 %v2632
        %2692 = vmatpush.bf16.msra.mxu0 %v2629
        %2693 = vmatpush.bf16.msra.mxu0 %v2626
        %2694 = vmatpush.bf16.msra.mxu0 %v2623
        %2695 = vmatmul.bf16.gmra.mxu0 %v2671
        %v2696 = vpop.f32.mrf.mxu0
        %v2697 = vadd.f32 %v2683, %v2696
        %v2698 = vpop.f32.mrf.mxu0
        %v2699 = vadd.f32 %v2685, %v2698
        %2700 = vdwg.mxu0
        %2701 = vmatpush.bf16.msra.mxu0 %v2621
        %2702 = vmatpush.bf16.msra.mxu0 %v2618
        %2703 = vmatpush.bf16.msra.mxu0 %v2615
        %2704 = vmatpush.bf16.msra.mxu0 %v2612
        %2705 = vmatpush.bf16.msra.mxu0 %v2609
        %2706 = vmatpush.bf16.msra.mxu0 %v2606
        %2707 = vmatpush.bf16.msra.mxu0 %v2603
        %2708 = vmatpush.bf16.msra.mxu0 %v2600
        %2709 = vmatmul.bf16.gmra.mxu0 %v1466
        %v2710 = vpop.f32.mrf.mxu0
        %v2711 = vadd.f32 %v1731, %v2710
        %v2712 = vpop.f32.mrf.mxu0
        %v2713 = vadd.f32 %v1733, %v2712
        %2714 = vdwg.mxu0
        %2715 = vmatpush.bf16.msra.mxu0 0
        %2716 = vmatpush.bf16.msra.mxu0 0
        %2717 = vmatpush.bf16.msra.mxu0 0
        %2718 = vmatpush.bf16.msra.mxu0 0
        %2719 = vmatpush.bf16.msra.mxu0 %v2633
        %2720 = vmatpush.bf16.msra.mxu0 %v2630
        %2721 = vmatpush.bf16.msra.mxu0 %v2627
        %2722 = vmatpush.bf16.msra.mxu0 %v2624
        %2723 = vmatmul.bf16.gmra.mxu0 %v2671
        %v2724 = vpop.f32.mrf.mxu0
        %v2725 = vadd.f32 %v2711, %v2724
        %v2726 = vpop.f32.mrf.mxu0
        %v2727 = vadd.f32 %v2713, %v2726
        %2728 = vdwg.mxu0
        %2729 = vmatpush.bf16.msra.mxu0 %v2622
        %2730 = vmatpush.bf16.msra.mxu0 %v2619
        %2731 = vmatpush.bf16.msra.mxu0 %v2616
        %2732 = vmatpush.bf16.msra.mxu0 %v2613
        %2733 = vmatpush.bf16.msra.mxu0 %v2610
        %2734 = vmatpush.bf16.msra.mxu0 %v2607
        %2735 = vmatpush.bf16.msra.mxu0 %v2604
        %2736 = vmatpush.bf16.msra.mxu0 %v2601
        %2737 = vmatmul.bf16.gmra.mxu0 %v1466
        %v2738 = vpop.f32.mrf.mxu0
        %v2739 = vadd.f32 %v1759, %v2738
        %v2740 = vpop.f32.mrf.mxu0
        %v2741 = vadd.f32 %v1761, %v2740
        %2742 = vdwg.mxu0
        %2743 = vmatpush.bf16.msra.mxu0 0
        %2744 = vmatpush.bf16.msra.mxu0 0
        %2745 = vmatpush.bf16.msra.mxu0 0
        %2746 = vmatpush.bf16.msra.mxu0 0
        %2747 = vmatpush.bf16.msra.mxu0 %v2634
        %2748 = vmatpush.bf16.msra.mxu0 %v2631
        %2749 = vmatpush.bf16.msra.mxu0 %v2628
        %2750 = vmatpush.bf16.msra.mxu0 %v2625
        %2751 = vmatmul.bf16.gmra.mxu0 %v2671
        %v2752 = vpop.f32.mrf.mxu0
        %v2753 = vadd.f32 %v2739, %v2752
        %v2754 = vpop.f32.mrf.mxu0
        %v2755 = vadd.f32 %v2741, %v2754
        %2756 = vdwg.mxu0
        %v2757 = vrot.slane %v1466, 1
        %v2758 = vrot.slane %v1467, 1
        %v2808 = vunpack.c.l.b16 %v1764
        %v2809 = vunpack.c.h.b16 %v1764
        %v2810 = vunpack.c.l.b16 %v1765
        %v2811 = vunpack.c.l.b16 %v1766
        %v2812 = vunpack.c.h.b16 %v1766
        %v2813 = vunpack.c.l.b16 %v1767
        %v2814 = vunpack.c.l.b16 %v1768
        %v2815 = vunpack.c.h.b16 %v1768
        %v2816 = vunpack.c.l.b16 %v1769
        %v2817 = vunpack.c.l.b16 %v1770
        %v2818 = vunpack.c.h.b16 %v1770
        %v2819 = vunpack.c.l.b16 %v1771
        %v2820 = vunpack.c.l.b16 %v1772
        %v2821 = vunpack.c.h.b16 %v1772
        %v2822 = vunpack.c.l.b16 %v1773
        %v2823 = vunpack.c.l.b16 %v1774
        %v2824 = vunpack.c.h.b16 %v1774
        %v2825 = vunpack.c.l.b16 %v1775
        %v2826 = vunpack.c.l.b16 %v1776
        %v2827 = vunpack.c.h.b16 %v1776
        %v2828 = vunpack.c.l.b16 %v1777
        %v2829 = vunpack.c.l.b16 %v1778
        %v2830 = vunpack.c.h.b16 %v1778
        %v2831 = vunpack.c.l.b16 %v1779
        %v2832 = vunpack.c.l.b16 %v1780
        %v2833 = vunpack.c.h.b16 %v1780
        %v2834 = vunpack.c.l.b16 %v1781
        %v2835 = vunpack.c.l.b16 %v1782
        %v2836 = vunpack.c.h.b16 %v1782
        %v2837 = vunpack.c.l.b16 %v1783
        %v2838 = vunpack.c.l.b16 %v1784
        %v2839 = vunpack.c.h.b16 %v1784
        %v2840 = vunpack.c.l.b16 %v1785
        %v2841 = vunpack.c.l.b16 %v1786
        %v2842 = vunpack.c.h.b16 %v1786
        %v2843 = vunpack.c.l.b16 %v1787
        %v2844 = vunpack.c.l.b16 %v1788
        %v2845 = vunpack.c.h.b16 %v1788
        %v2846 = vunpack.c.l.b16 %v1789
        %v2847 = vunpack.c.l.b16 %v1790
        %v2848 = vunpack.c.h.b16 %v1790
        %v2849 = vunpack.c.l.b16 %v1791
        %v2850 = vunpack.c.l.b16 %v1792
        %v2851 = vunpack.c.h.b16 %v1792
        %v2852 = vunpack.c.l.b16 %v1793
        %v2853 = vunpack.c.l.b16 %v1794
        %v2854 = vunpack.c.h.b16 %v1794
        %v2855 = vunpack.c.l.b16 %v1795
        %v2856 = vunpack.c.l.b16 %v1796
        %v2857 = vunpack.c.h.b16 %v1796
        %v2858 = vunpack.c.l.b16 %v1797
        %v2859 = vunpack.c.l.b16 %v1798
        %v2860 = vunpack.c.h.b16 %v1798
        %v2861 = vunpack.c.l.b16 %v1799
        %v2862 = vunpack.c.l.b16 %v1800
        %v2863 = vunpack.c.h.b16 %v1800
        %v2864 = vunpack.c.l.b16 %v1801
        %v2865 = vunpack.c.l.b16 %v1802
        %v2866 = vunpack.c.h.b16 %v1802
        %v2867 = vunpack.c.l.b16 %v1803
        %v2868 = vunpack.c.l.b16 %v1804
        %v2869 = vunpack.c.h.b16 %v1804
        %v2870 = vunpack.c.l.b16 %v1805
        %v2871 = vunpack.c.l.b16 %v1806
        %v2872 = vunpack.c.h.b16 %v1806
        %v2873 = vunpack.c.l.b16 %v1807
        %v2874 = vunpack.c.l.b16 %v1808
        %v2875 = vunpack.c.h.b16 %v1808
        %v2876 = vunpack.c.l.b16 %v1809
        %v2877 = vunpack.c.l.b16 %v1810
        %v2878 = vunpack.c.h.b16 %v1810
        %v2879 = vunpack.c.l.b16 %v1811
        %v2880 = vpack.c.b16 %v2811, %v2808
        %v2881 = vpack.c.b16 %v2812, %v2809
        %v2882 = vpack.c.b16 %v2813, %v2810
        %v2883 = vpack.c.b16 %v2817, %v2814
        %v2884 = vpack.c.b16 %v2818, %v2815
        %v2885 = vpack.c.b16 %v2819, %v2816
        %v2886 = vpack.c.b16 %v2823, %v2820
        %v2887 = vpack.c.b16 %v2824, %v2821
        %v2888 = vpack.c.b16 %v2825, %v2822
        %v2889 = vpack.c.b16 %v2829, %v2826
        %v2890 = vpack.c.b16 %v2830, %v2827
        %v2891 = vpack.c.b16 %v2831, %v2828
        %v2892 = vpack.c.b16 %v2835, %v2832
        %v2893 = vpack.c.b16 %v2836, %v2833
        %v2894 = vpack.c.b16 %v2837, %v2834
        %v2895 = vpack.c.b16 %v2841, %v2838
        %v2896 = vpack.c.b16 %v2842, %v2839
        %v2897 = vpack.c.b16 %v2843, %v2840
        %v2898 = vpack.c.b16 %v2847, %v2844
        %v2899 = vpack.c.b16 %v2848, %v2845
        %v2900 = vpack.c.b16 %v2849, %v2846
        %v2901 = vpack.c.b16 %v2853, %v2850
        %v2902 = vpack.c.b16 %v2854, %v2851
        %v2903 = vpack.c.b16 %v2855, %v2852
        %v2904 = vpack.c.b16 %v2859, %v2856
        %v2905 = vpack.c.b16 %v2860, %v2857
        %v2906 = vpack.c.b16 %v2861, %v2858
        %v2907 = vpack.c.b16 %v2865, %v2862
        %v2908 = vpack.c.b16 %v2866, %v2863
        %v2909 = vpack.c.b16 %v2867, %v2864
        %v2910 = vpack.c.b16 %v2871, %v2868
        %v2911 = vpack.c.b16 %v2872, %v2869
        %v2912 = vpack.c.b16 %v2873, %v2870
        %v2913 = vpack.c.b16 %v2877, %v2874
        %v2914 = vpack.c.b16 %v2878, %v2875
        %v2915 = vpack.c.b16 %v2879, %v2876
        %v2953 = vsel %vm1675, %v2758, 0
        %2955 = vmatpush.bf16.msra.mxu0 %v2901
        %2956 = vmatpush.bf16.msra.mxu0 %v2898
        %2957 = vmatpush.bf16.msra.mxu0 %v2895
        %2958 = vmatpush.bf16.msra.mxu0 %v2892
        %2959 = vmatpush.bf16.msra.mxu0 %v2889
        %2960 = vmatpush.bf16.msra.mxu0 %v2886
        %2961 = vmatpush.bf16.msra.mxu0 %v2883
        %2962 = vmatpush.bf16.msra.mxu0 %v2880
        %2963 = vmatmul.bf16.gmra.mxu0 %v2757
        %v2964 = vpop.f32.mrf.mxu0
        %v2965 = vadd.f32 %v2087, %v2964
        %v2966 = vpop.f32.mrf.mxu0
        %v2967 = vadd.f32 %v2089, %v2966
        %2968 = vdwg.mxu0
        %2969 = vmatpush.bf16.msra.mxu0 0
        %2970 = vmatpush.bf16.msra.mxu0 0
        %2971 = vmatpush.bf16.msra.mxu0 0
        %2972 = vmatpush.bf16.msra.mxu0 0
        %2973 = vmatpush.bf16.msra.mxu0 %v2913
        %2974 = vmatpush.bf16.msra.mxu0 %v2910
        %2975 = vmatpush.bf16.msra.mxu0 %v2907
        %2976 = vmatpush.bf16.msra.mxu0 %v2904
        %2977 = vmatmul.bf16.gmra.mxu0 %v2953
        %v2978 = vpop.f32.mrf.mxu0
        %v2979 = vadd.f32 %v2965, %v2978
        %v2980 = vpop.f32.mrf.mxu0
        %v2981 = vadd.f32 %v2967, %v2980
        %2982 = vdwg.mxu0
        %2983 = vmatpush.bf16.msra.mxu0 %v2902
        %2984 = vmatpush.bf16.msra.mxu0 %v2899
        %2985 = vmatpush.bf16.msra.mxu0 %v2896
        %2986 = vmatpush.bf16.msra.mxu0 %v2893
        %2987 = vmatpush.bf16.msra.mxu0 %v2890
        %2988 = vmatpush.bf16.msra.mxu0 %v2887
        %2989 = vmatpush.bf16.msra.mxu0 %v2884
        %2990 = vmatpush.bf16.msra.mxu0 %v2881
        %2991 = vmatmul.bf16.gmra.mxu0 %v2757
        %v2992 = vpop.f32.mrf.mxu0
        %v2993 = vadd.f32 %v2115, %v2992
        %v2994 = vpop.f32.mrf.mxu0
        %v2995 = vadd.f32 %v2117, %v2994
        %2996 = vdwg.mxu0
        %2997 = vmatpush.bf16.msra.mxu0 0
        %2998 = vmatpush.bf16.msra.mxu0 0
        %2999 = vmatpush.bf16.msra.mxu0 0
        %3000 = vmatpush.bf16.msra.mxu0 0
        %3001 = vmatpush.bf16.msra.mxu0 %v2914
        %3002 = vmatpush.bf16.msra.mxu0 %v2911
        %3003 = vmatpush.bf16.msra.mxu0 %v2908
        %3004 = vmatpush.bf16.msra.mxu0 %v2905
        %3005 = vmatmul.bf16.gmra.mxu0 %v2953
        %v3006 = vpop.f32.mrf.mxu0
        %v3007 = vadd.f32 %v2993, %v3006
        %v3008 = vpop.f32.mrf.mxu0
        %v3009 = vadd.f32 %v2995, %v3008
        %3010 = vdwg.mxu0
        %3011 = vmatpush.bf16.msra.mxu0 %v2903
        %3012 = vmatpush.bf16.msra.mxu0 %v2900
        %3013 = vmatpush.bf16.msra.mxu0 %v2897
        %3014 = vmatpush.bf16.msra.mxu0 %v2894
        %3015 = vmatpush.bf16.msra.mxu0 %v2891
        %3016 = vmatpush.bf16.msra.mxu0 %v2888
        %3017 = vmatpush.bf16.msra.mxu0 %v2885
        %3018 = vmatpush.bf16.msra.mxu0 %v2882
        %3019 = vmatmul.bf16.gmra.mxu0 %v2757
        %v3020 = vpop.f32.mrf.mxu0
        %v3021 = vadd.f32 %v2143, %v3020
        %v3022 = vpop.f32.mrf.mxu0
        %v3023 = vadd.f32 %v2145, %v3022
        %3024 = vdwg.mxu0
        %3025 = vmatpush.bf16.msra.mxu0 0
        %3026 = vmatpush.bf16.msra.mxu0 0
        %3027 = vmatpush.bf16.msra.mxu0 0
        %3028 = vmatpush.bf16.msra.mxu0 0
        %3029 = vmatpush.bf16.msra.mxu0 %v2915
        %3030 = vmatpush.bf16.msra.mxu0 %v2912
        %3031 = vmatpush.bf16.msra.mxu0 %v2909
        %3032 = vmatpush.bf16.msra.mxu0 %v2906
        %3033 = vmatmul.bf16.gmra.mxu0 %v2953
        %v3034 = vpop.f32.mrf.mxu0
        %v3035 = vadd.f32 %v3021, %v3034
        %v3036 = vpop.f32.mrf.mxu0
        %v3037 = vadd.f32 %v3023, %v3036
        %3038 = vdwg.mxu0
        %v3039 = vadd.f32 %v2697, %v2979
        %v3040 = vadd.f32 %v2725, %v3007
        %v3041 = vadd.f32 %v2753, %v3035
        %v3042 = vadd.f32 %v2699, %v2981
        %v3043 = vadd.f32 %v2727, %v3009
        %v3044 = vadd.f32 %v2755, %v3037
        %v3045 = vadd.f32 %v3039, %v2418
        %v3046 = vadd.f32 %v3040, %v2446
        %v3047 = vadd.f32 %v3041, %v2474
        %v3048 = vadd.f32 %v3042, %v2420
        %v3049 = vadd.f32 %v3043, %v2448
        %v3050 = vadd.f32 %v3044, %v2476
        %v3051 = vld [vmem:[#allocation9] sm:$0x7]
        %v3053 = vperm.slane %v3051, 0
        %v3054 = vperm.slane %v3051, 1
        %v3055 = vperm.slane %v3051, 2
        %v3059 = vadd.f32 %v3045, %v3053
        %v3060 = vadd.f32 %v3046, %v3054
        %v3061 = vadd.f32 %v3047, %v3055
        %v3062 = vadd.f32 %v3048, %v3053
        %v3063 = vadd.f32 %v3049, %v3054
        %v3064 = vadd.f32 %v3050, %v3055
        %vm3065 = vcmp.gt.f32.partialorder %v3059, 0.0
        %vm3066 = vcmp.gt.f32.partialorder %v3060, 0.0
        %vm3067 = vcmp.gt.f32.partialorder %v3061, 0.0
        %vm3068 = vcmp.gt.f32.partialorder %v3062, 0.0
        %vm3069 = vcmp.gt.f32.partialorder %v3063, 0.0
        %vm3070 = vcmp.gt.f32.partialorder %v3064, 0.0
        %v3071 = vstv %s738
        %v3072 = vmul.f32 %v3071, %v3059
        %v3073 = vmul.f32 %v3071, %v3060
        %v3074 = vmul.f32 %v3071, %v3061
        %v3075 = vmul.f32 %v3071, %v3062
        %v3076 = vmul.f32 %v3071, %v3063
        %v3077 = vmul.f32 %v3071, %v3064
        %v3078 = vsel %vm3065, %v3059, %v3072
        %v3079 = vsel %vm3066, %v3060, %v3073
        %v3080 = vsel %vm3067, %v3061, %v3074
        %v3081 = vsel %vm3068, %v3062, %v3075
        %v3082 = vsel %vm3069, %v3063, %v3076
        %v3083 = vsel %vm3070, %v3064, %v3077
        %v3084 = vpack.c.bf16 %v3081, %v3078
        %v3085 = vpack.c.bf16 %v3082, %v3079
        %v3086 = vpack.c.bf16 %v3083, %v3080
        %v3087 = vld [vmem:[#allocation15] sm:$0xf]
        %v3088 = vld [vmem:[#allocation15 + $0x4] sm:$0x3]
        %v3091 = vunpack.c.l.b16 %v3087
        %v3092 = vunpack.c.l.b16 %v3088
        %v3093 = vpack.c.b16 %v3092, %v3091
        %vm3094 = vcmask 80896
        %v3096 = vsel %vm3094, %v3093, 0
        %vm3098 = vcmask 1044480
        %v3100 = vsel %vm3098, %v3084, 0
        %v3103 = vsel %vm3098, %v3085, 0
        %v3106 = vsel %vm3098, %v3086, 0
        %3108 = vmatpush.bf16.msra.mxu0 0
        %3109 = vmatpush.bf16.msra.mxu0 0
        %3110 = vmatpush.bf16.msra.mxu0 0
        %3111 = vmatpush.bf16.msra.mxu0 0
        %3112 = vmatpush.bf16.msra.mxu0 0
        %3113 = vmatpush.bf16.msra.mxu0 0
        %3114 = vmatpush.bf16.msra.mxu0 0
        %3115 = vmatpush.bf16.msra.mxu0 %v3100
        %3116 = vmatmul.bf16.gmra.mxu0 %v3096
        %v3117 = vpop.f32.mrf.mxu0
        %v3118 = vadd.f32 0.0, %v3117
        %v3119 = vpop.f32.mrf.mxu0
        %v3120 = vadd.f32 0.0, %v3119
        %3121 = vdwg.mxu0
        %3122 = vmatpush.bf16.msra.mxu0 0
        %3123 = vmatpush.bf16.msra.mxu0 0
        %3124 = vmatpush.bf16.msra.mxu0 0
        %3125 = vmatpush.bf16.msra.mxu0 0
        %3126 = vmatpush.bf16.msra.mxu0 0
        %3127 = vmatpush.bf16.msra.mxu0 0
        %3128 = vmatpush.bf16.msra.mxu0 0
        %3129 = vmatpush.bf16.msra.mxu0 %v3103
        %3130 = vmatmul.bf16.gmra.mxu0 %v3096
        %v3131 = vpop.f32.mrf.mxu0
        %v3132 = vadd.f32 0.0, %v3131
        %v3133 = vpop.f32.mrf.mxu0
        %v3134 = vadd.f32 0.0, %v3133
        %3135 = vdwg.mxu0
        %3136 = vmatpush.bf16.msra.mxu0 0
        %3137 = vmatpush.bf16.msra.mxu0 0
        %3138 = vmatpush.bf16.msra.mxu0 0
        %3139 = vmatpush.bf16.msra.mxu0 0
        %3140 = vmatpush.bf16.msra.mxu0 0
        %3141 = vmatpush.bf16.msra.mxu0 0
        %3142 = vmatpush.bf16.msra.mxu0 0
        %3143 = vmatpush.bf16.msra.mxu0 %v3106
        %3144 = vmatmul.bf16.gmra.mxu0 %v3096
        %v3145 = vpop.f32.mrf.mxu0
        %v3146 = vadd.f32 0.0, %v3145
        %v3147 = vpop.f32.mrf.mxu0
        %v3148 = vadd.f32 0.0, %v3147
        %3149 = vdwg.mxu0
        %v3150 = vpack.c.bf16 %v3132, %v3118
        %v3151 = vpack.c.bf16 %v3146, %v3146
        %v3152 = vpack.c.bf16 %v3134, %v3120
        %v3153 = vpack.c.bf16 %v3148, %v3148
        %v3154 = vld [vmem:[#allocation12] sm:$0xff]
        %v3155 = vld [vmem:[#allocation12 + $0x8] sm:$0xff]
        %v3156 = vld [vmem:[#allocation12 + $0x10] sm:$0xff]
        %v3157 = vld [vmem:[#allocation12 + $0x18] sm:$0xff]
        %v3158 = vld [vmem:[#allocation12 + $0x20] sm:$0xff]
        %v3159 = vld [vmem:[#allocation12 + $0x28] sm:$0xff]
        %v3160 = vld [vmem:[#allocation12 + $0x30] sm:$0xff]
        %v3161 = vld [vmem:[#allocation12 + $0x38] sm:$0xff]
        %v3162 = vld [vmem:[#allocation12 + $0x40] sm:$0xff]
        %v3163 = vld [vmem:[#allocation12 + $0x48] sm:$0xff]
        %v3164 = vld [vmem:[#allocation12 + $0x50] sm:$0xff]
        %v3165 = vld [vmem:[#allocation12 + $0x58] sm:$0xff]
        %v3166 = vld [vmem:[#allocation12 + $0x60] sm:$0xff]
        %v3167 = vld [vmem:[#allocation12 + $0x68] sm:$0xff]
        %v3168 = vld [vmem:[#allocation12 + $0x70] sm:$0xff]
        %v3169 = vld [vmem:[#allocation12 + $0x78] sm:$0xff]
        %v3170 = vld [vmem:[#allocation12 + $0x80] sm:$0xff]
        %v3171 = vld [vmem:[#allocation12 + $0x88] sm:$0xff]
        %v3172 = vld [vmem:[#allocation12 + $0x90] sm:$0xff]
        %v3173 = vld [vmem:[#allocation12 + $0x98] sm:$0xff]
        %v3174 = vld [vmem:[#allocation12 + $0xa0] sm:$0xff]
        %v3175 = vld [vmem:[#allocation12 + $0xa8] sm:$0xff]
        %v3176 = vld [vmem:[#allocation12 + $0xb0] sm:$0xff]
        %v3177 = vld [vmem:[#allocation12 + $0xb8] sm:$0xff]
        %v3178 = vld [vmem:[#allocation12 + $0xc0] sm:$0xff]
        %v3179 = vld [vmem:[#allocation12 + $0xc8] sm:$0xff]
        %v3180 = vld [vmem:[#allocation12 + $0xd0] sm:$0xff]
        %v3181 = vld [vmem:[#allocation12 + $0xd8] sm:$0xff]
        %v3182 = vld [vmem:[#allocation12 + $0xe0] sm:$0xff]
        %v3183 = vld [vmem:[#allocation12 + $0xe8] sm:$0xff]
        %v3184 = vld [vmem:[#allocation12 + $0xf0] sm:$0xff]
        %v3185 = vld [vmem:[#allocation12 + $0xf8] sm:$0xff]
        %v3186 = vld [vmem:[#allocation12 + $0x100] sm:$0xff]
        %v3187 = vld [vmem:[#allocation12 + $0x108] sm:$0xff]
        %v3188 = vld [vmem:[#allocation12 + $0x110] sm:$0xff]
        %v3189 = vld [vmem:[#allocation12 + $0x118] sm:$0xff]
        %v3190 = vld [vmem:[#allocation12 + $0x120] sm:$0xff]
        %v3191 = vld [vmem:[#allocation12 + $0x128] sm:$0xff]
        %v3192 = vld [vmem:[#allocation12 + $0x130] sm:$0xff]
        %v3193 = vld [vmem:[#allocation12 + $0x138] sm:$0xff]
        %v3194 = vld [vmem:[#allocation12 + $0x140] sm:$0xff]
        %v3195 = vld [vmem:[#allocation12 + $0x148] sm:$0xff]
        %v3196 = vld [vmem:[#allocation12 + $0x150] sm:$0xff]
        %v3197 = vld [vmem:[#allocation12 + $0x158] sm:$0xff]
        %v3198 = vld [vmem:[#allocation12 + $0x160] sm:$0xff]
        %v3199 = vld [vmem:[#allocation12 + $0x168] sm:$0xff]
        %v3200 = vld [vmem:[#allocation12 + $0x170] sm:$0xff]
        %v3201 = vld [vmem:[#allocation12 + $0x178] sm:$0xff]
        %v3202 = vld [vmem:[#allocation12 + $0x180] sm:$0xff]
        %v3203 = vld [vmem:[#allocation12 + $0x188] sm:$0xff]
        %v3204 = vld [vmem:[#allocation12 + $0x190] sm:$0xff]
        %v3205 = vld [vmem:[#allocation12 + $0x198] sm:$0xff]
        %v3206 = vld [vmem:[#allocation12 + $0x1a0] sm:$0xff]
        %v3207 = vld [vmem:[#allocation12 + $0x1a8] sm:$0xff]
        %v3208 = vld [vmem:[#allocation12 + $0x1b0] sm:$0xff]
        %v3209 = vld [vmem:[#allocation12 + $0x1b8] sm:$0xff]
        %v3210 = vld [vmem:[#allocation12 + $0x1c0] sm:$0xff]
        %v3211 = vld [vmem:[#allocation12 + $0x1c8] sm:$0xff]
        %v3212 = vld [vmem:[#allocation12 + $0x1d0] sm:$0xff]
        %v3213 = vld [vmem:[#allocation12 + $0x1d8] sm:$0xff]
        %v3214 = vld [vmem:[#allocation12 + $0x1e0] sm:$0xff]
        %v3215 = vld [vmem:[#allocation12 + $0x1e8] sm:$0xff]
        %v3216 = vld [vmem:[#allocation12 + $0x1f0] sm:$0xff]
        %v3217 = vld [vmem:[#allocation12 + $0x1f8] sm:$0xff]
        %v3218 = vld [vmem:[#allocation12 + $0x200] sm:$0xff]
        %v3219 = vld [vmem:[#allocation12 + $0x208] sm:$0xff]
        %v3220 = vld [vmem:[#allocation12 + $0x210] sm:$0xff]
        %v3221 = vld [vmem:[#allocation12 + $0x218] sm:$0xff]
        %v3222 = vld [vmem:[#allocation12 + $0x220] sm:$0xff]
        %v3223 = vld [vmem:[#allocation12 + $0x228] sm:$0xff]
        %v3224 = vld [vmem:[#allocation12 + $0x230] sm:$0xff]
        %v3225 = vld [vmem:[#allocation12 + $0x238] sm:$0xff]
        %v3226 = vld [vmem:[#allocation12 + $0x240] sm:$0xff]
        %v3227 = vld [vmem:[#allocation12 + $0x248] sm:$0xff]
        %v3228 = vld [vmem:[#allocation12 + $0x250] sm:$0xff]
        %v3229 = vld [vmem:[#allocation12 + $0x258] sm:$0xff]
        %v3230 = vld [vmem:[#allocation12 + $0x260] sm:$0xff]
        %v3231 = vld [vmem:[#allocation12 + $0x268] sm:$0xff]
        %v3232 = vld [vmem:[#allocation12 + $0x270] sm:$0xff]
        %v3233 = vld [vmem:[#allocation12 + $0x278] sm:$0xff]
        %s3234 = scalar_lea.vmem [#allocation12], 640
        %v3235 = vld [vmem:[%s3234] sm:$0xff]
        %v3236 = vld [vmem:[%s3234 + $0x8] sm:$0xff]
        %v3237 = vld [vmem:[%s3234 + $0x10] sm:$0xff]
        %v3238 = vld [vmem:[%s3234 + $0x18] sm:$0xff]
        %v3239 = vld [vmem:[%s3234 + $0x20] sm:$0xff]
        %v3240 = vld [vmem:[%s3234 + $0x28] sm:$0xff]
        %v3241 = vld [vmem:[%s3234 + $0x30] sm:$0xff]
        %v3242 = vld [vmem:[%s3234 + $0x38] sm:$0xff]
        %v3243 = vld [vmem:[%s3234 + $0x40] sm:$0xff]
        %v3244 = vld [vmem:[%s3234 + $0x48] sm:$0xff]
        %v3245 = vld [vmem:[%s3234 + $0x50] sm:$0xff]
        %v3246 = vld [vmem:[%s3234 + $0x58] sm:$0xff]
        %v3247 = vld [vmem:[%s3234 + $0x60] sm:$0xff]
        %v3248 = vld [vmem:[%s3234 + $0x68] sm:$0xff]
        %v3249 = vld [vmem:[%s3234 + $0x70] sm:$0xff]
        %v3250 = vld [vmem:[%s3234 + $0x78] sm:$0xff]
        %v3251 = vld [vmem:[%s3234 + $0x80] sm:$0xff]
        %v3252 = vld [vmem:[%s3234 + $0x88] sm:$0xff]
        %v3253 = vld [vmem:[%s3234 + $0x90] sm:$0xff]
        %v3254 = vld [vmem:[%s3234 + $0x98] sm:$0xff]
        %v3255 = vld [vmem:[%s3234 + $0xa0] sm:$0xff]
        %v3256 = vld [vmem:[%s3234 + $0xa8] sm:$0xff]
        %v3257 = vld [vmem:[%s3234 + $0xb0] sm:$0xff]
        %v3258 = vld [vmem:[%s3234 + $0xb8] sm:$0xff]
        %v3259 = vld [vmem:[%s3234 + $0xc0] sm:$0xff]
        %v3260 = vld [vmem:[%s3234 + $0xc8] sm:$0xff]
        %v3261 = vld [vmem:[%s3234 + $0xd0] sm:$0xff]
        %v3262 = vld [vmem:[%s3234 + $0xd8] sm:$0xff]
        %v3263 = vld [vmem:[%s3234 + $0xe0] sm:$0xff]
        %v3264 = vld [vmem:[%s3234 + $0xe8] sm:$0xff]
        %v3265 = vld [vmem:[%s3234 + $0xf0] sm:$0xff]
        %v3266 = vld [vmem:[%s3234 + $0xf8] sm:$0xff]
        %v3267 = vld [vmem:[%s3234 + $0x100] sm:$0xff]
        %v3268 = vld [vmem:[%s3234 + $0x108] sm:$0xff]
        %v3269 = vld [vmem:[%s3234 + $0x110] sm:$0xff]
        %v3270 = vld [vmem:[%s3234 + $0x118] sm:$0xff]
        %v3271 = vld [vmem:[%s3234 + $0x120] sm:$0xff]
        %v3272 = vld [vmem:[%s3234 + $0x128] sm:$0xff]
        %v3273 = vld [vmem:[%s3234 + $0x130] sm:$0xff]
        %v3274 = vld [vmem:[%s3234 + $0x138] sm:$0xff]
        %v3275 = vld [vmem:[%s3234 + $0x140] sm:$0xff]
        %v3276 = vld [vmem:[%s3234 + $0x148] sm:$0xff]
        %v3277 = vld [vmem:[%s3234 + $0x150] sm:$0xff]
        %v3278 = vld [vmem:[%s3234 + $0x158] sm:$0xff]
        %v3279 = vld [vmem:[%s3234 + $0x160] sm:$0xff]
        %v3280 = vld [vmem:[%s3234 + $0x168] sm:$0xff]
        %v3281 = vld [vmem:[%s3234 + $0x170] sm:$0xff]
        %v3282 = vld [vmem:[%s3234 + $0x178] sm:$0xff]
        %v3283 = vld [vmem:[%s3234 + $0x180] sm:$0xff]
        %v3284 = vld [vmem:[%s3234 + $0x188] sm:$0xff]
        %v3285 = vld [vmem:[%s3234 + $0x190] sm:$0xff]
        %v3286 = vld [vmem:[%s3234 + $0x198] sm:$0xff]
        %v3287 = vld [vmem:[%s3234 + $0x1a0] sm:$0xff]
        %v3288 = vld [vmem:[%s3234 + $0x1a8] sm:$0xff]
        %v3289 = vld [vmem:[%s3234 + $0x1b0] sm:$0xff]
        %v3290 = vld [vmem:[%s3234 + $0x1b8] sm:$0xff]
        %v3291 = vld [vmem:[%s3234 + $0x1c0] sm:$0xff]
        %v3292 = vld [vmem:[%s3234 + $0x1c8] sm:$0xff]
        %v3293 = vld [vmem:[%s3234 + $0x1d0] sm:$0xff]
        %v3294 = vld [vmem:[%s3234 + $0x1d8] sm:$0xff]
        %v3295 = vld [vmem:[%s3234 + $0x1e0] sm:$0xff]
        %v3296 = vld [vmem:[%s3234 + $0x1e8] sm:$0xff]
        %v3297 = vld [vmem:[%s3234 + $0x1f0] sm:$0xff]
        %v3298 = vld [vmem:[%s3234 + $0x1f8] sm:$0xff]
        %v3299 = vld [vmem:[%s3234 + $0x200] sm:$0xff]
        %v3300 = vld [vmem:[%s3234 + $0x208] sm:$0xff]
        %v3301 = vld [vmem:[%s3234 + $0x210] sm:$0xff]
        %v3302 = vld [vmem:[%s3234 + $0x218] sm:$0xff]
        %v3303 = vld [vmem:[%s3234 + $0x220] sm:$0xff]
        %v3304 = vld [vmem:[%s3234 + $0x228] sm:$0xff]
        %v3305 = vld [vmem:[%s3234 + $0x230] sm:$0xff]
        %v3306 = vld [vmem:[%s3234 + $0x238] sm:$0xff]
        %v3307 = vld [vmem:[%s3234 + $0x240] sm:$0xff]
        %v3308 = vld [vmem:[%s3234 + $0x248] sm:$0xff]
        %v3309 = vld [vmem:[%s3234 + $0x250] sm:$0xff]
        %v3310 = vld [vmem:[%s3234 + $0x258] sm:$0xff]
        %v3311 = vld [vmem:[%s3234 + $0x260] sm:$0xff]
        %v3312 = vld [vmem:[%s3234 + $0x268] sm:$0xff]
        %v3313 = vld [vmem:[%s3234 + $0x270] sm:$0xff]
        %v3314 = vld [vmem:[%s3234 + $0x278] sm:$0xff]
        %v3319 = vunpack.c.l.b16 %v3150
        %v3320 = vunpack.c.h.b16 %v3150
        %v3321 = vunpack.c.l.b16 %v3151
        %v3322 = vunpack.c.l.b16 %v3152
        %v3323 = vunpack.c.h.b16 %v3152
        %v3324 = vunpack.c.l.b16 %v3153
        %v3325 = vpack.c.b16 %v3322, %v3319
        %v3326 = vpack.c.b16 %v3323, %v3320
        %v3327 = vpack.c.b16 %v3324, %v3321
        %v3329 = vshrl.u32 %v3325, 16
        %v3331 = vshll.u32 %v3325, 16
        %v3333 = vrot.slane %v3331, 1
        %v3334 = vor.u32 %v3329, %v3333
        %v3336 = vshrl.u32 %v3326, 16
        %v3338 = vshll.u32 %v3326, 16
        %v3340 = vrot.slane %v3338, 1
        %v3341 = vor.u32 %v3336, %v3340
        %v3343 = vshrl.u32 %v3327, 16
        %v3345 = vshll.u32 %v3327, 16
        %v3347 = vrot.slane %v3345, 1
        %v3348 = vor.u32 %v3343, %v3347
        %v3431 = vunpack.c.l.b16 %v3235
        %v3432 = vunpack.c.h.b16 %v3235
        %v3433 = vunpack.c.l.b16 %v3236
        %v3434 = vunpack.c.h.b16 %v3236
        %v3435 = vunpack.c.l.b16 %v3237
        %v3436 = vunpack.c.h.b16 %v3237
        %v3437 = vunpack.c.l.b16 %v3238
        %v3438 = vunpack.c.h.b16 %v3238
        %v3439 = vunpack.c.l.b16 %v3239
        %v3440 = vunpack.c.h.b16 %v3239
        %v3441 = vunpack.c.l.b16 %v3240
        %v3442 = vunpack.c.h.b16 %v3240
        %v3443 = vunpack.c.l.b16 %v3241
        %v3444 = vunpack.c.h.b16 %v3241
        %v3445 = vunpack.c.l.b16 %v3242
        %v3446 = vunpack.c.h.b16 %v3242
        %v3447 = vunpack.c.l.b16 %v3243
        %v3448 = vunpack.c.h.b16 %v3243
        %v3449 = vunpack.c.l.b16 %v3244
        %v3450 = vunpack.c.h.b16 %v3244
        %v3451 = vunpack.c.l.b16 %v3245
        %v3452 = vunpack.c.h.b16 %v3245
        %v3453 = vunpack.c.l.b16 %v3246
        %v3454 = vunpack.c.h.b16 %v3246
        %v3455 = vunpack.c.l.b16 %v3247
        %v3456 = vunpack.c.h.b16 %v3247
        %v3457 = vunpack.c.l.b16 %v3248
        %v3458 = vunpack.c.h.b16 %v3248
        %v3459 = vunpack.c.l.b16 %v3249
        %v3460 = vunpack.c.h.b16 %v3249
        %v3461 = vunpack.c.l.b16 %v3250
        %v3462 = vunpack.c.h.b16 %v3250
        %v3463 = vunpack.c.l.b16 %v3251
        %v3464 = vunpack.c.h.b16 %v3251
        %v3465 = vunpack.c.l.b16 %v3252
        %v3466 = vunpack.c.h.b16 %v3252
        %v3467 = vunpack.c.l.b16 %v3253
        %v3468 = vunpack.c.h.b16 %v3253
        %v3469 = vunpack.c.l.b16 %v3254
        %v3470 = vunpack.c.h.b16 %v3254
        %v3471 = vunpack.c.l.b16 %v3255
        %v3472 = vunpack.c.h.b16 %v3255
        %v3473 = vunpack.c.l.b16 %v3256
        %v3474 = vunpack.c.h.b16 %v3256
        %v3475 = vunpack.c.l.b16 %v3257
        %v3476 = vunpack.c.h.b16 %v3257
        %v3477 = vunpack.c.l.b16 %v3258
        %v3478 = vunpack.c.h.b16 %v3258
        %v3479 = vunpack.c.l.b16 %v3259
        %v3480 = vunpack.c.h.b16 %v3259
        %v3481 = vunpack.c.l.b16 %v3260
        %v3482 = vunpack.c.h.b16 %v3260
        %v3483 = vunpack.c.l.b16 %v3261
        %v3484 = vunpack.c.h.b16 %v3261
        %v3485 = vunpack.c.l.b16 %v3262
        %v3486 = vunpack.c.h.b16 %v3262
        %v3487 = vunpack.c.l.b16 %v3263
        %v3488 = vunpack.c.h.b16 %v3263
        %v3489 = vunpack.c.l.b16 %v3264
        %v3490 = vunpack.c.h.b16 %v3264
        %v3491 = vunpack.c.l.b16 %v3265
        %v3492 = vunpack.c.h.b16 %v3265
        %v3493 = vunpack.c.l.b16 %v3266
        %v3494 = vunpack.c.h.b16 %v3266
        %v3495 = vunpack.c.l.b16 %v3267
        %v3496 = vunpack.c.h.b16 %v3267
        %v3497 = vunpack.c.l.b16 %v3268
        %v3498 = vunpack.c.h.b16 %v3268
        %v3499 = vunpack.c.l.b16 %v3269
        %v3500 = vunpack.c.h.b16 %v3269
        %v3501 = vunpack.c.l.b16 %v3270
        %v3502 = vunpack.c.h.b16 %v3270
        %v3503 = vunpack.c.l.b16 %v3271
        %v3504 = vunpack.c.h.b16 %v3271
        %v3505 = vunpack.c.l.b16 %v3272
        %v3506 = vunpack.c.h.b16 %v3272
        %v3507 = vunpack.c.l.b16 %v3273
        %v3508 = vunpack.c.h.b16 %v3273
        %v3509 = vunpack.c.l.b16 %v3274
        %v3510 = vunpack.c.h.b16 %v3274
        %v3511 = vunpack.c.l.b16 %v3275
        %v3512 = vunpack.c.h.b16 %v3275
        %v3513 = vunpack.c.l.b16 %v3276
        %v3514 = vunpack.c.h.b16 %v3276
        %v3515 = vunpack.c.l.b16 %v3277
        %v3516 = vunpack.c.h.b16 %v3277
        %v3517 = vunpack.c.l.b16 %v3278
        %v3518 = vunpack.c.h.b16 %v3278
        %v3519 = vunpack.c.l.b16 %v3279
        %v3520 = vunpack.c.h.b16 %v3279
        %v3521 = vunpack.c.l.b16 %v3280
        %v3522 = vunpack.c.h.b16 %v3280
        %v3523 = vunpack.c.l.b16 %v3281
        %v3524 = vunpack.c.h.b16 %v3281
        %v3525 = vunpack.c.l.b16 %v3282
        %v3526 = vunpack.c.h.b16 %v3282
        %v3527 = vunpack.c.l.b16 %v3283
        %v3528 = vunpack.c.h.b16 %v3283
        %v3529 = vunpack.c.l.b16 %v3284
        %v3530 = vunpack.c.h.b16 %v3284
        %v3531 = vunpack.c.l.b16 %v3285
        %v3532 = vunpack.c.h.b16 %v3285
        %v3533 = vunpack.c.l.b16 %v3286
        %v3534 = vunpack.c.h.b16 %v3286
        %v3535 = vunpack.c.l.b16 %v3287
        %v3536 = vunpack.c.h.b16 %v3287
        %v3537 = vunpack.c.l.b16 %v3288
        %v3538 = vunpack.c.h.b16 %v3288
        %v3539 = vunpack.c.l.b16 %v3289
        %v3540 = vunpack.c.h.b16 %v3289
        %v3541 = vunpack.c.l.b16 %v3290
        %v3542 = vunpack.c.h.b16 %v3290
        %v3543 = vunpack.c.l.b16 %v3291
        %v3544 = vunpack.c.h.b16 %v3291
        %v3545 = vunpack.c.l.b16 %v3292
        %v3546 = vunpack.c.h.b16 %v3292
        %v3547 = vunpack.c.l.b16 %v3293
        %v3548 = vunpack.c.h.b16 %v3293
        %v3549 = vunpack.c.l.b16 %v3294
        %v3550 = vunpack.c.h.b16 %v3294
        %v3551 = vunpack.c.l.b16 %v3295
        %v3552 = vunpack.c.h.b16 %v3295
        %v3553 = vunpack.c.l.b16 %v3296
        %v3554 = vunpack.c.h.b16 %v3296
        %v3555 = vunpack.c.l.b16 %v3297
        %v3556 = vunpack.c.h.b16 %v3297
        %v3557 = vunpack.c.l.b16 %v3298
        %v3558 = vunpack.c.h.b16 %v3298
        %v3559 = vunpack.c.l.b16 %v3299
        %v3560 = vunpack.c.h.b16 %v3299
        %v3561 = vunpack.c.l.b16 %v3300
        %v3562 = vunpack.c.h.b16 %v3300
        %v3563 = vunpack.c.l.b16 %v3301
        %v3564 = vunpack.c.h.b16 %v3301
        %v3565 = vunpack.c.l.b16 %v3302
        %v3566 = vunpack.c.h.b16 %v3302
        %v3567 = vunpack.c.l.b16 %v3303
        %v3568 = vunpack.c.h.b16 %v3303
        %v3569 = vunpack.c.l.b16 %v3304
        %v3570 = vunpack.c.h.b16 %v3304
        %v3571 = vunpack.c.l.b16 %v3305
        %v3572 = vunpack.c.h.b16 %v3305
        %v3573 = vunpack.c.l.b16 %v3306
        %v3574 = vunpack.c.h.b16 %v3306
        %v3575 = vunpack.c.l.b16 %v3307
        %v3576 = vunpack.c.h.b16 %v3307
        %v3577 = vunpack.c.l.b16 %v3308
        %v3578 = vunpack.c.h.b16 %v3308
        %v3579 = vunpack.c.l.b16 %v3309
        %v3580 = vunpack.c.h.b16 %v3309
        %v3581 = vunpack.c.l.b16 %v3310
        %v3582 = vunpack.c.h.b16 %v3310
        %v3583 = vunpack.c.l.b16 %v3311
        %v3584 = vunpack.c.h.b16 %v3311
        %v3585 = vunpack.c.l.b16 %v3312
        %v3586 = vunpack.c.h.b16 %v3312
        %v3587 = vunpack.c.l.b16 %v3313
        %v3588 = vunpack.c.h.b16 %v3313
        %v3589 = vunpack.c.l.b16 %v3314
        %v3590 = vunpack.c.h.b16 %v3314
        %v3591 = vpack.c.b16 %v3435, %v3431
        %v3592 = vpack.c.b16 %v3436, %v3432
        %v3593 = vpack.c.b16 %v3437, %v3433
        %v3594 = vpack.c.b16 %v3438, %v3434
        %v3595 = vpack.c.b16 %v3443, %v3439
        %v3596 = vpack.c.b16 %v3444, %v3440
        %v3597 = vpack.c.b16 %v3445, %v3441
        %v3598 = vpack.c.b16 %v3446, %v3442
        %v3599 = vpack.c.b16 %v3451, %v3447
        %v3600 = vpack.c.b16 %v3452, %v3448
        %v3601 = vpack.c.b16 %v3453, %v3449
        %v3602 = vpack.c.b16 %v3454, %v3450
        %v3603 = vpack.c.b16 %v3459, %v3455
        %v3604 = vpack.c.b16 %v3460, %v3456
        %v3605 = vpack.c.b16 %v3461, %v3457
        %v3606 = vpack.c.b16 %v3462, %v3458
        %v3607 = vpack.c.b16 %v3467, %v3463
        %v3608 = vpack.c.b16 %v3468, %v3464
        %v3609 = vpack.c.b16 %v3469, %v3465
        %v3610 = vpack.c.b16 %v3470, %v3466
        %v3611 = vpack.c.b16 %v3475, %v3471
        %v3612 = vpack.c.b16 %v3476, %v3472
        %v3613 = vpack.c.b16 %v3477, %v3473
        %v3614 = vpack.c.b16 %v3478, %v3474
        %v3615 = vpack.c.b16 %v3483, %v3479
        %v3616 = vpack.c.b16 %v3484, %v3480
        %v3617 = vpack.c.b16 %v3485, %v3481
        %v3618 = vpack.c.b16 %v3486, %v3482
        %v3619 = vpack.c.b16 %v3491, %v3487
        %v3620 = vpack.c.b16 %v3492, %v3488
        %v3621 = vpack.c.b16 %v3493, %v3489
        %v3622 = vpack.c.b16 %v3494, %v3490
        %v3623 = vpack.c.b16 %v3499, %v3495
        %v3624 = vpack.c.b16 %v3500, %v3496
        %v3625 = vpack.c.b16 %v3501, %v3497
        %v3626 = vpack.c.b16 %v3502, %v3498
        %v3627 = vpack.c.b16 %v3507, %v3503
        %v3628 = vpack.c.b16 %v3508, %v3504
        %v3629 = vpack.c.b16 %v3509, %v3505
        %v3630 = vpack.c.b16 %v3510, %v3506
        %v3631 = vpack.c.b16 %v3515, %v3511
        %v3632 = vpack.c.b16 %v3516, %v3512
        %v3633 = vpack.c.b16 %v3517, %v3513
        %v3634 = vpack.c.b16 %v3518, %v3514
        %v3635 = vpack.c.b16 %v3523, %v3519
        %v3636 = vpack.c.b16 %v3524, %v3520
        %v3637 = vpack.c.b16 %v3525, %v3521
        %v3638 = vpack.c.b16 %v3526, %v3522
        %v3639 = vpack.c.b16 %v3531, %v3527
        %v3640 = vpack.c.b16 %v3532, %v3528
        %v3641 = vpack.c.b16 %v3533, %v3529
        %v3642 = vpack.c.b16 %v3534, %v3530
        %v3643 = vpack.c.b16 %v3539, %v3535
        %v3644 = vpack.c.b16 %v3540, %v3536
        %v3645 = vpack.c.b16 %v3541, %v3537
        %v3646 = vpack.c.b16 %v3542, %v3538
        %v3647 = vpack.c.b16 %v3547, %v3543
        %v3648 = vpack.c.b16 %v3548, %v3544
        %v3649 = vpack.c.b16 %v3549, %v3545
        %v3650 = vpack.c.b16 %v3550, %v3546
        %v3651 = vpack.c.b16 %v3555, %v3551
        %v3652 = vpack.c.b16 %v3556, %v3552
        %v3653 = vpack.c.b16 %v3557, %v3553
        %v3654 = vpack.c.b16 %v3558, %v3554
        %v3655 = vpack.c.b16 %v3563, %v3559
        %v3656 = vpack.c.b16 %v3564, %v3560
        %v3657 = vpack.c.b16 %v3565, %v3561
        %v3658 = vpack.c.b16 %v3566, %v3562
        %v3659 = vpack.c.b16 %v3571, %v3567
        %v3660 = vpack.c.b16 %v3572, %v3568
        %v3661 = vpack.c.b16 %v3573, %v3569
        %v3662 = vpack.c.b16 %v3574, %v3570
        %v3663 = vpack.c.b16 %v3579, %v3575
        %v3664 = vpack.c.b16 %v3580, %v3576
        %v3665 = vpack.c.b16 %v3581, %v3577
        %v3666 = vpack.c.b16 %v3582, %v3578
        %v3667 = vpack.c.b16 %v3587, %v3583
        %v3668 = vpack.c.b16 %v3588, %v3584
        %v3669 = vpack.c.b16 %v3589, %v3585
        %v3670 = vpack.c.b16 %v3590, %v3586
        %v3752 = vsel %vm1675, %v3348, 0
        %3754 = vmatpush.bf16.msra.mxu0 %v3619
        %3755 = vmatpush.bf16.msra.mxu0 %v3615
        %3756 = vmatpush.bf16.msra.mxu0 %v3611
        %3757 = vmatpush.bf16.msra.mxu0 %v3607
        %3758 = vmatpush.bf16.msra.mxu0 %v3603
        %3759 = vmatpush.bf16.msra.mxu0 %v3599
        %3760 = vmatpush.bf16.msra.mxu0 %v3595
        %3761 = vmatpush.bf16.msra.mxu0 %v3591
        %3762 = vmatmul.bf16.gmra.mxu0 %v3334
        %v3763 = vpop.f32.mrf.mxu0
        %v3764 = vadd.f32 0.0, %v3763
        %v3765 = vpop.f32.mrf.mxu0
        %3766 = vdwg.mxu0
        %3767 = vmatpush.bf16.msra.mxu0 %v3651
        %3768 = vmatpush.bf16.msra.mxu0 %v3647
        %3769 = vmatpush.bf16.msra.mxu0 %v3643
        %3770 = vmatpush.bf16.msra.mxu0 %v3639
        %3771 = vmatpush.bf16.msra.mxu0 %v3635
        %3772 = vmatpush.bf16.msra.mxu0 %v3631
        %3773 = vmatpush.bf16.msra.mxu0 %v3627
        %3774 = vmatpush.bf16.msra.mxu0 %v3623
        %3775 = vmatmul.bf16.gmra.mxu0 %v3341
        %v3776 = vpop.f32.mrf.mxu0
        %v3777 = vadd.f32 %v3764, %v3776
        %v3778 = vpop.f32.mrf.mxu0
        %3779 = vdwg.mxu0
        %3780 = vmatpush.bf16.msra.mxu0 0
        %3781 = vmatpush.bf16.msra.mxu0 0
        %3782 = vmatpush.bf16.msra.mxu0 0
        %3783 = vmatpush.bf16.msra.mxu0 0
        %3784 = vmatpush.bf16.msra.mxu0 %v3667
        %3785 = vmatpush.bf16.msra.mxu0 %v3663
        %3786 = vmatpush.bf16.msra.mxu0 %v3659
        %3787 = vmatpush.bf16.msra.mxu0 %v3655
        %3788 = vmatmul.bf16.gmra.mxu0 %v3752
        %v3789 = vpop.f32.mrf.mxu0
        %v3790 = vadd.f32 %v3777, %v3789
        %v3791 = vpop.f32.mrf.mxu0
        %3792 = vdwg.mxu0
        %3793 = vmatpush.bf16.msra.mxu0 %v3620
        %3794 = vmatpush.bf16.msra.mxu0 %v3616
        %3795 = vmatpush.bf16.msra.mxu0 %v3612
        %3796 = vmatpush.bf16.msra.mxu0 %v3608
        %3797 = vmatpush.bf16.msra.mxu0 %v3604
        %3798 = vmatpush.bf16.msra.mxu0 %v3600
        %3799 = vmatpush.bf16.msra.mxu0 %v3596
        %3800 = vmatpush.bf16.msra.mxu0 %v3592
        %3801 = vmatmul.bf16.gmra.mxu0 %v3334
        %v3802 = vpop.f32.mrf.mxu0
        %v3803 = vadd.f32 0.0, %v3802
        %v3804 = vpop.f32.mrf.mxu0
        %3805 = vdwg.mxu0
        %3806 = vmatpush.bf16.msra.mxu0 %v3652
        %3807 = vmatpush.bf16.msra.mxu0 %v3648
        %3808 = vmatpush.bf16.msra.mxu0 %v3644
        %3809 = vmatpush.bf16.msra.mxu0 %v3640
        %3810 = vmatpush.bf16.msra.mxu0 %v3636
        %3811 = vmatpush.bf16.msra.mxu0 %v3632
        %3812 = vmatpush.bf16.msra.mxu0 %v3628
        %3813 = vmatpush.bf16.msra.mxu0 %v3624
        %3814 = vmatmul.bf16.gmra.mxu0 %v3341
        %v3815 = vpop.f32.mrf.mxu0
        %v3816 = vadd.f32 %v3803, %v3815
        %v3817 = vpop.f32.mrf.mxu0
        %3818 = vdwg.mxu0
        %3819 = vmatpush.bf16.msra.mxu0 0
        %3820 = vmatpush.bf16.msra.mxu0 0
        %3821 = vmatpush.bf16.msra.mxu0 0
        %3822 = vmatpush.bf16.msra.mxu0 0
        %3823 = vmatpush.bf16.msra.mxu0 %v3668
        %3824 = vmatpush.bf16.msra.mxu0 %v3664
        %3825 = vmatpush.bf16.msra.mxu0 %v3660
        %3826 = vmatpush.bf16.msra.mxu0 %v3656
        %3827 = vmatmul.bf16.gmra.mxu0 %v3752
        %v3828 = vpop.f32.mrf.mxu0
        %v3829 = vadd.f32 %v3816, %v3828
        %v3830 = vpop.f32.mrf.mxu0
        %3831 = vdwg.mxu0
        %3832 = vmatpush.bf16.msra.mxu0 %v3621
        %3833 = vmatpush.bf16.msra.mxu0 %v3617
        %3834 = vmatpush.bf16.msra.mxu0 %v3613
        %3835 = vmatpush.bf16.msra.mxu0 %v3609
        %3836 = vmatpush.bf16.msra.mxu0 %v3605
        %3837 = vmatpush.bf16.msra.mxu0 %v3601
        %3838 = vmatpush.bf16.msra.mxu0 %v3597
        %3839 = vmatpush.bf16.msra.mxu0 %v3593
        %3840 = vmatmul.bf16.gmra.mxu0 %v3334
        %v3841 = vpop.f32.mrf.mxu0
        %v3842 = vadd.f32 0.0, %v3841
        %v3843 = vpop.f32.mrf.mxu0
        %3844 = vdwg.mxu0
        %3845 = vmatpush.bf16.msra.mxu0 %v3653
        %3846 = vmatpush.bf16.msra.mxu0 %v3649
        %3847 = vmatpush.bf16.msra.mxu0 %v3645
        %3848 = vmatpush.bf16.msra.mxu0 %v3641
        %3849 = vmatpush.bf16.msra.mxu0 %v3637
        %3850 = vmatpush.bf16.msra.mxu0 %v3633
        %3851 = vmatpush.bf16.msra.mxu0 %v3629
        %3852 = vmatpush.bf16.msra.mxu0 %v3625
        %3853 = vmatmul.bf16.gmra.mxu0 %v3341
        %v3854 = vpop.f32.mrf.mxu0
        %v3855 = vadd.f32 %v3842, %v3854
        %v3856 = vpop.f32.mrf.mxu0
        %3857 = vdwg.mxu0
        %3858 = vmatpush.bf16.msra.mxu0 0
        %3859 = vmatpush.bf16.msra.mxu0 0
        %3860 = vmatpush.bf16.msra.mxu0 0
        %3861 = vmatpush.bf16.msra.mxu0 0
        %3862 = vmatpush.bf16.msra.mxu0 %v3669
        %3863 = vmatpush.bf16.msra.mxu0 %v3665
        %3864 = vmatpush.bf16.msra.mxu0 %v3661
        %3865 = vmatpush.bf16.msra.mxu0 %v3657
        %3866 = vmatmul.bf16.gmra.mxu0 %v3752
        %v3867 = vpop.f32.mrf.mxu0
        %v3868 = vadd.f32 %v3855, %v3867
        %v3869 = vpop.f32.mrf.mxu0
        %3870 = vdwg.mxu0
        %3871 = vmatpush.bf16.msra.mxu0 %v3622
        %3872 = vmatpush.bf16.msra.mxu0 %v3618
        %3873 = vmatpush.bf16.msra.mxu0 %v3614
        %3874 = vmatpush.bf16.msra.mxu0 %v3610
        %3875 = vmatpush.bf16.msra.mxu0 %v3606
        %3876 = vmatpush.bf16.msra.mxu0 %v3602
        %3877 = vmatpush.bf16.msra.mxu0 %v3598
        %3878 = vmatpush.bf16.msra.mxu0 %v3594
        %3879 = vmatmul.bf16.gmra.mxu0 %v3334
        %v3880 = vpop.f32.mrf.mxu0
        %v3881 = vadd.f32 0.0, %v3880
        %v3882 = vpop.f32.mrf.mxu0
        %3883 = vdwg.mxu0
        %3884 = vmatpush.bf16.msra.mxu0 %v3654
        %3885 = vmatpush.bf16.msra.mxu0 %v3650
        %3886 = vmatpush.bf16.msra.mxu0 %v3646
        %3887 = vmatpush.bf16.msra.mxu0 %v3642
        %3888 = vmatpush.bf16.msra.mxu0 %v3638
        %3889 = vmatpush.bf16.msra.mxu0 %v3634
        %3890 = vmatpush.bf16.msra.mxu0 %v3630
        %3891 = vmatpush.bf16.msra.mxu0 %v3626
        %3892 = vmatmul.bf16.gmra.mxu0 %v3341
        %v3893 = vpop.f32.mrf.mxu0
        %v3894 = vadd.f32 %v3881, %v3893
        %v3895 = vpop.f32.mrf.mxu0
        %3896 = vdwg.mxu0
        %3897 = vmatpush.bf16.msra.mxu0 0
        %3898 = vmatpush.bf16.msra.mxu0 0
        %3899 = vmatpush.bf16.msra.mxu0 0
        %3900 = vmatpush.bf16.msra.mxu0 0
        %3901 = vmatpush.bf16.msra.mxu0 %v3670
        %3902 = vmatpush.bf16.msra.mxu0 %v3666
        %3903 = vmatpush.bf16.msra.mxu0 %v3662
        %3904 = vmatpush.bf16.msra.mxu0 %v3658
        %3905 = vmatmul.bf16.gmra.mxu0 %v3752
        %v3906 = vpop.f32.mrf.mxu0
        %v3907 = vadd.f32 %v3894, %v3906
        %v3908 = vpop.f32.mrf.mxu0
        %3909 = vdwg.mxu0
        %s3910 = scalar_lea.vmem [#allocation12], 1280
        %v3911 = vld [vmem:[%s3910] sm:$0xff]
        %v3912 = vld [vmem:[%s3910 + $0x8] sm:$0xff]
        %v3913 = vld [vmem:[%s3910 + $0x10] sm:$0xff]
        %v3914 = vld [vmem:[%s3910 + $0x18] sm:$0xff]
        %v3915 = vld [vmem:[%s3910 + $0x20] sm:$0xff]
        %v3916 = vld [vmem:[%s3910 + $0x28] sm:$0xff]
        %v3917 = vld [vmem:[%s3910 + $0x30] sm:$0xff]
        %v3918 = vld [vmem:[%s3910 + $0x38] sm:$0xff]
        %v3919 = vld [vmem:[%s3910 + $0x40] sm:$0xff]
        %v3920 = vld [vmem:[%s3910 + $0x48] sm:$0xff]
        %v3921 = vld [vmem:[%s3910 + $0x50] sm:$0xff]
        %v3922 = vld [vmem:[%s3910 + $0x58] sm:$0xff]
        %v3923 = vld [vmem:[%s3910 + $0x60] sm:$0xff]
        %v3924 = vld [vmem:[%s3910 + $0x68] sm:$0xff]
        %v3925 = vld [vmem:[%s3910 + $0x70] sm:$0xff]
        %v3926 = vld [vmem:[%s3910 + $0x78] sm:$0xff]
        %v3927 = vld [vmem:[%s3910 + $0x80] sm:$0xff]
        %v3928 = vld [vmem:[%s3910 + $0x88] sm:$0xff]
        %v3929 = vld [vmem:[%s3910 + $0x90] sm:$0xff]
        %v3930 = vld [vmem:[%s3910 + $0x98] sm:$0xff]
        %v3931 = vld [vmem:[%s3910 + $0xa0] sm:$0xff]
        %v3932 = vld [vmem:[%s3910 + $0xa8] sm:$0xff]
        %v3933 = vld [vmem:[%s3910 + $0xb0] sm:$0xff]
        %v3934 = vld [vmem:[%s3910 + $0xb8] sm:$0xff]
        %v3935 = vld [vmem:[%s3910 + $0xc0] sm:$0xff]
        %v3936 = vld [vmem:[%s3910 + $0xc8] sm:$0xff]
        %v3937 = vld [vmem:[%s3910 + $0xd0] sm:$0xff]
        %v3938 = vld [vmem:[%s3910 + $0xd8] sm:$0xff]
        %v3939 = vld [vmem:[%s3910 + $0xe0] sm:$0xff]
        %v3940 = vld [vmem:[%s3910 + $0xe8] sm:$0xff]
        %v3941 = vld [vmem:[%s3910 + $0xf0] sm:$0xff]
        %v3942 = vld [vmem:[%s3910 + $0xf8] sm:$0xff]
        %v3943 = vld [vmem:[%s3910 + $0x100] sm:$0xff]
        %v3944 = vld [vmem:[%s3910 + $0x108] sm:$0xff]
        %v3945 = vld [vmem:[%s3910 + $0x110] sm:$0xff]
        %v3946 = vld [vmem:[%s3910 + $0x118] sm:$0xff]
        %v3947 = vld [vmem:[%s3910 + $0x120] sm:$0xff]
        %v3948 = vld [vmem:[%s3910 + $0x128] sm:$0xff]
        %v3949 = vld [vmem:[%s3910 + $0x130] sm:$0xff]
        %v3950 = vld [vmem:[%s3910 + $0x138] sm:$0xff]
        %v3951 = vld [vmem:[%s3910 + $0x140] sm:$0xff]
        %v3952 = vld [vmem:[%s3910 + $0x148] sm:$0xff]
        %v3953 = vld [vmem:[%s3910 + $0x150] sm:$0xff]
        %v3954 = vld [vmem:[%s3910 + $0x158] sm:$0xff]
        %v3955 = vld [vmem:[%s3910 + $0x160] sm:$0xff]
        %v3956 = vld [vmem:[%s3910 + $0x168] sm:$0xff]
        %v3957 = vld [vmem:[%s3910 + $0x170] sm:$0xff]
        %v3958 = vld [vmem:[%s3910 + $0x178] sm:$0xff]
        %v3959 = vld [vmem:[%s3910 + $0x180] sm:$0xff]
        %v3960 = vld [vmem:[%s3910 + $0x188] sm:$0xff]
        %v3961 = vld [vmem:[%s3910 + $0x190] sm:$0xff]
        %v3962 = vld [vmem:[%s3910 + $0x198] sm:$0xff]
        %v3963 = vld [vmem:[%s3910 + $0x1a0] sm:$0xff]
        %v3964 = vld [vmem:[%s3910 + $0x1a8] sm:$0xff]
        %v3965 = vld [vmem:[%s3910 + $0x1b0] sm:$0xff]
        %v3966 = vld [vmem:[%s3910 + $0x1b8] sm:$0xff]
        %v3967 = vld [vmem:[%s3910 + $0x1c0] sm:$0xff]
        %v3968 = vld [vmem:[%s3910 + $0x1c8] sm:$0xff]
        %v3969 = vld [vmem:[%s3910 + $0x1d0] sm:$0xff]
        %v3970 = vld [vmem:[%s3910 + $0x1d8] sm:$0xff]
        %v3971 = vld [vmem:[%s3910 + $0x1e0] sm:$0xff]
        %v3972 = vld [vmem:[%s3910 + $0x1e8] sm:$0xff]
        %v3973 = vld [vmem:[%s3910 + $0x1f0] sm:$0xff]
        %v3974 = vld [vmem:[%s3910 + $0x1f8] sm:$0xff]
        %v3975 = vld [vmem:[%s3910 + $0x200] sm:$0xff]
        %v3976 = vld [vmem:[%s3910 + $0x208] sm:$0xff]
        %v3977 = vld [vmem:[%s3910 + $0x210] sm:$0xff]
        %v3978 = vld [vmem:[%s3910 + $0x218] sm:$0xff]
        %v3979 = vld [vmem:[%s3910 + $0x220] sm:$0xff]
        %v3980 = vld [vmem:[%s3910 + $0x228] sm:$0xff]
        %v3981 = vld [vmem:[%s3910 + $0x230] sm:$0xff]
        %v3982 = vld [vmem:[%s3910 + $0x238] sm:$0xff]
        %v3983 = vld [vmem:[%s3910 + $0x240] sm:$0xff]
        %v3984 = vld [vmem:[%s3910 + $0x248] sm:$0xff]
        %v3985 = vld [vmem:[%s3910 + $0x250] sm:$0xff]
        %v3986 = vld [vmem:[%s3910 + $0x258] sm:$0xff]
        %v3987 = vld [vmem:[%s3910 + $0x260] sm:$0xff]
        %v3988 = vld [vmem:[%s3910 + $0x268] sm:$0xff]
        %v3989 = vld [vmem:[%s3910 + $0x270] sm:$0xff]
        %v3990 = vld [vmem:[%s3910 + $0x278] sm:$0xff]
        %s3991 = scalar_lea.vmem [#allocation12], 1920
        %v3992 = vld [vmem:[%s3991] sm:$0xff]
        %v3993 = vld [vmem:[%s3991 + $0x8] sm:$0xff]
        %v3994 = vld [vmem:[%s3991 + $0x10] sm:$0xff]
        %v3995 = vld [vmem:[%s3991 + $0x18] sm:$0xff]
        %v3996 = vld [vmem:[%s3991 + $0x20] sm:$0xff]
        %v3997 = vld [vmem:[%s3991 + $0x28] sm:$0xff]
        %v3998 = vld [vmem:[%s3991 + $0x30] sm:$0xff]
        %v3999 = vld [vmem:[%s3991 + $0x38] sm:$0xff]
        %v4000 = vld [vmem:[%s3991 + $0x40] sm:$0xff]
        %v4001 = vld [vmem:[%s3991 + $0x48] sm:$0xff]
        %v4002 = vld [vmem:[%s3991 + $0x50] sm:$0xff]
        %v4003 = vld [vmem:[%s3991 + $0x58] sm:$0xff]
        %v4004 = vld [vmem:[%s3991 + $0x60] sm:$0xff]
        %v4005 = vld [vmem:[%s3991 + $0x68] sm:$0xff]
        %v4006 = vld [vmem:[%s3991 + $0x70] sm:$0xff]
        %v4007 = vld [vmem:[%s3991 + $0x78] sm:$0xff]
        %v4008 = vld [vmem:[%s3991 + $0x80] sm:$0xff]
        %v4009 = vld [vmem:[%s3991 + $0x88] sm:$0xff]
        %v4010 = vld [vmem:[%s3991 + $0x90] sm:$0xff]
        %v4011 = vld [vmem:[%s3991 + $0x98] sm:$0xff]
        %v4012 = vld [vmem:[%s3991 + $0xa0] sm:$0xff]
        %v4013 = vld [vmem:[%s3991 + $0xa8] sm:$0xff]
        %v4014 = vld [vmem:[%s3991 + $0xb0] sm:$0xff]
        %v4015 = vld [vmem:[%s3991 + $0xb8] sm:$0xff]
        %v4016 = vld [vmem:[%s3991 + $0xc0] sm:$0xff]
        %v4017 = vld [vmem:[%s3991 + $0xc8] sm:$0xff]
        %v4018 = vld [vmem:[%s3991 + $0xd0] sm:$0xff]
        %v4019 = vld [vmem:[%s3991 + $0xd8] sm:$0xff]
        %v4020 = vld [vmem:[%s3991 + $0xe0] sm:$0xff]
        %v4021 = vld [vmem:[%s3991 + $0xe8] sm:$0xff]
        %v4022 = vld [vmem:[%s3991 + $0xf0] sm:$0xff]
        %v4023 = vld [vmem:[%s3991 + $0xf8] sm:$0xff]
        %v4024 = vld [vmem:[%s3991 + $0x100] sm:$0xff]
        %v4025 = vld [vmem:[%s3991 + $0x108] sm:$0xff]
        %v4026 = vld [vmem:[%s3991 + $0x110] sm:$0xff]
        %v4027 = vld [vmem:[%s3991 + $0x118] sm:$0xff]
        %v4028 = vld [vmem:[%s3991 + $0x120] sm:$0xff]
        %v4029 = vld [vmem:[%s3991 + $0x128] sm:$0xff]
        %v4030 = vld [vmem:[%s3991 + $0x130] sm:$0xff]
        %v4031 = vld [vmem:[%s3991 + $0x138] sm:$0xff]
        %v4032 = vld [vmem:[%s3991 + $0x140] sm:$0xff]
        %v4033 = vld [vmem:[%s3991 + $0x148] sm:$0xff]
        %v4034 = vld [vmem:[%s3991 + $0x150] sm:$0xff]
        %v4035 = vld [vmem:[%s3991 + $0x158] sm:$0xff]
        %v4036 = vld [vmem:[%s3991 + $0x160] sm:$0xff]
        %v4037 = vld [vmem:[%s3991 + $0x168] sm:$0xff]
        %v4038 = vld [vmem:[%s3991 + $0x170] sm:$0xff]
        %v4039 = vld [vmem:[%s3991 + $0x178] sm:$0xff]
        %v4040 = vld [vmem:[%s3991 + $0x180] sm:$0xff]
        %v4041 = vld [vmem:[%s3991 + $0x188] sm:$0xff]
        %v4042 = vld [vmem:[%s3991 + $0x190] sm:$0xff]
        %v4043 = vld [vmem:[%s3991 + $0x198] sm:$0xff]
        %v4044 = vld [vmem:[%s3991 + $0x1a0] sm:$0xff]
        %v4045 = vld [vmem:[%s3991 + $0x1a8] sm:$0xff]
        %v4046 = vld [vmem:[%s3991 + $0x1b0] sm:$0xff]
        %v4047 = vld [vmem:[%s3991 + $0x1b8] sm:$0xff]
        %v4048 = vld [vmem:[%s3991 + $0x1c0] sm:$0xff]
        %v4049 = vld [vmem:[%s3991 + $0x1c8] sm:$0xff]
        %v4050 = vld [vmem:[%s3991 + $0x1d0] sm:$0xff]
        %v4051 = vld [vmem:[%s3991 + $0x1d8] sm:$0xff]
        %v4052 = vld [vmem:[%s3991 + $0x1e0] sm:$0xff]
        %v4053 = vld [vmem:[%s3991 + $0x1e8] sm:$0xff]
        %v4054 = vld [vmem:[%s3991 + $0x1f0] sm:$0xff]
        %v4055 = vld [vmem:[%s3991 + $0x1f8] sm:$0xff]
        %v4056 = vld [vmem:[%s3991 + $0x200] sm:$0xff]
        %v4057 = vld [vmem:[%s3991 + $0x208] sm:$0xff]
        %v4058 = vld [vmem:[%s3991 + $0x210] sm:$0xff]
        %v4059 = vld [vmem:[%s3991 + $0x218] sm:$0xff]
        %v4060 = vld [vmem:[%s3991 + $0x220] sm:$0xff]
        %v4061 = vld [vmem:[%s3991 + $0x228] sm:$0xff]
        %v4062 = vld [vmem:[%s3991 + $0x230] sm:$0xff]
        %v4063 = vld [vmem:[%s3991 + $0x238] sm:$0xff]
        %v4064 = vld [vmem:[%s3991 + $0x240] sm:$0xff]
        %v4065 = vld [vmem:[%s3991 + $0x248] sm:$0xff]
        %v4066 = vld [vmem:[%s3991 + $0x250] sm:$0xff]
        %v4067 = vld [vmem:[%s3991 + $0x258] sm:$0xff]
        %v4068 = vld [vmem:[%s3991 + $0x260] sm:$0xff]
        %v4069 = vld [vmem:[%s3991 + $0x268] sm:$0xff]
        %v4070 = vld [vmem:[%s3991 + $0x270] sm:$0xff]
        %v4071 = vld [vmem:[%s3991 + $0x278] sm:$0xff]
        %v4072 = vrot.slane %v3329, 1
        %v4073 = vrot.slane %v3331, 2
        %v4074 = vor.u32 %v4072, %v4073
        %v4075 = vrot.slane %v3336, 1
        %v4076 = vrot.slane %v3338, 2
        %v4077 = vor.u32 %v4075, %v4076
        %v4078 = vrot.slane %v3343, 1
        %v4079 = vrot.slane %v3345, 2
        %v4080 = vor.u32 %v4078, %v4079
        %v4163 = vunpack.c.l.b16 %v3992
        %v4164 = vunpack.c.h.b16 %v3992
        %v4165 = vunpack.c.l.b16 %v3993
        %v4166 = vunpack.c.h.b16 %v3993
        %v4167 = vunpack.c.l.b16 %v3994
        %v4168 = vunpack.c.h.b16 %v3994
        %v4169 = vunpack.c.l.b16 %v3995
        %v4170 = vunpack.c.h.b16 %v3995
        %v4171 = vunpack.c.l.b16 %v3996
        %v4172 = vunpack.c.h.b16 %v3996
        %v4173 = vunpack.c.l.b16 %v3997
        %v4174 = vunpack.c.h.b16 %v3997
        %v4175 = vunpack.c.l.b16 %v3998
        %v4176 = vunpack.c.h.b16 %v3998
        %v4177 = vunpack.c.l.b16 %v3999
        %v4178 = vunpack.c.h.b16 %v3999
        %v4179 = vunpack.c.l.b16 %v4000
        %v4180 = vunpack.c.h.b16 %v4000
        %v4181 = vunpack.c.l.b16 %v4001
        %v4182 = vunpack.c.h.b16 %v4001
        %v4183 = vunpack.c.l.b16 %v4002
        %v4184 = vunpack.c.h.b16 %v4002
        %v4185 = vunpack.c.l.b16 %v4003
        %v4186 = vunpack.c.h.b16 %v4003
        %v4187 = vunpack.c.l.b16 %v4004
        %v4188 = vunpack.c.h.b16 %v4004
        %v4189 = vunpack.c.l.b16 %v4005
        %v4190 = vunpack.c.h.b16 %v4005
        %v4191 = vunpack.c.l.b16 %v4006
        %v4192 = vunpack.c.h.b16 %v4006
        %v4193 = vunpack.c.l.b16 %v4007
        %v4194 = vunpack.c.h.b16 %v4007
        %v4195 = vunpack.c.l.b16 %v4008
        %v4196 = vunpack.c.h.b16 %v4008
        %v4197 = vunpack.c.l.b16 %v4009
        %v4198 = vunpack.c.h.b16 %v4009
        %v4199 = vunpack.c.l.b16 %v4010
        %v4200 = vunpack.c.h.b16 %v4010
        %v4201 = vunpack.c.l.b16 %v4011
        %v4202 = vunpack.c.h.b16 %v4011
        %v4203 = vunpack.c.l.b16 %v4012
        %v4204 = vunpack.c.h.b16 %v4012
        %v4205 = vunpack.c.l.b16 %v4013
        %v4206 = vunpack.c.h.b16 %v4013
        %v4207 = vunpack.c.l.b16 %v4014
        %v4208 = vunpack.c.h.b16 %v4014
        %v4209 = vunpack.c.l.b16 %v4015
        %v4210 = vunpack.c.h.b16 %v4015
        %v4211 = vunpack.c.l.b16 %v4016
        %v4212 = vunpack.c.h.b16 %v4016
        %v4213 = vunpack.c.l.b16 %v4017
        %v4214 = vunpack.c.h.b16 %v4017
        %v4215 = vunpack.c.l.b16 %v4018
        %v4216 = vunpack.c.h.b16 %v4018
        %v4217 = vunpack.c.l.b16 %v4019
        %v4218 = vunpack.c.h.b16 %v4019
        %v4219 = vunpack.c.l.b16 %v4020
        %v4220 = vunpack.c.h.b16 %v4020
        %v4221 = vunpack.c.l.b16 %v4021
        %v4222 = vunpack.c.h.b16 %v4021
        %v4223 = vunpack.c.l.b16 %v4022
        %v4224 = vunpack.c.h.b16 %v4022
        %v4225 = vunpack.c.l.b16 %v4023
        %v4226 = vunpack.c.h.b16 %v4023
        %v4227 = vunpack.c.l.b16 %v4024
        %v4228 = vunpack.c.h.b16 %v4024
        %v4229 = vunpack.c.l.b16 %v4025
        %v4230 = vunpack.c.h.b16 %v4025
        %v4231 = vunpack.c.l.b16 %v4026
        %v4232 = vunpack.c.h.b16 %v4026
        %v4233 = vunpack.c.l.b16 %v4027
        %v4234 = vunpack.c.h.b16 %v4027
        %v4235 = vunpack.c.l.b16 %v4028
        %v4236 = vunpack.c.h.b16 %v4028
        %v4237 = vunpack.c.l.b16 %v4029
        %v4238 = vunpack.c.h.b16 %v4029
        %v4239 = vunpack.c.l.b16 %v4030
        %v4240 = vunpack.c.h.b16 %v4030
        %v4241 = vunpack.c.l.b16 %v4031
        %v4242 = vunpack.c.h.b16 %v4031
        %v4243 = vunpack.c.l.b16 %v4032
        %v4244 = vunpack.c.h.b16 %v4032
        %v4245 = vunpack.c.l.b16 %v4033
        %v4246 = vunpack.c.h.b16 %v4033
        %v4247 = vunpack.c.l.b16 %v4034
        %v4248 = vunpack.c.h.b16 %v4034
        %v4249 = vunpack.c.l.b16 %v4035
        %v4250 = vunpack.c.h.b16 %v4035
        %v4251 = vunpack.c.l.b16 %v4036
        %v4252 = vunpack.c.h.b16 %v4036
        %v4253 = vunpack.c.l.b16 %v4037
        %v4254 = vunpack.c.h.b16 %v4037
        %v4255 = vunpack.c.l.b16 %v4038
        %v4256 = vunpack.c.h.b16 %v4038
        %v4257 = vunpack.c.l.b16 %v4039
        %v4258 = vunpack.c.h.b16 %v4039
        %v4259 = vunpack.c.l.b16 %v4040
        %v4260 = vunpack.c.h.b16 %v4040
        %v4261 = vunpack.c.l.b16 %v4041
        %v4262 = vunpack.c.h.b16 %v4041
        %v4263 = vunpack.c.l.b16 %v4042
        %v4264 = vunpack.c.h.b16 %v4042
        %v4265 = vunpack.c.l.b16 %v4043
        %v4266 = vunpack.c.h.b16 %v4043
        %v4267 = vunpack.c.l.b16 %v4044
        %v4268 = vunpack.c.h.b16 %v4044
        %v4269 = vunpack.c.l.b16 %v4045
        %v4270 = vunpack.c.h.b16 %v4045
        %v4271 = vunpack.c.l.b16 %v4046
        %v4272 = vunpack.c.h.b16 %v4046
        %v4273 = vunpack.c.l.b16 %v4047
        %v4274 = vunpack.c.h.b16 %v4047
        %v4275 = vunpack.c.l.b16 %v4048
        %v4276 = vunpack.c.h.b16 %v4048
        %v4277 = vunpack.c.l.b16 %v4049
        %v4278 = vunpack.c.h.b16 %v4049
        %v4279 = vunpack.c.l.b16 %v4050
        %v4280 = vunpack.c.h.b16 %v4050
        %v4281 = vunpack.c.l.b16 %v4051
        %v4282 = vunpack.c.h.b16 %v4051
        %v4283 = vunpack.c.l.b16 %v4052
        %v4284 = vunpack.c.h.b16 %v4052
        %v4285 = vunpack.c.l.b16 %v4053
        %v4286 = vunpack.c.h.b16 %v4053
        %v4287 = vunpack.c.l.b16 %v4054
        %v4288 = vunpack.c.h.b16 %v4054
        %v4289 = vunpack.c.l.b16 %v4055
        %v4290 = vunpack.c.h.b16 %v4055
        %v4291 = vunpack.c.l.b16 %v4056
        %v4292 = vunpack.c.h.b16 %v4056
        %v4293 = vunpack.c.l.b16 %v4057
        %v4294 = vunpack.c.h.b16 %v4057
        %v4295 = vunpack.c.l.b16 %v4058
        %v4296 = vunpack.c.h.b16 %v4058
        %v4297 = vunpack.c.l.b16 %v4059
        %v4298 = vunpack.c.h.b16 %v4059
        %v4299 = vunpack.c.l.b16 %v4060
        %v4300 = vunpack.c.h.b16 %v4060
        %v4301 = vunpack.c.l.b16 %v4061
        %v4302 = vunpack.c.h.b16 %v4061
        %v4303 = vunpack.c.l.b16 %v4062
        %v4304 = vunpack.c.h.b16 %v4062
        %v4305 = vunpack.c.l.b16 %v4063
        %v4306 = vunpack.c.h.b16 %v4063
        %v4307 = vunpack.c.l.b16 %v4064
        %v4308 = vunpack.c.h.b16 %v4064
        %v4309 = vunpack.c.l.b16 %v4065
        %v4310 = vunpack.c.h.b16 %v4065
        %v4311 = vunpack.c.l.b16 %v4066
        %v4312 = vunpack.c.h.b16 %v4066
        %v4313 = vunpack.c.l.b16 %v4067
        %v4314 = vunpack.c.h.b16 %v4067
        %v4315 = vunpack.c.l.b16 %v4068
        %v4316 = vunpack.c.h.b16 %v4068
        %v4317 = vunpack.c.l.b16 %v4069
        %v4318 = vunpack.c.h.b16 %v4069
        %v4319 = vunpack.c.l.b16 %v4070
        %v4320 = vunpack.c.h.b16 %v4070
        %v4321 = vunpack.c.l.b16 %v4071
        %v4322 = vunpack.c.h.b16 %v4071
        %v4323 = vpack.c.b16 %v4167, %v4163
        %v4324 = vpack.c.b16 %v4168, %v4164
        %v4325 = vpack.c.b16 %v4169, %v4165
        %v4326 = vpack.c.b16 %v4170, %v4166
        %v4327 = vpack.c.b16 %v4175, %v4171
        %v4328 = vpack.c.b16 %v4176, %v4172
        %v4329 = vpack.c.b16 %v4177, %v4173
        %v4330 = vpack.c.b16 %v4178, %v4174
        %v4331 = vpack.c.b16 %v4183, %v4179
        %v4332 = vpack.c.b16 %v4184, %v4180
        %v4333 = vpack.c.b16 %v4185, %v4181
        %v4334 = vpack.c.b16 %v4186, %v4182
        %v4335 = vpack.c.b16 %v4191, %v4187
        %v4336 = vpack.c.b16 %v4192, %v4188
        %v4337 = vpack.c.b16 %v4193, %v4189
        %v4338 = vpack.c.b16 %v4194, %v4190
        %v4339 = vpack.c.b16 %v4199, %v4195
        %v4340 = vpack.c.b16 %v4200, %v4196
        %v4341 = vpack.c.b16 %v4201, %v4197
        %v4342 = vpack.c.b16 %v4202, %v4198
        %v4343 = vpack.c.b16 %v4207, %v4203
        %v4344 = vpack.c.b16 %v4208, %v4204
        %v4345 = vpack.c.b16 %v4209, %v4205
        %v4346 = vpack.c.b16 %v4210, %v4206
        %v4347 = vpack.c.b16 %v4215, %v4211
        %v4348 = vpack.c.b16 %v4216, %v4212
        %v4349 = vpack.c.b16 %v4217, %v4213
        %v4350 = vpack.c.b16 %v4218, %v4214
        %v4351 = vpack.c.b16 %v4223, %v4219
        %v4352 = vpack.c.b16 %v4224, %v4220
        %v4353 = vpack.c.b16 %v4225, %v4221
        %v4354 = vpack.c.b16 %v4226, %v4222
        %v4355 = vpack.c.b16 %v4231, %v4227
        %v4356 = vpack.c.b16 %v4232, %v4228
        %v4357 = vpack.c.b16 %v4233, %v4229
        %v4358 = vpack.c.b16 %v4234, %v4230
        %v4359 = vpack.c.b16 %v4239, %v4235
        %v4360 = vpack.c.b16 %v4240, %v4236
        %v4361 = vpack.c.b16 %v4241, %v4237
        %v4362 = vpack.c.b16 %v4242, %v4238
        %v4363 = vpack.c.b16 %v4247, %v4243
        %v4364 = vpack.c.b16 %v4248, %v4244
        %v4365 = vpack.c.b16 %v4249, %v4245
        %v4366 = vpack.c.b16 %v4250, %v4246
        %v4367 = vpack.c.b16 %v4255, %v4251
        %v4368 = vpack.c.b16 %v4256, %v4252
        %v4369 = vpack.c.b16 %v4257, %v4253
        %v4370 = vpack.c.b16 %v4258, %v4254
        %v4371 = vpack.c.b16 %v4263, %v4259
        %v4372 = vpack.c.b16 %v4264, %v4260
        %v4373 = vpack.c.b16 %v4265, %v4261
        %v4374 = vpack.c.b16 %v4266, %v4262
        %v4375 = vpack.c.b16 %v4271, %v4267
        %v4376 = vpack.c.b16 %v4272, %v4268
        %v4377 = vpack.c.b16 %v4273, %v4269
        %v4378 = vpack.c.b16 %v4274, %v4270
        %v4379 = vpack.c.b16 %v4279, %v4275
        %v4380 = vpack.c.b16 %v4280, %v4276
        %v4381 = vpack.c.b16 %v4281, %v4277
        %v4382 = vpack.c.b16 %v4282, %v4278
        %v4383 = vpack.c.b16 %v4287, %v4283
        %v4384 = vpack.c.b16 %v4288, %v4284
        %v4385 = vpack.c.b16 %v4289, %v4285
        %v4386 = vpack.c.b16 %v4290, %v4286
        %v4387 = vpack.c.b16 %v4295, %v4291
        %v4388 = vpack.c.b16 %v4296, %v4292
        %v4389 = vpack.c.b16 %v4297, %v4293
        %v4390 = vpack.c.b16 %v4298, %v4294
        %v4391 = vpack.c.b16 %v4303, %v4299
        %v4392 = vpack.c.b16 %v4304, %v4300
        %v4393 = vpack.c.b16 %v4305, %v4301
        %v4394 = vpack.c.b16 %v4306, %v4302
        %v4395 = vpack.c.b16 %v4311, %v4307
        %v4396 = vpack.c.b16 %v4312, %v4308
        %v4397 = vpack.c.b16 %v4313, %v4309
        %v4398 = vpack.c.b16 %v4314, %v4310
        %v4399 = vpack.c.b16 %v4319, %v4315
        %v4400 = vpack.c.b16 %v4320, %v4316
        %v4401 = vpack.c.b16 %v4321, %v4317
        %v4402 = vpack.c.b16 %v4322, %v4318
        %v4484 = vsel %vm1675, %v4080, 0
        %4486 = vmatpush.bf16.msra.mxu0 %v4351
        %4487 = vmatpush.bf16.msra.mxu0 %v4347
        %4488 = vmatpush.bf16.msra.mxu0 %v4343
        %4489 = vmatpush.bf16.msra.mxu0 %v4339
        %4490 = vmatpush.bf16.msra.mxu0 %v4335
        %4491 = vmatpush.bf16.msra.mxu0 %v4331
        %4492 = vmatpush.bf16.msra.mxu0 %v4327
        %4493 = vmatpush.bf16.msra.mxu0 %v4323
        %4494 = vmatmul.bf16.gmra.mxu0 %v4074
        %v4495 = vpop.f32.mrf.mxu0
        %v4496 = vadd.f32 0.0, %v4495
        %v4497 = vpop.f32.mrf.mxu0
        %4498 = vdwg.mxu0
        %4499 = vmatpush.bf16.msra.mxu0 %v4383
        %4500 = vmatpush.bf16.msra.mxu0 %v4379
        %4501 = vmatpush.bf16.msra.mxu0 %v4375
        %4502 = vmatpush.bf16.msra.mxu0 %v4371
        %4503 = vmatpush.bf16.msra.mxu0 %v4367
        %4504 = vmatpush.bf16.msra.mxu0 %v4363
        %4505 = vmatpush.bf16.msra.mxu0 %v4359
        %4506 = vmatpush.bf16.msra.mxu0 %v4355
        %4507 = vmatmul.bf16.gmra.mxu0 %v4077
        %v4508 = vpop.f32.mrf.mxu0
        %v4509 = vadd.f32 %v4496, %v4508
        %v4510 = vpop.f32.mrf.mxu0
        %4511 = vdwg.mxu0
        %4512 = vmatpush.bf16.msra.mxu0 0
        %4513 = vmatpush.bf16.msra.mxu0 0
        %4514 = vmatpush.bf16.msra.mxu0 0
        %4515 = vmatpush.bf16.msra.mxu0 0
        %4516 = vmatpush.bf16.msra.mxu0 %v4399
        %4517 = vmatpush.bf16.msra.mxu0 %v4395
        %4518 = vmatpush.bf16.msra.mxu0 %v4391
        %4519 = vmatpush.bf16.msra.mxu0 %v4387
        %4520 = vmatmul.bf16.gmra.mxu0 %v4484
        %v4521 = vpop.f32.mrf.mxu0
        %v4522 = vadd.f32 %v4509, %v4521
        %v4523 = vpop.f32.mrf.mxu0
        %4524 = vdwg.mxu0
        %4525 = vmatpush.bf16.msra.mxu0 %v4352
        %4526 = vmatpush.bf16.msra.mxu0 %v4348
        %4527 = vmatpush.bf16.msra.mxu0 %v4344
        %4528 = vmatpush.bf16.msra.mxu0 %v4340
        %4529 = vmatpush.bf16.msra.mxu0 %v4336
        %4530 = vmatpush.bf16.msra.mxu0 %v4332
        %4531 = vmatpush.bf16.msra.mxu0 %v4328
        %4532 = vmatpush.bf16.msra.mxu0 %v4324
        %4533 = vmatmul.bf16.gmra.mxu0 %v4074
        %v4534 = vpop.f32.mrf.mxu0
        %v4535 = vadd.f32 0.0, %v4534
        %v4536 = vpop.f32.mrf.mxu0
        %4537 = vdwg.mxu0
        %4538 = vmatpush.bf16.msra.mxu0 %v4384
        %4539 = vmatpush.bf16.msra.mxu0 %v4380
        %4540 = vmatpush.bf16.msra.mxu0 %v4376
        %4541 = vmatpush.bf16.msra.mxu0 %v4372
        %4542 = vmatpush.bf16.msra.mxu0 %v4368
        %4543 = vmatpush.bf16.msra.mxu0 %v4364
        %4544 = vmatpush.bf16.msra.mxu0 %v4360
        %4545 = vmatpush.bf16.msra.mxu0 %v4356
        %4546 = vmatmul.bf16.gmra.mxu0 %v4077
        %v4547 = vpop.f32.mrf.mxu0
        %v4548 = vadd.f32 %v4535, %v4547
        %v4549 = vpop.f32.mrf.mxu0
        %4550 = vdwg.mxu0
        %4551 = vmatpush.bf16.msra.mxu0 0
        %4552 = vmatpush.bf16.msra.mxu0 0
        %4553 = vmatpush.bf16.msra.mxu0 0
        %4554 = vmatpush.bf16.msra.mxu0 0
        %4555 = vmatpush.bf16.msra.mxu0 %v4400
        %4556 = vmatpush.bf16.msra.mxu0 %v4396
        %4557 = vmatpush.bf16.msra.mxu0 %v4392
        %4558 = vmatpush.bf16.msra.mxu0 %v4388
        %4559 = vmatmul.bf16.gmra.mxu0 %v4484
        %v4560 = vpop.f32.mrf.mxu0
        %v4561 = vadd.f32 %v4548, %v4560
        %v4562 = vpop.f32.mrf.mxu0
        %4563 = vdwg.mxu0
        %4564 = vmatpush.bf16.msra.mxu0 %v4353
        %4565 = vmatpush.bf16.msra.mxu0 %v4349
        %4566 = vmatpush.bf16.msra.mxu0 %v4345
        %4567 = vmatpush.bf16.msra.mxu0 %v4341
        %4568 = vmatpush.bf16.msra.mxu0 %v4337
        %4569 = vmatpush.bf16.msra.mxu0 %v4333
        %4570 = vmatpush.bf16.msra.mxu0 %v4329
        %4571 = vmatpush.bf16.msra.mxu0 %v4325
        %4572 = vmatmul.bf16.gmra.mxu0 %v4074
        %v4573 = vpop.f32.mrf.mxu0
        %v4574 = vadd.f32 0.0, %v4573
        %v4575 = vpop.f32.mrf.mxu0
        %4576 = vdwg.mxu0
        %4577 = vmatpush.bf16.msra.mxu0 %v4385
        %4578 = vmatpush.bf16.msra.mxu0 %v4381
        %4579 = vmatpush.bf16.msra.mxu0 %v4377
        %4580 = vmatpush.bf16.msra.mxu0 %v4373
        %4581 = vmatpush.bf16.msra.mxu0 %v4369
        %4582 = vmatpush.bf16.msra.mxu0 %v4365
        %4583 = vmatpush.bf16.msra.mxu0 %v4361
        %4584 = vmatpush.bf16.msra.mxu0 %v4357
        %4585 = vmatmul.bf16.gmra.mxu0 %v4077
        %v4586 = vpop.f32.mrf.mxu0
        %v4587 = vadd.f32 %v4574, %v4586
        %v4588 = vpop.f32.mrf.mxu0
        %4589 = vdwg.mxu0
        %4590 = vmatpush.bf16.msra.mxu0 0
        %4591 = vmatpush.bf16.msra.mxu0 0
        %4592 = vmatpush.bf16.msra.mxu0 0
        %4593 = vmatpush.bf16.msra.mxu0 0
        %4594 = vmatpush.bf16.msra.mxu0 %v4401
        %4595 = vmatpush.bf16.msra.mxu0 %v4397
        %4596 = vmatpush.bf16.msra.mxu0 %v4393
        %4597 = vmatpush.bf16.msra.mxu0 %v4389
        %4598 = vmatmul.bf16.gmra.mxu0 %v4484
        %v4599 = vpop.f32.mrf.mxu0
        %v4600 = vadd.f32 %v4587, %v4599
        %v4601 = vpop.f32.mrf.mxu0
        %4602 = vdwg.mxu0
        %4603 = vmatpush.bf16.msra.mxu0 %v4354
        %4604 = vmatpush.bf16.msra.mxu0 %v4350
        %4605 = vmatpush.bf16.msra.mxu0 %v4346
        %4606 = vmatpush.bf16.msra.mxu0 %v4342
        %4607 = vmatpush.bf16.msra.mxu0 %v4338
        %4608 = vmatpush.bf16.msra.mxu0 %v4334
        %4609 = vmatpush.bf16.msra.mxu0 %v4330
        %4610 = vmatpush.bf16.msra.mxu0 %v4326
        %4611 = vmatmul.bf16.gmra.mxu0 %v4074
        %v4612 = vpop.f32.mrf.mxu0
        %v4613 = vadd.f32 0.0, %v4612
        %v4614 = vpop.f32.mrf.mxu0
        %4615 = vdwg.mxu0
        %4616 = vmatpush.bf16.msra.mxu0 %v4386
        %4617 = vmatpush.bf16.msra.mxu0 %v4382
        %4618 = vmatpush.bf16.msra.mxu0 %v4378
        %4619 = vmatpush.bf16.msra.mxu0 %v4374
        %4620 = vmatpush.bf16.msra.mxu0 %v4370
        %4621 = vmatpush.bf16.msra.mxu0 %v4366
        %4622 = vmatpush.bf16.msra.mxu0 %v4362
        %4623 = vmatpush.bf16.msra.mxu0 %v4358
        %4624 = vmatmul.bf16.gmra.mxu0 %v4077
        %v4625 = vpop.f32.mrf.mxu0
        %v4626 = vadd.f32 %v4613, %v4625
        %v4627 = vpop.f32.mrf.mxu0
        %4628 = vdwg.mxu0
        %4629 = vmatpush.bf16.msra.mxu0 0
        %4630 = vmatpush.bf16.msra.mxu0 0
        %4631 = vmatpush.bf16.msra.mxu0 0
        %4632 = vmatpush.bf16.msra.mxu0 0
        %4633 = vmatpush.bf16.msra.mxu0 %v4402
        %4634 = vmatpush.bf16.msra.mxu0 %v4398
        %4635 = vmatpush.bf16.msra.mxu0 %v4394
        %4636 = vmatpush.bf16.msra.mxu0 %v4390
        %4637 = vmatmul.bf16.gmra.mxu0 %v4484
        %v4638 = vpop.f32.mrf.mxu0
        %v4639 = vadd.f32 %v4626, %v4638
        %v4640 = vpop.f32.mrf.mxu0
        %4641 = vdwg.mxu0
        %s4642 = scalar_lea.vmem [#allocation12], 2560
        %v4643 = vld [vmem:[%s4642] sm:$0xff]
        %v4644 = vld [vmem:[%s4642 + $0x8] sm:$0xff]
        %v4645 = vld [vmem:[%s4642 + $0x10] sm:$0xff]
        %v4646 = vld [vmem:[%s4642 + $0x18] sm:$0xff]
        %v4647 = vld [vmem:[%s4642 + $0x20] sm:$0xff]
        %v4648 = vld [vmem:[%s4642 + $0x28] sm:$0xff]
        %v4649 = vld [vmem:[%s4642 + $0x30] sm:$0xff]
        %v4650 = vld [vmem:[%s4642 + $0x38] sm:$0xff]
        %v4651 = vld [vmem:[%s4642 + $0x40] sm:$0xff]
        %v4652 = vld [vmem:[%s4642 + $0x48] sm:$0xff]
        %v4653 = vld [vmem:[%s4642 + $0x50] sm:$0xff]
        %v4654 = vld [vmem:[%s4642 + $0x58] sm:$0xff]
        %v4655 = vld [vmem:[%s4642 + $0x60] sm:$0xff]
        %v4656 = vld [vmem:[%s4642 + $0x68] sm:$0xff]
        %v4657 = vld [vmem:[%s4642 + $0x70] sm:$0xff]
        %v4658 = vld [vmem:[%s4642 + $0x78] sm:$0xff]
        %v4659 = vld [vmem:[%s4642 + $0x80] sm:$0xff]
        %v4660 = vld [vmem:[%s4642 + $0x88] sm:$0xff]
        %v4661 = vld [vmem:[%s4642 + $0x90] sm:$0xff]
        %v4662 = vld [vmem:[%s4642 + $0x98] sm:$0xff]
        %v4663 = vld [vmem:[%s4642 + $0xa0] sm:$0xff]
        %v4664 = vld [vmem:[%s4642 + $0xa8] sm:$0xff]
        %v4665 = vld [vmem:[%s4642 + $0xb0] sm:$0xff]
        %v4666 = vld [vmem:[%s4642 + $0xb8] sm:$0xff]
        %v4667 = vld [vmem:[%s4642 + $0xc0] sm:$0xff]
        %v4668 = vld [vmem:[%s4642 + $0xc8] sm:$0xff]
        %v4669 = vld [vmem:[%s4642 + $0xd0] sm:$0xff]
        %v4670 = vld [vmem:[%s4642 + $0xd8] sm:$0xff]
        %v4671 = vld [vmem:[%s4642 + $0xe0] sm:$0xff]
        %v4672 = vld [vmem:[%s4642 + $0xe8] sm:$0xff]
        %v4673 = vld [vmem:[%s4642 + $0xf0] sm:$0xff]
        %v4674 = vld [vmem:[%s4642 + $0xf8] sm:$0xff]
        %v4675 = vld [vmem:[%s4642 + $0x100] sm:$0xff]
        %v4676 = vld [vmem:[%s4642 + $0x108] sm:$0xff]
        %v4677 = vld [vmem:[%s4642 + $0x110] sm:$0xff]
        %v4678 = vld [vmem:[%s4642 + $0x118] sm:$0xff]
        %v4679 = vld [vmem:[%s4642 + $0x120] sm:$0xff]
        %v4680 = vld [vmem:[%s4642 + $0x128] sm:$0xff]
        %v4681 = vld [vmem:[%s4642 + $0x130] sm:$0xff]
        %v4682 = vld [vmem:[%s4642 + $0x138] sm:$0xff]
        %v4683 = vld [vmem:[%s4642 + $0x140] sm:$0xff]
        %v4684 = vld [vmem:[%s4642 + $0x148] sm:$0xff]
        %v4685 = vld [vmem:[%s4642 + $0x150] sm:$0xff]
        %v4686 = vld [vmem:[%s4642 + $0x158] sm:$0xff]
        %v4687 = vld [vmem:[%s4642 + $0x160] sm:$0xff]
        %v4688 = vld [vmem:[%s4642 + $0x168] sm:$0xff]
        %v4689 = vld [vmem:[%s4642 + $0x170] sm:$0xff]
        %v4690 = vld [vmem:[%s4642 + $0x178] sm:$0xff]
        %v4691 = vld [vmem:[%s4642 + $0x180] sm:$0xff]
        %v4692 = vld [vmem:[%s4642 + $0x188] sm:$0xff]
        %v4693 = vld [vmem:[%s4642 + $0x190] sm:$0xff]
        %v4694 = vld [vmem:[%s4642 + $0x198] sm:$0xff]
        %v4695 = vld [vmem:[%s4642 + $0x1a0] sm:$0xff]
        %v4696 = vld [vmem:[%s4642 + $0x1a8] sm:$0xff]
        %v4697 = vld [vmem:[%s4642 + $0x1b0] sm:$0xff]
        %v4698 = vld [vmem:[%s4642 + $0x1b8] sm:$0xff]
        %v4699 = vld [vmem:[%s4642 + $0x1c0] sm:$0xff]
        %v4700 = vld [vmem:[%s4642 + $0x1c8] sm:$0xff]
        %v4701 = vld [vmem:[%s4642 + $0x1d0] sm:$0xff]
        %v4702 = vld [vmem:[%s4642 + $0x1d8] sm:$0xff]
        %v4703 = vld [vmem:[%s4642 + $0x1e0] sm:$0xff]
        %v4704 = vld [vmem:[%s4642 + $0x1e8] sm:$0xff]
        %v4705 = vld [vmem:[%s4642 + $0x1f0] sm:$0xff]
        %v4706 = vld [vmem:[%s4642 + $0x1f8] sm:$0xff]
        %v4707 = vld [vmem:[%s4642 + $0x200] sm:$0xff]
        %v4708 = vld [vmem:[%s4642 + $0x208] sm:$0xff]
        %v4709 = vld [vmem:[%s4642 + $0x210] sm:$0xff]
        %v4710 = vld [vmem:[%s4642 + $0x218] sm:$0xff]
        %v4711 = vld [vmem:[%s4642 + $0x220] sm:$0xff]
        %v4712 = vld [vmem:[%s4642 + $0x228] sm:$0xff]
        %v4713 = vld [vmem:[%s4642 + $0x230] sm:$0xff]
        %v4714 = vld [vmem:[%s4642 + $0x238] sm:$0xff]
        %v4715 = vld [vmem:[%s4642 + $0x240] sm:$0xff]
        %v4716 = vld [vmem:[%s4642 + $0x248] sm:$0xff]
        %v4717 = vld [vmem:[%s4642 + $0x250] sm:$0xff]
        %v4718 = vld [vmem:[%s4642 + $0x258] sm:$0xff]
        %v4719 = vld [vmem:[%s4642 + $0x260] sm:$0xff]
        %v4720 = vld [vmem:[%s4642 + $0x268] sm:$0xff]
        %v4721 = vld [vmem:[%s4642 + $0x270] sm:$0xff]
        %v4722 = vld [vmem:[%s4642 + $0x278] sm:$0xff]
        %v4723 = vrot.slane %v3325, 2
        %v4724 = vrot.slane %v3326, 2
        %v4725 = vrot.slane %v3327, 2
        %v4808 = vunpack.c.l.b16 %v4643
        %v4809 = vunpack.c.h.b16 %v4643
        %v4810 = vunpack.c.l.b16 %v4644
        %v4811 = vunpack.c.h.b16 %v4644
        %v4812 = vunpack.c.l.b16 %v4645
        %v4813 = vunpack.c.h.b16 %v4645
        %v4814 = vunpack.c.l.b16 %v4646
        %v4815 = vunpack.c.h.b16 %v4646
        %v4816 = vunpack.c.l.b16 %v4647
        %v4817 = vunpack.c.h.b16 %v4647
        %v4818 = vunpack.c.l.b16 %v4648
        %v4819 = vunpack.c.h.b16 %v4648
        %v4820 = vunpack.c.l.b16 %v4649
        %v4821 = vunpack.c.h.b16 %v4649
        %v4822 = vunpack.c.l.b16 %v4650
        %v4823 = vunpack.c.h.b16 %v4650
        %v4824 = vunpack.c.l.b16 %v4651
        %v4825 = vunpack.c.h.b16 %v4651
        %v4826 = vunpack.c.l.b16 %v4652
        %v4827 = vunpack.c.h.b16 %v4652
        %v4828 = vunpack.c.l.b16 %v4653
        %v4829 = vunpack.c.h.b16 %v4653
        %v4830 = vunpack.c.l.b16 %v4654
        %v4831 = vunpack.c.h.b16 %v4654
        %v4832 = vunpack.c.l.b16 %v4655
        %v4833 = vunpack.c.h.b16 %v4655
        %v4834 = vunpack.c.l.b16 %v4656
        %v4835 = vunpack.c.h.b16 %v4656
        %v4836 = vunpack.c.l.b16 %v4657
        %v4837 = vunpack.c.h.b16 %v4657
        %v4838 = vunpack.c.l.b16 %v4658
        %v4839 = vunpack.c.h.b16 %v4658
        %v4840 = vunpack.c.l.b16 %v4659
        %v4841 = vunpack.c.h.b16 %v4659
        %v4842 = vunpack.c.l.b16 %v4660
        %v4843 = vunpack.c.h.b16 %v4660
        %v4844 = vunpack.c.l.b16 %v4661
        %v4845 = vunpack.c.h.b16 %v4661
        %v4846 = vunpack.c.l.b16 %v4662
        %v4847 = vunpack.c.h.b16 %v4662
        %v4848 = vunpack.c.l.b16 %v4663
        %v4849 = vunpack.c.h.b16 %v4663
        %v4850 = vunpack.c.l.b16 %v4664
        %v4851 = vunpack.c.h.b16 %v4664
        %v4852 = vunpack.c.l.b16 %v4665
        %v4853 = vunpack.c.h.b16 %v4665
        %v4854 = vunpack.c.l.b16 %v4666
        %v4855 = vunpack.c.h.b16 %v4666
        %v4856 = vunpack.c.l.b16 %v4667
        %v4857 = vunpack.c.h.b16 %v4667
        %v4858 = vunpack.c.l.b16 %v4668
        %v4859 = vunpack.c.h.b16 %v4668
        %v4860 = vunpack.c.l.b16 %v4669
        %v4861 = vunpack.c.h.b16 %v4669
        %v4862 = vunpack.c.l.b16 %v4670
        %v4863 = vunpack.c.h.b16 %v4670
        %v4864 = vunpack.c.l.b16 %v4671
        %v4865 = vunpack.c.h.b16 %v4671
        %v4866 = vunpack.c.l.b16 %v4672
        %v4867 = vunpack.c.h.b16 %v4672
        %v4868 = vunpack.c.l.b16 %v4673
        %v4869 = vunpack.c.h.b16 %v4673
        %v4870 = vunpack.c.l.b16 %v4674
        %v4871 = vunpack.c.h.b16 %v4674
        %v4872 = vunpack.c.l.b16 %v4675
        %v4873 = vunpack.c.h.b16 %v4675
        %v4874 = vunpack.c.l.b16 %v4676
        %v4875 = vunpack.c.h.b16 %v4676
        %v4876 = vunpack.c.l.b16 %v4677
        %v4877 = vunpack.c.h.b16 %v4677
        %v4878 = vunpack.c.l.b16 %v4678
        %v4879 = vunpack.c.h.b16 %v4678
        %v4880 = vunpack.c.l.b16 %v4679
        %v4881 = vunpack.c.h.b16 %v4679
        %v4882 = vunpack.c.l.b16 %v4680
        %v4883 = vunpack.c.h.b16 %v4680
        %v4884 = vunpack.c.l.b16 %v4681
        %v4885 = vunpack.c.h.b16 %v4681
        %v4886 = vunpack.c.l.b16 %v4682
        %v4887 = vunpack.c.h.b16 %v4682
        %v4888 = vunpack.c.l.b16 %v4683
        %v4889 = vunpack.c.h.b16 %v4683
        %v4890 = vunpack.c.l.b16 %v4684
        %v4891 = vunpack.c.h.b16 %v4684
        %v4892 = vunpack.c.l.b16 %v4685
        %v4893 = vunpack.c.h.b16 %v4685
        %v4894 = vunpack.c.l.b16 %v4686
        %v4895 = vunpack.c.h.b16 %v4686
        %v4896 = vunpack.c.l.b16 %v4687
        %v4897 = vunpack.c.h.b16 %v4687
        %v4898 = vunpack.c.l.b16 %v4688
        %v4899 = vunpack.c.h.b16 %v4688
        %v4900 = vunpack.c.l.b16 %v4689
        %v4901 = vunpack.c.h.b16 %v4689
        %v4902 = vunpack.c.l.b16 %v4690
        %v4903 = vunpack.c.h.b16 %v4690
        %v4904 = vunpack.c.l.b16 %v4691
        %v4905 = vunpack.c.h.b16 %v4691
        %v4906 = vunpack.c.l.b16 %v4692
        %v4907 = vunpack.c.h.b16 %v4692
        %v4908 = vunpack.c.l.b16 %v4693
        %v4909 = vunpack.c.h.b16 %v4693
        %v4910 = vunpack.c.l.b16 %v4694
        %v4911 = vunpack.c.h.b16 %v4694
        %v4912 = vunpack.c.l.b16 %v4695
        %v4913 = vunpack.c.h.b16 %v4695
        %v4914 = vunpack.c.l.b16 %v4696
        %v4915 = vunpack.c.h.b16 %v4696
        %v4916 = vunpack.c.l.b16 %v4697
        %v4917 = vunpack.c.h.b16 %v4697
        %v4918 = vunpack.c.l.b16 %v4698
        %v4919 = vunpack.c.h.b16 %v4698
        %v4920 = vunpack.c.l.b16 %v4699
        %v4921 = vunpack.c.h.b16 %v4699
        %v4922 = vunpack.c.l.b16 %v4700
        %v4923 = vunpack.c.h.b16 %v4700
        %v4924 = vunpack.c.l.b16 %v4701
        %v4925 = vunpack.c.h.b16 %v4701
        %v4926 = vunpack.c.l.b16 %v4702
        %v4927 = vunpack.c.h.b16 %v4702
        %v4928 = vunpack.c.l.b16 %v4703
        %v4929 = vunpack.c.h.b16 %v4703
        %v4930 = vunpack.c.l.b16 %v4704
        %v4931 = vunpack.c.h.b16 %v4704
        %v4932 = vunpack.c.l.b16 %v4705
        %v4933 = vunpack.c.h.b16 %v4705
        %v4934 = vunpack.c.l.b16 %v4706
        %v4935 = vunpack.c.h.b16 %v4706
        %v4936 = vunpack.c.l.b16 %v4707
        %v4937 = vunpack.c.h.b16 %v4707
        %v4938 = vunpack.c.l.b16 %v4708
        %v4939 = vunpack.c.h.b16 %v4708
        %v4940 = vunpack.c.l.b16 %v4709
        %v4941 = vunpack.c.h.b16 %v4709
        %v4942 = vunpack.c.l.b16 %v4710
        %v4943 = vunpack.c.h.b16 %v4710
        %v4944 = vunpack.c.l.b16 %v4711
        %v4945 = vunpack.c.h.b16 %v4711
        %v4946 = vunpack.c.l.b16 %v4712
        %v4947 = vunpack.c.h.b16 %v4712
        %v4948 = vunpack.c.l.b16 %v4713
        %v4949 = vunpack.c.h.b16 %v4713
        %v4950 = vunpack.c.l.b16 %v4714
        %v4951 = vunpack.c.h.b16 %v4714
        %v4952 = vunpack.c.l.b16 %v4715
        %v4953 = vunpack.c.h.b16 %v4715
        %v4954 = vunpack.c.l.b16 %v4716
        %v4955 = vunpack.c.h.b16 %v4716
        %v4956 = vunpack.c.l.b16 %v4717
        %v4957 = vunpack.c.h.b16 %v4717
        %v4958 = vunpack.c.l.b16 %v4718
        %v4959 = vunpack.c.h.b16 %v4718
        %v4960 = vunpack.c.l.b16 %v4719
        %v4961 = vunpack.c.h.b16 %v4719
        %v4962 = vunpack.c.l.b16 %v4720
        %v4963 = vunpack.c.h.b16 %v4720
        %v4964 = vunpack.c.l.b16 %v4721
        %v4965 = vunpack.c.h.b16 %v4721
        %v4966 = vunpack.c.l.b16 %v4722
        %v4967 = vunpack.c.h.b16 %v4722
        %v4968 = vpack.c.b16 %v4812, %v4808
        %v4969 = vpack.c.b16 %v4813, %v4809
        %v4970 = vpack.c.b16 %v4814, %v4810
        %v4971 = vpack.c.b16 %v4815, %v4811
        %v4972 = vpack.c.b16 %v4820, %v4816
        %v4973 = vpack.c.b16 %v4821, %v4817
        %v4974 = vpack.c.b16 %v4822, %v4818
        %v4975 = vpack.c.b16 %v4823, %v4819
        %v4976 = vpack.c.b16 %v4828, %v4824
        %v4977 = vpack.c.b16 %v4829, %v4825
        %v4978 = vpack.c.b16 %v4830, %v4826
        %v4979 = vpack.c.b16 %v4831, %v4827
        %v4980 = vpack.c.b16 %v4836, %v4832
        %v4981 = vpack.c.b16 %v4837, %v4833
        %v4982 = vpack.c.b16 %v4838, %v4834
        %v4983 = vpack.c.b16 %v4839, %v4835
        %v4984 = vpack.c.b16 %v4844, %v4840
        %v4985 = vpack.c.b16 %v4845, %v4841
        %v4986 = vpack.c.b16 %v4846, %v4842
        %v4987 = vpack.c.b16 %v4847, %v4843
        %v4988 = vpack.c.b16 %v4852, %v4848
        %v4989 = vpack.c.b16 %v4853, %v4849
        %v4990 = vpack.c.b16 %v4854, %v4850
        %v4991 = vpack.c.b16 %v4855, %v4851
        %v4992 = vpack.c.b16 %v4860, %v4856
        %v4993 = vpack.c.b16 %v4861, %v4857
        %v4994 = vpack.c.b16 %v4862, %v4858
        %v4995 = vpack.c.b16 %v4863, %v4859
        %v4996 = vpack.c.b16 %v4868, %v4864
        %v4997 = vpack.c.b16 %v4869, %v4865
        %v4998 = vpack.c.b16 %v4870, %v4866
        %v4999 = vpack.c.b16 %v4871, %v4867
        %v5000 = vpack.c.b16 %v4876, %v4872
        %v5001 = vpack.c.b16 %v4877, %v4873
        %v5002 = vpack.c.b16 %v4878, %v4874
        %v5003 = vpack.c.b16 %v4879, %v4875
        %v5004 = vpack.c.b16 %v4884, %v4880
        %v5005 = vpack.c.b16 %v4885, %v4881
        %v5006 = vpack.c.b16 %v4886, %v4882
        %v5007 = vpack.c.b16 %v4887, %v4883
        %v5008 = vpack.c.b16 %v4892, %v4888
        %v5009 = vpack.c.b16 %v4893, %v4889
        %v5010 = vpack.c.b16 %v4894, %v4890
        %v5011 = vpack.c.b16 %v4895, %v4891
        %v5012 = vpack.c.b16 %v4900, %v4896
        %v5013 = vpack.c.b16 %v4901, %v4897
        %v5014 = vpack.c.b16 %v4902, %v4898
        %v5015 = vpack.c.b16 %v4903, %v4899
        %v5016 = vpack.c.b16 %v4908, %v4904
        %v5017 = vpack.c.b16 %v4909, %v4905
        %v5018 = vpack.c.b16 %v4910, %v4906
        %v5019 = vpack.c.b16 %v4911, %v4907
        %v5020 = vpack.c.b16 %v4916, %v4912
        %v5021 = vpack.c.b16 %v4917, %v4913
        %v5022 = vpack.c.b16 %v4918, %v4914
        %v5023 = vpack.c.b16 %v4919, %v4915
        %v5024 = vpack.c.b16 %v4924, %v4920
        %v5025 = vpack.c.b16 %v4925, %v4921
        %v5026 = vpack.c.b16 %v4926, %v4922
        %v5027 = vpack.c.b16 %v4927, %v4923
        %v5028 = vpack.c.b16 %v4932, %v4928
        %v5029 = vpack.c.b16 %v4933, %v4929
        %v5030 = vpack.c.b16 %v4934, %v4930
        %v5031 = vpack.c.b16 %v4935, %v4931
        %v5032 = vpack.c.b16 %v4940, %v4936
        %v5033 = vpack.c.b16 %v4941, %v4937
        %v5034 = vpack.c.b16 %v4942, %v4938
        %v5035 = vpack.c.b16 %v4943, %v4939
        %v5036 = vpack.c.b16 %v4948, %v4944
        %v5037 = vpack.c.b16 %v4949, %v4945
        %v5038 = vpack.c.b16 %v4950, %v4946
        %v5039 = vpack.c.b16 %v4951, %v4947
        %v5040 = vpack.c.b16 %v4956, %v4952
        %v5041 = vpack.c.b16 %v4957, %v4953
        %v5042 = vpack.c.b16 %v4958, %v4954
        %v5043 = vpack.c.b16 %v4959, %v4955
        %v5044 = vpack.c.b16 %v4964, %v4960
        %v5045 = vpack.c.b16 %v4965, %v4961
        %v5046 = vpack.c.b16 %v4966, %v4962
        %v5047 = vpack.c.b16 %v4967, %v4963
        %v5129 = vsel %vm1675, %v4725, 0
        %5131 = vmatpush.bf16.msra.mxu0 %v4996
        %5132 = vmatpush.bf16.msra.mxu0 %v4992
        %5133 = vmatpush.bf16.msra.mxu0 %v4988
        %5134 = vmatpush.bf16.msra.mxu0 %v4984
        %5135 = vmatpush.bf16.msra.mxu0 %v4980
        %5136 = vmatpush.bf16.msra.mxu0 %v4976
        %5137 = vmatpush.bf16.msra.mxu0 %v4972
        %5138 = vmatpush.bf16.msra.mxu0 %v4968
        %5139 = vmatmul.bf16.gmra.mxu0 %v4723
        %v5140 = vpop.f32.mrf.mxu0
        %v5141 = vadd.f32 0.0, %v5140
        %v5142 = vpop.f32.mrf.mxu0
        %5143 = vdwg.mxu0
        %5144 = vmatpush.bf16.msra.mxu0 %v5028
        %5145 = vmatpush.bf16.msra.mxu0 %v5024
        %5146 = vmatpush.bf16.msra.mxu0 %v5020
        %5147 = vmatpush.bf16.msra.mxu0 %v5016
        %5148 = vmatpush.bf16.msra.mxu0 %v5012
        %5149 = vmatpush.bf16.msra.mxu0 %v5008
        %5150 = vmatpush.bf16.msra.mxu0 %v5004
        %5151 = vmatpush.bf16.msra.mxu0 %v5000
        %5152 = vmatmul.bf16.gmra.mxu0 %v4724
        %v5153 = vpop.f32.mrf.mxu0
        %v5154 = vadd.f32 %v5141, %v5153
        %v5155 = vpop.f32.mrf.mxu0
        %5156 = vdwg.mxu0
        %5157 = vmatpush.bf16.msra.mxu0 0
        %5158 = vmatpush.bf16.msra.mxu0 0
        %5159 = vmatpush.bf16.msra.mxu0 0
        %5160 = vmatpush.bf16.msra.mxu0 0
        %5161 = vmatpush.bf16.msra.mxu0 %v5044
        %5162 = vmatpush.bf16.msra.mxu0 %v5040
        %5163 = vmatpush.bf16.msra.mxu0 %v5036
        %5164 = vmatpush.bf16.msra.mxu0 %v5032
        %5165 = vmatmul.bf16.gmra.mxu0 %v5129
        %v5166 = vpop.f32.mrf.mxu0
        %v5167 = vadd.f32 %v5154, %v5166
        %v5168 = vpop.f32.mrf.mxu0
        %5169 = vdwg.mxu0
        %5170 = vmatpush.bf16.msra.mxu0 %v4997
        %5171 = vmatpush.bf16.msra.mxu0 %v4993
        %5172 = vmatpush.bf16.msra.mxu0 %v4989
        %5173 = vmatpush.bf16.msra.mxu0 %v4985
        %5174 = vmatpush.bf16.msra.mxu0 %v4981
        %5175 = vmatpush.bf16.msra.mxu0 %v4977
        %5176 = vmatpush.bf16.msra.mxu0 %v4973
        %5177 = vmatpush.bf16.msra.mxu0 %v4969
        %5178 = vmatmul.bf16.gmra.mxu0 %v4723
        %v5179 = vpop.f32.mrf.mxu0
        %v5180 = vadd.f32 0.0, %v5179
        %v5181 = vpop.f32.mrf.mxu0
        %5182 = vdwg.mxu0
        %5183 = vmatpush.bf16.msra.mxu0 %v5029
        %5184 = vmatpush.bf16.msra.mxu0 %v5025
        %5185 = vmatpush.bf16.msra.mxu0 %v5021
        %5186 = vmatpush.bf16.msra.mxu0 %v5017
        %5187 = vmatpush.bf16.msra.mxu0 %v5013
        %5188 = vmatpush.bf16.msra.mxu0 %v5009
        %5189 = vmatpush.bf16.msra.mxu0 %v5005
        %5190 = vmatpush.bf16.msra.mxu0 %v5001
        %5191 = vmatmul.bf16.gmra.mxu0 %v4724
        %v5192 = vpop.f32.mrf.mxu0
        %v5193 = vadd.f32 %v5180, %v5192
        %v5194 = vpop.f32.mrf.mxu0
        %5195 = vdwg.mxu0
        %5196 = vmatpush.bf16.msra.mxu0 0
        %5197 = vmatpush.bf16.msra.mxu0 0
        %5198 = vmatpush.bf16.msra.mxu0 0
        %5199 = vmatpush.bf16.msra.mxu0 0
        %5200 = vmatpush.bf16.msra.mxu0 %v5045
        %5201 = vmatpush.bf16.msra.mxu0 %v5041
        %5202 = vmatpush.bf16.msra.mxu0 %v5037
        %5203 = vmatpush.bf16.msra.mxu0 %v5033
        %5204 = vmatmul.bf16.gmra.mxu0 %v5129
        %v5205 = vpop.f32.mrf.mxu0
        %v5206 = vadd.f32 %v5193, %v5205
        %v5207 = vpop.f32.mrf.mxu0
        %5208 = vdwg.mxu0
        %5209 = vmatpush.bf16.msra.mxu0 %v4998
        %5210 = vmatpush.bf16.msra.mxu0 %v4994
        %5211 = vmatpush.bf16.msra.mxu0 %v4990
        %5212 = vmatpush.bf16.msra.mxu0 %v4986
        %5213 = vmatpush.bf16.msra.mxu0 %v4982
        %5214 = vmatpush.bf16.msra.mxu0 %v4978
        %5215 = vmatpush.bf16.msra.mxu0 %v4974
        %5216 = vmatpush.bf16.msra.mxu0 %v4970
        %5217 = vmatmul.bf16.gmra.mxu0 %v4723
        %v5218 = vpop.f32.mrf.mxu0
        %v5219 = vadd.f32 0.0, %v5218
        %v5220 = vpop.f32.mrf.mxu0
        %5221 = vdwg.mxu0
        %5222 = vmatpush.bf16.msra.mxu0 %v5030
        %5223 = vmatpush.bf16.msra.mxu0 %v5026
        %5224 = vmatpush.bf16.msra.mxu0 %v5022
        %5225 = vmatpush.bf16.msra.mxu0 %v5018
        %5226 = vmatpush.bf16.msra.mxu0 %v5014
        %5227 = vmatpush.bf16.msra.mxu0 %v5010
        %5228 = vmatpush.bf16.msra.mxu0 %v5006
        %5229 = vmatpush.bf16.msra.mxu0 %v5002
        %5230 = vmatmul.bf16.gmra.mxu0 %v4724
        %v5231 = vpop.f32.mrf.mxu0
        %v5232 = vadd.f32 %v5219, %v5231
        %v5233 = vpop.f32.mrf.mxu0
        %5234 = vdwg.mxu0
        %5235 = vmatpush.bf16.msra.mxu0 0
        %5236 = vmatpush.bf16.msra.mxu0 0
        %5237 = vmatpush.bf16.msra.mxu0 0
        %5238 = vmatpush.bf16.msra.mxu0 0
        %5239 = vmatpush.bf16.msra.mxu0 %v5046
        %5240 = vmatpush.bf16.msra.mxu0 %v5042
        %5241 = vmatpush.bf16.msra.mxu0 %v5038
        %5242 = vmatpush.bf16.msra.mxu0 %v5034
        %5243 = vmatmul.bf16.gmra.mxu0 %v5129
        %v5244 = vpop.f32.mrf.mxu0
        %v5245 = vadd.f32 %v5232, %v5244
        %v5246 = vpop.f32.mrf.mxu0
        %5247 = vdwg.mxu0
        %5248 = vmatpush.bf16.msra.mxu0 %v4999
        %5249 = vmatpush.bf16.msra.mxu0 %v4995
        %5250 = vmatpush.bf16.msra.mxu0 %v4991
        %5251 = vmatpush.bf16.msra.mxu0 %v4987
        %5252 = vmatpush.bf16.msra.mxu0 %v4983
        %5253 = vmatpush.bf16.msra.mxu0 %v4979
        %5254 = vmatpush.bf16.msra.mxu0 %v4975
        %5255 = vmatpush.bf16.msra.mxu0 %v4971
        %5256 = vmatmul.bf16.gmra.mxu0 %v4723
        %v5257 = vpop.f32.mrf.mxu0
        %v5258 = vadd.f32 0.0, %v5257
        %v5259 = vpop.f32.mrf.mxu0
        %5260 = vdwg.mxu0
        %5261 = vmatpush.bf16.msra.mxu0 %v5031
        %5262 = vmatpush.bf16.msra.mxu0 %v5027
        %5263 = vmatpush.bf16.msra.mxu0 %v5023
        %5264 = vmatpush.bf16.msra.mxu0 %v5019
        %5265 = vmatpush.bf16.msra.mxu0 %v5015
        %5266 = vmatpush.bf16.msra.mxu0 %v5011
        %5267 = vmatpush.bf16.msra.mxu0 %v5007
        %5268 = vmatpush.bf16.msra.mxu0 %v5003
        %5269 = vmatmul.bf16.gmra.mxu0 %v4724
        %v5270 = vpop.f32.mrf.mxu0
        %v5271 = vadd.f32 %v5258, %v5270
        %v5272 = vpop.f32.mrf.mxu0
        %5273 = vdwg.mxu0
        %5274 = vmatpush.bf16.msra.mxu0 0
        %5275 = vmatpush.bf16.msra.mxu0 0
        %5276 = vmatpush.bf16.msra.mxu0 0
        %5277 = vmatpush.bf16.msra.mxu0 0
        %5278 = vmatpush.bf16.msra.mxu0 %v5047
        %5279 = vmatpush.bf16.msra.mxu0 %v5043
        %5280 = vmatpush.bf16.msra.mxu0 %v5039
        %5281 = vmatpush.bf16.msra.mxu0 %v5035
        %5282 = vmatmul.bf16.gmra.mxu0 %v5129
        %v5283 = vpop.f32.mrf.mxu0
        %v5284 = vadd.f32 %v5271, %v5283
        %v5285 = vpop.f32.mrf.mxu0
        %5286 = vdwg.mxu0
        %v5287 = vpack.c.b16 %v3319, %v3319
        %v5288 = vpack.c.b16 %v3320, %v3320
        %v5289 = vpack.c.b16 %v3321, %v3321
        %v5372 = vunpack.c.l.b16 %v3154
        %v5373 = vunpack.c.h.b16 %v3154
        %v5374 = vunpack.c.l.b16 %v3155
        %v5375 = vunpack.c.h.b16 %v3155
        %v5376 = vunpack.c.l.b16 %v3156
        %v5377 = vunpack.c.h.b16 %v3156
        %v5378 = vunpack.c.l.b16 %v3157
        %v5379 = vunpack.c.h.b16 %v3157
        %v5380 = vunpack.c.l.b16 %v3158
        %v5381 = vunpack.c.h.b16 %v3158
        %v5382 = vunpack.c.l.b16 %v3159
        %v5383 = vunpack.c.h.b16 %v3159
        %v5384 = vunpack.c.l.b16 %v3160
        %v5385 = vunpack.c.h.b16 %v3160
        %v5386 = vunpack.c.l.b16 %v3161
        %v5387 = vunpack.c.h.b16 %v3161
        %v5388 = vunpack.c.l.b16 %v3162
        %v5389 = vunpack.c.h.b16 %v3162
        %v5390 = vunpack.c.l.b16 %v3163
        %v5391 = vunpack.c.h.b16 %v3163
        %v5392 = vunpack.c.l.b16 %v3164
        %v5393 = vunpack.c.h.b16 %v3164
        %v5394 = vunpack.c.l.b16 %v3165
        %v5395 = vunpack.c.h.b16 %v3165
        %v5396 = vunpack.c.l.b16 %v3166
        %v5397 = vunpack.c.h.b16 %v3166
        %v5398 = vunpack.c.l.b16 %v3167
        %v5399 = vunpack.c.h.b16 %v3167
        %v5400 = vunpack.c.l.b16 %v3168
        %v5401 = vunpack.c.h.b16 %v3168
        %v5402 = vunpack.c.l.b16 %v3169
        %v5403 = vunpack.c.h.b16 %v3169
        %v5404 = vunpack.c.l.b16 %v3170
        %v5405 = vunpack.c.h.b16 %v3170
        %v5406 = vunpack.c.l.b16 %v3171
        %v5407 = vunpack.c.h.b16 %v3171
        %v5408 = vunpack.c.l.b16 %v3172
        %v5409 = vunpack.c.h.b16 %v3172
        %v5410 = vunpack.c.l.b16 %v3173
        %v5411 = vunpack.c.h.b16 %v3173
        %v5412 = vunpack.c.l.b16 %v3174
        %v5413 = vunpack.c.h.b16 %v3174
        %v5414 = vunpack.c.l.b16 %v3175
        %v5415 = vunpack.c.h.b16 %v3175
        %v5416 = vunpack.c.l.b16 %v3176
        %v5417 = vunpack.c.h.b16 %v3176
        %v5418 = vunpack.c.l.b16 %v3177
        %v5419 = vunpack.c.h.b16 %v3177
        %v5420 = vunpack.c.l.b16 %v3178
        %v5421 = vunpack.c.h.b16 %v3178
        %v5422 = vunpack.c.l.b16 %v3179
        %v5423 = vunpack.c.h.b16 %v3179
        %v5424 = vunpack.c.l.b16 %v3180
        %v5425 = vunpack.c.h.b16 %v3180
        %v5426 = vunpack.c.l.b16 %v3181
        %v5427 = vunpack.c.h.b16 %v3181
        %v5428 = vunpack.c.l.b16 %v3182
        %v5429 = vunpack.c.h.b16 %v3182
        %v5430 = vunpack.c.l.b16 %v3183
        %v5431 = vunpack.c.h.b16 %v3183
        %v5432 = vunpack.c.l.b16 %v3184
        %v5433 = vunpack.c.h.b16 %v3184
        %v5434 = vunpack.c.l.b16 %v3185
        %v5435 = vunpack.c.h.b16 %v3185
        %v5436 = vunpack.c.l.b16 %v3186
        %v5437 = vunpack.c.h.b16 %v3186
        %v5438 = vunpack.c.l.b16 %v3187
        %v5439 = vunpack.c.h.b16 %v3187
        %v5440 = vunpack.c.l.b16 %v3188
        %v5441 = vunpack.c.h.b16 %v3188
        %v5442 = vunpack.c.l.b16 %v3189
        %v5443 = vunpack.c.h.b16 %v3189
        %v5444 = vunpack.c.l.b16 %v3190
        %v5445 = vunpack.c.h.b16 %v3190
        %v5446 = vunpack.c.l.b16 %v3191
        %v5447 = vunpack.c.h.b16 %v3191
        %v5448 = vunpack.c.l.b16 %v3192
        %v5449 = vunpack.c.h.b16 %v3192
        %v5450 = vunpack.c.l.b16 %v3193
        %v5451 = vunpack.c.h.b16 %v3193
        %v5452 = vunpack.c.l.b16 %v3194
        %v5453 = vunpack.c.h.b16 %v3194
        %v5454 = vunpack.c.l.b16 %v3195
        %v5455 = vunpack.c.h.b16 %v3195
        %v5456 = vunpack.c.l.b16 %v3196
        %v5457 = vunpack.c.h.b16 %v3196
        %v5458 = vunpack.c.l.b16 %v3197
        %v5459 = vunpack.c.h.b16 %v3197
        %v5460 = vunpack.c.l.b16 %v3198
        %v5461 = vunpack.c.h.b16 %v3198
        %v5462 = vunpack.c.l.b16 %v3199
        %v5463 = vunpack.c.h.b16 %v3199
        %v5464 = vunpack.c.l.b16 %v3200
        %v5465 = vunpack.c.h.b16 %v3200
        %v5466 = vunpack.c.l.b16 %v3201
        %v5467 = vunpack.c.h.b16 %v3201
        %v5468 = vunpack.c.l.b16 %v3202
        %v5469 = vunpack.c.h.b16 %v3202
        %v5470 = vunpack.c.l.b16 %v3203
        %v5471 = vunpack.c.h.b16 %v3203
        %v5472 = vunpack.c.l.b16 %v3204
        %v5473 = vunpack.c.h.b16 %v3204
        %v5474 = vunpack.c.l.b16 %v3205
        %v5475 = vunpack.c.h.b16 %v3205
        %v5476 = vunpack.c.l.b16 %v3206
        %v5477 = vunpack.c.h.b16 %v3206
        %v5478 = vunpack.c.l.b16 %v3207
        %v5479 = vunpack.c.h.b16 %v3207
        %v5480 = vunpack.c.l.b16 %v3208
        %v5481 = vunpack.c.h.b16 %v3208
        %v5482 = vunpack.c.l.b16 %v3209
        %v5483 = vunpack.c.h.b16 %v3209
        %v5484 = vunpack.c.l.b16 %v3210
        %v5485 = vunpack.c.h.b16 %v3210
        %v5486 = vunpack.c.l.b16 %v3211
        %v5487 = vunpack.c.h.b16 %v3211
        %v5488 = vunpack.c.l.b16 %v3212
        %v5489 = vunpack.c.h.b16 %v3212
        %v5490 = vunpack.c.l.b16 %v3213
        %v5491 = vunpack.c.h.b16 %v3213
        %v5492 = vunpack.c.l.b16 %v3214
        %v5493 = vunpack.c.h.b16 %v3214
        %v5494 = vunpack.c.l.b16 %v3215
        %v5495 = vunpack.c.h.b16 %v3215
        %v5496 = vunpack.c.l.b16 %v3216
        %v5497 = vunpack.c.h.b16 %v3216
        %v5498 = vunpack.c.l.b16 %v3217
        %v5499 = vunpack.c.h.b16 %v3217
        %v5500 = vunpack.c.l.b16 %v3218
        %v5501 = vunpack.c.h.b16 %v3218
        %v5502 = vunpack.c.l.b16 %v3219
        %v5503 = vunpack.c.h.b16 %v3219
        %v5504 = vunpack.c.l.b16 %v3220
        %v5505 = vunpack.c.h.b16 %v3220
        %v5506 = vunpack.c.l.b16 %v3221
        %v5507 = vunpack.c.h.b16 %v3221
        %v5508 = vunpack.c.l.b16 %v3222
        %v5509 = vunpack.c.h.b16 %v3222
        %v5510 = vunpack.c.l.b16 %v3223
        %v5511 = vunpack.c.h.b16 %v3223
        %v5512 = vunpack.c.l.b16 %v3224
        %v5513 = vunpack.c.h.b16 %v3224
        %v5514 = vunpack.c.l.b16 %v3225
        %v5515 = vunpack.c.h.b16 %v3225
        %v5516 = vunpack.c.l.b16 %v3226
        %v5517 = vunpack.c.h.b16 %v3226
        %v5518 = vunpack.c.l.b16 %v3227
        %v5519 = vunpack.c.h.b16 %v3227
        %v5520 = vunpack.c.l.b16 %v3228
        %v5521 = vunpack.c.h.b16 %v3228
        %v5522 = vunpack.c.l.b16 %v3229
        %v5523 = vunpack.c.h.b16 %v3229
        %v5524 = vunpack.c.l.b16 %v3230
        %v5525 = vunpack.c.h.b16 %v3230
        %v5526 = vunpack.c.l.b16 %v3231
        %v5527 = vunpack.c.h.b16 %v3231
        %v5528 = vunpack.c.l.b16 %v3232
        %v5529 = vunpack.c.h.b16 %v3232
        %v5530 = vunpack.c.l.b16 %v3233
        %v5531 = vunpack.c.h.b16 %v3233
        %v5532 = vpack.c.b16 %v5376, %v5372
        %v5533 = vpack.c.b16 %v5377, %v5373
        %v5534 = vpack.c.b16 %v5378, %v5374
        %v5535 = vpack.c.b16 %v5379, %v5375
        %v5536 = vpack.c.b16 %v5384, %v5380
        %v5537 = vpack.c.b16 %v5385, %v5381
        %v5538 = vpack.c.b16 %v5386, %v5382
        %v5539 = vpack.c.b16 %v5387, %v5383
        %v5540 = vpack.c.b16 %v5392, %v5388
        %v5541 = vpack.c.b16 %v5393, %v5389
        %v5542 = vpack.c.b16 %v5394, %v5390
        %v5543 = vpack.c.b16 %v5395, %v5391
        %v5544 = vpack.c.b16 %v5400, %v5396
        %v5545 = vpack.c.b16 %v5401, %v5397
        %v5546 = vpack.c.b16 %v5402, %v5398
        %v5547 = vpack.c.b16 %v5403, %v5399
        %v5548 = vpack.c.b16 %v5408, %v5404
        %v5549 = vpack.c.b16 %v5409, %v5405
        %v5550 = vpack.c.b16 %v5410, %v5406
        %v5551 = vpack.c.b16 %v5411, %v5407
        %v5552 = vpack.c.b16 %v5416, %v5412
        %v5553 = vpack.c.b16 %v5417, %v5413
        %v5554 = vpack.c.b16 %v5418, %v5414
        %v5555 = vpack.c.b16 %v5419, %v5415
        %v5556 = vpack.c.b16 %v5424, %v5420
        %v5557 = vpack.c.b16 %v5425, %v5421
        %v5558 = vpack.c.b16 %v5426, %v5422
        %v5559 = vpack.c.b16 %v5427, %v5423
        %v5560 = vpack.c.b16 %v5432, %v5428
        %v5561 = vpack.c.b16 %v5433, %v5429
        %v5562 = vpack.c.b16 %v5434, %v5430
        %v5563 = vpack.c.b16 %v5435, %v5431
        %v5564 = vpack.c.b16 %v5440, %v5436
        %v5565 = vpack.c.b16 %v5441, %v5437
        %v5566 = vpack.c.b16 %v5442, %v5438
        %v5567 = vpack.c.b16 %v5443, %v5439
        %v5568 = vpack.c.b16 %v5448, %v5444
        %v5569 = vpack.c.b16 %v5449, %v5445
        %v5570 = vpack.c.b16 %v5450, %v5446
        %v5571 = vpack.c.b16 %v5451, %v5447
        %v5572 = vpack.c.b16 %v5456, %v5452
        %v5573 = vpack.c.b16 %v5457, %v5453
        %v5574 = vpack.c.b16 %v5458, %v5454
        %v5575 = vpack.c.b16 %v5459, %v5455
        %v5576 = vpack.c.b16 %v5464, %v5460
        %v5577 = vpack.c.b16 %v5465, %v5461
        %v5578 = vpack.c.b16 %v5466, %v5462
        %v5579 = vpack.c.b16 %v5467, %v5463
        %v5580 = vpack.c.b16 %v5472, %v5468
        %v5581 = vpack.c.b16 %v5473, %v5469
        %v5582 = vpack.c.b16 %v5474, %v5470
        %v5583 = vpack.c.b16 %v5475, %v5471
        %v5584 = vpack.c.b16 %v5480, %v5476
        %v5585 = vpack.c.b16 %v5481, %v5477
        %v5586 = vpack.c.b16 %v5482, %v5478
        %v5587 = vpack.c.b16 %v5483, %v5479
        %v5588 = vpack.c.b16 %v5488, %v5484
        %v5589 = vpack.c.b16 %v5489, %v5485
        %v5590 = vpack.c.b16 %v5490, %v5486
        %v5591 = vpack.c.b16 %v5491, %v5487
        %v5592 = vpack.c.b16 %v5496, %v5492
        %v5593 = vpack.c.b16 %v5497, %v5493
        %v5594 = vpack.c.b16 %v5498, %v5494
        %v5595 = vpack.c.b16 %v5499, %v5495
        %v5596 = vpack.c.b16 %v5504, %v5500
        %v5597 = vpack.c.b16 %v5505, %v5501
        %v5598 = vpack.c.b16 %v5506, %v5502
        %v5599 = vpack.c.b16 %v5507, %v5503
        %v5600 = vpack.c.b16 %v5512, %v5508
        %v5601 = vpack.c.b16 %v5513, %v5509
        %v5602 = vpack.c.b16 %v5514, %v5510
        %v5603 = vpack.c.b16 %v5515, %v5511
        %v5604 = vpack.c.b16 %v5520, %v5516
        %v5605 = vpack.c.b16 %v5521, %v5517
        %v5606 = vpack.c.b16 %v5522, %v5518
        %v5607 = vpack.c.b16 %v5523, %v5519
        %v5608 = vpack.c.b16 %v5528, %v5524
        %v5609 = vpack.c.b16 %v5529, %v5525
        %v5610 = vpack.c.b16 %v5530, %v5526
        %v5611 = vpack.c.b16 %v5531, %v5527
        %v5693 = vsel %vm1675, %v5289, 0
        %5695 = vmatpush.bf16.msra.mxu0 %v5560
        %5696 = vmatpush.bf16.msra.mxu0 %v5556
        %5697 = vmatpush.bf16.msra.mxu0 %v5552
        %5698 = vmatpush.bf16.msra.mxu0 %v5548
        %5699 = vmatpush.bf16.msra.mxu0 %v5544
        %5700 = vmatpush.bf16.msra.mxu0 %v5540
        %5701 = vmatpush.bf16.msra.mxu0 %v5536
        %5702 = vmatpush.bf16.msra.mxu0 %v5532
        %5703 = vmatmul.bf16.gmra.mxu0 %v5287
        %v5704 = vpop.f32.mrf.mxu0
        %v5705 = vadd.f32 %v3790, %v5704
        %v5706 = vpop.f32.mrf.mxu0
        %5707 = vdwg.mxu0
        %5708 = vmatpush.bf16.msra.mxu0 %v5592
        %5709 = vmatpush.bf16.msra.mxu0 %v5588
        %5710 = vmatpush.bf16.msra.mxu0 %v5584
        %5711 = vmatpush.bf16.msra.mxu0 %v5580
        %5712 = vmatpush.bf16.msra.mxu0 %v5576
        %5713 = vmatpush.bf16.msra.mxu0 %v5572
        %5714 = vmatpush.bf16.msra.mxu0 %v5568
        %5715 = vmatpush.bf16.msra.mxu0 %v5564
        %5716 = vmatmul.bf16.gmra.mxu0 %v5288
        %v5717 = vpop.f32.mrf.mxu0
        %v5718 = vadd.f32 %v5705, %v5717
        %v5719 = vpop.f32.mrf.mxu0
        %5720 = vdwg.mxu0
        %5721 = vmatpush.bf16.msra.mxu0 0
        %5722 = vmatpush.bf16.msra.mxu0 0
        %5723 = vmatpush.bf16.msra.mxu0 0
        %5724 = vmatpush.bf16.msra.mxu0 0
        %5725 = vmatpush.bf16.msra.mxu0 %v5608
        %5726 = vmatpush.bf16.msra.mxu0 %v5604
        %5727 = vmatpush.bf16.msra.mxu0 %v5600
        %5728 = vmatpush.bf16.msra.mxu0 %v5596
        %5729 = vmatmul.bf16.gmra.mxu0 %v5693
        %v5730 = vpop.f32.mrf.mxu0
        %v5731 = vadd.f32 %v5718, %v5730
        %v5732 = vpop.f32.mrf.mxu0
        %5733 = vdwg.mxu0
        %5734 = vmatpush.bf16.msra.mxu0 %v5561
        %5735 = vmatpush.bf16.msra.mxu0 %v5557
        %5736 = vmatpush.bf16.msra.mxu0 %v5553
        %5737 = vmatpush.bf16.msra.mxu0 %v5549
        %5738 = vmatpush.bf16.msra.mxu0 %v5545
        %5739 = vmatpush.bf16.msra.mxu0 %v5541
        %5740 = vmatpush.bf16.msra.mxu0 %v5537
        %5741 = vmatpush.bf16.msra.mxu0 %v5533
        %5742 = vmatmul.bf16.gmra.mxu0 %v5287
        %v5743 = vpop.f32.mrf.mxu0
        %v5744 = vadd.f32 %v3829, %v5743
        %v5745 = vpop.f32.mrf.mxu0
        %5746 = vdwg.mxu0
        %5747 = vmatpush.bf16.msra.mxu0 %v5593
        %5748 = vmatpush.bf16.msra.mxu0 %v5589
        %5749 = vmatpush.bf16.msra.mxu0 %v5585
        %5750 = vmatpush.bf16.msra.mxu0 %v5581
        %5751 = vmatpush.bf16.msra.mxu0 %v5577
        %5752 = vmatpush.bf16.msra.mxu0 %v5573
        %5753 = vmatpush.bf16.msra.mxu0 %v5569
        %5754 = vmatpush.bf16.msra.mxu0 %v5565
        %5755 = vmatmul.bf16.gmra.mxu0 %v5288
        %v5756 = vpop.f32.mrf.mxu0
        %v5757 = vadd.f32 %v5744, %v5756
        %v5758 = vpop.f32.mrf.mxu0
        %5759 = vdwg.mxu0
        %5760 = vmatpush.bf16.msra.mxu0 0
        %5761 = vmatpush.bf16.msra.mxu0 0
        %5762 = vmatpush.bf16.msra.mxu0 0
        %5763 = vmatpush.bf16.msra.mxu0 0
        %5764 = vmatpush.bf16.msra.mxu0 %v5609
        %5765 = vmatpush.bf16.msra.mxu0 %v5605
        %5766 = vmatpush.bf16.msra.mxu0 %v5601
        %5767 = vmatpush.bf16.msra.mxu0 %v5597
        %5768 = vmatmul.bf16.gmra.mxu0 %v5693
        %v5769 = vpop.f32.mrf.mxu0
        %v5770 = vadd.f32 %v5757, %v5769
        %v5771 = vpop.f32.mrf.mxu0
        %5772 = vdwg.mxu0
        %5773 = vmatpush.bf16.msra.mxu0 %v5562
        %5774 = vmatpush.bf16.msra.mxu0 %v5558
        %5775 = vmatpush.bf16.msra.mxu0 %v5554
        %5776 = vmatpush.bf16.msra.mxu0 %v5550
        %5777 = vmatpush.bf16.msra.mxu0 %v5546
        %5778 = vmatpush.bf16.msra.mxu0 %v5542
        %5779 = vmatpush.bf16.msra.mxu0 %v5538
        %5780 = vmatpush.bf16.msra.mxu0 %v5534
        %5781 = vmatmul.bf16.gmra.mxu0 %v5287
        %v5782 = vpop.f32.mrf.mxu0
        %v5783 = vadd.f32 %v3868, %v5782
        %v5784 = vpop.f32.mrf.mxu0
        %5785 = vdwg.mxu0
        %5786 = vmatpush.bf16.msra.mxu0 %v5594
        %5787 = vmatpush.bf16.msra.mxu0 %v5590
        %5788 = vmatpush.bf16.msra.mxu0 %v5586
        %5789 = vmatpush.bf16.msra.mxu0 %v5582
        %5790 = vmatpush.bf16.msra.mxu0 %v5578
        %5791 = vmatpush.bf16.msra.mxu0 %v5574
        %5792 = vmatpush.bf16.msra.mxu0 %v5570
        %5793 = vmatpush.bf16.msra.mxu0 %v5566
        %5794 = vmatmul.bf16.gmra.mxu0 %v5288
        %v5795 = vpop.f32.mrf.mxu0
        %v5796 = vadd.f32 %v5783, %v5795
        %v5797 = vpop.f32.mrf.mxu0
        %5798 = vdwg.mxu0
        %5799 = vmatpush.bf16.msra.mxu0 0
        %5800 = vmatpush.bf16.msra.mxu0 0
        %5801 = vmatpush.bf16.msra.mxu0 0
        %5802 = vmatpush.bf16.msra.mxu0 0
        %5803 = vmatpush.bf16.msra.mxu0 %v5610
        %5804 = vmatpush.bf16.msra.mxu0 %v5606
        %5805 = vmatpush.bf16.msra.mxu0 %v5602
        %5806 = vmatpush.bf16.msra.mxu0 %v5598
        %5807 = vmatmul.bf16.gmra.mxu0 %v5693
        %v5808 = vpop.f32.mrf.mxu0
        %v5809 = vadd.f32 %v5796, %v5808
        %v5810 = vpop.f32.mrf.mxu0
        %5811 = vdwg.mxu0
        %5812 = vmatpush.bf16.msra.mxu0 %v5563
        %5813 = vmatpush.bf16.msra.mxu0 %v5559
        %5814 = vmatpush.bf16.msra.mxu0 %v5555
        %5815 = vmatpush.bf16.msra.mxu0 %v5551
        %5816 = vmatpush.bf16.msra.mxu0 %v5547
        %5817 = vmatpush.bf16.msra.mxu0 %v5543
        %5818 = vmatpush.bf16.msra.mxu0 %v5539
        %5819 = vmatpush.bf16.msra.mxu0 %v5535
        %5820 = vmatmul.bf16.gmra.mxu0 %v5287
        %v5821 = vpop.f32.mrf.mxu0
        %v5822 = vadd.f32 %v3907, %v5821
        %v5823 = vpop.f32.mrf.mxu0
        %5824 = vdwg.mxu0
        %5825 = vmatpush.bf16.msra.mxu0 %v5595
        %5826 = vmatpush.bf16.msra.mxu0 %v5591
        %5827 = vmatpush.bf16.msra.mxu0 %v5587
        %5828 = vmatpush.bf16.msra.mxu0 %v5583
        %5829 = vmatpush.bf16.msra.mxu0 %v5579
        %5830 = vmatpush.bf16.msra.mxu0 %v5575
        %5831 = vmatpush.bf16.msra.mxu0 %v5571
        %5832 = vmatpush.bf16.msra.mxu0 %v5567
        %5833 = vmatmul.bf16.gmra.mxu0 %v5288
        %v5834 = vpop.f32.mrf.mxu0
        %v5835 = vadd.f32 %v5822, %v5834
        %v5836 = vpop.f32.mrf.mxu0
        %5837 = vdwg.mxu0
        %5838 = vmatpush.bf16.msra.mxu0 0
        %5839 = vmatpush.bf16.msra.mxu0 0
        %5840 = vmatpush.bf16.msra.mxu0 0
        %5841 = vmatpush.bf16.msra.mxu0 0
        %5842 = vmatpush.bf16.msra.mxu0 %v5611
        %5843 = vmatpush.bf16.msra.mxu0 %v5607
        %5844 = vmatpush.bf16.msra.mxu0 %v5603
        %5845 = vmatpush.bf16.msra.mxu0 %v5599
        %5846 = vmatmul.bf16.gmra.mxu0 %v5693
        %v5847 = vpop.f32.mrf.mxu0
        %v5848 = vadd.f32 %v5835, %v5847
        %v5849 = vpop.f32.mrf.mxu0
        %5850 = vdwg.mxu0
        %v5851 = vrot.slane %v3325, 1
        %v5852 = vrot.slane %v3326, 1
        %v5853 = vrot.slane %v3327, 1
        %v5936 = vunpack.c.l.b16 %v3911
        %v5937 = vunpack.c.h.b16 %v3911
        %v5938 = vunpack.c.l.b16 %v3912
        %v5939 = vunpack.c.h.b16 %v3912
        %v5940 = vunpack.c.l.b16 %v3913
        %v5941 = vunpack.c.h.b16 %v3913
        %v5942 = vunpack.c.l.b16 %v3914
        %v5943 = vunpack.c.h.b16 %v3914
        %v5944 = vunpack.c.l.b16 %v3915
        %v5945 = vunpack.c.h.b16 %v3915
        %v5946 = vunpack.c.l.b16 %v3916
        %v5947 = vunpack.c.h.b16 %v3916
        %v5948 = vunpack.c.l.b16 %v3917
        %v5949 = vunpack.c.h.b16 %v3917
        %v5950 = vunpack.c.l.b16 %v3918
        %v5951 = vunpack.c.h.b16 %v3918
        %v5952 = vunpack.c.l.b16 %v3919
        %v5953 = vunpack.c.h.b16 %v3919
        %v5954 = vunpack.c.l.b16 %v3920
        %v5955 = vunpack.c.h.b16 %v3920
        %v5956 = vunpack.c.l.b16 %v3921
        %v5957 = vunpack.c.h.b16 %v3921
        %v5958 = vunpack.c.l.b16 %v3922
        %v5959 = vunpack.c.h.b16 %v3922
        %v5960 = vunpack.c.l.b16 %v3923
        %v5961 = vunpack.c.h.b16 %v3923
        %v5962 = vunpack.c.l.b16 %v3924
        %v5963 = vunpack.c.h.b16 %v3924
        %v5964 = vunpack.c.l.b16 %v3925
        %v5965 = vunpack.c.h.b16 %v3925
        %v5966 = vunpack.c.l.b16 %v3926
        %v5967 = vunpack.c.h.b16 %v3926
        %v5968 = vunpack.c.l.b16 %v3927
        %v5969 = vunpack.c.h.b16 %v3927
        %v5970 = vunpack.c.l.b16 %v3928
        %v5971 = vunpack.c.h.b16 %v3928
        %v5972 = vunpack.c.l.b16 %v3929
        %v5973 = vunpack.c.h.b16 %v3929
        %v5974 = vunpack.c.l.b16 %v3930
        %v5975 = vunpack.c.h.b16 %v3930
        %v5976 = vunpack.c.l.b16 %v3931
        %v5977 = vunpack.c.h.b16 %v3931
        %v5978 = vunpack.c.l.b16 %v3932
        %v5979 = vunpack.c.h.b16 %v3932
        %v5980 = vunpack.c.l.b16 %v3933
        %v5981 = vunpack.c.h.b16 %v3933
        %v5982 = vunpack.c.l.b16 %v3934
        %v5983 = vunpack.c.h.b16 %v3934
        %v5984 = vunpack.c.l.b16 %v3935
        %v5985 = vunpack.c.h.b16 %v3935
        %v5986 = vunpack.c.l.b16 %v3936
        %v5987 = vunpack.c.h.b16 %v3936
        %v5988 = vunpack.c.l.b16 %v3937
        %v5989 = vunpack.c.h.b16 %v3937
        %v5990 = vunpack.c.l.b16 %v3938
        %v5991 = vunpack.c.h.b16 %v3938
        %v5992 = vunpack.c.l.b16 %v3939
        %v5993 = vunpack.c.h.b16 %v3939
        %v5994 = vunpack.c.l.b16 %v3940
        %v5995 = vunpack.c.h.b16 %v3940
        %v5996 = vunpack.c.l.b16 %v3941
        %v5997 = vunpack.c.h.b16 %v3941
        %v5998 = vunpack.c.l.b16 %v3942
        %v5999 = vunpack.c.h.b16 %v3942
        %v6000 = vunpack.c.l.b16 %v3943
        %v6001 = vunpack.c.h.b16 %v3943
        %v6002 = vunpack.c.l.b16 %v3944
        %v6003 = vunpack.c.h.b16 %v3944
        %v6004 = vunpack.c.l.b16 %v3945
        %v6005 = vunpack.c.h.b16 %v3945
        %v6006 = vunpack.c.l.b16 %v3946
        %v6007 = vunpack.c.h.b16 %v3946
        %v6008 = vunpack.c.l.b16 %v3947
        %v6009 = vunpack.c.h.b16 %v3947
        %v6010 = vunpack.c.l.b16 %v3948
        %v6011 = vunpack.c.h.b16 %v3948
        %v6012 = vunpack.c.l.b16 %v3949
        %v6013 = vunpack.c.h.b16 %v3949
        %v6014 = vunpack.c.l.b16 %v3950
        %v6015 = vunpack.c.h.b16 %v3950
        %v6016 = vunpack.c.l.b16 %v3951
        %v6017 = vunpack.c.h.b16 %v3951
        %v6018 = vunpack.c.l.b16 %v3952
        %v6019 = vunpack.c.h.b16 %v3952
        %v6020 = vunpack.c.l.b16 %v3953
        %v6021 = vunpack.c.h.b16 %v3953
        %v6022 = vunpack.c.l.b16 %v3954
        %v6023 = vunpack.c.h.b16 %v3954
        %v6024 = vunpack.c.l.b16 %v3955
        %v6025 = vunpack.c.h.b16 %v3955
        %v6026 = vunpack.c.l.b16 %v3956
        %v6027 = vunpack.c.h.b16 %v3956
        %v6028 = vunpack.c.l.b16 %v3957
        %v6029 = vunpack.c.h.b16 %v3957
        %v6030 = vunpack.c.l.b16 %v3958
        %v6031 = vunpack.c.h.b16 %v3958
        %v6032 = vunpack.c.l.b16 %v3959
        %v6033 = vunpack.c.h.b16 %v3959
        %v6034 = vunpack.c.l.b16 %v3960
        %v6035 = vunpack.c.h.b16 %v3960
        %v6036 = vunpack.c.l.b16 %v3961
        %v6037 = vunpack.c.h.b16 %v3961
        %v6038 = vunpack.c.l.b16 %v3962
        %v6039 = vunpack.c.h.b16 %v3962
        %v6040 = vunpack.c.l.b16 %v3963
        %v6041 = vunpack.c.h.b16 %v3963
        %v6042 = vunpack.c.l.b16 %v3964
        %v6043 = vunpack.c.h.b16 %v3964
        %v6044 = vunpack.c.l.b16 %v3965
        %v6045 = vunpack.c.h.b16 %v3965
        %v6046 = vunpack.c.l.b16 %v3966
        %v6047 = vunpack.c.h.b16 %v3966
        %v6048 = vunpack.c.l.b16 %v3967
        %v6049 = vunpack.c.h.b16 %v3967
        %v6050 = vunpack.c.l.b16 %v3968
        %v6051 = vunpack.c.h.b16 %v3968
        %v6052 = vunpack.c.l.b16 %v3969
        %v6053 = vunpack.c.h.b16 %v3969
        %v6054 = vunpack.c.l.b16 %v3970
        %v6055 = vunpack.c.h.b16 %v3970
        %v6056 = vunpack.c.l.b16 %v3971
        %v6057 = vunpack.c.h.b16 %v3971
        %v6058 = vunpack.c.l.b16 %v3972
        %v6059 = vunpack.c.h.b16 %v3972
        %v6060 = vunpack.c.l.b16 %v3973
        %v6061 = vunpack.c.h.b16 %v3973
        %v6062 = vunpack.c.l.b16 %v3974
        %v6063 = vunpack.c.h.b16 %v3974
        %v6064 = vunpack.c.l.b16 %v3975
        %v6065 = vunpack.c.h.b16 %v3975
        %v6066 = vunpack.c.l.b16 %v3976
        %v6067 = vunpack.c.h.b16 %v3976
        %v6068 = vunpack.c.l.b16 %v3977
        %v6069 = vunpack.c.h.b16 %v3977
        %v6070 = vunpack.c.l.b16 %v3978
        %v6071 = vunpack.c.h.b16 %v3978
        %v6072 = vunpack.c.l.b16 %v3979
        %v6073 = vunpack.c.h.b16 %v3979
        %v6074 = vunpack.c.l.b16 %v3980
        %v6075 = vunpack.c.h.b16 %v3980
        %v6076 = vunpack.c.l.b16 %v3981
        %v6077 = vunpack.c.h.b16 %v3981
        %v6078 = vunpack.c.l.b16 %v3982
        %v6079 = vunpack.c.h.b16 %v3982
        %v6080 = vunpack.c.l.b16 %v3983
        %v6081 = vunpack.c.h.b16 %v3983
        %v6082 = vunpack.c.l.b16 %v3984
        %v6083 = vunpack.c.h.b16 %v3984
        %v6084 = vunpack.c.l.b16 %v3985
        %v6085 = vunpack.c.h.b16 %v3985
        %v6086 = vunpack.c.l.b16 %v3986
        %v6087 = vunpack.c.h.b16 %v3986
        %v6088 = vunpack.c.l.b16 %v3987
        %v6089 = vunpack.c.h.b16 %v3987
        %v6090 = vunpack.c.l.b16 %v3988
        %v6091 = vunpack.c.h.b16 %v3988
        %v6092 = vunpack.c.l.b16 %v3989
        %v6093 = vunpack.c.h.b16 %v3989
        %v6094 = vunpack.c.l.b16 %v3990
        %v6095 = vunpack.c.h.b16 %v3990
        %v6096 = vpack.c.b16 %v5940, %v5936
        %v6097 = vpack.c.b16 %v5941, %v5937
        %v6098 = vpack.c.b16 %v5942, %v5938
        %v6099 = vpack.c.b16 %v5943, %v5939
        %v6100 = vpack.c.b16 %v5948, %v5944
        %v6101 = vpack.c.b16 %v5949, %v5945
        %v6102 = vpack.c.b16 %v5950, %v5946
        %v6103 = vpack.c.b16 %v5951, %v5947
        %v6104 = vpack.c.b16 %v5956, %v5952
        %v6105 = vpack.c.b16 %v5957, %v5953
        %v6106 = vpack.c.b16 %v5958, %v5954
        %v6107 = vpack.c.b16 %v5959, %v5955
        %v6108 = vpack.c.b16 %v5964, %v5960
        %v6109 = vpack.c.b16 %v5965, %v5961
        %v6110 = vpack.c.b16 %v5966, %v5962
        %v6111 = vpack.c.b16 %v5967, %v5963
        %v6112 = vpack.c.b16 %v5972, %v5968
        %v6113 = vpack.c.b16 %v5973, %v5969
        %v6114 = vpack.c.b16 %v5974, %v5970
        %v6115 = vpack.c.b16 %v5975, %v5971
        %v6116 = vpack.c.b16 %v5980, %v5976
        %v6117 = vpack.c.b16 %v5981, %v5977
        %v6118 = vpack.c.b16 %v5982, %v5978
        %v6119 = vpack.c.b16 %v5983, %v5979
        %v6120 = vpack.c.b16 %v5988, %v5984
        %v6121 = vpack.c.b16 %v5989, %v5985
        %v6122 = vpack.c.b16 %v5990, %v5986
        %v6123 = vpack.c.b16 %v5991, %v5987
        %v6124 = vpack.c.b16 %v5996, %v5992
        %v6125 = vpack.c.b16 %v5997, %v5993
        %v6126 = vpack.c.b16 %v5998, %v5994
        %v6127 = vpack.c.b16 %v5999, %v5995
        %v6128 = vpack.c.b16 %v6004, %v6000
        %v6129 = vpack.c.b16 %v6005, %v6001
        %v6130 = vpack.c.b16 %v6006, %v6002
        %v6131 = vpack.c.b16 %v6007, %v6003
        %v6132 = vpack.c.b16 %v6012, %v6008
        %v6133 = vpack.c.b16 %v6013, %v6009
        %v6134 = vpack.c.b16 %v6014, %v6010
        %v6135 = vpack.c.b16 %v6015, %v6011
        %v6136 = vpack.c.b16 %v6020, %v6016
        %v6137 = vpack.c.b16 %v6021, %v6017
        %v6138 = vpack.c.b16 %v6022, %v6018
        %v6139 = vpack.c.b16 %v6023, %v6019
        %v6140 = vpack.c.b16 %v6028, %v6024
        %v6141 = vpack.c.b16 %v6029, %v6025
        %v6142 = vpack.c.b16 %v6030, %v6026
        %v6143 = vpack.c.b16 %v6031, %v6027
        %v6144 = vpack.c.b16 %v6036, %v6032
        %v6145 = vpack.c.b16 %v6037, %v6033
        %v6146 = vpack.c.b16 %v6038, %v6034
        %v6147 = vpack.c.b16 %v6039, %v6035
        %v6148 = vpack.c.b16 %v6044, %v6040
        %v6149 = vpack.c.b16 %v6045, %v6041
        %v6150 = vpack.c.b16 %v6046, %v6042
        %v6151 = vpack.c.b16 %v6047, %v6043
        %v6152 = vpack.c.b16 %v6052, %v6048
        %v6153 = vpack.c.b16 %v6053, %v6049
        %v6154 = vpack.c.b16 %v6054, %v6050
        %v6155 = vpack.c.b16 %v6055, %v6051
        %v6156 = vpack.c.b16 %v6060, %v6056
        %v6157 = vpack.c.b16 %v6061, %v6057
        %v6158 = vpack.c.b16 %v6062, %v6058
        %v6159 = vpack.c.b16 %v6063, %v6059
        %v6160 = vpack.c.b16 %v6068, %v6064
        %v6161 = vpack.c.b16 %v6069, %v6065
        %v6162 = vpack.c.b16 %v6070, %v6066
        %v6163 = vpack.c.b16 %v6071, %v6067
        %v6164 = vpack.c.b16 %v6076, %v6072
        %v6165 = vpack.c.b16 %v6077, %v6073
        %v6166 = vpack.c.b16 %v6078, %v6074
        %v6167 = vpack.c.b16 %v6079, %v6075
        %v6168 = vpack.c.b16 %v6084, %v6080
        %v6169 = vpack.c.b16 %v6085, %v6081
        %v6170 = vpack.c.b16 %v6086, %v6082
        %v6171 = vpack.c.b16 %v6087, %v6083
        %v6172 = vpack.c.b16 %v6092, %v6088
        %v6173 = vpack.c.b16 %v6093, %v6089
        %v6174 = vpack.c.b16 %v6094, %v6090
        %v6175 = vpack.c.b16 %v6095, %v6091
        %v6257 = vsel %vm1675, %v5853, 0
        %6259 = vmatpush.bf16.msra.mxu0 %v6124
        %6260 = vmatpush.bf16.msra.mxu0 %v6120
        %6261 = vmatpush.bf16.msra.mxu0 %v6116
        %6262 = vmatpush.bf16.msra.mxu0 %v6112
        %6263 = vmatpush.bf16.msra.mxu0 %v6108
        %6264 = vmatpush.bf16.msra.mxu0 %v6104
        %6265 = vmatpush.bf16.msra.mxu0 %v6100
        %6266 = vmatpush.bf16.msra.mxu0 %v6096
        %6267 = vmatmul.bf16.gmra.mxu0 %v5851
        %v6268 = vpop.f32.mrf.mxu0
        %v6269 = vadd.f32 %v4522, %v6268
        %v6270 = vpop.f32.mrf.mxu0
        %6271 = vdwg.mxu0
        %6272 = vmatpush.bf16.msra.mxu0 %v6156
        %6273 = vmatpush.bf16.msra.mxu0 %v6152
        %6274 = vmatpush.bf16.msra.mxu0 %v6148
        %6275 = vmatpush.bf16.msra.mxu0 %v6144
        %6276 = vmatpush.bf16.msra.mxu0 %v6140
        %6277 = vmatpush.bf16.msra.mxu0 %v6136
        %6278 = vmatpush.bf16.msra.mxu0 %v6132
        %6279 = vmatpush.bf16.msra.mxu0 %v6128
        %6280 = vmatmul.bf16.gmra.mxu0 %v5852
        %v6281 = vpop.f32.mrf.mxu0
        %v6282 = vadd.f32 %v6269, %v6281
        %v6283 = vpop.f32.mrf.mxu0
        %6284 = vdwg.mxu0
        %6285 = vmatpush.bf16.msra.mxu0 0
        %6286 = vmatpush.bf16.msra.mxu0 0
        %6287 = vmatpush.bf16.msra.mxu0 0
        %6288 = vmatpush.bf16.msra.mxu0 0
        %6289 = vmatpush.bf16.msra.mxu0 %v6172
        %6290 = vmatpush.bf16.msra.mxu0 %v6168
        %6291 = vmatpush.bf16.msra.mxu0 %v6164
        %6292 = vmatpush.bf16.msra.mxu0 %v6160
        %6293 = vmatmul.bf16.gmra.mxu0 %v6257
        %v6294 = vpop.f32.mrf.mxu0
        %v6295 = vadd.f32 %v6282, %v6294
        %v6296 = vpop.f32.mrf.mxu0
        %6297 = vdwg.mxu0
        %6298 = vmatpush.bf16.msra.mxu0 %v6125
        %6299 = vmatpush.bf16.msra.mxu0 %v6121
        %6300 = vmatpush.bf16.msra.mxu0 %v6117
        %6301 = vmatpush.bf16.msra.mxu0 %v6113
        %6302 = vmatpush.bf16.msra.mxu0 %v6109
        %6303 = vmatpush.bf16.msra.mxu0 %v6105
        %6304 = vmatpush.bf16.msra.mxu0 %v6101
        %6305 = vmatpush.bf16.msra.mxu0 %v6097
        %6306 = vmatmul.bf16.gmra.mxu0 %v5851
        %v6307 = vpop.f32.mrf.mxu0
        %v6308 = vadd.f32 %v4561, %v6307
        %v6309 = vpop.f32.mrf.mxu0
        %6310 = vdwg.mxu0
        %6311 = vmatpush.bf16.msra.mxu0 %v6157
        %6312 = vmatpush.bf16.msra.mxu0 %v6153
        %6313 = vmatpush.bf16.msra.mxu0 %v6149
        %6314 = vmatpush.bf16.msra.mxu0 %v6145
        %6315 = vmatpush.bf16.msra.mxu0 %v6141
        %6316 = vmatpush.bf16.msra.mxu0 %v6137
        %6317 = vmatpush.bf16.msra.mxu0 %v6133
        %6318 = vmatpush.bf16.msra.mxu0 %v6129
        %6319 = vmatmul.bf16.gmra.mxu0 %v5852
        %v6320 = vpop.f32.mrf.mxu0
        %v6321 = vadd.f32 %v6308, %v6320
        %v6322 = vpop.f32.mrf.mxu0
        %6323 = vdwg.mxu0
        %6324 = vmatpush.bf16.msra.mxu0 0
        %6325 = vmatpush.bf16.msra.mxu0 0
        %6326 = vmatpush.bf16.msra.mxu0 0
        %6327 = vmatpush.bf16.msra.mxu0 0
        %6328 = vmatpush.bf16.msra.mxu0 %v6173
        %6329 = vmatpush.bf16.msra.mxu0 %v6169
        %6330 = vmatpush.bf16.msra.mxu0 %v6165
        %6331 = vmatpush.bf16.msra.mxu0 %v6161
        %6332 = vmatmul.bf16.gmra.mxu0 %v6257
        %v6333 = vpop.f32.mrf.mxu0
        %v6334 = vadd.f32 %v6321, %v6333
        %v6335 = vpop.f32.mrf.mxu0
        %6336 = vdwg.mxu0
        %6337 = vmatpush.bf16.msra.mxu0 %v6126
        %6338 = vmatpush.bf16.msra.mxu0 %v6122
        %6339 = vmatpush.bf16.msra.mxu0 %v6118
        %6340 = vmatpush.bf16.msra.mxu0 %v6114
        %6341 = vmatpush.bf16.msra.mxu0 %v6110
        %6342 = vmatpush.bf16.msra.mxu0 %v6106
        %6343 = vmatpush.bf16.msra.mxu0 %v6102
        %6344 = vmatpush.bf16.msra.mxu0 %v6098
        %6345 = vmatmul.bf16.gmra.mxu0 %v5851
        %v6346 = vpop.f32.mrf.mxu0
        %v6347 = vadd.f32 %v4600, %v6346
        %v6348 = vpop.f32.mrf.mxu0
        %6349 = vdwg.mxu0
        %6350 = vmatpush.bf16.msra.mxu0 %v6158
        %6351 = vmatpush.bf16.msra.mxu0 %v6154
        %6352 = vmatpush.bf16.msra.mxu0 %v6150
        %6353 = vmatpush.bf16.msra.mxu0 %v6146
        %6354 = vmatpush.bf16.msra.mxu0 %v6142
        %6355 = vmatpush.bf16.msra.mxu0 %v6138
        %6356 = vmatpush.bf16.msra.mxu0 %v6134
        %6357 = vmatpush.bf16.msra.mxu0 %v6130
        %6358 = vmatmul.bf16.gmra.mxu0 %v5852
        %v6359 = vpop.f32.mrf.mxu0
        %v6360 = vadd.f32 %v6347, %v6359
        %v6361 = vpop.f32.mrf.mxu0
        %6362 = vdwg.mxu0
        %6363 = vmatpush.bf16.msra.mxu0 0
        %6364 = vmatpush.bf16.msra.mxu0 0
        %6365 = vmatpush.bf16.msra.mxu0 0
        %6366 = vmatpush.bf16.msra.mxu0 0
        %6367 = vmatpush.bf16.msra.mxu0 %v6174
        %6368 = vmatpush.bf16.msra.mxu0 %v6170
        %6369 = vmatpush.bf16.msra.mxu0 %v6166
        %6370 = vmatpush.bf16.msra.mxu0 %v6162
        %6371 = vmatmul.bf16.gmra.mxu0 %v6257
        %v6372 = vpop.f32.mrf.mxu0
        %v6373 = vadd.f32 %v6360, %v6372
        %v6374 = vpop.f32.mrf.mxu0
        %6375 = vdwg.mxu0
        %6376 = vmatpush.bf16.msra.mxu0 %v6127
        %6377 = vmatpush.bf16.msra.mxu0 %v6123
        %6378 = vmatpush.bf16.msra.mxu0 %v6119
        %6379 = vmatpush.bf16.msra.mxu0 %v6115
        %6380 = vmatpush.bf16.msra.mxu0 %v6111
        %6381 = vmatpush.bf16.msra.mxu0 %v6107
        %6382 = vmatpush.bf16.msra.mxu0 %v6103
        %6383 = vmatpush.bf16.msra.mxu0 %v6099
        %6384 = vmatmul.bf16.gmra.mxu0 %v5851
        %v6385 = vpop.f32.mrf.mxu0
        %v6386 = vadd.f32 %v4639, %v6385
        %v6387 = vpop.f32.mrf.mxu0
        %6388 = vdwg.mxu0
        %6389 = vmatpush.bf16.msra.mxu0 %v6159
        %6390 = vmatpush.bf16.msra.mxu0 %v6155
        %6391 = vmatpush.bf16.msra.mxu0 %v6151
        %6392 = vmatpush.bf16.msra.mxu0 %v6147
        %6393 = vmatpush.bf16.msra.mxu0 %v6143
        %6394 = vmatpush.bf16.msra.mxu0 %v6139
        %6395 = vmatpush.bf16.msra.mxu0 %v6135
        %6396 = vmatpush.bf16.msra.mxu0 %v6131
        %6397 = vmatmul.bf16.gmra.mxu0 %v5852
        %v6398 = vpop.f32.mrf.mxu0
        %v6399 = vadd.f32 %v6386, %v6398
        %v6400 = vpop.f32.mrf.mxu0
        %6401 = vdwg.mxu0
        %6402 = vmatpush.bf16.msra.mxu0 0
        %6403 = vmatpush.bf16.msra.mxu0 0
        %6404 = vmatpush.bf16.msra.mxu0 0
        %6405 = vmatpush.bf16.msra.mxu0 0
        %6406 = vmatpush.bf16.msra.mxu0 %v6175
        %6407 = vmatpush.bf16.msra.mxu0 %v6171
        %6408 = vmatpush.bf16.msra.mxu0 %v6167
        %6409 = vmatpush.bf16.msra.mxu0 %v6163
        %6410 = vmatmul.bf16.gmra.mxu0 %v6257
        %v6411 = vpop.f32.mrf.mxu0
        %v6412 = vadd.f32 %v6399, %v6411
        %v6413 = vpop.f32.mrf.mxu0
        %6414 = vdwg.mxu0
        %v6415 = vadd.f32 %v5731, %v6295
        %v6416 = vadd.f32 %v5770, %v6334
        %v6417 = vadd.f32 %v5809, %v6373
        %v6418 = vadd.f32 %v5848, %v6412
        %v6419 = vadd.f32 %v6415, %v5167
        %v6420 = vadd.f32 %v6416, %v5206
        %v6421 = vadd.f32 %v6417, %v5245
        %v6422 = vadd.f32 %v6418, %v5284
        %v6423 = vld [vmem:[#allocation14] sm:$0xf]
        %v6425 = vperm.slane %v6423, 0
        %v6426 = vperm.slane %v6423, 1
        %v6427 = vperm.slane %v6423, 2
        %v6428 = vperm.slane %v6423, 3
        %v6433 = vadd.f32 %v6419, %v6425
        %v6434 = vadd.f32 %v6420, %v6426
        %v6435 = vadd.f32 %v6421, %v6427
        %v6436 = vadd.f32 %v6422, %v6428
        %vm6437 = vcmp.gt.f32.partialorder %v6433, 0.0
        %vm6438 = vcmp.gt.f32.partialorder %v6434, 0.0
        %vm6439 = vcmp.gt.f32.partialorder %v6435, 0.0
        %vm6440 = vcmp.gt.f32.partialorder %v6436, 0.0
        %v6441 = vstv %s739
        %v6442 = vmul.f32 %v6441, %v6433
        %v6443 = vmul.f32 %v6441, %v6434
        %v6444 = vmul.f32 %v6441, %v6435
        %v6445 = vmul.f32 %v6441, %v6436
        %v6446 = vsel %vm6437, %v6433, %v6442
        %v6447 = vsel %vm6438, %v6434, %v6443
        %v6448 = vsel %vm6439, %v6435, %v6444
        %v6449 = vsel %vm6440, %v6436, %v6445
        %v6450 = vpack.c.bf16 %v6447, %v6446
        %v6451 = vpack.c.bf16 %v6449, %v6448
        %v6452 = vld [vmem:[#allocation17] sm:$0xff]
        %v6453 = vld [vmem:[#allocation17 + $0x8] sm:$0xff]
        %v6454 = vld [vmem:[#allocation17 + $0x10] sm:$0xff]
        %v6455 = vld [vmem:[#allocation17 + $0x18] sm:$0xff]
        %v6456 = vld [vmem:[#allocation17 + $0x20] sm:$0xff]
        %v6457 = vld [vmem:[#allocation17 + $0x28] sm:$0xff]
        %v6458 = vld [vmem:[#allocation17 + $0x30] sm:$0xff]
        %v6459 = vld [vmem:[#allocation17 + $0x38] sm:$0xff]
        %v6460 = vld [vmem:[#allocation17 + $0x40] sm:$0xff]
        %v6461 = vld [vmem:[#allocation17 + $0x48] sm:$0xff]
        %v6462 = vld [vmem:[#allocation17 + $0x50] sm:$0xff]
        %v6463 = vld [vmem:[#allocation17 + $0x58] sm:$0xff]
        %v6464 = vld [vmem:[#allocation17 + $0x60] sm:$0xff]
        %v6465 = vld [vmem:[#allocation17 + $0x68] sm:$0xff]
        %v6466 = vld [vmem:[#allocation17 + $0x70] sm:$0xff]
        %v6467 = vld [vmem:[#allocation17 + $0x78] sm:$0xff]
        %v6468 = vld [vmem:[#allocation17 + $0x80] sm:$0xff]
        %v6469 = vld [vmem:[#allocation17 + $0x88] sm:$0xff]
        %v6470 = vld [vmem:[#allocation17 + $0x90] sm:$0xff]
        %v6471 = vld [vmem:[#allocation17 + $0x98] sm:$0xff]
        %v6472 = vld [vmem:[#allocation17 + $0xa0] sm:$0xff]
        %v6473 = vld [vmem:[#allocation17 + $0xa8] sm:$0xff]
        %v6474 = vld [vmem:[#allocation17 + $0xb0] sm:$0xff]
        %v6475 = vld [vmem:[#allocation17 + $0xb8] sm:$0xff]
        %v6476 = vld [vmem:[#allocation17 + $0xc0] sm:$0xff]
        %v6477 = vld [vmem:[#allocation17 + $0xc8] sm:$0xff]
        %v6478 = vld [vmem:[#allocation17 + $0xd0] sm:$0xff]
        %v6479 = vld [vmem:[#allocation17 + $0xd8] sm:$0xff]
        %v6480 = vld [vmem:[#allocation17 + $0xe0] sm:$0xff]
        %v6481 = vld [vmem:[#allocation17 + $0xe8] sm:$0xff]
        %v6482 = vld [vmem:[#allocation17 + $0xf0] sm:$0xff]
        %v6483 = vld [vmem:[#allocation17 + $0xf8] sm:$0xff]
        %v6484 = vld [vmem:[#allocation17 + $0x100] sm:$0xff]
        %v6485 = vld [vmem:[#allocation17 + $0x108] sm:$0xff]
        %v6486 = vld [vmem:[#allocation17 + $0x110] sm:$0xff]
        %v6487 = vld [vmem:[#allocation17 + $0x118] sm:$0xff]
        %v6488 = vld [vmem:[#allocation17 + $0x120] sm:$0xff]
        %v6489 = vld [vmem:[#allocation17 + $0x128] sm:$0xff]
        %v6490 = vld [vmem:[#allocation17 + $0x130] sm:$0xff]
        %v6491 = vld [vmem:[#allocation17 + $0x138] sm:$0xff]
        %v6492 = vld [vmem:[#allocation17 + $0x140] sm:$0xff]
        %v6493 = vld [vmem:[#allocation17 + $0x148] sm:$0xff]
        %v6494 = vld [vmem:[#allocation17 + $0x150] sm:$0xff]
        %v6495 = vld [vmem:[#allocation17 + $0x158] sm:$0xff]
        %v6496 = vld [vmem:[#allocation17 + $0x160] sm:$0xff]
        %v6497 = vld [vmem:[#allocation17 + $0x168] sm:$0xff]
        %v6498 = vld [vmem:[#allocation17 + $0x170] sm:$0xff]
        %v6499 = vld [vmem:[#allocation17 + $0x178] sm:$0xff]
        %v6500 = vld [vmem:[#allocation17 + $0x180] sm:$0xff]
        %v6501 = vld [vmem:[#allocation17 + $0x188] sm:$0xff]
        %v6502 = vld [vmem:[#allocation17 + $0x190] sm:$0xff]
        %v6503 = vld [vmem:[#allocation17 + $0x198] sm:$0xff]
        %v6504 = vld [vmem:[#allocation17 + $0x1a0] sm:$0xff]
        %v6505 = vld [vmem:[#allocation17 + $0x1a8] sm:$0xff]
        %v6506 = vld [vmem:[#allocation17 + $0x1b0] sm:$0xff]
        %v6507 = vld [vmem:[#allocation17 + $0x1b8] sm:$0xff]
        %v6508 = vld [vmem:[#allocation17 + $0x1c0] sm:$0xff]
        %v6509 = vld [vmem:[#allocation17 + $0x1c8] sm:$0xff]
        %v6510 = vld [vmem:[#allocation17 + $0x1d0] sm:$0xff]
        %v6511 = vld [vmem:[#allocation17 + $0x1d8] sm:$0xff]
        %v6512 = vld [vmem:[#allocation17 + $0x1e0] sm:$0xff]
        %v6513 = vld [vmem:[#allocation17 + $0x1e8] sm:$0xff]
        %v6514 = vld [vmem:[#allocation17 + $0x1f0] sm:$0xff]
        %v6515 = vld [vmem:[#allocation17 + $0x1f8] sm:$0xff]
        %s6516 = scalar_lea.vmem [#allocation17], 512
        %v6517 = vld [vmem:[%s6516] sm:$0xff]
        %v6518 = vld [vmem:[%s6516 + $0x8] sm:$0xff]
        %v6519 = vld [vmem:[%s6516 + $0x10] sm:$0xff]
        %v6520 = vld [vmem:[%s6516 + $0x18] sm:$0xff]
        %v6521 = vld [vmem:[%s6516 + $0x20] sm:$0xff]
        %v6522 = vld [vmem:[%s6516 + $0x28] sm:$0xff]
        %v6523 = vld [vmem:[%s6516 + $0x30] sm:$0xff]
        %v6524 = vld [vmem:[%s6516 + $0x38] sm:$0xff]
        %v6525 = vld [vmem:[%s6516 + $0x40] sm:$0xff]
        %v6526 = vld [vmem:[%s6516 + $0x48] sm:$0xff]
        %v6527 = vld [vmem:[%s6516 + $0x50] sm:$0xff]
        %v6528 = vld [vmem:[%s6516 + $0x58] sm:$0xff]
        %v6529 = vld [vmem:[%s6516 + $0x60] sm:$0xff]
        %v6530 = vld [vmem:[%s6516 + $0x68] sm:$0xff]
        %v6531 = vld [vmem:[%s6516 + $0x70] sm:$0xff]
        %v6532 = vld [vmem:[%s6516 + $0x78] sm:$0xff]
        %v6533 = vld [vmem:[%s6516 + $0x80] sm:$0xff]
        %v6534 = vld [vmem:[%s6516 + $0x88] sm:$0xff]
        %v6535 = vld [vmem:[%s6516 + $0x90] sm:$0xff]
        %v6536 = vld [vmem:[%s6516 + $0x98] sm:$0xff]
        %v6537 = vld [vmem:[%s6516 + $0xa0] sm:$0xff]
        %v6538 = vld [vmem:[%s6516 + $0xa8] sm:$0xff]
        %v6539 = vld [vmem:[%s6516 + $0xb0] sm:$0xff]
        %v6540 = vld [vmem:[%s6516 + $0xb8] sm:$0xff]
        %v6541 = vld [vmem:[%s6516 + $0xc0] sm:$0xff]
        %v6542 = vld [vmem:[%s6516 + $0xc8] sm:$0xff]
        %v6543 = vld [vmem:[%s6516 + $0xd0] sm:$0xff]
        %v6544 = vld [vmem:[%s6516 + $0xd8] sm:$0xff]
        %v6545 = vld [vmem:[%s6516 + $0xe0] sm:$0xff]
        %v6546 = vld [vmem:[%s6516 + $0xe8] sm:$0xff]
        %v6547 = vld [vmem:[%s6516 + $0xf0] sm:$0xff]
        %v6548 = vld [vmem:[%s6516 + $0xf8] sm:$0xff]
        %v6549 = vld [vmem:[%s6516 + $0x100] sm:$0xff]
        %v6550 = vld [vmem:[%s6516 + $0x108] sm:$0xff]
        %v6551 = vld [vmem:[%s6516 + $0x110] sm:$0xff]
        %v6552 = vld [vmem:[%s6516 + $0x118] sm:$0xff]
        %v6553 = vld [vmem:[%s6516 + $0x120] sm:$0xff]
        %v6554 = vld [vmem:[%s6516 + $0x128] sm:$0xff]
        %v6555 = vld [vmem:[%s6516 + $0x130] sm:$0xff]
        %v6556 = vld [vmem:[%s6516 + $0x138] sm:$0xff]
        %v6557 = vld [vmem:[%s6516 + $0x140] sm:$0xff]
        %v6558 = vld [vmem:[%s6516 + $0x148] sm:$0xff]
        %v6559 = vld [vmem:[%s6516 + $0x150] sm:$0xff]
        %v6560 = vld [vmem:[%s6516 + $0x158] sm:$0xff]
        %v6561 = vld [vmem:[%s6516 + $0x160] sm:$0xff]
        %v6562 = vld [vmem:[%s6516 + $0x168] sm:$0xff]
        %v6563 = vld [vmem:[%s6516 + $0x170] sm:$0xff]
        %v6564 = vld [vmem:[%s6516 + $0x178] sm:$0xff]
        %v6565 = vld [vmem:[%s6516 + $0x180] sm:$0xff]
        %v6566 = vld [vmem:[%s6516 + $0x188] sm:$0xff]
        %v6567 = vld [vmem:[%s6516 + $0x190] sm:$0xff]
        %v6568 = vld [vmem:[%s6516 + $0x198] sm:$0xff]
        %v6569 = vld [vmem:[%s6516 + $0x1a0] sm:$0xff]
        %v6570 = vld [vmem:[%s6516 + $0x1a8] sm:$0xff]
        %v6571 = vld [vmem:[%s6516 + $0x1b0] sm:$0xff]
        %v6572 = vld [vmem:[%s6516 + $0x1b8] sm:$0xff]
        %v6573 = vld [vmem:[%s6516 + $0x1c0] sm:$0xff]
        %v6574 = vld [vmem:[%s6516 + $0x1c8] sm:$0xff]
        %v6575 = vld [vmem:[%s6516 + $0x1d0] sm:$0xff]
        %v6576 = vld [vmem:[%s6516 + $0x1d8] sm:$0xff]
        %v6577 = vld [vmem:[%s6516 + $0x1e0] sm:$0xff]
        %v6578 = vld [vmem:[%s6516 + $0x1e8] sm:$0xff]
        %v6579 = vld [vmem:[%s6516 + $0x1f0] sm:$0xff]
        %v6580 = vld [vmem:[%s6516 + $0x1f8] sm:$0xff]
        %v6583 = vunpack.c.l.b16 %v6450
        %v6584 = vunpack.c.h.b16 %v6450
        %v6585 = vunpack.c.l.b16 %v6451
        %v6586 = vunpack.c.h.b16 %v6451
        %v6587 = vpack.c.b16 %v6583, %v6583
        %v6588 = vpack.c.b16 %v6584, %v6584
        %v6589 = vpack.c.b16 %v6585, %v6585
        %v6590 = vpack.c.b16 %v6586, %v6586
        %v6592 = vshrl.u32 %v6587, 16
        %v6595 = vshrl.u32 %v6588, 16
        %v6598 = vshrl.u32 %v6589, 16
        %v6601 = vshrl.u32 %v6590, 16
        %v6671 = vunpack.c.l.b16 %v6517
        %v6672 = vunpack.c.h.b16 %v6517
        %v6673 = vunpack.c.l.b16 %v6518
        %v6674 = vunpack.c.h.b16 %v6518
        %v6675 = vunpack.c.l.b16 %v6519
        %v6676 = vunpack.c.h.b16 %v6519
        %v6677 = vunpack.c.l.b16 %v6520
        %v6678 = vunpack.c.h.b16 %v6520
        %v6679 = vunpack.c.l.b16 %v6521
        %v6680 = vunpack.c.h.b16 %v6521
        %v6681 = vunpack.c.l.b16 %v6522
        %v6682 = vunpack.c.h.b16 %v6522
        %v6683 = vunpack.c.l.b16 %v6523
        %v6684 = vunpack.c.h.b16 %v6523
        %v6685 = vunpack.c.l.b16 %v6524
        %v6686 = vunpack.c.h.b16 %v6524
        %v6687 = vunpack.c.l.b16 %v6525
        %v6688 = vunpack.c.h.b16 %v6525
        %v6689 = vunpack.c.l.b16 %v6526
        %v6690 = vunpack.c.h.b16 %v6526
        %v6691 = vunpack.c.l.b16 %v6527
        %v6692 = vunpack.c.h.b16 %v6527
        %v6693 = vunpack.c.l.b16 %v6528
        %v6694 = vunpack.c.h.b16 %v6528
        %v6695 = vunpack.c.l.b16 %v6529
        %v6696 = vunpack.c.h.b16 %v6529
        %v6697 = vunpack.c.l.b16 %v6530
        %v6698 = vunpack.c.h.b16 %v6530
        %v6699 = vunpack.c.l.b16 %v6531
        %v6700 = vunpack.c.h.b16 %v6531
        %v6701 = vunpack.c.l.b16 %v6532
        %v6702 = vunpack.c.h.b16 %v6532
        %v6703 = vunpack.c.l.b16 %v6533
        %v6704 = vunpack.c.h.b16 %v6533
        %v6705 = vunpack.c.l.b16 %v6534
        %v6706 = vunpack.c.h.b16 %v6534
        %v6707 = vunpack.c.l.b16 %v6535
        %v6708 = vunpack.c.h.b16 %v6535
        %v6709 = vunpack.c.l.b16 %v6536
        %v6710 = vunpack.c.h.b16 %v6536
        %v6711 = vunpack.c.l.b16 %v6537
        %v6712 = vunpack.c.h.b16 %v6537
        %v6713 = vunpack.c.l.b16 %v6538
        %v6714 = vunpack.c.h.b16 %v6538
        %v6715 = vunpack.c.l.b16 %v6539
        %v6716 = vunpack.c.h.b16 %v6539
        %v6717 = vunpack.c.l.b16 %v6540
        %v6718 = vunpack.c.h.b16 %v6540
        %v6719 = vunpack.c.l.b16 %v6541
        %v6720 = vunpack.c.h.b16 %v6541
        %v6721 = vunpack.c.l.b16 %v6542
        %v6722 = vunpack.c.h.b16 %v6542
        %v6723 = vunpack.c.l.b16 %v6543
        %v6724 = vunpack.c.h.b16 %v6543
        %v6725 = vunpack.c.l.b16 %v6544
        %v6726 = vunpack.c.h.b16 %v6544
        %v6727 = vunpack.c.l.b16 %v6545
        %v6728 = vunpack.c.h.b16 %v6545
        %v6729 = vunpack.c.l.b16 %v6546
        %v6730 = vunpack.c.h.b16 %v6546
        %v6731 = vunpack.c.l.b16 %v6547
        %v6732 = vunpack.c.h.b16 %v6547
        %v6733 = vunpack.c.l.b16 %v6548
        %v6734 = vunpack.c.h.b16 %v6548
        %v6735 = vunpack.c.l.b16 %v6549
        %v6736 = vunpack.c.h.b16 %v6549
        %v6737 = vunpack.c.l.b16 %v6550
        %v6738 = vunpack.c.h.b16 %v6550
        %v6739 = vunpack.c.l.b16 %v6551
        %v6740 = vunpack.c.h.b16 %v6551
        %v6741 = vunpack.c.l.b16 %v6552
        %v6742 = vunpack.c.h.b16 %v6552
        %v6743 = vunpack.c.l.b16 %v6553
        %v6744 = vunpack.c.h.b16 %v6553
        %v6745 = vunpack.c.l.b16 %v6554
        %v6746 = vunpack.c.h.b16 %v6554
        %v6747 = vunpack.c.l.b16 %v6555
        %v6748 = vunpack.c.h.b16 %v6555
        %v6749 = vunpack.c.l.b16 %v6556
        %v6750 = vunpack.c.h.b16 %v6556
        %v6751 = vunpack.c.l.b16 %v6557
        %v6752 = vunpack.c.h.b16 %v6557
        %v6753 = vunpack.c.l.b16 %v6558
        %v6754 = vunpack.c.h.b16 %v6558
        %v6755 = vunpack.c.l.b16 %v6559
        %v6756 = vunpack.c.h.b16 %v6559
        %v6757 = vunpack.c.l.b16 %v6560
        %v6758 = vunpack.c.h.b16 %v6560
        %v6759 = vunpack.c.l.b16 %v6561
        %v6760 = vunpack.c.h.b16 %v6561
        %v6761 = vunpack.c.l.b16 %v6562
        %v6762 = vunpack.c.h.b16 %v6562
        %v6763 = vunpack.c.l.b16 %v6563
        %v6764 = vunpack.c.h.b16 %v6563
        %v6765 = vunpack.c.l.b16 %v6564
        %v6766 = vunpack.c.h.b16 %v6564
        %v6767 = vunpack.c.l.b16 %v6565
        %v6768 = vunpack.c.h.b16 %v6565
        %v6769 = vunpack.c.l.b16 %v6566
        %v6770 = vunpack.c.h.b16 %v6566
        %v6771 = vunpack.c.l.b16 %v6567
        %v6772 = vunpack.c.h.b16 %v6567
        %v6773 = vunpack.c.l.b16 %v6568
        %v6774 = vunpack.c.h.b16 %v6568
        %v6775 = vunpack.c.l.b16 %v6569
        %v6776 = vunpack.c.h.b16 %v6569
        %v6777 = vunpack.c.l.b16 %v6570
        %v6778 = vunpack.c.h.b16 %v6570
        %v6779 = vunpack.c.l.b16 %v6571
        %v6780 = vunpack.c.h.b16 %v6571
        %v6781 = vunpack.c.l.b16 %v6572
        %v6782 = vunpack.c.h.b16 %v6572
        %v6783 = vunpack.c.l.b16 %v6573
        %v6784 = vunpack.c.h.b16 %v6573
        %v6785 = vunpack.c.l.b16 %v6574
        %v6786 = vunpack.c.h.b16 %v6574
        %v6787 = vunpack.c.l.b16 %v6575
        %v6788 = vunpack.c.h.b16 %v6575
        %v6789 = vunpack.c.l.b16 %v6576
        %v6790 = vunpack.c.h.b16 %v6576
        %v6791 = vunpack.c.l.b16 %v6577
        %v6792 = vunpack.c.h.b16 %v6577
        %v6793 = vunpack.c.l.b16 %v6578
        %v6794 = vunpack.c.h.b16 %v6578
        %v6795 = vunpack.c.l.b16 %v6579
        %v6796 = vunpack.c.h.b16 %v6579
        %v6797 = vunpack.c.l.b16 %v6580
        %v6798 = vunpack.c.h.b16 %v6580
        %v6799 = vpack.c.b16 %v6673, %v6671
        %v6800 = vpack.c.b16 %v6674, %v6672
        %v6801 = vpack.c.b16 %v6677, %v6675
        %v6802 = vpack.c.b16 %v6678, %v6676
        %v6803 = vpack.c.b16 %v6681, %v6679
        %v6804 = vpack.c.b16 %v6682, %v6680
        %v6805 = vpack.c.b16 %v6685, %v6683
        %v6806 = vpack.c.b16 %v6686, %v6684
        %v6807 = vpack.c.b16 %v6689, %v6687
        %v6808 = vpack.c.b16 %v6690, %v6688
        %v6809 = vpack.c.b16 %v6693, %v6691
        %v6810 = vpack.c.b16 %v6694, %v6692
        %v6811 = vpack.c.b16 %v6697, %v6695
        %v6812 = vpack.c.b16 %v6698, %v6696
        %v6813 = vpack.c.b16 %v6701, %v6699
        %v6814 = vpack.c.b16 %v6702, %v6700
        %v6815 = vpack.c.b16 %v6705, %v6703
        %v6816 = vpack.c.b16 %v6706, %v6704
        %v6817 = vpack.c.b16 %v6709, %v6707
        %v6818 = vpack.c.b16 %v6710, %v6708
        %v6819 = vpack.c.b16 %v6713, %v6711
        %v6820 = vpack.c.b16 %v6714, %v6712
        %v6821 = vpack.c.b16 %v6717, %v6715
        %v6822 = vpack.c.b16 %v6718, %v6716
        %v6823 = vpack.c.b16 %v6721, %v6719
        %v6824 = vpack.c.b16 %v6722, %v6720
        %v6825 = vpack.c.b16 %v6725, %v6723
        %v6826 = vpack.c.b16 %v6726, %v6724
        %v6827 = vpack.c.b16 %v6729, %v6727
        %v6828 = vpack.c.b16 %v6730, %v6728
        %v6829 = vpack.c.b16 %v6733, %v6731
        %v6830 = vpack.c.b16 %v6734, %v6732
        %v6831 = vpack.c.b16 %v6737, %v6735
        %v6832 = vpack.c.b16 %v6738, %v6736
        %v6833 = vpack.c.b16 %v6741, %v6739
        %v6834 = vpack.c.b16 %v6742, %v6740
        %v6835 = vpack.c.b16 %v6745, %v6743
        %v6836 = vpack.c.b16 %v6746, %v6744
        %v6837 = vpack.c.b16 %v6749, %v6747
        %v6838 = vpack.c.b16 %v6750, %v6748
        %v6839 = vpack.c.b16 %v6753, %v6751
        %v6840 = vpack.c.b16 %v6754, %v6752
        %v6841 = vpack.c.b16 %v6757, %v6755
        %v6842 = vpack.c.b16 %v6758, %v6756
        %v6843 = vpack.c.b16 %v6761, %v6759
        %v6844 = vpack.c.b16 %v6762, %v6760
        %v6845 = vpack.c.b16 %v6765, %v6763
        %v6846 = vpack.c.b16 %v6766, %v6764
        %v6847 = vpack.c.b16 %v6769, %v6767
        %v6848 = vpack.c.b16 %v6770, %v6768
        %v6849 = vpack.c.b16 %v6773, %v6771
        %v6850 = vpack.c.b16 %v6774, %v6772
        %v6851 = vpack.c.b16 %v6777, %v6775
        %v6852 = vpack.c.b16 %v6778, %v6776
        %v6853 = vpack.c.b16 %v6781, %v6779
        %v6854 = vpack.c.b16 %v6782, %v6780
        %v6855 = vpack.c.b16 %v6785, %v6783
        %v6856 = vpack.c.b16 %v6786, %v6784
        %v6857 = vpack.c.b16 %v6789, %v6787
        %v6858 = vpack.c.b16 %v6790, %v6788
        %v6859 = vpack.c.b16 %v6793, %v6791
        %v6860 = vpack.c.b16 %v6794, %v6792
        %v6861 = vpack.c.b16 %v6797, %v6795
        %v6862 = vpack.c.b16 %v6798, %v6796
        %6927 = vmatpush.bf16.msra.mxu0 %v6813
        %6928 = vmatpush.bf16.msra.mxu0 %v6811
        %6929 = vmatpush.bf16.msra.mxu0 %v6809
        %6930 = vmatpush.bf16.msra.mxu0 %v6807
        %6931 = vmatpush.bf16.msra.mxu0 %v6805
        %6932 = vmatpush.bf16.msra.mxu0 %v6803
        %6933 = vmatpush.bf16.msra.mxu0 %v6801
        %6934 = vmatpush.bf16.msra.mxu0 %v6799
        %6935 = vmatmul.bf16.gmra.mxu0 %v6592
        %v6936 = vpop.f32.mrf.mxu0
        %v6937 = vadd.f32 0.0, %v6936
        %v6938 = vpop.f32.mrf.mxu0
        %6939 = vdwg.mxu0
        %6940 = vmatpush.bf16.msra.mxu0 %v6829
        %6941 = vmatpush.bf16.msra.mxu0 %v6827
        %6942 = vmatpush.bf16.msra.mxu0 %v6825
        %6943 = vmatpush.bf16.msra.mxu0 %v6823
        %6944 = vmatpush.bf16.msra.mxu0 %v6821
        %6945 = vmatpush.bf16.msra.mxu0 %v6819
        %6946 = vmatpush.bf16.msra.mxu0 %v6817
        %6947 = vmatpush.bf16.msra.mxu0 %v6815
        %6948 = vmatmul.bf16.gmra.mxu0 %v6595
        %v6949 = vpop.f32.mrf.mxu0
        %v6950 = vadd.f32 %v6937, %v6949
        %v6951 = vpop.f32.mrf.mxu0
        %6952 = vdwg.mxu0
        %6953 = vmatpush.bf16.msra.mxu0 %v6845
        %6954 = vmatpush.bf16.msra.mxu0 %v6843
        %6955 = vmatpush.bf16.msra.mxu0 %v6841
        %6956 = vmatpush.bf16.msra.mxu0 %v6839
        %6957 = vmatpush.bf16.msra.mxu0 %v6837
        %6958 = vmatpush.bf16.msra.mxu0 %v6835
        %6959 = vmatpush.bf16.msra.mxu0 %v6833
        %6960 = vmatpush.bf16.msra.mxu0 %v6831
        %6961 = vmatmul.bf16.gmra.mxu0 %v6598
        %v6962 = vpop.f32.mrf.mxu0
        %v6963 = vadd.f32 %v6950, %v6962
        %v6964 = vpop.f32.mrf.mxu0
        %6965 = vdwg.mxu0
        %6966 = vmatpush.bf16.msra.mxu0 %v6861
        %6967 = vmatpush.bf16.msra.mxu0 %v6859
        %6968 = vmatpush.bf16.msra.mxu0 %v6857
        %6969 = vmatpush.bf16.msra.mxu0 %v6855
        %6970 = vmatpush.bf16.msra.mxu0 %v6853
        %6971 = vmatpush.bf16.msra.mxu0 %v6851
        %6972 = vmatpush.bf16.msra.mxu0 %v6849
        %6973 = vmatpush.bf16.msra.mxu0 %v6847
        %6974 = vmatmul.bf16.gmra.mxu0 %v6601
        %v6975 = vpop.f32.mrf.mxu0
        %v6976 = vadd.f32 %v6963, %v6975
        %v6977 = vpop.f32.mrf.mxu0
        %6978 = vdwg.mxu0
        %6979 = vmatpush.bf16.msra.mxu0 %v6814
        %6980 = vmatpush.bf16.msra.mxu0 %v6812
        %6981 = vmatpush.bf16.msra.mxu0 %v6810
        %6982 = vmatpush.bf16.msra.mxu0 %v6808
        %6983 = vmatpush.bf16.msra.mxu0 %v6806
        %6984 = vmatpush.bf16.msra.mxu0 %v6804
        %6985 = vmatpush.bf16.msra.mxu0 %v6802
        %6986 = vmatpush.bf16.msra.mxu0 %v6800
        %6987 = vmatmul.bf16.gmra.mxu0 %v6592
        %v6988 = vpop.f32.mrf.mxu0
        %v6989 = vadd.f32 0.0, %v6988
        %v6990 = vpop.f32.mrf.mxu0
        %6991 = vdwg.mxu0
        %6992 = vmatpush.bf16.msra.mxu0 %v6830
        %6993 = vmatpush.bf16.msra.mxu0 %v6828
        %6994 = vmatpush.bf16.msra.mxu0 %v6826
        %6995 = vmatpush.bf16.msra.mxu0 %v6824
        %6996 = vmatpush.bf16.msra.mxu0 %v6822
        %6997 = vmatpush.bf16.msra.mxu0 %v6820
        %6998 = vmatpush.bf16.msra.mxu0 %v6818
        %6999 = vmatpush.bf16.msra.mxu0 %v6816
        %7000 = vmatmul.bf16.gmra.mxu0 %v6595
        %v7001 = vpop.f32.mrf.mxu0
        %v7002 = vadd.f32 %v6989, %v7001
        %v7003 = vpop.f32.mrf.mxu0
        %7004 = vdwg.mxu0
        %7005 = vmatpush.bf16.msra.mxu0 %v6846
        %7006 = vmatpush.bf16.msra.mxu0 %v6844
        %7007 = vmatpush.bf16.msra.mxu0 %v6842
        %7008 = vmatpush.bf16.msra.mxu0 %v6840
        %7009 = vmatpush.bf16.msra.mxu0 %v6838
        %7010 = vmatpush.bf16.msra.mxu0 %v6836
        %7011 = vmatpush.bf16.msra.mxu0 %v6834
        %7012 = vmatpush.bf16.msra.mxu0 %v6832
        %7013 = vmatmul.bf16.gmra.mxu0 %v6598
        %v7014 = vpop.f32.mrf.mxu0
        %v7015 = vadd.f32 %v7002, %v7014
        %v7016 = vpop.f32.mrf.mxu0
        %7017 = vdwg.mxu0
        %7018 = vmatpush.bf16.msra.mxu0 %v6862
        %7019 = vmatpush.bf16.msra.mxu0 %v6860
        %7020 = vmatpush.bf16.msra.mxu0 %v6858
        %7021 = vmatpush.bf16.msra.mxu0 %v6856
        %7022 = vmatpush.bf16.msra.mxu0 %v6854
        %7023 = vmatpush.bf16.msra.mxu0 %v6852
        %7024 = vmatpush.bf16.msra.mxu0 %v6850
        %7025 = vmatpush.bf16.msra.mxu0 %v6848
        %7026 = vmatmul.bf16.gmra.mxu0 %v6601
        %v7027 = vpop.f32.mrf.mxu0
        %v7028 = vadd.f32 %v7015, %v7027
        %v7029 = vpop.f32.mrf.mxu0
        %7030 = vdwg.mxu0
        %s7031 = scalar_lea.vmem [#allocation17], 1024
        %v7032 = vld [vmem:[%s7031] sm:$0xff]
        %v7033 = vld [vmem:[%s7031 + $0x8] sm:$0xff]
        %v7034 = vld [vmem:[%s7031 + $0x10] sm:$0xff]
        %v7035 = vld [vmem:[%s7031 + $0x18] sm:$0xff]
        %v7036 = vld [vmem:[%s7031 + $0x20] sm:$0xff]
        %v7037 = vld [vmem:[%s7031 + $0x28] sm:$0xff]
        %v7038 = vld [vmem:[%s7031 + $0x30] sm:$0xff]
        %v7039 = vld [vmem:[%s7031 + $0x38] sm:$0xff]
        %v7040 = vld [vmem:[%s7031 + $0x40] sm:$0xff]
        %v7041 = vld [vmem:[%s7031 + $0x48] sm:$0xff]
        %v7042 = vld [vmem:[%s7031 + $0x50] sm:$0xff]
        %v7043 = vld [vmem:[%s7031 + $0x58] sm:$0xff]
        %v7044 = vld [vmem:[%s7031 + $0x60] sm:$0xff]
        %v7045 = vld [vmem:[%s7031 + $0x68] sm:$0xff]
        %v7046 = vld [vmem:[%s7031 + $0x70] sm:$0xff]
        %v7047 = vld [vmem:[%s7031 + $0x78] sm:$0xff]
        %v7048 = vld [vmem:[%s7031 + $0x80] sm:$0xff]
        %v7049 = vld [vmem:[%s7031 + $0x88] sm:$0xff]
        %v7050 = vld [vmem:[%s7031 + $0x90] sm:$0xff]
        %v7051 = vld [vmem:[%s7031 + $0x98] sm:$0xff]
        %v7052 = vld [vmem:[%s7031 + $0xa0] sm:$0xff]
        %v7053 = vld [vmem:[%s7031 + $0xa8] sm:$0xff]
        %v7054 = vld [vmem:[%s7031 + $0xb0] sm:$0xff]
        %v7055 = vld [vmem:[%s7031 + $0xb8] sm:$0xff]
        %v7056 = vld [vmem:[%s7031 + $0xc0] sm:$0xff]
        %v7057 = vld [vmem:[%s7031 + $0xc8] sm:$0xff]
        %v7058 = vld [vmem:[%s7031 + $0xd0] sm:$0xff]
        %v7059 = vld [vmem:[%s7031 + $0xd8] sm:$0xff]
        %v7060 = vld [vmem:[%s7031 + $0xe0] sm:$0xff]
        %v7061 = vld [vmem:[%s7031 + $0xe8] sm:$0xff]
        %v7062 = vld [vmem:[%s7031 + $0xf0] sm:$0xff]
        %v7063 = vld [vmem:[%s7031 + $0xf8] sm:$0xff]
        %v7064 = vld [vmem:[%s7031 + $0x100] sm:$0xff]
        %v7065 = vld [vmem:[%s7031 + $0x108] sm:$0xff]
        %v7066 = vld [vmem:[%s7031 + $0x110] sm:$0xff]
        %v7067 = vld [vmem:[%s7031 + $0x118] sm:$0xff]
        %v7068 = vld [vmem:[%s7031 + $0x120] sm:$0xff]
        %v7069 = vld [vmem:[%s7031 + $0x128] sm:$0xff]
        %v7070 = vld [vmem:[%s7031 + $0x130] sm:$0xff]
        %v7071 = vld [vmem:[%s7031 + $0x138] sm:$0xff]
        %v7072 = vld [vmem:[%s7031 + $0x140] sm:$0xff]
        %v7073 = vld [vmem:[%s7031 + $0x148] sm:$0xff]
        %v7074 = vld [vmem:[%s7031 + $0x150] sm:$0xff]
        %v7075 = vld [vmem:[%s7031 + $0x158] sm:$0xff]
        %v7076 = vld [vmem:[%s7031 + $0x160] sm:$0xff]
        %v7077 = vld [vmem:[%s7031 + $0x168] sm:$0xff]
        %v7078 = vld [vmem:[%s7031 + $0x170] sm:$0xff]
        %v7079 = vld [vmem:[%s7031 + $0x178] sm:$0xff]
        %v7080 = vld [vmem:[%s7031 + $0x180] sm:$0xff]
        %v7081 = vld [vmem:[%s7031 + $0x188] sm:$0xff]
        %v7082 = vld [vmem:[%s7031 + $0x190] sm:$0xff]
        %v7083 = vld [vmem:[%s7031 + $0x198] sm:$0xff]
        %v7084 = vld [vmem:[%s7031 + $0x1a0] sm:$0xff]
        %v7085 = vld [vmem:[%s7031 + $0x1a8] sm:$0xff]
        %v7086 = vld [vmem:[%s7031 + $0x1b0] sm:$0xff]
        %v7087 = vld [vmem:[%s7031 + $0x1b8] sm:$0xff]
        %v7088 = vld [vmem:[%s7031 + $0x1c0] sm:$0xff]
        %v7089 = vld [vmem:[%s7031 + $0x1c8] sm:$0xff]
        %v7090 = vld [vmem:[%s7031 + $0x1d0] sm:$0xff]
        %v7091 = vld [vmem:[%s7031 + $0x1d8] sm:$0xff]
        %v7092 = vld [vmem:[%s7031 + $0x1e0] sm:$0xff]
        %v7093 = vld [vmem:[%s7031 + $0x1e8] sm:$0xff]
        %v7094 = vld [vmem:[%s7031 + $0x1f0] sm:$0xff]
        %v7095 = vld [vmem:[%s7031 + $0x1f8] sm:$0xff]
        %s7096 = scalar_lea.vmem [#allocation17], 1536
        %v7097 = vld [vmem:[%s7096] sm:$0xff]
        %v7098 = vld [vmem:[%s7096 + $0x8] sm:$0xff]
        %v7099 = vld [vmem:[%s7096 + $0x10] sm:$0xff]
        %v7100 = vld [vmem:[%s7096 + $0x18] sm:$0xff]
        %v7101 = vld [vmem:[%s7096 + $0x20] sm:$0xff]
        %v7102 = vld [vmem:[%s7096 + $0x28] sm:$0xff]
        %v7103 = vld [vmem:[%s7096 + $0x30] sm:$0xff]
        %v7104 = vld [vmem:[%s7096 + $0x38] sm:$0xff]
        %v7105 = vld [vmem:[%s7096 + $0x40] sm:$0xff]
        %v7106 = vld [vmem:[%s7096 + $0x48] sm:$0xff]
        %v7107 = vld [vmem:[%s7096 + $0x50] sm:$0xff]
        %v7108 = vld [vmem:[%s7096 + $0x58] sm:$0xff]
        %v7109 = vld [vmem:[%s7096 + $0x60] sm:$0xff]
        %v7110 = vld [vmem:[%s7096 + $0x68] sm:$0xff]
        %v7111 = vld [vmem:[%s7096 + $0x70] sm:$0xff]
        %v7112 = vld [vmem:[%s7096 + $0x78] sm:$0xff]
        %v7113 = vld [vmem:[%s7096 + $0x80] sm:$0xff]
        %v7114 = vld [vmem:[%s7096 + $0x88] sm:$0xff]
        %v7115 = vld [vmem:[%s7096 + $0x90] sm:$0xff]
        %v7116 = vld [vmem:[%s7096 + $0x98] sm:$0xff]
        %v7117 = vld [vmem:[%s7096 + $0xa0] sm:$0xff]
        %v7118 = vld [vmem:[%s7096 + $0xa8] sm:$0xff]
        %v7119 = vld [vmem:[%s7096 + $0xb0] sm:$0xff]
        %v7120 = vld [vmem:[%s7096 + $0xb8] sm:$0xff]
        %v7121 = vld [vmem:[%s7096 + $0xc0] sm:$0xff]
        %v7122 = vld [vmem:[%s7096 + $0xc8] sm:$0xff]
        %v7123 = vld [vmem:[%s7096 + $0xd0] sm:$0xff]
        %v7124 = vld [vmem:[%s7096 + $0xd8] sm:$0xff]
        %v7125 = vld [vmem:[%s7096 + $0xe0] sm:$0xff]
        %v7126 = vld [vmem:[%s7096 + $0xe8] sm:$0xff]
        %v7127 = vld [vmem:[%s7096 + $0xf0] sm:$0xff]
        %v7128 = vld [vmem:[%s7096 + $0xf8] sm:$0xff]
        %v7129 = vld [vmem:[%s7096 + $0x100] sm:$0xff]
        %v7130 = vld [vmem:[%s7096 + $0x108] sm:$0xff]
        %v7131 = vld [vmem:[%s7096 + $0x110] sm:$0xff]
        %v7132 = vld [vmem:[%s7096 + $0x118] sm:$0xff]
        %v7133 = vld [vmem:[%s7096 + $0x120] sm:$0xff]
        %v7134 = vld [vmem:[%s7096 + $0x128] sm:$0xff]
        %v7135 = vld [vmem:[%s7096 + $0x130] sm:$0xff]
        %v7136 = vld [vmem:[%s7096 + $0x138] sm:$0xff]
        %v7137 = vld [vmem:[%s7096 + $0x140] sm:$0xff]
        %v7138 = vld [vmem:[%s7096 + $0x148] sm:$0xff]
        %v7139 = vld [vmem:[%s7096 + $0x150] sm:$0xff]
        %v7140 = vld [vmem:[%s7096 + $0x158] sm:$0xff]
        %v7141 = vld [vmem:[%s7096 + $0x160] sm:$0xff]
        %v7142 = vld [vmem:[%s7096 + $0x168] sm:$0xff]
        %v7143 = vld [vmem:[%s7096 + $0x170] sm:$0xff]
        %v7144 = vld [vmem:[%s7096 + $0x178] sm:$0xff]
        %v7145 = vld [vmem:[%s7096 + $0x180] sm:$0xff]
        %v7146 = vld [vmem:[%s7096 + $0x188] sm:$0xff]
        %v7147 = vld [vmem:[%s7096 + $0x190] sm:$0xff]
        %v7148 = vld [vmem:[%s7096 + $0x198] sm:$0xff]
        %v7149 = vld [vmem:[%s7096 + $0x1a0] sm:$0xff]
        %v7150 = vld [vmem:[%s7096 + $0x1a8] sm:$0xff]
        %v7151 = vld [vmem:[%s7096 + $0x1b0] sm:$0xff]
        %v7152 = vld [vmem:[%s7096 + $0x1b8] sm:$0xff]
        %v7153 = vld [vmem:[%s7096 + $0x1c0] sm:$0xff]
        %v7154 = vld [vmem:[%s7096 + $0x1c8] sm:$0xff]
        %v7155 = vld [vmem:[%s7096 + $0x1d0] sm:$0xff]
        %v7156 = vld [vmem:[%s7096 + $0x1d8] sm:$0xff]
        %v7157 = vld [vmem:[%s7096 + $0x1e0] sm:$0xff]
        %v7158 = vld [vmem:[%s7096 + $0x1e8] sm:$0xff]
        %v7159 = vld [vmem:[%s7096 + $0x1f0] sm:$0xff]
        %v7160 = vld [vmem:[%s7096 + $0x1f8] sm:$0xff]
        %v7161 = vrot.slane %v6592, 1
        %v7162 = vrot.slane %v6595, 1
        %v7163 = vrot.slane %v6598, 1
        %v7164 = vrot.slane %v6601, 1
        %v7233 = vunpack.c.l.b16 %v7097
        %v7234 = vunpack.c.h.b16 %v7097
        %v7235 = vunpack.c.l.b16 %v7098
        %v7236 = vunpack.c.h.b16 %v7098
        %v7237 = vunpack.c.l.b16 %v7099
        %v7238 = vunpack.c.h.b16 %v7099
        %v7239 = vunpack.c.l.b16 %v7100
        %v7240 = vunpack.c.h.b16 %v7100
        %v7241 = vunpack.c.l.b16 %v7101
        %v7242 = vunpack.c.h.b16 %v7101
        %v7243 = vunpack.c.l.b16 %v7102
        %v7244 = vunpack.c.h.b16 %v7102
        %v7245 = vunpack.c.l.b16 %v7103
        %v7246 = vunpack.c.h.b16 %v7103
        %v7247 = vunpack.c.l.b16 %v7104
        %v7248 = vunpack.c.h.b16 %v7104
        %v7249 = vunpack.c.l.b16 %v7105
        %v7250 = vunpack.c.h.b16 %v7105
        %v7251 = vunpack.c.l.b16 %v7106
        %v7252 = vunpack.c.h.b16 %v7106
        %v7253 = vunpack.c.l.b16 %v7107
        %v7254 = vunpack.c.h.b16 %v7107
        %v7255 = vunpack.c.l.b16 %v7108
        %v7256 = vunpack.c.h.b16 %v7108
        %v7257 = vunpack.c.l.b16 %v7109
        %v7258 = vunpack.c.h.b16 %v7109
        %v7259 = vunpack.c.l.b16 %v7110
        %v7260 = vunpack.c.h.b16 %v7110
        %v7261 = vunpack.c.l.b16 %v7111
        %v7262 = vunpack.c.h.b16 %v7111
        %v7263 = vunpack.c.l.b16 %v7112
        %v7264 = vunpack.c.h.b16 %v7112
        %v7265 = vunpack.c.l.b16 %v7113
        %v7266 = vunpack.c.h.b16 %v7113
        %v7267 = vunpack.c.l.b16 %v7114
        %v7268 = vunpack.c.h.b16 %v7114
        %v7269 = vunpack.c.l.b16 %v7115
        %v7270 = vunpack.c.h.b16 %v7115
        %v7271 = vunpack.c.l.b16 %v7116
        %v7272 = vunpack.c.h.b16 %v7116
        %v7273 = vunpack.c.l.b16 %v7117
        %v7274 = vunpack.c.h.b16 %v7117
        %v7275 = vunpack.c.l.b16 %v7118
        %v7276 = vunpack.c.h.b16 %v7118
        %v7277 = vunpack.c.l.b16 %v7119
        %v7278 = vunpack.c.h.b16 %v7119
        %v7279 = vunpack.c.l.b16 %v7120
        %v7280 = vunpack.c.h.b16 %v7120
        %v7281 = vunpack.c.l.b16 %v7121
        %v7282 = vunpack.c.h.b16 %v7121
        %v7283 = vunpack.c.l.b16 %v7122
        %v7284 = vunpack.c.h.b16 %v7122
        %v7285 = vunpack.c.l.b16 %v7123
        %v7286 = vunpack.c.h.b16 %v7123
        %v7287 = vunpack.c.l.b16 %v7124
        %v7288 = vunpack.c.h.b16 %v7124
        %v7289 = vunpack.c.l.b16 %v7125
        %v7290 = vunpack.c.h.b16 %v7125
        %v7291 = vunpack.c.l.b16 %v7126
        %v7292 = vunpack.c.h.b16 %v7126
        %v7293 = vunpack.c.l.b16 %v7127
        %v7294 = vunpack.c.h.b16 %v7127
        %v7295 = vunpack.c.l.b16 %v7128
        %v7296 = vunpack.c.h.b16 %v7128
        %v7297 = vunpack.c.l.b16 %v7129
        %v7298 = vunpack.c.h.b16 %v7129
        %v7299 = vunpack.c.l.b16 %v7130
        %v7300 = vunpack.c.h.b16 %v7130
        %v7301 = vunpack.c.l.b16 %v7131
        %v7302 = vunpack.c.h.b16 %v7131
        %v7303 = vunpack.c.l.b16 %v7132
        %v7304 = vunpack.c.h.b16 %v7132
        %v7305 = vunpack.c.l.b16 %v7133
        %v7306 = vunpack.c.h.b16 %v7133
        %v7307 = vunpack.c.l.b16 %v7134
        %v7308 = vunpack.c.h.b16 %v7134
        %v7309 = vunpack.c.l.b16 %v7135
        %v7310 = vunpack.c.h.b16 %v7135
        %v7311 = vunpack.c.l.b16 %v7136
        %v7312 = vunpack.c.h.b16 %v7136
        %v7313 = vunpack.c.l.b16 %v7137
        %v7314 = vunpack.c.h.b16 %v7137
        %v7315 = vunpack.c.l.b16 %v7138
        %v7316 = vunpack.c.h.b16 %v7138
        %v7317 = vunpack.c.l.b16 %v7139
        %v7318 = vunpack.c.h.b16 %v7139
        %v7319 = vunpack.c.l.b16 %v7140
        %v7320 = vunpack.c.h.b16 %v7140
        %v7321 = vunpack.c.l.b16 %v7141
        %v7322 = vunpack.c.h.b16 %v7141
        %v7323 = vunpack.c.l.b16 %v7142
        %v7324 = vunpack.c.h.b16 %v7142
        %v7325 = vunpack.c.l.b16 %v7143
        %v7326 = vunpack.c.h.b16 %v7143
        %v7327 = vunpack.c.l.b16 %v7144
        %v7328 = vunpack.c.h.b16 %v7144
        %v7329 = vunpack.c.l.b16 %v7145
        %v7330 = vunpack.c.h.b16 %v7145
        %v7331 = vunpack.c.l.b16 %v7146
        %v7332 = vunpack.c.h.b16 %v7146
        %v7333 = vunpack.c.l.b16 %v7147
        %v7334 = vunpack.c.h.b16 %v7147
        %v7335 = vunpack.c.l.b16 %v7148
        %v7336 = vunpack.c.h.b16 %v7148
        %v7337 = vunpack.c.l.b16 %v7149
        %v7338 = vunpack.c.h.b16 %v7149
        %v7339 = vunpack.c.l.b16 %v7150
        %v7340 = vunpack.c.h.b16 %v7150
        %v7341 = vunpack.c.l.b16 %v7151
        %v7342 = vunpack.c.h.b16 %v7151
        %v7343 = vunpack.c.l.b16 %v7152
        %v7344 = vunpack.c.h.b16 %v7152
        %v7345 = vunpack.c.l.b16 %v7153
        %v7346 = vunpack.c.h.b16 %v7153
        %v7347 = vunpack.c.l.b16 %v7154
        %v7348 = vunpack.c.h.b16 %v7154
        %v7349 = vunpack.c.l.b16 %v7155
        %v7350 = vunpack.c.h.b16 %v7155
        %v7351 = vunpack.c.l.b16 %v7156
        %v7352 = vunpack.c.h.b16 %v7156
        %v7353 = vunpack.c.l.b16 %v7157
        %v7354 = vunpack.c.h.b16 %v7157
        %v7355 = vunpack.c.l.b16 %v7158
        %v7356 = vunpack.c.h.b16 %v7158
        %v7357 = vunpack.c.l.b16 %v7159
        %v7358 = vunpack.c.h.b16 %v7159
        %v7359 = vunpack.c.l.b16 %v7160
        %v7360 = vunpack.c.h.b16 %v7160
        %v7361 = vpack.c.b16 %v7235, %v7233
        %v7362 = vpack.c.b16 %v7236, %v7234
        %v7363 = vpack.c.b16 %v7239, %v7237
        %v7364 = vpack.c.b16 %v7240, %v7238
        %v7365 = vpack.c.b16 %v7243, %v7241
        %v7366 = vpack.c.b16 %v7244, %v7242
        %v7367 = vpack.c.b16 %v7247, %v7245
        %v7368 = vpack.c.b16 %v7248, %v7246
        %v7369 = vpack.c.b16 %v7251, %v7249
        %v7370 = vpack.c.b16 %v7252, %v7250
        %v7371 = vpack.c.b16 %v7255, %v7253
        %v7372 = vpack.c.b16 %v7256, %v7254
        %v7373 = vpack.c.b16 %v7259, %v7257
        %v7374 = vpack.c.b16 %v7260, %v7258
        %v7375 = vpack.c.b16 %v7263, %v7261
        %v7376 = vpack.c.b16 %v7264, %v7262
        %v7377 = vpack.c.b16 %v7267, %v7265
        %v7378 = vpack.c.b16 %v7268, %v7266
        %v7379 = vpack.c.b16 %v7271, %v7269
        %v7380 = vpack.c.b16 %v7272, %v7270
        %v7381 = vpack.c.b16 %v7275, %v7273
        %v7382 = vpack.c.b16 %v7276, %v7274
        %v7383 = vpack.c.b16 %v7279, %v7277
        %v7384 = vpack.c.b16 %v7280, %v7278
        %v7385 = vpack.c.b16 %v7283, %v7281
        %v7386 = vpack.c.b16 %v7284, %v7282
        %v7387 = vpack.c.b16 %v7287, %v7285
        %v7388 = vpack.c.b16 %v7288, %v7286
        %v7389 = vpack.c.b16 %v7291, %v7289
        %v7390 = vpack.c.b16 %v7292, %v7290
        %v7391 = vpack.c.b16 %v7295, %v7293
        %v7392 = vpack.c.b16 %v7296, %v7294
        %v7393 = vpack.c.b16 %v7299, %v7297
        %v7394 = vpack.c.b16 %v7300, %v7298
        %v7395 = vpack.c.b16 %v7303, %v7301
        %v7396 = vpack.c.b16 %v7304, %v7302
        %v7397 = vpack.c.b16 %v7307, %v7305
        %v7398 = vpack.c.b16 %v7308, %v7306
        %v7399 = vpack.c.b16 %v7311, %v7309
        %v7400 = vpack.c.b16 %v7312, %v7310
        %v7401 = vpack.c.b16 %v7315, %v7313
        %v7402 = vpack.c.b16 %v7316, %v7314
        %v7403 = vpack.c.b16 %v7319, %v7317
        %v7404 = vpack.c.b16 %v7320, %v7318
        %v7405 = vpack.c.b16 %v7323, %v7321
        %v7406 = vpack.c.b16 %v7324, %v7322
        %v7407 = vpack.c.b16 %v7327, %v7325
        %v7408 = vpack.c.b16 %v7328, %v7326
        %v7409 = vpack.c.b16 %v7331, %v7329
        %v7410 = vpack.c.b16 %v7332, %v7330
        %v7411 = vpack.c.b16 %v7335, %v7333
        %v7412 = vpack.c.b16 %v7336, %v7334
        %v7413 = vpack.c.b16 %v7339, %v7337
        %v7414 = vpack.c.b16 %v7340, %v7338
        %v7415 = vpack.c.b16 %v7343, %v7341
        %v7416 = vpack.c.b16 %v7344, %v7342
        %v7417 = vpack.c.b16 %v7347, %v7345
        %v7418 = vpack.c.b16 %v7348, %v7346
        %v7419 = vpack.c.b16 %v7351, %v7349
        %v7420 = vpack.c.b16 %v7352, %v7350
        %v7421 = vpack.c.b16 %v7355, %v7353
        %v7422 = vpack.c.b16 %v7356, %v7354
        %v7423 = vpack.c.b16 %v7359, %v7357
        %v7424 = vpack.c.b16 %v7360, %v7358
        %7489 = vmatpush.bf16.msra.mxu0 %v7375
        %7490 = vmatpush.bf16.msra.mxu0 %v7373
        %7491 = vmatpush.bf16.msra.mxu0 %v7371
        %7492 = vmatpush.bf16.msra.mxu0 %v7369
        %7493 = vmatpush.bf16.msra.mxu0 %v7367
        %7494 = vmatpush.bf16.msra.mxu0 %v7365
        %7495 = vmatpush.bf16.msra.mxu0 %v7363
        %7496 = vmatpush.bf16.msra.mxu0 %v7361
        %7497 = vmatmul.bf16.gmra.mxu0 %v7161
        %v7498 = vpop.f32.mrf.mxu0
        %v7499 = vadd.f32 0.0, %v7498
        %v7500 = vpop.f32.mrf.mxu0
        %7501 = vdwg.mxu0
        %7502 = vmatpush.bf16.msra.mxu0 %v7391
        %7503 = vmatpush.bf16.msra.mxu0 %v7389
        %7504 = vmatpush.bf16.msra.mxu0 %v7387
        %7505 = vmatpush.bf16.msra.mxu0 %v7385
        %7506 = vmatpush.bf16.msra.mxu0 %v7383
        %7507 = vmatpush.bf16.msra.mxu0 %v7381
        %7508 = vmatpush.bf16.msra.mxu0 %v7379
        %7509 = vmatpush.bf16.msra.mxu0 %v7377
        %7510 = vmatmul.bf16.gmra.mxu0 %v7162
        %v7511 = vpop.f32.mrf.mxu0
        %v7512 = vadd.f32 %v7499, %v7511
        %v7513 = vpop.f32.mrf.mxu0
        %7514 = vdwg.mxu0
        %7515 = vmatpush.bf16.msra.mxu0 %v7407
        %7516 = vmatpush.bf16.msra.mxu0 %v7405
        %7517 = vmatpush.bf16.msra.mxu0 %v7403
        %7518 = vmatpush.bf16.msra.mxu0 %v7401
        %7519 = vmatpush.bf16.msra.mxu0 %v7399
        %7520 = vmatpush.bf16.msra.mxu0 %v7397
        %7521 = vmatpush.bf16.msra.mxu0 %v7395
        %7522 = vmatpush.bf16.msra.mxu0 %v7393
        %7523 = vmatmul.bf16.gmra.mxu0 %v7163
        %v7524 = vpop.f32.mrf.mxu0
        %v7525 = vadd.f32 %v7512, %v7524
        %v7526 = vpop.f32.mrf.mxu0
        %7527 = vdwg.mxu0
        %7528 = vmatpush.bf16.msra.mxu0 %v7423
        %7529 = vmatpush.bf16.msra.mxu0 %v7421
        %7530 = vmatpush.bf16.msra.mxu0 %v7419
        %7531 = vmatpush.bf16.msra.mxu0 %v7417
        %7532 = vmatpush.bf16.msra.mxu0 %v7415
        %7533 = vmatpush.bf16.msra.mxu0 %v7413
        %7534 = vmatpush.bf16.msra.mxu0 %v7411
        %7535 = vmatpush.bf16.msra.mxu0 %v7409
        %7536 = vmatmul.bf16.gmra.mxu0 %v7164
        %v7537 = vpop.f32.mrf.mxu0
        %v7538 = vadd.f32 %v7525, %v7537
        %v7539 = vpop.f32.mrf.mxu0
        %7540 = vdwg.mxu0
        %7541 = vmatpush.bf16.msra.mxu0 %v7376
        %7542 = vmatpush.bf16.msra.mxu0 %v7374
        %7543 = vmatpush.bf16.msra.mxu0 %v7372
        %7544 = vmatpush.bf16.msra.mxu0 %v7370
        %7545 = vmatpush.bf16.msra.mxu0 %v7368
        %7546 = vmatpush.bf16.msra.mxu0 %v7366
        %7547 = vmatpush.bf16.msra.mxu0 %v7364
        %7548 = vmatpush.bf16.msra.mxu0 %v7362
        %7549 = vmatmul.bf16.gmra.mxu0 %v7161
        %v7550 = vpop.f32.mrf.mxu0
        %v7551 = vadd.f32 0.0, %v7550
        %v7552 = vpop.f32.mrf.mxu0
        %7553 = vdwg.mxu0
        %7554 = vmatpush.bf16.msra.mxu0 %v7392
        %7555 = vmatpush.bf16.msra.mxu0 %v7390
        %7556 = vmatpush.bf16.msra.mxu0 %v7388
        %7557 = vmatpush.bf16.msra.mxu0 %v7386
        %7558 = vmatpush.bf16.msra.mxu0 %v7384
        %7559 = vmatpush.bf16.msra.mxu0 %v7382
        %7560 = vmatpush.bf16.msra.mxu0 %v7380
        %7561 = vmatpush.bf16.msra.mxu0 %v7378
        %7562 = vmatmul.bf16.gmra.mxu0 %v7162
        %v7563 = vpop.f32.mrf.mxu0
        %v7564 = vadd.f32 %v7551, %v7563
        %v7565 = vpop.f32.mrf.mxu0
        %7566 = vdwg.mxu0
        %7567 = vmatpush.bf16.msra.mxu0 %v7408
        %7568 = vmatpush.bf16.msra.mxu0 %v7406
        %7569 = vmatpush.bf16.msra.mxu0 %v7404
        %7570 = vmatpush.bf16.msra.mxu0 %v7402
        %7571 = vmatpush.bf16.msra.mxu0 %v7400
        %7572 = vmatpush.bf16.msra.mxu0 %v7398
        %7573 = vmatpush.bf16.msra.mxu0 %v7396
        %7574 = vmatpush.bf16.msra.mxu0 %v7394
        %7575 = vmatmul.bf16.gmra.mxu0 %v7163
        %v7576 = vpop.f32.mrf.mxu0
        %v7577 = vadd.f32 %v7564, %v7576
        %v7578 = vpop.f32.mrf.mxu0
        %7579 = vdwg.mxu0
        %7580 = vmatpush.bf16.msra.mxu0 %v7424
        %7581 = vmatpush.bf16.msra.mxu0 %v7422
        %7582 = vmatpush.bf16.msra.mxu0 %v7420
        %7583 = vmatpush.bf16.msra.mxu0 %v7418
        %7584 = vmatpush.bf16.msra.mxu0 %v7416
        %7585 = vmatpush.bf16.msra.mxu0 %v7414
        %7586 = vmatpush.bf16.msra.mxu0 %v7412
        %7587 = vmatpush.bf16.msra.mxu0 %v7410
        %7588 = vmatmul.bf16.gmra.mxu0 %v7164
        %v7589 = vpop.f32.mrf.mxu0
        %v7590 = vadd.f32 %v7577, %v7589
        %v7591 = vpop.f32.mrf.mxu0
        %7592 = vdwg.mxu0
        %s7593 = scalar_lea.vmem [#allocation17], 2048
        %v7594 = vld [vmem:[%s7593] sm:$0xff]
        %v7595 = vld [vmem:[%s7593 + $0x8] sm:$0xff]
        %v7596 = vld [vmem:[%s7593 + $0x10] sm:$0xff]
        %v7597 = vld [vmem:[%s7593 + $0x18] sm:$0xff]
        %v7598 = vld [vmem:[%s7593 + $0x20] sm:$0xff]
        %v7599 = vld [vmem:[%s7593 + $0x28] sm:$0xff]
        %v7600 = vld [vmem:[%s7593 + $0x30] sm:$0xff]
        %v7601 = vld [vmem:[%s7593 + $0x38] sm:$0xff]
        %v7602 = vld [vmem:[%s7593 + $0x40] sm:$0xff]
        %v7603 = vld [vmem:[%s7593 + $0x48] sm:$0xff]
        %v7604 = vld [vmem:[%s7593 + $0x50] sm:$0xff]
        %v7605 = vld [vmem:[%s7593 + $0x58] sm:$0xff]
        %v7606 = vld [vmem:[%s7593 + $0x60] sm:$0xff]
        %v7607 = vld [vmem:[%s7593 + $0x68] sm:$0xff]
        %v7608 = vld [vmem:[%s7593 + $0x70] sm:$0xff]
        %v7609 = vld [vmem:[%s7593 + $0x78] sm:$0xff]
        %v7610 = vld [vmem:[%s7593 + $0x80] sm:$0xff]
        %v7611 = vld [vmem:[%s7593 + $0x88] sm:$0xff]
        %v7612 = vld [vmem:[%s7593 + $0x90] sm:$0xff]
        %v7613 = vld [vmem:[%s7593 + $0x98] sm:$0xff]
        %v7614 = vld [vmem:[%s7593 + $0xa0] sm:$0xff]
        %v7615 = vld [vmem:[%s7593 + $0xa8] sm:$0xff]
        %v7616 = vld [vmem:[%s7593 + $0xb0] sm:$0xff]
        %v7617 = vld [vmem:[%s7593 + $0xb8] sm:$0xff]
        %v7618 = vld [vmem:[%s7593 + $0xc0] sm:$0xff]
        %v7619 = vld [vmem:[%s7593 + $0xc8] sm:$0xff]
        %v7620 = vld [vmem:[%s7593 + $0xd0] sm:$0xff]
        %v7621 = vld [vmem:[%s7593 + $0xd8] sm:$0xff]
        %v7622 = vld [vmem:[%s7593 + $0xe0] sm:$0xff]
        %v7623 = vld [vmem:[%s7593 + $0xe8] sm:$0xff]
        %v7624 = vld [vmem:[%s7593 + $0xf0] sm:$0xff]
        %v7625 = vld [vmem:[%s7593 + $0xf8] sm:$0xff]
        %v7626 = vld [vmem:[%s7593 + $0x100] sm:$0xff]
        %v7627 = vld [vmem:[%s7593 + $0x108] sm:$0xff]
        %v7628 = vld [vmem:[%s7593 + $0x110] sm:$0xff]
        %v7629 = vld [vmem:[%s7593 + $0x118] sm:$0xff]
        %v7630 = vld [vmem:[%s7593 + $0x120] sm:$0xff]
        %v7631 = vld [vmem:[%s7593 + $0x128] sm:$0xff]
        %v7632 = vld [vmem:[%s7593 + $0x130] sm:$0xff]
        %v7633 = vld [vmem:[%s7593 + $0x138] sm:$0xff]
        %v7634 = vld [vmem:[%s7593 + $0x140] sm:$0xff]
        %v7635 = vld [vmem:[%s7593 + $0x148] sm:$0xff]
        %v7636 = vld [vmem:[%s7593 + $0x150] sm:$0xff]
        %v7637 = vld [vmem:[%s7593 + $0x158] sm:$0xff]
        %v7638 = vld [vmem:[%s7593 + $0x160] sm:$0xff]
        %v7639 = vld [vmem:[%s7593 + $0x168] sm:$0xff]
        %v7640 = vld [vmem:[%s7593 + $0x170] sm:$0xff]
        %v7641 = vld [vmem:[%s7593 + $0x178] sm:$0xff]
        %v7642 = vld [vmem:[%s7593 + $0x180] sm:$0xff]
        %v7643 = vld [vmem:[%s7593 + $0x188] sm:$0xff]
        %v7644 = vld [vmem:[%s7593 + $0x190] sm:$0xff]
        %v7645 = vld [vmem:[%s7593 + $0x198] sm:$0xff]
        %v7646 = vld [vmem:[%s7593 + $0x1a0] sm:$0xff]
        %v7647 = vld [vmem:[%s7593 + $0x1a8] sm:$0xff]
        %v7648 = vld [vmem:[%s7593 + $0x1b0] sm:$0xff]
        %v7649 = vld [vmem:[%s7593 + $0x1b8] sm:$0xff]
        %v7650 = vld [vmem:[%s7593 + $0x1c0] sm:$0xff]
        %v7651 = vld [vmem:[%s7593 + $0x1c8] sm:$0xff]
        %v7652 = vld [vmem:[%s7593 + $0x1d0] sm:$0xff]
        %v7653 = vld [vmem:[%s7593 + $0x1d8] sm:$0xff]
        %v7654 = vld [vmem:[%s7593 + $0x1e0] sm:$0xff]
        %v7655 = vld [vmem:[%s7593 + $0x1e8] sm:$0xff]
        %v7656 = vld [vmem:[%s7593 + $0x1f0] sm:$0xff]
        %v7657 = vld [vmem:[%s7593 + $0x1f8] sm:$0xff]
        %s7658 = scalar_lea.vmem [#allocation17], 2560
        %v7659 = vld [vmem:[%s7658] sm:$0xff]
        %v7660 = vld [vmem:[%s7658 + $0x8] sm:$0xff]
        %v7661 = vld [vmem:[%s7658 + $0x10] sm:$0xff]
        %v7662 = vld [vmem:[%s7658 + $0x18] sm:$0xff]
        %v7663 = vld [vmem:[%s7658 + $0x20] sm:$0xff]
        %v7664 = vld [vmem:[%s7658 + $0x28] sm:$0xff]
        %v7665 = vld [vmem:[%s7658 + $0x30] sm:$0xff]
        %v7666 = vld [vmem:[%s7658 + $0x38] sm:$0xff]
        %v7667 = vld [vmem:[%s7658 + $0x40] sm:$0xff]
        %v7668 = vld [vmem:[%s7658 + $0x48] sm:$0xff]
        %v7669 = vld [vmem:[%s7658 + $0x50] sm:$0xff]
        %v7670 = vld [vmem:[%s7658 + $0x58] sm:$0xff]
        %v7671 = vld [vmem:[%s7658 + $0x60] sm:$0xff]
        %v7672 = vld [vmem:[%s7658 + $0x68] sm:$0xff]
        %v7673 = vld [vmem:[%s7658 + $0x70] sm:$0xff]
        %v7674 = vld [vmem:[%s7658 + $0x78] sm:$0xff]
        %v7675 = vld [vmem:[%s7658 + $0x80] sm:$0xff]
        %v7676 = vld [vmem:[%s7658 + $0x88] sm:$0xff]
        %v7677 = vld [vmem:[%s7658 + $0x90] sm:$0xff]
        %v7678 = vld [vmem:[%s7658 + $0x98] sm:$0xff]
        %v7679 = vld [vmem:[%s7658 + $0xa0] sm:$0xff]
        %v7680 = vld [vmem:[%s7658 + $0xa8] sm:$0xff]
        %v7681 = vld [vmem:[%s7658 + $0xb0] sm:$0xff]
        %v7682 = vld [vmem:[%s7658 + $0xb8] sm:$0xff]
        %v7683 = vld [vmem:[%s7658 + $0xc0] sm:$0xff]
        %v7684 = vld [vmem:[%s7658 + $0xc8] sm:$0xff]
        %v7685 = vld [vmem:[%s7658 + $0xd0] sm:$0xff]
        %v7686 = vld [vmem:[%s7658 + $0xd8] sm:$0xff]
        %v7687 = vld [vmem:[%s7658 + $0xe0] sm:$0xff]
        %v7688 = vld [vmem:[%s7658 + $0xe8] sm:$0xff]
        %v7689 = vld [vmem:[%s7658 + $0xf0] sm:$0xff]
        %v7690 = vld [vmem:[%s7658 + $0xf8] sm:$0xff]
        %v7691 = vld [vmem:[%s7658 + $0x100] sm:$0xff]
        %v7692 = vld [vmem:[%s7658 + $0x108] sm:$0xff]
        %v7693 = vld [vmem:[%s7658 + $0x110] sm:$0xff]
        %v7694 = vld [vmem:[%s7658 + $0x118] sm:$0xff]
        %v7695 = vld [vmem:[%s7658 + $0x120] sm:$0xff]
        %v7696 = vld [vmem:[%s7658 + $0x128] sm:$0xff]
        %v7697 = vld [vmem:[%s7658 + $0x130] sm:$0xff]
        %v7698 = vld [vmem:[%s7658 + $0x138] sm:$0xff]
        %v7699 = vld [vmem:[%s7658 + $0x140] sm:$0xff]
        %v7700 = vld [vmem:[%s7658 + $0x148] sm:$0xff]
        %v7701 = vld [vmem:[%s7658 + $0x150] sm:$0xff]
        %v7702 = vld [vmem:[%s7658 + $0x158] sm:$0xff]
        %v7703 = vld [vmem:[%s7658 + $0x160] sm:$0xff]
        %v7704 = vld [vmem:[%s7658 + $0x168] sm:$0xff]
        %v7705 = vld [vmem:[%s7658 + $0x170] sm:$0xff]
        %v7706 = vld [vmem:[%s7658 + $0x178] sm:$0xff]
        %v7707 = vld [vmem:[%s7658 + $0x180] sm:$0xff]
        %v7708 = vld [vmem:[%s7658 + $0x188] sm:$0xff]
        %v7709 = vld [vmem:[%s7658 + $0x190] sm:$0xff]
        %v7710 = vld [vmem:[%s7658 + $0x198] sm:$0xff]
        %v7711 = vld [vmem:[%s7658 + $0x1a0] sm:$0xff]
        %v7712 = vld [vmem:[%s7658 + $0x1a8] sm:$0xff]
        %v7713 = vld [vmem:[%s7658 + $0x1b0] sm:$0xff]
        %v7714 = vld [vmem:[%s7658 + $0x1b8] sm:$0xff]
        %v7715 = vld [vmem:[%s7658 + $0x1c0] sm:$0xff]
        %v7716 = vld [vmem:[%s7658 + $0x1c8] sm:$0xff]
        %v7717 = vld [vmem:[%s7658 + $0x1d0] sm:$0xff]
        %v7718 = vld [vmem:[%s7658 + $0x1d8] sm:$0xff]
        %v7719 = vld [vmem:[%s7658 + $0x1e0] sm:$0xff]
        %v7720 = vld [vmem:[%s7658 + $0x1e8] sm:$0xff]
        %v7721 = vld [vmem:[%s7658 + $0x1f0] sm:$0xff]
        %v7722 = vld [vmem:[%s7658 + $0x1f8] sm:$0xff]
        %v7723 = vrot.slane %v6592, 2
        %v7724 = vrot.slane %v6595, 2
        %v7725 = vrot.slane %v6598, 2
        %v7726 = vrot.slane %v6601, 2
        %v7795 = vunpack.c.l.b16 %v7659
        %v7796 = vunpack.c.h.b16 %v7659
        %v7797 = vunpack.c.l.b16 %v7660
        %v7798 = vunpack.c.h.b16 %v7660
        %v7799 = vunpack.c.l.b16 %v7661
        %v7800 = vunpack.c.h.b16 %v7661
        %v7801 = vunpack.c.l.b16 %v7662
        %v7802 = vunpack.c.h.b16 %v7662
        %v7803 = vunpack.c.l.b16 %v7663
        %v7804 = vunpack.c.h.b16 %v7663
        %v7805 = vunpack.c.l.b16 %v7664
        %v7806 = vunpack.c.h.b16 %v7664
        %v7807 = vunpack.c.l.b16 %v7665
        %v7808 = vunpack.c.h.b16 %v7665
        %v7809 = vunpack.c.l.b16 %v7666
        %v7810 = vunpack.c.h.b16 %v7666
        %v7811 = vunpack.c.l.b16 %v7667
        %v7812 = vunpack.c.h.b16 %v7667
        %v7813 = vunpack.c.l.b16 %v7668
        %v7814 = vunpack.c.h.b16 %v7668
        %v7815 = vunpack.c.l.b16 %v7669
        %v7816 = vunpack.c.h.b16 %v7669
        %v7817 = vunpack.c.l.b16 %v7670
        %v7818 = vunpack.c.h.b16 %v7670
        %v7819 = vunpack.c.l.b16 %v7671
        %v7820 = vunpack.c.h.b16 %v7671
        %v7821 = vunpack.c.l.b16 %v7672
        %v7822 = vunpack.c.h.b16 %v7672
        %v7823 = vunpack.c.l.b16 %v7673
        %v7824 = vunpack.c.h.b16 %v7673
        %v7825 = vunpack.c.l.b16 %v7674
        %v7826 = vunpack.c.h.b16 %v7674
        %v7827 = vunpack.c.l.b16 %v7675
        %v7828 = vunpack.c.h.b16 %v7675
        %v7829 = vunpack.c.l.b16 %v7676
        %v7830 = vunpack.c.h.b16 %v7676
        %v7831 = vunpack.c.l.b16 %v7677
        %v7832 = vunpack.c.h.b16 %v7677
        %v7833 = vunpack.c.l.b16 %v7678
        %v7834 = vunpack.c.h.b16 %v7678
        %v7835 = vunpack.c.l.b16 %v7679
        %v7836 = vunpack.c.h.b16 %v7679
        %v7837 = vunpack.c.l.b16 %v7680
        %v7838 = vunpack.c.h.b16 %v7680
        %v7839 = vunpack.c.l.b16 %v7681
        %v7840 = vunpack.c.h.b16 %v7681
        %v7841 = vunpack.c.l.b16 %v7682
        %v7842 = vunpack.c.h.b16 %v7682
        %v7843 = vunpack.c.l.b16 %v7683
        %v7844 = vunpack.c.h.b16 %v7683
        %v7845 = vunpack.c.l.b16 %v7684
        %v7846 = vunpack.c.h.b16 %v7684
        %v7847 = vunpack.c.l.b16 %v7685
        %v7848 = vunpack.c.h.b16 %v7685
        %v7849 = vunpack.c.l.b16 %v7686
        %v7850 = vunpack.c.h.b16 %v7686
        %v7851 = vunpack.c.l.b16 %v7687
        %v7852 = vunpack.c.h.b16 %v7687
        %v7853 = vunpack.c.l.b16 %v7688
        %v7854 = vunpack.c.h.b16 %v7688
        %v7855 = vunpack.c.l.b16 %v7689
        %v7856 = vunpack.c.h.b16 %v7689
        %v7857 = vunpack.c.l.b16 %v7690
        %v7858 = vunpack.c.h.b16 %v7690
        %v7859 = vunpack.c.l.b16 %v7691
        %v7860 = vunpack.c.h.b16 %v7691
        %v7861 = vunpack.c.l.b16 %v7692
        %v7862 = vunpack.c.h.b16 %v7692
        %v7863 = vunpack.c.l.b16 %v7693
        %v7864 = vunpack.c.h.b16 %v7693
        %v7865 = vunpack.c.l.b16 %v7694
        %v7866 = vunpack.c.h.b16 %v7694
        %v7867 = vunpack.c.l.b16 %v7695
        %v7868 = vunpack.c.h.b16 %v7695
        %v7869 = vunpack.c.l.b16 %v7696
        %v7870 = vunpack.c.h.b16 %v7696
        %v7871 = vunpack.c.l.b16 %v7697
        %v7872 = vunpack.c.h.b16 %v7697
        %v7873 = vunpack.c.l.b16 %v7698
        %v7874 = vunpack.c.h.b16 %v7698
        %v7875 = vunpack.c.l.b16 %v7699
        %v7876 = vunpack.c.h.b16 %v7699
        %v7877 = vunpack.c.l.b16 %v7700
        %v7878 = vunpack.c.h.b16 %v7700
        %v7879 = vunpack.c.l.b16 %v7701
        %v7880 = vunpack.c.h.b16 %v7701
        %v7881 = vunpack.c.l.b16 %v7702
        %v7882 = vunpack.c.h.b16 %v7702
        %v7883 = vunpack.c.l.b16 %v7703
        %v7884 = vunpack.c.h.b16 %v7703
        %v7885 = vunpack.c.l.b16 %v7704
        %v7886 = vunpack.c.h.b16 %v7704
        %v7887 = vunpack.c.l.b16 %v7705
        %v7888 = vunpack.c.h.b16 %v7705
        %v7889 = vunpack.c.l.b16 %v7706
        %v7890 = vunpack.c.h.b16 %v7706
        %v7891 = vunpack.c.l.b16 %v7707
        %v7892 = vunpack.c.h.b16 %v7707
        %v7893 = vunpack.c.l.b16 %v7708
        %v7894 = vunpack.c.h.b16 %v7708
        %v7895 = vunpack.c.l.b16 %v7709
        %v7896 = vunpack.c.h.b16 %v7709
        %v7897 = vunpack.c.l.b16 %v7710
        %v7898 = vunpack.c.h.b16 %v7710
        %v7899 = vunpack.c.l.b16 %v7711
        %v7900 = vunpack.c.h.b16 %v7711
        %v7901 = vunpack.c.l.b16 %v7712
        %v7902 = vunpack.c.h.b16 %v7712
        %v7903 = vunpack.c.l.b16 %v7713
        %v7904 = vunpack.c.h.b16 %v7713
        %v7905 = vunpack.c.l.b16 %v7714
        %v7906 = vunpack.c.h.b16 %v7714
        %v7907 = vunpack.c.l.b16 %v7715
        %v7908 = vunpack.c.h.b16 %v7715
        %v7909 = vunpack.c.l.b16 %v7716
        %v7910 = vunpack.c.h.b16 %v7716
        %v7911 = vunpack.c.l.b16 %v7717
        %v7912 = vunpack.c.h.b16 %v7717
        %v7913 = vunpack.c.l.b16 %v7718
        %v7914 = vunpack.c.h.b16 %v7718
        %v7915 = vunpack.c.l.b16 %v7719
        %v7916 = vunpack.c.h.b16 %v7719
        %v7917 = vunpack.c.l.b16 %v7720
        %v7918 = vunpack.c.h.b16 %v7720
        %v7919 = vunpack.c.l.b16 %v7721
        %v7920 = vunpack.c.h.b16 %v7721
        %v7921 = vunpack.c.l.b16 %v7722
        %v7922 = vunpack.c.h.b16 %v7722
        %v7923 = vpack.c.b16 %v7797, %v7795
        %v7924 = vpack.c.b16 %v7798, %v7796
        %v7925 = vpack.c.b16 %v7801, %v7799
        %v7926 = vpack.c.b16 %v7802, %v7800
        %v7927 = vpack.c.b16 %v7805, %v7803
        %v7928 = vpack.c.b16 %v7806, %v7804
        %v7929 = vpack.c.b16 %v7809, %v7807
        %v7930 = vpack.c.b16 %v7810, %v7808
        %v7931 = vpack.c.b16 %v7813, %v7811
        %v7932 = vpack.c.b16 %v7814, %v7812
        %v7933 = vpack.c.b16 %v7817, %v7815
        %v7934 = vpack.c.b16 %v7818, %v7816
        %v7935 = vpack.c.b16 %v7821, %v7819
        %v7936 = vpack.c.b16 %v7822, %v7820
        %v7937 = vpack.c.b16 %v7825, %v7823
        %v7938 = vpack.c.b16 %v7826, %v7824
        %v7939 = vpack.c.b16 %v7829, %v7827
        %v7940 = vpack.c.b16 %v7830, %v7828
        %v7941 = vpack.c.b16 %v7833, %v7831
        %v7942 = vpack.c.b16 %v7834, %v7832
        %v7943 = vpack.c.b16 %v7837, %v7835
        %v7944 = vpack.c.b16 %v7838, %v7836
        %v7945 = vpack.c.b16 %v7841, %v7839
        %v7946 = vpack.c.b16 %v7842, %v7840
        %v7947 = vpack.c.b16 %v7845, %v7843
        %v7948 = vpack.c.b16 %v7846, %v7844
        %v7949 = vpack.c.b16 %v7849, %v7847
        %v7950 = vpack.c.b16 %v7850, %v7848
        %v7951 = vpack.c.b16 %v7853, %v7851
        %v7952 = vpack.c.b16 %v7854, %v7852
        %v7953 = vpack.c.b16 %v7857, %v7855
        %v7954 = vpack.c.b16 %v7858, %v7856
        %v7955 = vpack.c.b16 %v7861, %v7859
        %v7956 = vpack.c.b16 %v7862, %v7860
        %v7957 = vpack.c.b16 %v7865, %v7863
        %v7958 = vpack.c.b16 %v7866, %v7864
        %v7959 = vpack.c.b16 %v7869, %v7867
        %v7960 = vpack.c.b16 %v7870, %v7868
        %v7961 = vpack.c.b16 %v7873, %v7871
        %v7962 = vpack.c.b16 %v7874, %v7872
        %v7963 = vpack.c.b16 %v7877, %v7875
        %v7964 = vpack.c.b16 %v7878, %v7876
        %v7965 = vpack.c.b16 %v7881, %v7879
        %v7966 = vpack.c.b16 %v7882, %v7880
        %v7967 = vpack.c.b16 %v7885, %v7883
        %v7968 = vpack.c.b16 %v7886, %v7884
        %v7969 = vpack.c.b16 %v7889, %v7887
        %v7970 = vpack.c.b16 %v7890, %v7888
        %v7971 = vpack.c.b16 %v7893, %v7891
        %v7972 = vpack.c.b16 %v7894, %v7892
        %v7973 = vpack.c.b16 %v7897, %v7895
        %v7974 = vpack.c.b16 %v7898, %v7896
        %v7975 = vpack.c.b16 %v7901, %v7899
        %v7976 = vpack.c.b16 %v7902, %v7900
        %v7977 = vpack.c.b16 %v7905, %v7903
        %v7978 = vpack.c.b16 %v7906, %v7904
        %v7979 = vpack.c.b16 %v7909, %v7907
        %v7980 = vpack.c.b16 %v7910, %v7908
        %v7981 = vpack.c.b16 %v7913, %v7911
        %v7982 = vpack.c.b16 %v7914, %v7912
        %v7983 = vpack.c.b16 %v7917, %v7915
        %v7984 = vpack.c.b16 %v7918, %v7916
        %v7985 = vpack.c.b16 %v7921, %v7919
        %v7986 = vpack.c.b16 %v7922, %v7920
        %8051 = vmatpush.bf16.msra.mxu0 %v7937
        %8052 = vmatpush.bf16.msra.mxu0 %v7935
        %8053 = vmatpush.bf16.msra.mxu0 %v7933
        %8054 = vmatpush.bf16.msra.mxu0 %v7931
        %8055 = vmatpush.bf16.msra.mxu0 %v7929
        %8056 = vmatpush.bf16.msra.mxu0 %v7927
        %8057 = vmatpush.bf16.msra.mxu0 %v7925
        %8058 = vmatpush.bf16.msra.mxu0 %v7923
        %8059 = vmatmul.bf16.gmra.mxu0 %v7723
        %v8060 = vpop.f32.mrf.mxu0
        %v8061 = vadd.f32 0.0, %v8060
        %v8062 = vpop.f32.mrf.mxu0
        %8063 = vdwg.mxu0
        %8064 = vmatpush.bf16.msra.mxu0 %v7953
        %8065 = vmatpush.bf16.msra.mxu0 %v7951
        %8066 = vmatpush.bf16.msra.mxu0 %v7949
        %8067 = vmatpush.bf16.msra.mxu0 %v7947
        %8068 = vmatpush.bf16.msra.mxu0 %v7945
        %8069 = vmatpush.bf16.msra.mxu0 %v7943
        %8070 = vmatpush.bf16.msra.mxu0 %v7941
        %8071 = vmatpush.bf16.msra.mxu0 %v7939
        %8072 = vmatmul.bf16.gmra.mxu0 %v7724
        %v8073 = vpop.f32.mrf.mxu0
        %v8074 = vadd.f32 %v8061, %v8073
        %v8075 = vpop.f32.mrf.mxu0
        %8076 = vdwg.mxu0
        %8077 = vmatpush.bf16.msra.mxu0 %v7969
        %8078 = vmatpush.bf16.msra.mxu0 %v7967
        %8079 = vmatpush.bf16.msra.mxu0 %v7965
        %8080 = vmatpush.bf16.msra.mxu0 %v7963
        %8081 = vmatpush.bf16.msra.mxu0 %v7961
        %8082 = vmatpush.bf16.msra.mxu0 %v7959
        %8083 = vmatpush.bf16.msra.mxu0 %v7957
        %8084 = vmatpush.bf16.msra.mxu0 %v7955
        %8085 = vmatmul.bf16.gmra.mxu0 %v7725
        %v8086 = vpop.f32.mrf.mxu0
        %v8087 = vadd.f32 %v8074, %v8086
        %v8088 = vpop.f32.mrf.mxu0
        %8089 = vdwg.mxu0
        %8090 = vmatpush.bf16.msra.mxu0 %v7985
        %8091 = vmatpush.bf16.msra.mxu0 %v7983
        %8092 = vmatpush.bf16.msra.mxu0 %v7981
        %8093 = vmatpush.bf16.msra.mxu0 %v7979
        %8094 = vmatpush.bf16.msra.mxu0 %v7977
        %8095 = vmatpush.bf16.msra.mxu0 %v7975
        %8096 = vmatpush.bf16.msra.mxu0 %v7973
        %8097 = vmatpush.bf16.msra.mxu0 %v7971
        %8098 = vmatmul.bf16.gmra.mxu0 %v7726
        %v8099 = vpop.f32.mrf.mxu0
        %v8100 = vadd.f32 %v8087, %v8099
        %v8101 = vpop.f32.mrf.mxu0
        %8102 = vdwg.mxu0
        %8103 = vmatpush.bf16.msra.mxu0 %v7938
        %8104 = vmatpush.bf16.msra.mxu0 %v7936
        %8105 = vmatpush.bf16.msra.mxu0 %v7934
        %8106 = vmatpush.bf16.msra.mxu0 %v7932
        %8107 = vmatpush.bf16.msra.mxu0 %v7930
        %8108 = vmatpush.bf16.msra.mxu0 %v7928
        %8109 = vmatpush.bf16.msra.mxu0 %v7926
        %8110 = vmatpush.bf16.msra.mxu0 %v7924
        %8111 = vmatmul.bf16.gmra.mxu0 %v7723
        %v8112 = vpop.f32.mrf.mxu0
        %v8113 = vadd.f32 0.0, %v8112
        %v8114 = vpop.f32.mrf.mxu0
        %8115 = vdwg.mxu0
        %8116 = vmatpush.bf16.msra.mxu0 %v7954
        %8117 = vmatpush.bf16.msra.mxu0 %v7952
        %8118 = vmatpush.bf16.msra.mxu0 %v7950
        %8119 = vmatpush.bf16.msra.mxu0 %v7948
        %8120 = vmatpush.bf16.msra.mxu0 %v7946
        %8121 = vmatpush.bf16.msra.mxu0 %v7944
        %8122 = vmatpush.bf16.msra.mxu0 %v7942
        %8123 = vmatpush.bf16.msra.mxu0 %v7940
        %8124 = vmatmul.bf16.gmra.mxu0 %v7724
        %v8125 = vpop.f32.mrf.mxu0
        %v8126 = vadd.f32 %v8113, %v8125
        %v8127 = vpop.f32.mrf.mxu0
        %8128 = vdwg.mxu0
        %8129 = vmatpush.bf16.msra.mxu0 %v7970
        %8130 = vmatpush.bf16.msra.mxu0 %v7968
        %8131 = vmatpush.bf16.msra.mxu0 %v7966
        %8132 = vmatpush.bf16.msra.mxu0 %v7964
        %8133 = vmatpush.bf16.msra.mxu0 %v7962
        %8134 = vmatpush.bf16.msra.mxu0 %v7960
        %8135 = vmatpush.bf16.msra.mxu0 %v7958
        %8136 = vmatpush.bf16.msra.mxu0 %v7956
        %8137 = vmatmul.bf16.gmra.mxu0 %v7725
        %v8138 = vpop.f32.mrf.mxu0
        %v8139 = vadd.f32 %v8126, %v8138
        %v8140 = vpop.f32.mrf.mxu0
        %8141 = vdwg.mxu0
        %8142 = vmatpush.bf16.msra.mxu0 %v7986
        %8143 = vmatpush.bf16.msra.mxu0 %v7984
        %8144 = vmatpush.bf16.msra.mxu0 %v7982
        %8145 = vmatpush.bf16.msra.mxu0 %v7980
        %8146 = vmatpush.bf16.msra.mxu0 %v7978
        %8147 = vmatpush.bf16.msra.mxu0 %v7976
        %8148 = vmatpush.bf16.msra.mxu0 %v7974
        %8149 = vmatpush.bf16.msra.mxu0 %v7972
        %8150 = vmatmul.bf16.gmra.mxu0 %v7726
        %v8151 = vpop.f32.mrf.mxu0
        %v8152 = vadd.f32 %v8139, %v8151
        %v8153 = vpop.f32.mrf.mxu0
        %8154 = vdwg.mxu0
        %s8155 = scalar_lea.vmem [#allocation17], 3072
        %v8156 = vld [vmem:[%s8155] sm:$0xff]
        %v8157 = vld [vmem:[%s8155 + $0x8] sm:$0xff]
        %v8158 = vld [vmem:[%s8155 + $0x10] sm:$0xff]
        %v8159 = vld [vmem:[%s8155 + $0x18] sm:$0xff]
        %v8160 = vld [vmem:[%s8155 + $0x20] sm:$0xff]
        %v8161 = vld [vmem:[%s8155 + $0x28] sm:$0xff]
        %v8162 = vld [vmem:[%s8155 + $0x30] sm:$0xff]
        %v8163 = vld [vmem:[%s8155 + $0x38] sm:$0xff]
        %v8164 = vld [vmem:[%s8155 + $0x40] sm:$0xff]
        %v8165 = vld [vmem:[%s8155 + $0x48] sm:$0xff]
        %v8166 = vld [vmem:[%s8155 + $0x50] sm:$0xff]
        %v8167 = vld [vmem:[%s8155 + $0x58] sm:$0xff]
        %v8168 = vld [vmem:[%s8155 + $0x60] sm:$0xff]
        %v8169 = vld [vmem:[%s8155 + $0x68] sm:$0xff]
        %v8170 = vld [vmem:[%s8155 + $0x70] sm:$0xff]
        %v8171 = vld [vmem:[%s8155 + $0x78] sm:$0xff]
        %v8172 = vld [vmem:[%s8155 + $0x80] sm:$0xff]
        %v8173 = vld [vmem:[%s8155 + $0x88] sm:$0xff]
        %v8174 = vld [vmem:[%s8155 + $0x90] sm:$0xff]
        %v8175 = vld [vmem:[%s8155 + $0x98] sm:$0xff]
        %v8176 = vld [vmem:[%s8155 + $0xa0] sm:$0xff]
        %v8177 = vld [vmem:[%s8155 + $0xa8] sm:$0xff]
        %v8178 = vld [vmem:[%s8155 + $0xb0] sm:$0xff]
        %v8179 = vld [vmem:[%s8155 + $0xb8] sm:$0xff]
        %v8180 = vld [vmem:[%s8155 + $0xc0] sm:$0xff]
        %v8181 = vld [vmem:[%s8155 + $0xc8] sm:$0xff]
        %v8182 = vld [vmem:[%s8155 + $0xd0] sm:$0xff]
        %v8183 = vld [vmem:[%s8155 + $0xd8] sm:$0xff]
        %v8184 = vld [vmem:[%s8155 + $0xe0] sm:$0xff]
        %v8185 = vld [vmem:[%s8155 + $0xe8] sm:$0xff]
        %v8186 = vld [vmem:[%s8155 + $0xf0] sm:$0xff]
        %v8187 = vld [vmem:[%s8155 + $0xf8] sm:$0xff]
        %v8188 = vld [vmem:[%s8155 + $0x100] sm:$0xff]
        %v8189 = vld [vmem:[%s8155 + $0x108] sm:$0xff]
        %v8190 = vld [vmem:[%s8155 + $0x110] sm:$0xff]
        %v8191 = vld [vmem:[%s8155 + $0x118] sm:$0xff]
        %v8192 = vld [vmem:[%s8155 + $0x120] sm:$0xff]
        %v8193 = vld [vmem:[%s8155 + $0x128] sm:$0xff]
        %v8194 = vld [vmem:[%s8155 + $0x130] sm:$0xff]
        %v8195 = vld [vmem:[%s8155 + $0x138] sm:$0xff]
        %v8196 = vld [vmem:[%s8155 + $0x140] sm:$0xff]
        %v8197 = vld [vmem:[%s8155 + $0x148] sm:$0xff]
        %v8198 = vld [vmem:[%s8155 + $0x150] sm:$0xff]
        %v8199 = vld [vmem:[%s8155 + $0x158] sm:$0xff]
        %v8200 = vld [vmem:[%s8155 + $0x160] sm:$0xff]
        %v8201 = vld [vmem:[%s8155 + $0x168] sm:$0xff]
        %v8202 = vld [vmem:[%s8155 + $0x170] sm:$0xff]
        %v8203 = vld [vmem:[%s8155 + $0x178] sm:$0xff]
        %v8204 = vld [vmem:[%s8155 + $0x180] sm:$0xff]
        %v8205 = vld [vmem:[%s8155 + $0x188] sm:$0xff]
        %v8206 = vld [vmem:[%s8155 + $0x190] sm:$0xff]
        %v8207 = vld [vmem:[%s8155 + $0x198] sm:$0xff]
        %v8208 = vld [vmem:[%s8155 + $0x1a0] sm:$0xff]
        %v8209 = vld [vmem:[%s8155 + $0x1a8] sm:$0xff]
        %v8210 = vld [vmem:[%s8155 + $0x1b0] sm:$0xff]
        %v8211 = vld [vmem:[%s8155 + $0x1b8] sm:$0xff]
        %v8212 = vld [vmem:[%s8155 + $0x1c0] sm:$0xff]
        %v8213 = vld [vmem:[%s8155 + $0x1c8] sm:$0xff]
        %v8214 = vld [vmem:[%s8155 + $0x1d0] sm:$0xff]
        %v8215 = vld [vmem:[%s8155 + $0x1d8] sm:$0xff]
        %v8216 = vld [vmem:[%s8155 + $0x1e0] sm:$0xff]
        %v8217 = vld [vmem:[%s8155 + $0x1e8] sm:$0xff]
        %v8218 = vld [vmem:[%s8155 + $0x1f0] sm:$0xff]
        %v8219 = vld [vmem:[%s8155 + $0x1f8] sm:$0xff]
        %s8220 = scalar_lea.vmem [#allocation17], 3584
        %v8221 = vld [vmem:[%s8220] sm:$0xff]
        %v8222 = vld [vmem:[%s8220 + $0x8] sm:$0xff]
        %v8223 = vld [vmem:[%s8220 + $0x10] sm:$0xff]
        %v8224 = vld [vmem:[%s8220 + $0x18] sm:$0xff]
        %v8225 = vld [vmem:[%s8220 + $0x20] sm:$0xff]
        %v8226 = vld [vmem:[%s8220 + $0x28] sm:$0xff]
        %v8227 = vld [vmem:[%s8220 + $0x30] sm:$0xff]
        %v8228 = vld [vmem:[%s8220 + $0x38] sm:$0xff]
        %v8229 = vld [vmem:[%s8220 + $0x40] sm:$0xff]
        %v8230 = vld [vmem:[%s8220 + $0x48] sm:$0xff]
        %v8231 = vld [vmem:[%s8220 + $0x50] sm:$0xff]
        %v8232 = vld [vmem:[%s8220 + $0x58] sm:$0xff]
        %v8233 = vld [vmem:[%s8220 + $0x60] sm:$0xff]
        %v8234 = vld [vmem:[%s8220 + $0x68] sm:$0xff]
        %v8235 = vld [vmem:[%s8220 + $0x70] sm:$0xff]
        %v8236 = vld [vmem:[%s8220 + $0x78] sm:$0xff]
        %v8237 = vld [vmem:[%s8220 + $0x80] sm:$0xff]
        %v8238 = vld [vmem:[%s8220 + $0x88] sm:$0xff]
        %v8239 = vld [vmem:[%s8220 + $0x90] sm:$0xff]
        %v8240 = vld [vmem:[%s8220 + $0x98] sm:$0xff]
        %v8241 = vld [vmem:[%s8220 + $0xa0] sm:$0xff]
        %v8242 = vld [vmem:[%s8220 + $0xa8] sm:$0xff]
        %v8243 = vld [vmem:[%s8220 + $0xb0] sm:$0xff]
        %v8244 = vld [vmem:[%s8220 + $0xb8] sm:$0xff]
        %v8245 = vld [vmem:[%s8220 + $0xc0] sm:$0xff]
        %v8246 = vld [vmem:[%s8220 + $0xc8] sm:$0xff]
        %v8247 = vld [vmem:[%s8220 + $0xd0] sm:$0xff]
        %v8248 = vld [vmem:[%s8220 + $0xd8] sm:$0xff]
        %v8249 = vld [vmem:[%s8220 + $0xe0] sm:$0xff]
        %v8250 = vld [vmem:[%s8220 + $0xe8] sm:$0xff]
        %v8251 = vld [vmem:[%s8220 + $0xf0] sm:$0xff]
        %v8252 = vld [vmem:[%s8220 + $0xf8] sm:$0xff]
        %v8253 = vld [vmem:[%s8220 + $0x100] sm:$0xff]
        %v8254 = vld [vmem:[%s8220 + $0x108] sm:$0xff]
        %v8255 = vld [vmem:[%s8220 + $0x110] sm:$0xff]
        %v8256 = vld [vmem:[%s8220 + $0x118] sm:$0xff]
        %v8257 = vld [vmem:[%s8220 + $0x120] sm:$0xff]
        %v8258 = vld [vmem:[%s8220 + $0x128] sm:$0xff]
        %v8259 = vld [vmem:[%s8220 + $0x130] sm:$0xff]
        %v8260 = vld [vmem:[%s8220 + $0x138] sm:$0xff]
        %v8261 = vld [vmem:[%s8220 + $0x140] sm:$0xff]
        %v8262 = vld [vmem:[%s8220 + $0x148] sm:$0xff]
        %v8263 = vld [vmem:[%s8220 + $0x150] sm:$0xff]
        %v8264 = vld [vmem:[%s8220 + $0x158] sm:$0xff]
        %v8265 = vld [vmem:[%s8220 + $0x160] sm:$0xff]
        %v8266 = vld [vmem:[%s8220 + $0x168] sm:$0xff]
        %v8267 = vld [vmem:[%s8220 + $0x170] sm:$0xff]
        %v8268 = vld [vmem:[%s8220 + $0x178] sm:$0xff]
        %v8269 = vld [vmem:[%s8220 + $0x180] sm:$0xff]
        %v8270 = vld [vmem:[%s8220 + $0x188] sm:$0xff]
        %v8271 = vld [vmem:[%s8220 + $0x190] sm:$0xff]
        %v8272 = vld [vmem:[%s8220 + $0x198] sm:$0xff]
        %v8273 = vld [vmem:[%s8220 + $0x1a0] sm:$0xff]
        %v8274 = vld [vmem:[%s8220 + $0x1a8] sm:$0xff]
        %v8275 = vld [vmem:[%s8220 + $0x1b0] sm:$0xff]
        %v8276 = vld [vmem:[%s8220 + $0x1b8] sm:$0xff]
        %v8277 = vld [vmem:[%s8220 + $0x1c0] sm:$0xff]
        %v8278 = vld [vmem:[%s8220 + $0x1c8] sm:$0xff]
        %v8279 = vld [vmem:[%s8220 + $0x1d0] sm:$0xff]
        %v8280 = vld [vmem:[%s8220 + $0x1d8] sm:$0xff]
        %v8281 = vld [vmem:[%s8220 + $0x1e0] sm:$0xff]
        %v8282 = vld [vmem:[%s8220 + $0x1e8] sm:$0xff]
        %v8283 = vld [vmem:[%s8220 + $0x1f0] sm:$0xff]
        %v8284 = vld [vmem:[%s8220 + $0x1f8] sm:$0xff]
        %v8285 = vrot.slane %v6592, 3
        %v8286 = vrot.slane %v6595, 3
        %v8287 = vrot.slane %v6598, 3
        %v8288 = vrot.slane %v6601, 3
        %v8357 = vunpack.c.l.b16 %v8221
        %v8358 = vunpack.c.h.b16 %v8221
        %v8359 = vunpack.c.l.b16 %v8222
        %v8360 = vunpack.c.h.b16 %v8222
        %v8361 = vunpack.c.l.b16 %v8223
        %v8362 = vunpack.c.h.b16 %v8223
        %v8363 = vunpack.c.l.b16 %v8224
        %v8364 = vunpack.c.h.b16 %v8224
        %v8365 = vunpack.c.l.b16 %v8225
        %v8366 = vunpack.c.h.b16 %v8225
        %v8367 = vunpack.c.l.b16 %v8226
        %v8368 = vunpack.c.h.b16 %v8226
        %v8369 = vunpack.c.l.b16 %v8227
        %v8370 = vunpack.c.h.b16 %v8227
        %v8371 = vunpack.c.l.b16 %v8228
        %v8372 = vunpack.c.h.b16 %v8228
        %v8373 = vunpack.c.l.b16 %v8229
        %v8374 = vunpack.c.h.b16 %v8229
        %v8375 = vunpack.c.l.b16 %v8230
        %v8376 = vunpack.c.h.b16 %v8230
        %v8377 = vunpack.c.l.b16 %v8231
        %v8378 = vunpack.c.h.b16 %v8231
        %v8379 = vunpack.c.l.b16 %v8232
        %v8380 = vunpack.c.h.b16 %v8232
        %v8381 = vunpack.c.l.b16 %v8233
        %v8382 = vunpack.c.h.b16 %v8233
        %v8383 = vunpack.c.l.b16 %v8234
        %v8384 = vunpack.c.h.b16 %v8234
        %v8385 = vunpack.c.l.b16 %v8235
        %v8386 = vunpack.c.h.b16 %v8235
        %v8387 = vunpack.c.l.b16 %v8236
        %v8388 = vunpack.c.h.b16 %v8236
        %v8389 = vunpack.c.l.b16 %v8237
        %v8390 = vunpack.c.h.b16 %v8237
        %v8391 = vunpack.c.l.b16 %v8238
        %v8392 = vunpack.c.h.b16 %v8238
        %v8393 = vunpack.c.l.b16 %v8239
        %v8394 = vunpack.c.h.b16 %v8239
        %v8395 = vunpack.c.l.b16 %v8240
        %v8396 = vunpack.c.h.b16 %v8240
        %v8397 = vunpack.c.l.b16 %v8241
        %v8398 = vunpack.c.h.b16 %v8241
        %v8399 = vunpack.c.l.b16 %v8242
        %v8400 = vunpack.c.h.b16 %v8242
        %v8401 = vunpack.c.l.b16 %v8243
        %v8402 = vunpack.c.h.b16 %v8243
        %v8403 = vunpack.c.l.b16 %v8244
        %v8404 = vunpack.c.h.b16 %v8244
        %v8405 = vunpack.c.l.b16 %v8245
        %v8406 = vunpack.c.h.b16 %v8245
        %v8407 = vunpack.c.l.b16 %v8246
        %v8408 = vunpack.c.h.b16 %v8246
        %v8409 = vunpack.c.l.b16 %v8247
        %v8410 = vunpack.c.h.b16 %v8247
        %v8411 = vunpack.c.l.b16 %v8248
        %v8412 = vunpack.c.h.b16 %v8248
        %v8413 = vunpack.c.l.b16 %v8249
        %v8414 = vunpack.c.h.b16 %v8249
        %v8415 = vunpack.c.l.b16 %v8250
        %v8416 = vunpack.c.h.b16 %v8250
        %v8417 = vunpack.c.l.b16 %v8251
        %v8418 = vunpack.c.h.b16 %v8251
        %v8419 = vunpack.c.l.b16 %v8252
        %v8420 = vunpack.c.h.b16 %v8252
        %v8421 = vunpack.c.l.b16 %v8253
        %v8422 = vunpack.c.h.b16 %v8253
        %v8423 = vunpack.c.l.b16 %v8254
        %v8424 = vunpack.c.h.b16 %v8254
        %v8425 = vunpack.c.l.b16 %v8255
        %v8426 = vunpack.c.h.b16 %v8255
        %v8427 = vunpack.c.l.b16 %v8256
        %v8428 = vunpack.c.h.b16 %v8256
        %v8429 = vunpack.c.l.b16 %v8257
        %v8430 = vunpack.c.h.b16 %v8257
        %v8431 = vunpack.c.l.b16 %v8258
        %v8432 = vunpack.c.h.b16 %v8258
        %v8433 = vunpack.c.l.b16 %v8259
        %v8434 = vunpack.c.h.b16 %v8259
        %v8435 = vunpack.c.l.b16 %v8260
        %v8436 = vunpack.c.h.b16 %v8260
        %v8437 = vunpack.c.l.b16 %v8261
        %v8438 = vunpack.c.h.b16 %v8261
        %v8439 = vunpack.c.l.b16 %v8262
        %v8440 = vunpack.c.h.b16 %v8262
        %v8441 = vunpack.c.l.b16 %v8263
        %v8442 = vunpack.c.h.b16 %v8263
        %v8443 = vunpack.c.l.b16 %v8264
        %v8444 = vunpack.c.h.b16 %v8264
        %v8445 = vunpack.c.l.b16 %v8265
        %v8446 = vunpack.c.h.b16 %v8265
        %v8447 = vunpack.c.l.b16 %v8266
        %v8448 = vunpack.c.h.b16 %v8266
        %v8449 = vunpack.c.l.b16 %v8267
        %v8450 = vunpack.c.h.b16 %v8267
        %v8451 = vunpack.c.l.b16 %v8268
        %v8452 = vunpack.c.h.b16 %v8268
        %v8453 = vunpack.c.l.b16 %v8269
        %v8454 = vunpack.c.h.b16 %v8269
        %v8455 = vunpack.c.l.b16 %v8270
        %v8456 = vunpack.c.h.b16 %v8270
        %v8457 = vunpack.c.l.b16 %v8271
        %v8458 = vunpack.c.h.b16 %v8271
        %v8459 = vunpack.c.l.b16 %v8272
        %v8460 = vunpack.c.h.b16 %v8272
        %v8461 = vunpack.c.l.b16 %v8273
        %v8462 = vunpack.c.h.b16 %v8273
        %v8463 = vunpack.c.l.b16 %v8274
        %v8464 = vunpack.c.h.b16 %v8274
        %v8465 = vunpack.c.l.b16 %v8275
        %v8466 = vunpack.c.h.b16 %v8275
        %v8467 = vunpack.c.l.b16 %v8276
        %v8468 = vunpack.c.h.b16 %v8276
        %v8469 = vunpack.c.l.b16 %v8277
        %v8470 = vunpack.c.h.b16 %v8277
        %v8471 = vunpack.c.l.b16 %v8278
        %v8472 = vunpack.c.h.b16 %v8278
        %v8473 = vunpack.c.l.b16 %v8279
        %v8474 = vunpack.c.h.b16 %v8279
        %v8475 = vunpack.c.l.b16 %v8280
        %v8476 = vunpack.c.h.b16 %v8280
        %v8477 = vunpack.c.l.b16 %v8281
        %v8478 = vunpack.c.h.b16 %v8281
        %v8479 = vunpack.c.l.b16 %v8282
        %v8480 = vunpack.c.h.b16 %v8282
        %v8481 = vunpack.c.l.b16 %v8283
        %v8482 = vunpack.c.h.b16 %v8283
        %v8483 = vunpack.c.l.b16 %v8284
        %v8484 = vunpack.c.h.b16 %v8284
        %v8485 = vpack.c.b16 %v8359, %v8357
        %v8486 = vpack.c.b16 %v8360, %v8358
        %v8487 = vpack.c.b16 %v8363, %v8361
        %v8488 = vpack.c.b16 %v8364, %v8362
        %v8489 = vpack.c.b16 %v8367, %v8365
        %v8490 = vpack.c.b16 %v8368, %v8366
        %v8491 = vpack.c.b16 %v8371, %v8369
        %v8492 = vpack.c.b16 %v8372, %v8370
        %v8493 = vpack.c.b16 %v8375, %v8373
        %v8494 = vpack.c.b16 %v8376, %v8374
        %v8495 = vpack.c.b16 %v8379, %v8377
        %v8496 = vpack.c.b16 %v8380, %v8378
        %v8497 = vpack.c.b16 %v8383, %v8381
        %v8498 = vpack.c.b16 %v8384, %v8382
        %v8499 = vpack.c.b16 %v8387, %v8385
        %v8500 = vpack.c.b16 %v8388, %v8386
        %v8501 = vpack.c.b16 %v8391, %v8389
        %v8502 = vpack.c.b16 %v8392, %v8390
        %v8503 = vpack.c.b16 %v8395, %v8393
        %v8504 = vpack.c.b16 %v8396, %v8394
        %v8505 = vpack.c.b16 %v8399, %v8397
        %v8506 = vpack.c.b16 %v8400, %v8398
        %v8507 = vpack.c.b16 %v8403, %v8401
        %v8508 = vpack.c.b16 %v8404, %v8402
        %v8509 = vpack.c.b16 %v8407, %v8405
        %v8510 = vpack.c.b16 %v8408, %v8406
        %v8511 = vpack.c.b16 %v8411, %v8409
        %v8512 = vpack.c.b16 %v8412, %v8410
        %v8513 = vpack.c.b16 %v8415, %v8413
        %v8514 = vpack.c.b16 %v8416, %v8414
        %v8515 = vpack.c.b16 %v8419, %v8417
        %v8516 = vpack.c.b16 %v8420, %v8418
        %v8517 = vpack.c.b16 %v8423, %v8421
        %v8518 = vpack.c.b16 %v8424, %v8422
        %v8519 = vpack.c.b16 %v8427, %v8425
        %v8520 = vpack.c.b16 %v8428, %v8426
        %v8521 = vpack.c.b16 %v8431, %v8429
        %v8522 = vpack.c.b16 %v8432, %v8430
        %v8523 = vpack.c.b16 %v8435, %v8433
        %v8524 = vpack.c.b16 %v8436, %v8434
        %v8525 = vpack.c.b16 %v8439, %v8437
        %v8526 = vpack.c.b16 %v8440, %v8438
        %v8527 = vpack.c.b16 %v8443, %v8441
        %v8528 = vpack.c.b16 %v8444, %v8442
        %v8529 = vpack.c.b16 %v8447, %v8445
        %v8530 = vpack.c.b16 %v8448, %v8446
        %v8531 = vpack.c.b16 %v8451, %v8449
        %v8532 = vpack.c.b16 %v8452, %v8450
        %v8533 = vpack.c.b16 %v8455, %v8453
        %v8534 = vpack.c.b16 %v8456, %v8454
        %v8535 = vpack.c.b16 %v8459, %v8457
        %v8536 = vpack.c.b16 %v8460, %v8458
        %v8537 = vpack.c.b16 %v8463, %v8461
        %v8538 = vpack.c.b16 %v8464, %v8462
        %v8539 = vpack.c.b16 %v8467, %v8465
        %v8540 = vpack.c.b16 %v8468, %v8466
        %v8541 = vpack.c.b16 %v8471, %v8469
        %v8542 = vpack.c.b16 %v8472, %v8470
        %v8543 = vpack.c.b16 %v8475, %v8473
        %v8544 = vpack.c.b16 %v8476, %v8474
        %v8545 = vpack.c.b16 %v8479, %v8477
        %v8546 = vpack.c.b16 %v8480, %v8478
        %v8547 = vpack.c.b16 %v8483, %v8481
        %v8548 = vpack.c.b16 %v8484, %v8482
        %8613 = vmatpush.bf16.msra.mxu0 %v8499
        %8614 = vmatpush.bf16.msra.mxu0 %v8497
        %8615 = vmatpush.bf16.msra.mxu0 %v8495
        %8616 = vmatpush.bf16.msra.mxu0 %v8493
        %8617 = vmatpush.bf16.msra.mxu0 %v8491
        %8618 = vmatpush.bf16.msra.mxu0 %v8489
        %8619 = vmatpush.bf16.msra.mxu0 %v8487
        %8620 = vmatpush.bf16.msra.mxu0 %v8485
        %8621 = vmatmul.bf16.gmra.mxu0 %v8285
        %v8622 = vpop.f32.mrf.mxu0
        %v8623 = vadd.f32 0.0, %v8622
        %v8624 = vpop.f32.mrf.mxu0
        %8625 = vdwg.mxu0
        %8626 = vmatpush.bf16.msra.mxu0 %v8515
        %8627 = vmatpush.bf16.msra.mxu0 %v8513
        %8628 = vmatpush.bf16.msra.mxu0 %v8511
        %8629 = vmatpush.bf16.msra.mxu0 %v8509
        %8630 = vmatpush.bf16.msra.mxu0 %v8507
        %8631 = vmatpush.bf16.msra.mxu0 %v8505
        %8632 = vmatpush.bf16.msra.mxu0 %v8503
        %8633 = vmatpush.bf16.msra.mxu0 %v8501
        %8634 = vmatmul.bf16.gmra.mxu0 %v8286
        %v8635 = vpop.f32.mrf.mxu0
        %v8636 = vadd.f32 %v8623, %v8635
        %v8637 = vpop.f32.mrf.mxu0
        %8638 = vdwg.mxu0
        %8639 = vmatpush.bf16.msra.mxu0 %v8531
        %8640 = vmatpush.bf16.msra.mxu0 %v8529
        %8641 = vmatpush.bf16.msra.mxu0 %v8527
        %8642 = vmatpush.bf16.msra.mxu0 %v8525
        %8643 = vmatpush.bf16.msra.mxu0 %v8523
        %8644 = vmatpush.bf16.msra.mxu0 %v8521
        %8645 = vmatpush.bf16.msra.mxu0 %v8519
        %8646 = vmatpush.bf16.msra.mxu0 %v8517
        %8647 = vmatmul.bf16.gmra.mxu0 %v8287
        %v8648 = vpop.f32.mrf.mxu0
        %v8649 = vadd.f32 %v8636, %v8648
        %v8650 = vpop.f32.mrf.mxu0
        %8651 = vdwg.mxu0
        %8652 = vmatpush.bf16.msra.mxu0 %v8547
        %8653 = vmatpush.bf16.msra.mxu0 %v8545
        %8654 = vmatpush.bf16.msra.mxu0 %v8543
        %8655 = vmatpush.bf16.msra.mxu0 %v8541
        %8656 = vmatpush.bf16.msra.mxu0 %v8539
        %8657 = vmatpush.bf16.msra.mxu0 %v8537
        %8658 = vmatpush.bf16.msra.mxu0 %v8535
        %8659 = vmatpush.bf16.msra.mxu0 %v8533
        %8660 = vmatmul.bf16.gmra.mxu0 %v8288
        %v8661 = vpop.f32.mrf.mxu0
        %v8662 = vadd.f32 %v8649, %v8661
        %v8663 = vpop.f32.mrf.mxu0
        %8664 = vdwg.mxu0
        %8665 = vmatpush.bf16.msra.mxu0 %v8500
        %8666 = vmatpush.bf16.msra.mxu0 %v8498
        %8667 = vmatpush.bf16.msra.mxu0 %v8496
        %8668 = vmatpush.bf16.msra.mxu0 %v8494
        %8669 = vmatpush.bf16.msra.mxu0 %v8492
        %8670 = vmatpush.bf16.msra.mxu0 %v8490
        %8671 = vmatpush.bf16.msra.mxu0 %v8488
        %8672 = vmatpush.bf16.msra.mxu0 %v8486
        %8673 = vmatmul.bf16.gmra.mxu0 %v8285
        %v8674 = vpop.f32.mrf.mxu0
        %v8675 = vadd.f32 0.0, %v8674
        %v8676 = vpop.f32.mrf.mxu0
        %8677 = vdwg.mxu0
        %8678 = vmatpush.bf16.msra.mxu0 %v8516
        %8679 = vmatpush.bf16.msra.mxu0 %v8514
        %8680 = vmatpush.bf16.msra.mxu0 %v8512
        %8681 = vmatpush.bf16.msra.mxu0 %v8510
        %8682 = vmatpush.bf16.msra.mxu0 %v8508
        %8683 = vmatpush.bf16.msra.mxu0 %v8506
        %8684 = vmatpush.bf16.msra.mxu0 %v8504
        %8685 = vmatpush.bf16.msra.mxu0 %v8502
        %8686 = vmatmul.bf16.gmra.mxu0 %v8286
        %v8687 = vpop.f32.mrf.mxu0
        %v8688 = vadd.f32 %v8675, %v8687
        %v8689 = vpop.f32.mrf.mxu0
        %8690 = vdwg.mxu0
        %8691 = vmatpush.bf16.msra.mxu0 %v8532
        %8692 = vmatpush.bf16.msra.mxu0 %v8530
        %8693 = vmatpush.bf16.msra.mxu0 %v8528
        %8694 = vmatpush.bf16.msra.mxu0 %v8526
        %8695 = vmatpush.bf16.msra.mxu0 %v8524
        %8696 = vmatpush.bf16.msra.mxu0 %v8522
        %8697 = vmatpush.bf16.msra.mxu0 %v8520
        %8698 = vmatpush.bf16.msra.mxu0 %v8518
        %8699 = vmatmul.bf16.gmra.mxu0 %v8287
        %v8700 = vpop.f32.mrf.mxu0
        %v8701 = vadd.f32 %v8688, %v8700
        %v8702 = vpop.f32.mrf.mxu0
        %8703 = vdwg.mxu0
        %8704 = vmatpush.bf16.msra.mxu0 %v8548
        %8705 = vmatpush.bf16.msra.mxu0 %v8546
        %8706 = vmatpush.bf16.msra.mxu0 %v8544
        %8707 = vmatpush.bf16.msra.mxu0 %v8542
        %8708 = vmatpush.bf16.msra.mxu0 %v8540
        %8709 = vmatpush.bf16.msra.mxu0 %v8538
        %8710 = vmatpush.bf16.msra.mxu0 %v8536
        %8711 = vmatpush.bf16.msra.mxu0 %v8534
        %8712 = vmatmul.bf16.gmra.mxu0 %v8288
        %v8713 = vpop.f32.mrf.mxu0
        %v8714 = vadd.f32 %v8701, %v8713
        %v8715 = vpop.f32.mrf.mxu0
        %8716 = vdwg.mxu0
        %v8785 = vunpack.c.l.b16 %v6452
        %v8786 = vunpack.c.h.b16 %v6452
        %v8787 = vunpack.c.l.b16 %v6453
        %v8788 = vunpack.c.h.b16 %v6453
        %v8789 = vunpack.c.l.b16 %v6454
        %v8790 = vunpack.c.h.b16 %v6454
        %v8791 = vunpack.c.l.b16 %v6455
        %v8792 = vunpack.c.h.b16 %v6455
        %v8793 = vunpack.c.l.b16 %v6456
        %v8794 = vunpack.c.h.b16 %v6456
        %v8795 = vunpack.c.l.b16 %v6457
        %v8796 = vunpack.c.h.b16 %v6457
        %v8797 = vunpack.c.l.b16 %v6458
        %v8798 = vunpack.c.h.b16 %v6458
        %v8799 = vunpack.c.l.b16 %v6459
        %v8800 = vunpack.c.h.b16 %v6459
        %v8801 = vunpack.c.l.b16 %v6460
        %v8802 = vunpack.c.h.b16 %v6460
        %v8803 = vunpack.c.l.b16 %v6461
        %v8804 = vunpack.c.h.b16 %v6461
        %v8805 = vunpack.c.l.b16 %v6462
        %v8806 = vunpack.c.h.b16 %v6462
        %v8807 = vunpack.c.l.b16 %v6463
        %v8808 = vunpack.c.h.b16 %v6463
        %v8809 = vunpack.c.l.b16 %v6464
        %v8810 = vunpack.c.h.b16 %v6464
        %v8811 = vunpack.c.l.b16 %v6465
        %v8812 = vunpack.c.h.b16 %v6465
        %v8813 = vunpack.c.l.b16 %v6466
        %v8814 = vunpack.c.h.b16 %v6466
        %v8815 = vunpack.c.l.b16 %v6467
        %v8816 = vunpack.c.h.b16 %v6467
        %v8817 = vunpack.c.l.b16 %v6468
        %v8818 = vunpack.c.h.b16 %v6468
        %v8819 = vunpack.c.l.b16 %v6469
        %v8820 = vunpack.c.h.b16 %v6469
        %v8821 = vunpack.c.l.b16 %v6470
        %v8822 = vunpack.c.h.b16 %v6470
        %v8823 = vunpack.c.l.b16 %v6471
        %v8824 = vunpack.c.h.b16 %v6471
        %v8825 = vunpack.c.l.b16 %v6472
        %v8826 = vunpack.c.h.b16 %v6472
        %v8827 = vunpack.c.l.b16 %v6473
        %v8828 = vunpack.c.h.b16 %v6473
        %v8829 = vunpack.c.l.b16 %v6474
        %v8830 = vunpack.c.h.b16 %v6474
        %v8831 = vunpack.c.l.b16 %v6475
        %v8832 = vunpack.c.h.b16 %v6475
        %v8833 = vunpack.c.l.b16 %v6476
        %v8834 = vunpack.c.h.b16 %v6476
        %v8835 = vunpack.c.l.b16 %v6477
        %v8836 = vunpack.c.h.b16 %v6477
        %v8837 = vunpack.c.l.b16 %v6478
        %v8838 = vunpack.c.h.b16 %v6478
        %v8839 = vunpack.c.l.b16 %v6479
        %v8840 = vunpack.c.h.b16 %v6479
        %v8841 = vunpack.c.l.b16 %v6480
        %v8842 = vunpack.c.h.b16 %v6480
        %v8843 = vunpack.c.l.b16 %v6481
        %v8844 = vunpack.c.h.b16 %v6481
        %v8845 = vunpack.c.l.b16 %v6482
        %v8846 = vunpack.c.h.b16 %v6482
        %v8847 = vunpack.c.l.b16 %v6483
        %v8848 = vunpack.c.h.b16 %v6483
        %v8849 = vunpack.c.l.b16 %v6484
        %v8850 = vunpack.c.h.b16 %v6484
        %v8851 = vunpack.c.l.b16 %v6485
        %v8852 = vunpack.c.h.b16 %v6485
        %v8853 = vunpack.c.l.b16 %v6486
        %v8854 = vunpack.c.h.b16 %v6486
        %v8855 = vunpack.c.l.b16 %v6487
        %v8856 = vunpack.c.h.b16 %v6487
        %v8857 = vunpack.c.l.b16 %v6488
        %v8858 = vunpack.c.h.b16 %v6488
        %v8859 = vunpack.c.l.b16 %v6489
        %v8860 = vunpack.c.h.b16 %v6489
        %v8861 = vunpack.c.l.b16 %v6490
        %v8862 = vunpack.c.h.b16 %v6490
        %v8863 = vunpack.c.l.b16 %v6491
        %v8864 = vunpack.c.h.b16 %v6491
        %v8865 = vunpack.c.l.b16 %v6492
        %v8866 = vunpack.c.h.b16 %v6492
        %v8867 = vunpack.c.l.b16 %v6493
        %v8868 = vunpack.c.h.b16 %v6493
        %v8869 = vunpack.c.l.b16 %v6494
        %v8870 = vunpack.c.h.b16 %v6494
        %v8871 = vunpack.c.l.b16 %v6495
        %v8872 = vunpack.c.h.b16 %v6495
        %v8873 = vunpack.c.l.b16 %v6496
        %v8874 = vunpack.c.h.b16 %v6496
        %v8875 = vunpack.c.l.b16 %v6497
        %v8876 = vunpack.c.h.b16 %v6497
        %v8877 = vunpack.c.l.b16 %v6498
        %v8878 = vunpack.c.h.b16 %v6498
        %v8879 = vunpack.c.l.b16 %v6499
        %v8880 = vunpack.c.h.b16 %v6499
        %v8881 = vunpack.c.l.b16 %v6500
        %v8882 = vunpack.c.h.b16 %v6500
        %v8883 = vunpack.c.l.b16 %v6501
        %v8884 = vunpack.c.h.b16 %v6501
        %v8885 = vunpack.c.l.b16 %v6502
        %v8886 = vunpack.c.h.b16 %v6502
        %v8887 = vunpack.c.l.b16 %v6503
        %v8888 = vunpack.c.h.b16 %v6503
        %v8889 = vunpack.c.l.b16 %v6504
        %v8890 = vunpack.c.h.b16 %v6504
        %v8891 = vunpack.c.l.b16 %v6505
        %v8892 = vunpack.c.h.b16 %v6505
        %v8893 = vunpack.c.l.b16 %v6506
        %v8894 = vunpack.c.h.b16 %v6506
        %v8895 = vunpack.c.l.b16 %v6507
        %v8896 = vunpack.c.h.b16 %v6507
        %v8897 = vunpack.c.l.b16 %v6508
        %v8898 = vunpack.c.h.b16 %v6508
        %v8899 = vunpack.c.l.b16 %v6509
        %v8900 = vunpack.c.h.b16 %v6509
        %v8901 = vunpack.c.l.b16 %v6510
        %v8902 = vunpack.c.h.b16 %v6510
        %v8903 = vunpack.c.l.b16 %v6511
        %v8904 = vunpack.c.h.b16 %v6511
        %v8905 = vunpack.c.l.b16 %v6512
        %v8906 = vunpack.c.h.b16 %v6512
        %v8907 = vunpack.c.l.b16 %v6513
        %v8908 = vunpack.c.h.b16 %v6513
        %v8909 = vunpack.c.l.b16 %v6514
        %v8910 = vunpack.c.h.b16 %v6514
        %v8911 = vunpack.c.l.b16 %v6515
        %v8912 = vunpack.c.h.b16 %v6515
        %v8913 = vpack.c.b16 %v8787, %v8785
        %v8914 = vpack.c.b16 %v8788, %v8786
        %v8915 = vpack.c.b16 %v8791, %v8789
        %v8916 = vpack.c.b16 %v8792, %v8790
        %v8917 = vpack.c.b16 %v8795, %v8793
        %v8918 = vpack.c.b16 %v8796, %v8794
        %v8919 = vpack.c.b16 %v8799, %v8797
        %v8920 = vpack.c.b16 %v8800, %v8798
        %v8921 = vpack.c.b16 %v8803, %v8801
        %v8922 = vpack.c.b16 %v8804, %v8802
        %v8923 = vpack.c.b16 %v8807, %v8805
        %v8924 = vpack.c.b16 %v8808, %v8806
        %v8925 = vpack.c.b16 %v8811, %v8809
        %v8926 = vpack.c.b16 %v8812, %v8810
        %v8927 = vpack.c.b16 %v8815, %v8813
        %v8928 = vpack.c.b16 %v8816, %v8814
        %v8929 = vpack.c.b16 %v8819, %v8817
        %v8930 = vpack.c.b16 %v8820, %v8818
        %v8931 = vpack.c.b16 %v8823, %v8821
        %v8932 = vpack.c.b16 %v8824, %v8822
        %v8933 = vpack.c.b16 %v8827, %v8825
        %v8934 = vpack.c.b16 %v8828, %v8826
        %v8935 = vpack.c.b16 %v8831, %v8829
        %v8936 = vpack.c.b16 %v8832, %v8830
        %v8937 = vpack.c.b16 %v8835, %v8833
        %v8938 = vpack.c.b16 %v8836, %v8834
        %v8939 = vpack.c.b16 %v8839, %v8837
        %v8940 = vpack.c.b16 %v8840, %v8838
        %v8941 = vpack.c.b16 %v8843, %v8841
        %v8942 = vpack.c.b16 %v8844, %v8842
        %v8943 = vpack.c.b16 %v8847, %v8845
        %v8944 = vpack.c.b16 %v8848, %v8846
        %v8945 = vpack.c.b16 %v8851, %v8849
        %v8946 = vpack.c.b16 %v8852, %v8850
        %v8947 = vpack.c.b16 %v8855, %v8853
        %v8948 = vpack.c.b16 %v8856, %v8854
        %v8949 = vpack.c.b16 %v8859, %v8857
        %v8950 = vpack.c.b16 %v8860, %v8858
        %v8951 = vpack.c.b16 %v8863, %v8861
        %v8952 = vpack.c.b16 %v8864, %v8862
        %v8953 = vpack.c.b16 %v8867, %v8865
        %v8954 = vpack.c.b16 %v8868, %v8866
        %v8955 = vpack.c.b16 %v8871, %v8869
        %v8956 = vpack.c.b16 %v8872, %v8870
        %v8957 = vpack.c.b16 %v8875, %v8873
        %v8958 = vpack.c.b16 %v8876, %v8874
        %v8959 = vpack.c.b16 %v8879, %v8877
        %v8960 = vpack.c.b16 %v8880, %v8878
        %v8961 = vpack.c.b16 %v8883, %v8881
        %v8962 = vpack.c.b16 %v8884, %v8882
        %v8963 = vpack.c.b16 %v8887, %v8885
        %v8964 = vpack.c.b16 %v8888, %v8886
        %v8965 = vpack.c.b16 %v8891, %v8889
        %v8966 = vpack.c.b16 %v8892, %v8890
        %v8967 = vpack.c.b16 %v8895, %v8893
        %v8968 = vpack.c.b16 %v8896, %v8894
        %v8969 = vpack.c.b16 %v8899, %v8897
        %v8970 = vpack.c.b16 %v8900, %v8898
        %v8971 = vpack.c.b16 %v8903, %v8901
        %v8972 = vpack.c.b16 %v8904, %v8902
        %v8973 = vpack.c.b16 %v8907, %v8905
        %v8974 = vpack.c.b16 %v8908, %v8906
        %v8975 = vpack.c.b16 %v8911, %v8909
        %v8976 = vpack.c.b16 %v8912, %v8910
        %9041 = vmatpush.bf16.msra.mxu0 %v8927
        %9042 = vmatpush.bf16.msra.mxu0 %v8925
        %9043 = vmatpush.bf16.msra.mxu0 %v8923
        %9044 = vmatpush.bf16.msra.mxu0 %v8921
        %9045 = vmatpush.bf16.msra.mxu0 %v8919
        %9046 = vmatpush.bf16.msra.mxu0 %v8917
        %9047 = vmatpush.bf16.msra.mxu0 %v8915
        %9048 = vmatpush.bf16.msra.mxu0 %v8913
        %9049 = vmatmul.bf16.gmra.mxu0 %v6587
        %v9050 = vpop.f32.mrf.mxu0
        %v9051 = vadd.f32 %v6976, %v9050
        %v9052 = vpop.f32.mrf.mxu0
        %9053 = vdwg.mxu0
        %9054 = vmatpush.bf16.msra.mxu0 %v8943
        %9055 = vmatpush.bf16.msra.mxu0 %v8941
        %9056 = vmatpush.bf16.msra.mxu0 %v8939
        %9057 = vmatpush.bf16.msra.mxu0 %v8937
        %9058 = vmatpush.bf16.msra.mxu0 %v8935
        %9059 = vmatpush.bf16.msra.mxu0 %v8933
        %9060 = vmatpush.bf16.msra.mxu0 %v8931
        %9061 = vmatpush.bf16.msra.mxu0 %v8929
        %9062 = vmatmul.bf16.gmra.mxu0 %v6588
        %v9063 = vpop.f32.mrf.mxu0
        %v9064 = vadd.f32 %v9051, %v9063
        %v9065 = vpop.f32.mrf.mxu0
        %9066 = vdwg.mxu0
        %9067 = vmatpush.bf16.msra.mxu0 %v8959
        %9068 = vmatpush.bf16.msra.mxu0 %v8957
        %9069 = vmatpush.bf16.msra.mxu0 %v8955
        %9070 = vmatpush.bf16.msra.mxu0 %v8953
        %9071 = vmatpush.bf16.msra.mxu0 %v8951
        %9072 = vmatpush.bf16.msra.mxu0 %v8949
        %9073 = vmatpush.bf16.msra.mxu0 %v8947
        %9074 = vmatpush.bf16.msra.mxu0 %v8945
        %9075 = vmatmul.bf16.gmra.mxu0 %v6589
        %v9076 = vpop.f32.mrf.mxu0
        %v9077 = vadd.f32 %v9064, %v9076
        %v9078 = vpop.f32.mrf.mxu0
        %9079 = vdwg.mxu0
        %9080 = vmatpush.bf16.msra.mxu0 %v8975
        %9081 = vmatpush.bf16.msra.mxu0 %v8973
        %9082 = vmatpush.bf16.msra.mxu0 %v8971
        %9083 = vmatpush.bf16.msra.mxu0 %v8969
        %9084 = vmatpush.bf16.msra.mxu0 %v8967
        %9085 = vmatpush.bf16.msra.mxu0 %v8965
        %9086 = vmatpush.bf16.msra.mxu0 %v8963
        %9087 = vmatpush.bf16.msra.mxu0 %v8961
        %9088 = vmatmul.bf16.gmra.mxu0 %v6590
        %v9089 = vpop.f32.mrf.mxu0
        %v9090 = vadd.f32 %v9077, %v9089
        %v9091 = vpop.f32.mrf.mxu0
        %9092 = vdwg.mxu0
        %9093 = vmatpush.bf16.msra.mxu0 %v8928
        %9094 = vmatpush.bf16.msra.mxu0 %v8926
        %9095 = vmatpush.bf16.msra.mxu0 %v8924
        %9096 = vmatpush.bf16.msra.mxu0 %v8922
        %9097 = vmatpush.bf16.msra.mxu0 %v8920
        %9098 = vmatpush.bf16.msra.mxu0 %v8918
        %9099 = vmatpush.bf16.msra.mxu0 %v8916
        %9100 = vmatpush.bf16.msra.mxu0 %v8914
        %9101 = vmatmul.bf16.gmra.mxu0 %v6587
        %v9102 = vpop.f32.mrf.mxu0
        %v9103 = vadd.f32 %v7028, %v9102
        %v9104 = vpop.f32.mrf.mxu0
        %9105 = vdwg.mxu0
        %9106 = vmatpush.bf16.msra.mxu0 %v8944
        %9107 = vmatpush.bf16.msra.mxu0 %v8942
        %9108 = vmatpush.bf16.msra.mxu0 %v8940
        %9109 = vmatpush.bf16.msra.mxu0 %v8938
        %9110 = vmatpush.bf16.msra.mxu0 %v8936
        %9111 = vmatpush.bf16.msra.mxu0 %v8934
        %9112 = vmatpush.bf16.msra.mxu0 %v8932
        %9113 = vmatpush.bf16.msra.mxu0 %v8930
        %9114 = vmatmul.bf16.gmra.mxu0 %v6588
        %v9115 = vpop.f32.mrf.mxu0
        %v9116 = vadd.f32 %v9103, %v9115
        %v9117 = vpop.f32.mrf.mxu0
        %9118 = vdwg.mxu0
        %9119 = vmatpush.bf16.msra.mxu0 %v8960
        %9120 = vmatpush.bf16.msra.mxu0 %v8958
        %9121 = vmatpush.bf16.msra.mxu0 %v8956
        %9122 = vmatpush.bf16.msra.mxu0 %v8954
        %9123 = vmatpush.bf16.msra.mxu0 %v8952
        %9124 = vmatpush.bf16.msra.mxu0 %v8950
        %9125 = vmatpush.bf16.msra.mxu0 %v8948
        %9126 = vmatpush.bf16.msra.mxu0 %v8946
        %9127 = vmatmul.bf16.gmra.mxu0 %v6589
        %v9128 = vpop.f32.mrf.mxu0
        %v9129 = vadd.f32 %v9116, %v9128
        %v9130 = vpop.f32.mrf.mxu0
        %9131 = vdwg.mxu0
        %9132 = vmatpush.bf16.msra.mxu0 %v8976
        %9133 = vmatpush.bf16.msra.mxu0 %v8974
        %9134 = vmatpush.bf16.msra.mxu0 %v8972
        %9135 = vmatpush.bf16.msra.mxu0 %v8970
        %9136 = vmatpush.bf16.msra.mxu0 %v8968
        %9137 = vmatpush.bf16.msra.mxu0 %v8966
        %9138 = vmatpush.bf16.msra.mxu0 %v8964
        %9139 = vmatpush.bf16.msra.mxu0 %v8962
        %9140 = vmatmul.bf16.gmra.mxu0 %v6590
        %v9141 = vpop.f32.mrf.mxu0
        %v9142 = vadd.f32 %v9129, %v9141
        %v9143 = vpop.f32.mrf.mxu0
        %9144 = vdwg.mxu0
        %v9145 = vrot.slane %v6587, 1
        %v9146 = vrot.slane %v6588, 1
        %v9147 = vrot.slane %v6589, 1
        %v9148 = vrot.slane %v6590, 1
        %v9217 = vunpack.c.l.b16 %v7032
        %v9218 = vunpack.c.h.b16 %v7032
        %v9219 = vunpack.c.l.b16 %v7033
        %v9220 = vunpack.c.h.b16 %v7033
        %v9221 = vunpack.c.l.b16 %v7034
        %v9222 = vunpack.c.h.b16 %v7034
        %v9223 = vunpack.c.l.b16 %v7035
        %v9224 = vunpack.c.h.b16 %v7035
        %v9225 = vunpack.c.l.b16 %v7036
        %v9226 = vunpack.c.h.b16 %v7036
        %v9227 = vunpack.c.l.b16 %v7037
        %v9228 = vunpack.c.h.b16 %v7037
        %v9229 = vunpack.c.l.b16 %v7038
        %v9230 = vunpack.c.h.b16 %v7038
        %v9231 = vunpack.c.l.b16 %v7039
        %v9232 = vunpack.c.h.b16 %v7039
        %v9233 = vunpack.c.l.b16 %v7040
        %v9234 = vunpack.c.h.b16 %v7040
        %v9235 = vunpack.c.l.b16 %v7041
        %v9236 = vunpack.c.h.b16 %v7041
        %v9237 = vunpack.c.l.b16 %v7042
        %v9238 = vunpack.c.h.b16 %v7042
        %v9239 = vunpack.c.l.b16 %v7043
        %v9240 = vunpack.c.h.b16 %v7043
        %v9241 = vunpack.c.l.b16 %v7044
        %v9242 = vunpack.c.h.b16 %v7044
        %v9243 = vunpack.c.l.b16 %v7045
        %v9244 = vunpack.c.h.b16 %v7045
        %v9245 = vunpack.c.l.b16 %v7046
        %v9246 = vunpack.c.h.b16 %v7046
        %v9247 = vunpack.c.l.b16 %v7047
        %v9248 = vunpack.c.h.b16 %v7047
        %v9249 = vunpack.c.l.b16 %v7048
        %v9250 = vunpack.c.h.b16 %v7048
        %v9251 = vunpack.c.l.b16 %v7049
        %v9252 = vunpack.c.h.b16 %v7049
        %v9253 = vunpack.c.l.b16 %v7050
        %v9254 = vunpack.c.h.b16 %v7050
        %v9255 = vunpack.c.l.b16 %v7051
        %v9256 = vunpack.c.h.b16 %v7051
        %v9257 = vunpack.c.l.b16 %v7052
        %v9258 = vunpack.c.h.b16 %v7052
        %v9259 = vunpack.c.l.b16 %v7053
        %v9260 = vunpack.c.h.b16 %v7053
        %v9261 = vunpack.c.l.b16 %v7054
        %v9262 = vunpack.c.h.b16 %v7054
        %v9263 = vunpack.c.l.b16 %v7055
        %v9264 = vunpack.c.h.b16 %v7055
        %v9265 = vunpack.c.l.b16 %v7056
        %v9266 = vunpack.c.h.b16 %v7056
        %v9267 = vunpack.c.l.b16 %v7057
        %v9268 = vunpack.c.h.b16 %v7057
        %v9269 = vunpack.c.l.b16 %v7058
        %v9270 = vunpack.c.h.b16 %v7058
        %v9271 = vunpack.c.l.b16 %v7059
        %v9272 = vunpack.c.h.b16 %v7059
        %v9273 = vunpack.c.l.b16 %v7060
        %v9274 = vunpack.c.h.b16 %v7060
        %v9275 = vunpack.c.l.b16 %v7061
        %v9276 = vunpack.c.h.b16 %v7061
        %v9277 = vunpack.c.l.b16 %v7062
        %v9278 = vunpack.c.h.b16 %v7062
        %v9279 = vunpack.c.l.b16 %v7063
        %v9280 = vunpack.c.h.b16 %v7063
        %v9281 = vunpack.c.l.b16 %v7064
        %v9282 = vunpack.c.h.b16 %v7064
        %v9283 = vunpack.c.l.b16 %v7065
        %v9284 = vunpack.c.h.b16 %v7065
        %v9285 = vunpack.c.l.b16 %v7066
        %v9286 = vunpack.c.h.b16 %v7066
        %v9287 = vunpack.c.l.b16 %v7067
        %v9288 = vunpack.c.h.b16 %v7067
        %v9289 = vunpack.c.l.b16 %v7068
        %v9290 = vunpack.c.h.b16 %v7068
        %v9291 = vunpack.c.l.b16 %v7069
        %v9292 = vunpack.c.h.b16 %v7069
        %v9293 = vunpack.c.l.b16 %v7070
        %v9294 = vunpack.c.h.b16 %v7070
        %v9295 = vunpack.c.l.b16 %v7071
        %v9296 = vunpack.c.h.b16 %v7071
        %v9297 = vunpack.c.l.b16 %v7072
        %v9298 = vunpack.c.h.b16 %v7072
        %v9299 = vunpack.c.l.b16 %v7073
        %v9300 = vunpack.c.h.b16 %v7073
        %v9301 = vunpack.c.l.b16 %v7074
        %v9302 = vunpack.c.h.b16 %v7074
        %v9303 = vunpack.c.l.b16 %v7075
        %v9304 = vunpack.c.h.b16 %v7075
        %v9305 = vunpack.c.l.b16 %v7076
        %v9306 = vunpack.c.h.b16 %v7076
        %v9307 = vunpack.c.l.b16 %v7077
        %v9308 = vunpack.c.h.b16 %v7077
        %v9309 = vunpack.c.l.b16 %v7078
        %v9310 = vunpack.c.h.b16 %v7078
        %v9311 = vunpack.c.l.b16 %v7079
        %v9312 = vunpack.c.h.b16 %v7079
        %v9313 = vunpack.c.l.b16 %v7080
        %v9314 = vunpack.c.h.b16 %v7080
        %v9315 = vunpack.c.l.b16 %v7081
        %v9316 = vunpack.c.h.b16 %v7081
        %v9317 = vunpack.c.l.b16 %v7082
        %v9318 = vunpack.c.h.b16 %v7082
        %v9319 = vunpack.c.l.b16 %v7083
        %v9320 = vunpack.c.h.b16 %v7083
        %v9321 = vunpack.c.l.b16 %v7084
        %v9322 = vunpack.c.h.b16 %v7084
        %v9323 = vunpack.c.l.b16 %v7085
        %v9324 = vunpack.c.h.b16 %v7085
        %v9325 = vunpack.c.l.b16 %v7086
        %v9326 = vunpack.c.h.b16 %v7086
        %v9327 = vunpack.c.l.b16 %v7087
        %v9328 = vunpack.c.h.b16 %v7087
        %v9329 = vunpack.c.l.b16 %v7088
        %v9330 = vunpack.c.h.b16 %v7088
        %v9331 = vunpack.c.l.b16 %v7089
        %v9332 = vunpack.c.h.b16 %v7089
        %v9333 = vunpack.c.l.b16 %v7090
        %v9334 = vunpack.c.h.b16 %v7090
        %v9335 = vunpack.c.l.b16 %v7091
        %v9336 = vunpack.c.h.b16 %v7091
        %v9337 = vunpack.c.l.b16 %v7092
        %v9338 = vunpack.c.h.b16 %v7092
        %v9339 = vunpack.c.l.b16 %v7093
        %v9340 = vunpack.c.h.b16 %v7093
        %v9341 = vunpack.c.l.b16 %v7094
        %v9342 = vunpack.c.h.b16 %v7094
        %v9343 = vunpack.c.l.b16 %v7095
        %v9344 = vunpack.c.h.b16 %v7095
        %v9345 = vpack.c.b16 %v9219, %v9217
        %v9346 = vpack.c.b16 %v9220, %v9218
        %v9347 = vpack.c.b16 %v9223, %v9221
        %v9348 = vpack.c.b16 %v9224, %v9222
        %v9349 = vpack.c.b16 %v9227, %v9225
        %v9350 = vpack.c.b16 %v9228, %v9226
        %v9351 = vpack.c.b16 %v9231, %v9229
        %v9352 = vpack.c.b16 %v9232, %v9230
        %v9353 = vpack.c.b16 %v9235, %v9233
        %v9354 = vpack.c.b16 %v9236, %v9234
        %v9355 = vpack.c.b16 %v9239, %v9237
        %v9356 = vpack.c.b16 %v9240, %v9238
        %v9357 = vpack.c.b16 %v9243, %v9241
        %v9358 = vpack.c.b16 %v9244, %v9242
        %v9359 = vpack.c.b16 %v9247, %v9245
        %v9360 = vpack.c.b16 %v9248, %v9246
        %v9361 = vpack.c.b16 %v9251, %v9249
        %v9362 = vpack.c.b16 %v9252, %v9250
        %v9363 = vpack.c.b16 %v9255, %v9253
        %v9364 = vpack.c.b16 %v9256, %v9254
        %v9365 = vpack.c.b16 %v9259, %v9257
        %v9366 = vpack.c.b16 %v9260, %v9258
        %v9367 = vpack.c.b16 %v9263, %v9261
        %v9368 = vpack.c.b16 %v9264, %v9262
        %v9369 = vpack.c.b16 %v9267, %v9265
        %v9370 = vpack.c.b16 %v9268, %v9266
        %v9371 = vpack.c.b16 %v9271, %v9269
        %v9372 = vpack.c.b16 %v9272, %v9270
        %v9373 = vpack.c.b16 %v9275, %v9273
        %v9374 = vpack.c.b16 %v9276, %v9274
        %v9375 = vpack.c.b16 %v9279, %v9277
        %v9376 = vpack.c.b16 %v9280, %v9278
        %v9377 = vpack.c.b16 %v9283, %v9281
        %v9378 = vpack.c.b16 %v9284, %v9282
        %v9379 = vpack.c.b16 %v9287, %v9285
        %v9380 = vpack.c.b16 %v9288, %v9286
        %v9381 = vpack.c.b16 %v9291, %v9289
        %v9382 = vpack.c.b16 %v9292, %v9290
        %v9383 = vpack.c.b16 %v9295, %v9293
        %v9384 = vpack.c.b16 %v9296, %v9294
        %v9385 = vpack.c.b16 %v9299, %v9297
        %v9386 = vpack.c.b16 %v9300, %v9298
        %v9387 = vpack.c.b16 %v9303, %v9301
        %v9388 = vpack.c.b16 %v9304, %v9302
        %v9389 = vpack.c.b16 %v9307, %v9305
        %v9390 = vpack.c.b16 %v9308, %v9306
        %v9391 = vpack.c.b16 %v9311, %v9309
        %v9392 = vpack.c.b16 %v9312, %v9310
        %v9393 = vpack.c.b16 %v9315, %v9313
        %v9394 = vpack.c.b16 %v9316, %v9314
        %v9395 = vpack.c.b16 %v9319, %v9317
        %v9396 = vpack.c.b16 %v9320, %v9318
        %v9397 = vpack.c.b16 %v9323, %v9321
        %v9398 = vpack.c.b16 %v9324, %v9322
        %v9399 = vpack.c.b16 %v9327, %v9325
        %v9400 = vpack.c.b16 %v9328, %v9326
        %v9401 = vpack.c.b16 %v9331, %v9329
        %v9402 = vpack.c.b16 %v9332, %v9330
        %v9403 = vpack.c.b16 %v9335, %v9333
        %v9404 = vpack.c.b16 %v9336, %v9334
        %v9405 = vpack.c.b16 %v9339, %v9337
        %v9406 = vpack.c.b16 %v9340, %v9338
        %v9407 = vpack.c.b16 %v9343, %v9341
        %v9408 = vpack.c.b16 %v9344, %v9342
        %9473 = vmatpush.bf16.msra.mxu0 %v9359
        %9474 = vmatpush.bf16.msra.mxu0 %v9357
        %9475 = vmatpush.bf16.msra.mxu0 %v9355
        %9476 = vmatpush.bf16.msra.mxu0 %v9353
        %9477 = vmatpush.bf16.msra.mxu0 %v9351
        %9478 = vmatpush.bf16.msra.mxu0 %v9349
        %9479 = vmatpush.bf16.msra.mxu0 %v9347
        %9480 = vmatpush.bf16.msra.mxu0 %v9345
        %9481 = vmatmul.bf16.gmra.mxu0 %v9145
        %v9482 = vpop.f32.mrf.mxu0
        %v9483 = vadd.f32 %v7538, %v9482
        %v9484 = vpop.f32.mrf.mxu0
        %9485 = vdwg.mxu0
        %9486 = vmatpush.bf16.msra.mxu0 %v9375
        %9487 = vmatpush.bf16.msra.mxu0 %v9373
        %9488 = vmatpush.bf16.msra.mxu0 %v9371
        %9489 = vmatpush.bf16.msra.mxu0 %v9369
        %9490 = vmatpush.bf16.msra.mxu0 %v9367
        %9491 = vmatpush.bf16.msra.mxu0 %v9365
        %9492 = vmatpush.bf16.msra.mxu0 %v9363
        %9493 = vmatpush.bf16.msra.mxu0 %v9361
        %9494 = vmatmul.bf16.gmra.mxu0 %v9146
        %v9495 = vpop.f32.mrf.mxu0
        %v9496 = vadd.f32 %v9483, %v9495
        %v9497 = vpop.f32.mrf.mxu0
        %9498 = vdwg.mxu0
        %9499 = vmatpush.bf16.msra.mxu0 %v9391
        %9500 = vmatpush.bf16.msra.mxu0 %v9389
        %9501 = vmatpush.bf16.msra.mxu0 %v9387
        %9502 = vmatpush.bf16.msra.mxu0 %v9385
        %9503 = vmatpush.bf16.msra.mxu0 %v9383
        %9504 = vmatpush.bf16.msra.mxu0 %v9381
        %9505 = vmatpush.bf16.msra.mxu0 %v9379
        %9506 = vmatpush.bf16.msra.mxu0 %v9377
        %9507 = vmatmul.bf16.gmra.mxu0 %v9147
        %v9508 = vpop.f32.mrf.mxu0
        %v9509 = vadd.f32 %v9496, %v9508
        %v9510 = vpop.f32.mrf.mxu0
        %9511 = vdwg.mxu0
        %9512 = vmatpush.bf16.msra.mxu0 %v9407
        %9513 = vmatpush.bf16.msra.mxu0 %v9405
        %9514 = vmatpush.bf16.msra.mxu0 %v9403
        %9515 = vmatpush.bf16.msra.mxu0 %v9401
        %9516 = vmatpush.bf16.msra.mxu0 %v9399
        %9517 = vmatpush.bf16.msra.mxu0 %v9397
        %9518 = vmatpush.bf16.msra.mxu0 %v9395
        %9519 = vmatpush.bf16.msra.mxu0 %v9393
        %9520 = vmatmul.bf16.gmra.mxu0 %v9148
        %v9521 = vpop.f32.mrf.mxu0
        %v9522 = vadd.f32 %v9509, %v9521
        %v9523 = vpop.f32.mrf.mxu0
        %9524 = vdwg.mxu0
        %9525 = vmatpush.bf16.msra.mxu0 %v9360
        %9526 = vmatpush.bf16.msra.mxu0 %v9358
        %9527 = vmatpush.bf16.msra.mxu0 %v9356
        %9528 = vmatpush.bf16.msra.mxu0 %v9354
        %9529 = vmatpush.bf16.msra.mxu0 %v9352
        %9530 = vmatpush.bf16.msra.mxu0 %v9350
        %9531 = vmatpush.bf16.msra.mxu0 %v9348
        %9532 = vmatpush.bf16.msra.mxu0 %v9346
        %9533 = vmatmul.bf16.gmra.mxu0 %v9145
        %v9534 = vpop.f32.mrf.mxu0
        %v9535 = vadd.f32 %v7590, %v9534
        %v9536 = vpop.f32.mrf.mxu0
        %9537 = vdwg.mxu0
        %9538 = vmatpush.bf16.msra.mxu0 %v9376
        %9539 = vmatpush.bf16.msra.mxu0 %v9374
        %9540 = vmatpush.bf16.msra.mxu0 %v9372
        %9541 = vmatpush.bf16.msra.mxu0 %v9370
        %9542 = vmatpush.bf16.msra.mxu0 %v9368
        %9543 = vmatpush.bf16.msra.mxu0 %v9366
        %9544 = vmatpush.bf16.msra.mxu0 %v9364
        %9545 = vmatpush.bf16.msra.mxu0 %v9362
        %9546 = vmatmul.bf16.gmra.mxu0 %v9146
        %v9547 = vpop.f32.mrf.mxu0
        %v9548 = vadd.f32 %v9535, %v9547
        %v9549 = vpop.f32.mrf.mxu0
        %9550 = vdwg.mxu0
        %9551 = vmatpush.bf16.msra.mxu0 %v9392
        %9552 = vmatpush.bf16.msra.mxu0 %v9390
        %9553 = vmatpush.bf16.msra.mxu0 %v9388
        %9554 = vmatpush.bf16.msra.mxu0 %v9386
        %9555 = vmatpush.bf16.msra.mxu0 %v9384
        %9556 = vmatpush.bf16.msra.mxu0 %v9382
        %9557 = vmatpush.bf16.msra.mxu0 %v9380
        %9558 = vmatpush.bf16.msra.mxu0 %v9378
        %9559 = vmatmul.bf16.gmra.mxu0 %v9147
        %v9560 = vpop.f32.mrf.mxu0
        %v9561 = vadd.f32 %v9548, %v9560
        %v9562 = vpop.f32.mrf.mxu0
        %9563 = vdwg.mxu0
        %9564 = vmatpush.bf16.msra.mxu0 %v9408
        %9565 = vmatpush.bf16.msra.mxu0 %v9406
        %9566 = vmatpush.bf16.msra.mxu0 %v9404
        %9567 = vmatpush.bf16.msra.mxu0 %v9402
        %9568 = vmatpush.bf16.msra.mxu0 %v9400
        %9569 = vmatpush.bf16.msra.mxu0 %v9398
        %9570 = vmatpush.bf16.msra.mxu0 %v9396
        %9571 = vmatpush.bf16.msra.mxu0 %v9394
        %9572 = vmatmul.bf16.gmra.mxu0 %v9148
        %v9573 = vpop.f32.mrf.mxu0
        %v9574 = vadd.f32 %v9561, %v9573
        %v9575 = vpop.f32.mrf.mxu0
        %9576 = vdwg.mxu0
        %v9577 = vrot.slane %v6587, 2
        %v9578 = vrot.slane %v6588, 2
        %v9579 = vrot.slane %v6589, 2
        %v9580 = vrot.slane %v6590, 2
        %v9649 = vunpack.c.l.b16 %v7594
        %v9650 = vunpack.c.h.b16 %v7594
        %v9651 = vunpack.c.l.b16 %v7595
        %v9652 = vunpack.c.h.b16 %v7595
        %v9653 = vunpack.c.l.b16 %v7596
        %v9654 = vunpack.c.h.b16 %v7596
        %v9655 = vunpack.c.l.b16 %v7597
        %v9656 = vunpack.c.h.b16 %v7597
        %v9657 = vunpack.c.l.b16 %v7598
        %v9658 = vunpack.c.h.b16 %v7598
        %v9659 = vunpack.c.l.b16 %v7599
        %v9660 = vunpack.c.h.b16 %v7599
        %v9661 = vunpack.c.l.b16 %v7600
        %v9662 = vunpack.c.h.b16 %v7600
        %v9663 = vunpack.c.l.b16 %v7601
        %v9664 = vunpack.c.h.b16 %v7601
        %v9665 = vunpack.c.l.b16 %v7602
        %v9666 = vunpack.c.h.b16 %v7602
        %v9667 = vunpack.c.l.b16 %v7603
        %v9668 = vunpack.c.h.b16 %v7603
        %v9669 = vunpack.c.l.b16 %v7604
        %v9670 = vunpack.c.h.b16 %v7604
        %v9671 = vunpack.c.l.b16 %v7605
        %v9672 = vunpack.c.h.b16 %v7605
        %v9673 = vunpack.c.l.b16 %v7606
        %v9674 = vunpack.c.h.b16 %v7606
        %v9675 = vunpack.c.l.b16 %v7607
        %v9676 = vunpack.c.h.b16 %v7607
        %v9677 = vunpack.c.l.b16 %v7608
        %v9678 = vunpack.c.h.b16 %v7608
        %v9679 = vunpack.c.l.b16 %v7609
        %v9680 = vunpack.c.h.b16 %v7609
        %v9681 = vunpack.c.l.b16 %v7610
        %v9682 = vunpack.c.h.b16 %v7610
        %v9683 = vunpack.c.l.b16 %v7611
        %v9684 = vunpack.c.h.b16 %v7611
        %v9685 = vunpack.c.l.b16 %v7612
        %v9686 = vunpack.c.h.b16 %v7612
        %v9687 = vunpack.c.l.b16 %v7613
        %v9688 = vunpack.c.h.b16 %v7613
        %v9689 = vunpack.c.l.b16 %v7614
        %v9690 = vunpack.c.h.b16 %v7614
        %v9691 = vunpack.c.l.b16 %v7615
        %v9692 = vunpack.c.h.b16 %v7615
        %v9693 = vunpack.c.l.b16 %v7616
        %v9694 = vunpack.c.h.b16 %v7616
        %v9695 = vunpack.c.l.b16 %v7617
        %v9696 = vunpack.c.h.b16 %v7617
        %v9697 = vunpack.c.l.b16 %v7618
        %v9698 = vunpack.c.h.b16 %v7618
        %v9699 = vunpack.c.l.b16 %v7619
        %v9700 = vunpack.c.h.b16 %v7619
        %v9701 = vunpack.c.l.b16 %v7620
        %v9702 = vunpack.c.h.b16 %v7620
        %v9703 = vunpack.c.l.b16 %v7621
        %v9704 = vunpack.c.h.b16 %v7621
        %v9705 = vunpack.c.l.b16 %v7622
        %v9706 = vunpack.c.h.b16 %v7622
        %v9707 = vunpack.c.l.b16 %v7623
        %v9708 = vunpack.c.h.b16 %v7623
        %v9709 = vunpack.c.l.b16 %v7624
        %v9710 = vunpack.c.h.b16 %v7624
        %v9711 = vunpack.c.l.b16 %v7625
        %v9712 = vunpack.c.h.b16 %v7625
        %v9713 = vunpack.c.l.b16 %v7626
        %v9714 = vunpack.c.h.b16 %v7626
        %v9715 = vunpack.c.l.b16 %v7627
        %v9716 = vunpack.c.h.b16 %v7627
        %v9717 = vunpack.c.l.b16 %v7628
        %v9718 = vunpack.c.h.b16 %v7628
        %v9719 = vunpack.c.l.b16 %v7629
        %v9720 = vunpack.c.h.b16 %v7629
        %v9721 = vunpack.c.l.b16 %v7630
        %v9722 = vunpack.c.h.b16 %v7630
        %v9723 = vunpack.c.l.b16 %v7631
        %v9724 = vunpack.c.h.b16 %v7631
        %v9725 = vunpack.c.l.b16 %v7632
        %v9726 = vunpack.c.h.b16 %v7632
        %v9727 = vunpack.c.l.b16 %v7633
        %v9728 = vunpack.c.h.b16 %v7633
        %v9729 = vunpack.c.l.b16 %v7634
        %v9730 = vunpack.c.h.b16 %v7634
        %v9731 = vunpack.c.l.b16 %v7635
        %v9732 = vunpack.c.h.b16 %v7635
        %v9733 = vunpack.c.l.b16 %v7636
        %v9734 = vunpack.c.h.b16 %v7636
        %v9735 = vunpack.c.l.b16 %v7637
        %v9736 = vunpack.c.h.b16 %v7637
        %v9737 = vunpack.c.l.b16 %v7638
        %v9738 = vunpack.c.h.b16 %v7638
        %v9739 = vunpack.c.l.b16 %v7639
        %v9740 = vunpack.c.h.b16 %v7639
        %v9741 = vunpack.c.l.b16 %v7640
        %v9742 = vunpack.c.h.b16 %v7640
        %v9743 = vunpack.c.l.b16 %v7641
        %v9744 = vunpack.c.h.b16 %v7641
        %v9745 = vunpack.c.l.b16 %v7642
        %v9746 = vunpack.c.h.b16 %v7642
        %v9747 = vunpack.c.l.b16 %v7643
        %v9748 = vunpack.c.h.b16 %v7643
        %v9749 = vunpack.c.l.b16 %v7644
        %v9750 = vunpack.c.h.b16 %v7644
        %v9751 = vunpack.c.l.b16 %v7645
        %v9752 = vunpack.c.h.b16 %v7645
        %v9753 = vunpack.c.l.b16 %v7646
        %v9754 = vunpack.c.h.b16 %v7646
        %v9755 = vunpack.c.l.b16 %v7647
        %v9756 = vunpack.c.h.b16 %v7647
        %v9757 = vunpack.c.l.b16 %v7648
        %v9758 = vunpack.c.h.b16 %v7648
        %v9759 = vunpack.c.l.b16 %v7649
        %v9760 = vunpack.c.h.b16 %v7649
        %v9761 = vunpack.c.l.b16 %v7650
        %v9762 = vunpack.c.h.b16 %v7650
        %v9763 = vunpack.c.l.b16 %v7651
        %v9764 = vunpack.c.h.b16 %v7651
        %v9765 = vunpack.c.l.b16 %v7652
        %v9766 = vunpack.c.h.b16 %v7652
        %v9767 = vunpack.c.l.b16 %v7653
        %v9768 = vunpack.c.h.b16 %v7653
        %v9769 = vunpack.c.l.b16 %v7654
        %v9770 = vunpack.c.h.b16 %v7654
        %v9771 = vunpack.c.l.b16 %v7655
        %v9772 = vunpack.c.h.b16 %v7655
        %v9773 = vunpack.c.l.b16 %v7656
        %v9774 = vunpack.c.h.b16 %v7656
        %v9775 = vunpack.c.l.b16 %v7657
        %v9776 = vunpack.c.h.b16 %v7657
        %v9777 = vpack.c.b16 %v9651, %v9649
        %v9778 = vpack.c.b16 %v9652, %v9650
        %v9779 = vpack.c.b16 %v9655, %v9653
        %v9780 = vpack.c.b16 %v9656, %v9654
        %v9781 = vpack.c.b16 %v9659, %v9657
        %v9782 = vpack.c.b16 %v9660, %v9658
        %v9783 = vpack.c.b16 %v9663, %v9661
        %v9784 = vpack.c.b16 %v9664, %v9662
        %v9785 = vpack.c.b16 %v9667, %v9665
        %v9786 = vpack.c.b16 %v9668, %v9666
        %v9787 = vpack.c.b16 %v9671, %v9669
        %v9788 = vpack.c.b16 %v9672, %v9670
        %v9789 = vpack.c.b16 %v9675, %v9673
        %v9790 = vpack.c.b16 %v9676, %v9674
        %v9791 = vpack.c.b16 %v9679, %v9677
        %v9792 = vpack.c.b16 %v9680, %v9678
        %v9793 = vpack.c.b16 %v9683, %v9681
        %v9794 = vpack.c.b16 %v9684, %v9682
        %v9795 = vpack.c.b16 %v9687, %v9685
        %v9796 = vpack.c.b16 %v9688, %v9686
        %v9797 = vpack.c.b16 %v9691, %v9689
        %v9798 = vpack.c.b16 %v9692, %v9690
        %v9799 = vpack.c.b16 %v9695, %v9693
        %v9800 = vpack.c.b16 %v9696, %v9694
        %v9801 = vpack.c.b16 %v9699, %v9697
        %v9802 = vpack.c.b16 %v9700, %v9698
        %v9803 = vpack.c.b16 %v9703, %v9701
        %v9804 = vpack.c.b16 %v9704, %v9702
        %v9805 = vpack.c.b16 %v9707, %v9705
        %v9806 = vpack.c.b16 %v9708, %v9706
        %v9807 = vpack.c.b16 %v9711, %v9709
        %v9808 = vpack.c.b16 %v9712, %v9710
        %v9809 = vpack.c.b16 %v9715, %v9713
        %v9810 = vpack.c.b16 %v9716, %v9714
        %v9811 = vpack.c.b16 %v9719, %v9717
        %v9812 = vpack.c.b16 %v9720, %v9718
        %v9813 = vpack.c.b16 %v9723, %v9721
        %v9814 = vpack.c.b16 %v9724, %v9722
        %v9815 = vpack.c.b16 %v9727, %v9725
        %v9816 = vpack.c.b16 %v9728, %v9726
        %v9817 = vpack.c.b16 %v9731, %v9729
        %v9818 = vpack.c.b16 %v9732, %v9730
        %v9819 = vpack.c.b16 %v9735, %v9733
        %v9820 = vpack.c.b16 %v9736, %v9734
        %v9821 = vpack.c.b16 %v9739, %v9737
        %v9822 = vpack.c.b16 %v9740, %v9738
        %v9823 = vpack.c.b16 %v9743, %v9741
        %v9824 = vpack.c.b16 %v9744, %v9742
        %v9825 = vpack.c.b16 %v9747, %v9745
        %v9826 = vpack.c.b16 %v9748, %v9746
        %v9827 = vpack.c.b16 %v9751, %v9749
        %v9828 = vpack.c.b16 %v9752, %v9750
        %v9829 = vpack.c.b16 %v9755, %v9753
        %v9830 = vpack.c.b16 %v9756, %v9754
        %v9831 = vpack.c.b16 %v9759, %v9757
        %v9832 = vpack.c.b16 %v9760, %v9758
        %v9833 = vpack.c.b16 %v9763, %v9761
        %v9834 = vpack.c.b16 %v9764, %v9762
        %v9835 = vpack.c.b16 %v9767, %v9765
        %v9836 = vpack.c.b16 %v9768, %v9766
        %v9837 = vpack.c.b16 %v9771, %v9769
        %v9838 = vpack.c.b16 %v9772, %v9770
        %v9839 = vpack.c.b16 %v9775, %v9773
        %v9840 = vpack.c.b16 %v9776, %v9774
        %9905 = vmatpush.bf16.msra.mxu0 %v9791
        %9906 = vmatpush.bf16.msra.mxu0 %v9789
        %9907 = vmatpush.bf16.msra.mxu0 %v9787
        %9908 = vmatpush.bf16.msra.mxu0 %v9785
        %9909 = vmatpush.bf16.msra.mxu0 %v9783
        %9910 = vmatpush.bf16.msra.mxu0 %v9781
        %9911 = vmatpush.bf16.msra.mxu0 %v9779
        %9912 = vmatpush.bf16.msra.mxu0 %v9777
        %9913 = vmatmul.bf16.gmra.mxu0 %v9577
        %v9914 = vpop.f32.mrf.mxu0
        %v9915 = vadd.f32 %v8100, %v9914
        %v9916 = vpop.f32.mrf.mxu0
        %9917 = vdwg.mxu0
        %9918 = vmatpush.bf16.msra.mxu0 %v9807
        %9919 = vmatpush.bf16.msra.mxu0 %v9805
        %9920 = vmatpush.bf16.msra.mxu0 %v9803
        %9921 = vmatpush.bf16.msra.mxu0 %v9801
        %9922 = vmatpush.bf16.msra.mxu0 %v9799
        %9923 = vmatpush.bf16.msra.mxu0 %v9797
        %9924 = vmatpush.bf16.msra.mxu0 %v9795
        %9925 = vmatpush.bf16.msra.mxu0 %v9793
        %9926 = vmatmul.bf16.gmra.mxu0 %v9578
        %v9927 = vpop.f32.mrf.mxu0
        %v9928 = vadd.f32 %v9915, %v9927
        %v9929 = vpop.f32.mrf.mxu0
        %9930 = vdwg.mxu0
        %9931 = vmatpush.bf16.msra.mxu0 %v9823
        %9932 = vmatpush.bf16.msra.mxu0 %v9821
        %9933 = vmatpush.bf16.msra.mxu0 %v9819
        %9934 = vmatpush.bf16.msra.mxu0 %v9817
        %9935 = vmatpush.bf16.msra.mxu0 %v9815
        %9936 = vmatpush.bf16.msra.mxu0 %v9813
        %9937 = vmatpush.bf16.msra.mxu0 %v9811
        %9938 = vmatpush.bf16.msra.mxu0 %v9809
        %9939 = vmatmul.bf16.gmra.mxu0 %v9579
        %v9940 = vpop.f32.mrf.mxu0
        %v9941 = vadd.f32 %v9928, %v9940
        %v9942 = vpop.f32.mrf.mxu0
        %9943 = vdwg.mxu0
        %9944 = vmatpush.bf16.msra.mxu0 %v9839
        %9945 = vmatpush.bf16.msra.mxu0 %v9837
        %9946 = vmatpush.bf16.msra.mxu0 %v9835
        %9947 = vmatpush.bf16.msra.mxu0 %v9833
        %9948 = vmatpush.bf16.msra.mxu0 %v9831
        %9949 = vmatpush.bf16.msra.mxu0 %v9829
        %9950 = vmatpush.bf16.msra.mxu0 %v9827
        %9951 = vmatpush.bf16.msra.mxu0 %v9825
        %9952 = vmatmul.bf16.gmra.mxu0 %v9580
        %v9953 = vpop.f32.mrf.mxu0
        %v9954 = vadd.f32 %v9941, %v9953
        %v9955 = vpop.f32.mrf.mxu0
        %9956 = vdwg.mxu0
        %9957 = vmatpush.bf16.msra.mxu0 %v9792
        %9958 = vmatpush.bf16.msra.mxu0 %v9790
        %9959 = vmatpush.bf16.msra.mxu0 %v9788
        %9960 = vmatpush.bf16.msra.mxu0 %v9786
        %9961 = vmatpush.bf16.msra.mxu0 %v9784
        %9962 = vmatpush.bf16.msra.mxu0 %v9782
        %9963 = vmatpush.bf16.msra.mxu0 %v9780
        %9964 = vmatpush.bf16.msra.mxu0 %v9778
        %9965 = vmatmul.bf16.gmra.mxu0 %v9577
        %v9966 = vpop.f32.mrf.mxu0
        %v9967 = vadd.f32 %v8152, %v9966
        %v9968 = vpop.f32.mrf.mxu0
        %9969 = vdwg.mxu0
        %9970 = vmatpush.bf16.msra.mxu0 %v9808
        %9971 = vmatpush.bf16.msra.mxu0 %v9806
        %9972 = vmatpush.bf16.msra.mxu0 %v9804
        %9973 = vmatpush.bf16.msra.mxu0 %v9802
        %9974 = vmatpush.bf16.msra.mxu0 %v9800
        %9975 = vmatpush.bf16.msra.mxu0 %v9798
        %9976 = vmatpush.bf16.msra.mxu0 %v9796
        %9977 = vmatpush.bf16.msra.mxu0 %v9794
        %9978 = vmatmul.bf16.gmra.mxu0 %v9578
        %v9979 = vpop.f32.mrf.mxu0
        %v9980 = vadd.f32 %v9967, %v9979
        %v9981 = vpop.f32.mrf.mxu0
        %9982 = vdwg.mxu0
        %9983 = vmatpush.bf16.msra.mxu0 %v9824
        %9984 = vmatpush.bf16.msra.mxu0 %v9822
        %9985 = vmatpush.bf16.msra.mxu0 %v9820
        %9986 = vmatpush.bf16.msra.mxu0 %v9818
        %9987 = vmatpush.bf16.msra.mxu0 %v9816
        %9988 = vmatpush.bf16.msra.mxu0 %v9814
        %9989 = vmatpush.bf16.msra.mxu0 %v9812
        %9990 = vmatpush.bf16.msra.mxu0 %v9810
        %9991 = vmatmul.bf16.gmra.mxu0 %v9579
        %v9992 = vpop.f32.mrf.mxu0
        %v9993 = vadd.f32 %v9980, %v9992
        %v9994 = vpop.f32.mrf.mxu0
        %9995 = vdwg.mxu0
        %9996 = vmatpush.bf16.msra.mxu0 %v9840
        %9997 = vmatpush.bf16.msra.mxu0 %v9838
        %9998 = vmatpush.bf16.msra.mxu0 %v9836
        %9999 = vmatpush.bf16.msra.mxu0 %v9834
        %10000 = vmatpush.bf16.msra.mxu0 %v9832
        %10001 = vmatpush.bf16.msra.mxu0 %v9830
        %10002 = vmatpush.bf16.msra.mxu0 %v9828
        %10003 = vmatpush.bf16.msra.mxu0 %v9826
        %10004 = vmatmul.bf16.gmra.mxu0 %v9580
        %v10005 = vpop.f32.mrf.mxu0
        %v10006 = vadd.f32 %v9993, %v10005
        %v10007 = vpop.f32.mrf.mxu0
        %10008 = vdwg.mxu0
        %v10009 = vrot.slane %v6587, 3
        %v10010 = vrot.slane %v6588, 3
        %v10011 = vrot.slane %v6589, 3
        %v10012 = vrot.slane %v6590, 3
        %v10081 = vunpack.c.l.b16 %v8156
        %v10082 = vunpack.c.h.b16 %v8156
        %v10083 = vunpack.c.l.b16 %v8157
        %v10084 = vunpack.c.h.b16 %v8157
        %v10085 = vunpack.c.l.b16 %v8158
        %v10086 = vunpack.c.h.b16 %v8158
        %v10087 = vunpack.c.l.b16 %v8159
        %v10088 = vunpack.c.h.b16 %v8159
        %v10089 = vunpack.c.l.b16 %v8160
        %v10090 = vunpack.c.h.b16 %v8160
        %v10091 = vunpack.c.l.b16 %v8161
        %v10092 = vunpack.c.h.b16 %v8161
        %v10093 = vunpack.c.l.b16 %v8162
        %v10094 = vunpack.c.h.b16 %v8162
        %v10095 = vunpack.c.l.b16 %v8163
        %v10096 = vunpack.c.h.b16 %v8163
        %v10097 = vunpack.c.l.b16 %v8164
        %v10098 = vunpack.c.h.b16 %v8164
        %v10099 = vunpack.c.l.b16 %v8165
        %v10100 = vunpack.c.h.b16 %v8165
        %v10101 = vunpack.c.l.b16 %v8166
        %v10102 = vunpack.c.h.b16 %v8166
        %v10103 = vunpack.c.l.b16 %v8167
        %v10104 = vunpack.c.h.b16 %v8167
        %v10105 = vunpack.c.l.b16 %v8168
        %v10106 = vunpack.c.h.b16 %v8168
        %v10107 = vunpack.c.l.b16 %v8169
        %v10108 = vunpack.c.h.b16 %v8169
        %v10109 = vunpack.c.l.b16 %v8170
        %v10110 = vunpack.c.h.b16 %v8170
        %v10111 = vunpack.c.l.b16 %v8171
        %v10112 = vunpack.c.h.b16 %v8171
        %v10113 = vunpack.c.l.b16 %v8172
        %v10114 = vunpack.c.h.b16 %v8172
        %v10115 = vunpack.c.l.b16 %v8173
        %v10116 = vunpack.c.h.b16 %v8173
        %v10117 = vunpack.c.l.b16 %v8174
        %v10118 = vunpack.c.h.b16 %v8174
        %v10119 = vunpack.c.l.b16 %v8175
        %v10120 = vunpack.c.h.b16 %v8175
        %v10121 = vunpack.c.l.b16 %v8176
        %v10122 = vunpack.c.h.b16 %v8176
        %v10123 = vunpack.c.l.b16 %v8177
        %v10124 = vunpack.c.h.b16 %v8177
        %v10125 = vunpack.c.l.b16 %v8178
        %v10126 = vunpack.c.h.b16 %v8178
        %v10127 = vunpack.c.l.b16 %v8179
        %v10128 = vunpack.c.h.b16 %v8179
        %v10129 = vunpack.c.l.b16 %v8180
        %v10130 = vunpack.c.h.b16 %v8180
        %v10131 = vunpack.c.l.b16 %v8181
        %v10132 = vunpack.c.h.b16 %v8181
        %v10133 = vunpack.c.l.b16 %v8182
        %v10134 = vunpack.c.h.b16 %v8182
        %v10135 = vunpack.c.l.b16 %v8183
        %v10136 = vunpack.c.h.b16 %v8183
        %v10137 = vunpack.c.l.b16 %v8184
        %v10138 = vunpack.c.h.b16 %v8184
        %v10139 = vunpack.c.l.b16 %v8185
        %v10140 = vunpack.c.h.b16 %v8185
        %v10141 = vunpack.c.l.b16 %v8186
        %v10142 = vunpack.c.h.b16 %v8186
        %v10143 = vunpack.c.l.b16 %v8187
        %v10144 = vunpack.c.h.b16 %v8187
        %v10145 = vunpack.c.l.b16 %v8188
        %v10146 = vunpack.c.h.b16 %v8188
        %v10147 = vunpack.c.l.b16 %v8189
        %v10148 = vunpack.c.h.b16 %v8189
        %v10149 = vunpack.c.l.b16 %v8190
        %v10150 = vunpack.c.h.b16 %v8190
        %v10151 = vunpack.c.l.b16 %v8191
        %v10152 = vunpack.c.h.b16 %v8191
        %v10153 = vunpack.c.l.b16 %v8192
        %v10154 = vunpack.c.h.b16 %v8192
        %v10155 = vunpack.c.l.b16 %v8193
        %v10156 = vunpack.c.h.b16 %v8193
        %v10157 = vunpack.c.l.b16 %v8194
        %v10158 = vunpack.c.h.b16 %v8194
        %v10159 = vunpack.c.l.b16 %v8195
        %v10160 = vunpack.c.h.b16 %v8195
        %v10161 = vunpack.c.l.b16 %v8196
        %v10162 = vunpack.c.h.b16 %v8196
        %v10163 = vunpack.c.l.b16 %v8197
        %v10164 = vunpack.c.h.b16 %v8197
        %v10165 = vunpack.c.l.b16 %v8198
        %v10166 = vunpack.c.h.b16 %v8198
        %v10167 = vunpack.c.l.b16 %v8199
        %v10168 = vunpack.c.h.b16 %v8199
        %v10169 = vunpack.c.l.b16 %v8200
        %v10170 = vunpack.c.h.b16 %v8200
        %v10171 = vunpack.c.l.b16 %v8201
        %v10172 = vunpack.c.h.b16 %v8201
        %v10173 = vunpack.c.l.b16 %v8202
        %v10174 = vunpack.c.h.b16 %v8202
        %v10175 = vunpack.c.l.b16 %v8203
        %v10176 = vunpack.c.h.b16 %v8203
        %v10177 = vunpack.c.l.b16 %v8204
        %v10178 = vunpack.c.h.b16 %v8204
        %v10179 = vunpack.c.l.b16 %v8205
        %v10180 = vunpack.c.h.b16 %v8205
        %v10181 = vunpack.c.l.b16 %v8206
        %v10182 = vunpack.c.h.b16 %v8206
        %v10183 = vunpack.c.l.b16 %v8207
        %v10184 = vunpack.c.h.b16 %v8207
        %v10185 = vunpack.c.l.b16 %v8208
        %v10186 = vunpack.c.h.b16 %v8208
        %v10187 = vunpack.c.l.b16 %v8209
        %v10188 = vunpack.c.h.b16 %v8209
        %v10189 = vunpack.c.l.b16 %v8210
        %v10190 = vunpack.c.h.b16 %v8210
        %v10191 = vunpack.c.l.b16 %v8211
        %v10192 = vunpack.c.h.b16 %v8211
        %v10193 = vunpack.c.l.b16 %v8212
        %v10194 = vunpack.c.h.b16 %v8212
        %v10195 = vunpack.c.l.b16 %v8213
        %v10196 = vunpack.c.h.b16 %v8213
        %v10197 = vunpack.c.l.b16 %v8214
        %v10198 = vunpack.c.h.b16 %v8214
        %v10199 = vunpack.c.l.b16 %v8215
        %v10200 = vunpack.c.h.b16 %v8215
        %v10201 = vunpack.c.l.b16 %v8216
        %v10202 = vunpack.c.h.b16 %v8216
        %v10203 = vunpack.c.l.b16 %v8217
        %v10204 = vunpack.c.h.b16 %v8217
        %v10205 = vunpack.c.l.b16 %v8218
        %v10206 = vunpack.c.h.b16 %v8218
        %v10207 = vunpack.c.l.b16 %v8219
        %v10208 = vunpack.c.h.b16 %v8219
        %v10209 = vpack.c.b16 %v10083, %v10081
        %v10210 = vpack.c.b16 %v10084, %v10082
        %v10211 = vpack.c.b16 %v10087, %v10085
        %v10212 = vpack.c.b16 %v10088, %v10086
        %v10213 = vpack.c.b16 %v10091, %v10089
        %v10214 = vpack.c.b16 %v10092, %v10090
        %v10215 = vpack.c.b16 %v10095, %v10093
        %v10216 = vpack.c.b16 %v10096, %v10094
        %v10217 = vpack.c.b16 %v10099, %v10097
        %v10218 = vpack.c.b16 %v10100, %v10098
        %v10219 = vpack.c.b16 %v10103, %v10101
        %v10220 = vpack.c.b16 %v10104, %v10102
        %v10221 = vpack.c.b16 %v10107, %v10105
        %v10222 = vpack.c.b16 %v10108, %v10106
        %v10223 = vpack.c.b16 %v10111, %v10109
        %v10224 = vpack.c.b16 %v10112, %v10110
        %v10225 = vpack.c.b16 %v10115, %v10113
        %v10226 = vpack.c.b16 %v10116, %v10114
        %v10227 = vpack.c.b16 %v10119, %v10117
        %v10228 = vpack.c.b16 %v10120, %v10118
        %v10229 = vpack.c.b16 %v10123, %v10121
        %v10230 = vpack.c.b16 %v10124, %v10122
        %v10231 = vpack.c.b16 %v10127, %v10125
        %v10232 = vpack.c.b16 %v10128, %v10126
        %v10233 = vpack.c.b16 %v10131, %v10129
        %v10234 = vpack.c.b16 %v10132, %v10130
        %v10235 = vpack.c.b16 %v10135, %v10133
        %v10236 = vpack.c.b16 %v10136, %v10134
        %v10237 = vpack.c.b16 %v10139, %v10137
        %v10238 = vpack.c.b16 %v10140, %v10138
        %v10239 = vpack.c.b16 %v10143, %v10141
        %v10240 = vpack.c.b16 %v10144, %v10142
        %v10241 = vpack.c.b16 %v10147, %v10145
        %v10242 = vpack.c.b16 %v10148, %v10146
        %v10243 = vpack.c.b16 %v10151, %v10149
        %v10244 = vpack.c.b16 %v10152, %v10150
        %v10245 = vpack.c.b16 %v10155, %v10153
        %v10246 = vpack.c.b16 %v10156, %v10154
        %v10247 = vpack.c.b16 %v10159, %v10157
        %v10248 = vpack.c.b16 %v10160, %v10158
        %v10249 = vpack.c.b16 %v10163, %v10161
        %v10250 = vpack.c.b16 %v10164, %v10162
        %v10251 = vpack.c.b16 %v10167, %v10165
        %v10252 = vpack.c.b16 %v10168, %v10166
        %v10253 = vpack.c.b16 %v10171, %v10169
        %v10254 = vpack.c.b16 %v10172, %v10170
        %v10255 = vpack.c.b16 %v10175, %v10173
        %v10256 = vpack.c.b16 %v10176, %v10174
        %v10257 = vpack.c.b16 %v10179, %v10177
        %v10258 = vpack.c.b16 %v10180, %v10178
        %v10259 = vpack.c.b16 %v10183, %v10181
        %v10260 = vpack.c.b16 %v10184, %v10182
        %v10261 = vpack.c.b16 %v10187, %v10185
        %v10262 = vpack.c.b16 %v10188, %v10186
        %v10263 = vpack.c.b16 %v10191, %v10189
        %v10264 = vpack.c.b16 %v10192, %v10190
        %v10265 = vpack.c.b16 %v10195, %v10193
        %v10266 = vpack.c.b16 %v10196, %v10194
        %v10267 = vpack.c.b16 %v10199, %v10197
        %v10268 = vpack.c.b16 %v10200, %v10198
        %v10269 = vpack.c.b16 %v10203, %v10201
        %v10270 = vpack.c.b16 %v10204, %v10202
        %v10271 = vpack.c.b16 %v10207, %v10205
        %v10272 = vpack.c.b16 %v10208, %v10206
        %10337 = vmatpush.bf16.msra.mxu0 %v10223
        %10338 = vmatpush.bf16.msra.mxu0 %v10221
        %10339 = vmatpush.bf16.msra.mxu0 %v10219
        %10340 = vmatpush.bf16.msra.mxu0 %v10217
        %10341 = vmatpush.bf16.msra.mxu0 %v10215
        %10342 = vmatpush.bf16.msra.mxu0 %v10213
        %10343 = vmatpush.bf16.msra.mxu0 %v10211
        %10344 = vmatpush.bf16.msra.mxu0 %v10209
        %10345 = vmatmul.bf16.gmra.mxu0 %v10009
        %v10346 = vpop.f32.mrf.mxu0
        %v10347 = vadd.f32 %v8662, %v10346
        %v10348 = vpop.f32.mrf.mxu0
        %10349 = vdwg.mxu0
        %10350 = vmatpush.bf16.msra.mxu0 %v10239
        %10351 = vmatpush.bf16.msra.mxu0 %v10237
        %10352 = vmatpush.bf16.msra.mxu0 %v10235
        %10353 = vmatpush.bf16.msra.mxu0 %v10233
        %10354 = vmatpush.bf16.msra.mxu0 %v10231
        %10355 = vmatpush.bf16.msra.mxu0 %v10229
        %10356 = vmatpush.bf16.msra.mxu0 %v10227
        %10357 = vmatpush.bf16.msra.mxu0 %v10225
        %10358 = vmatmul.bf16.gmra.mxu0 %v10010
        %v10359 = vpop.f32.mrf.mxu0
        %v10360 = vadd.f32 %v10347, %v10359
        %v10361 = vpop.f32.mrf.mxu0
        %10362 = vdwg.mxu0
        %10363 = vmatpush.bf16.msra.mxu0 %v10255
        %10364 = vmatpush.bf16.msra.mxu0 %v10253
        %10365 = vmatpush.bf16.msra.mxu0 %v10251
        %10366 = vmatpush.bf16.msra.mxu0 %v10249
        %10367 = vmatpush.bf16.msra.mxu0 %v10247
        %10368 = vmatpush.bf16.msra.mxu0 %v10245
        %10369 = vmatpush.bf16.msra.mxu0 %v10243
        %10370 = vmatpush.bf16.msra.mxu0 %v10241
        %10371 = vmatmul.bf16.gmra.mxu0 %v10011
        %v10372 = vpop.f32.mrf.mxu0
        %v10373 = vadd.f32 %v10360, %v10372
        %v10374 = vpop.f32.mrf.mxu0
        %10375 = vdwg.mxu0
        %10376 = vmatpush.bf16.msra.mxu0 %v10271
        %10377 = vmatpush.bf16.msra.mxu0 %v10269
        %10378 = vmatpush.bf16.msra.mxu0 %v10267
        %10379 = vmatpush.bf16.msra.mxu0 %v10265
        %10380 = vmatpush.bf16.msra.mxu0 %v10263
        %10381 = vmatpush.bf16.msra.mxu0 %v10261
        %10382 = vmatpush.bf16.msra.mxu0 %v10259
        %10383 = vmatpush.bf16.msra.mxu0 %v10257
        %10384 = vmatmul.bf16.gmra.mxu0 %v10012
        %v10385 = vpop.f32.mrf.mxu0
        %v10386 = vadd.f32 %v10373, %v10385
        %v10387 = vpop.f32.mrf.mxu0
        %10388 = vdwg.mxu0
        %10389 = vmatpush.bf16.msra.mxu0 %v10224
        %10390 = vmatpush.bf16.msra.mxu0 %v10222
        %10391 = vmatpush.bf16.msra.mxu0 %v10220
        %10392 = vmatpush.bf16.msra.mxu0 %v10218
        %10393 = vmatpush.bf16.msra.mxu0 %v10216
        %10394 = vmatpush.bf16.msra.mxu0 %v10214
        %10395 = vmatpush.bf16.msra.mxu0 %v10212
        %10396 = vmatpush.bf16.msra.mxu0 %v10210
        %10397 = vmatmul.bf16.gmra.mxu0 %v10009
        %v10398 = vpop.f32.mrf.mxu0
        %v10399 = vadd.f32 %v8714, %v10398
        %v10400 = vpop.f32.mrf.mxu0
        %10401 = vdwg.mxu0
        %10402 = vmatpush.bf16.msra.mxu0 %v10240
        %10403 = vmatpush.bf16.msra.mxu0 %v10238
        %10404 = vmatpush.bf16.msra.mxu0 %v10236
        %10405 = vmatpush.bf16.msra.mxu0 %v10234
        %10406 = vmatpush.bf16.msra.mxu0 %v10232
        %10407 = vmatpush.bf16.msra.mxu0 %v10230
        %10408 = vmatpush.bf16.msra.mxu0 %v10228
        %10409 = vmatpush.bf16.msra.mxu0 %v10226
        %10410 = vmatmul.bf16.gmra.mxu0 %v10010
        %v10411 = vpop.f32.mrf.mxu0
        %v10412 = vadd.f32 %v10399, %v10411
        %v10413 = vpop.f32.mrf.mxu0
        %10414 = vdwg.mxu0
        %10415 = vmatpush.bf16.msra.mxu0 %v10256
        %10416 = vmatpush.bf16.msra.mxu0 %v10254
        %10417 = vmatpush.bf16.msra.mxu0 %v10252
        %10418 = vmatpush.bf16.msra.mxu0 %v10250
        %10419 = vmatpush.bf16.msra.mxu0 %v10248
        %10420 = vmatpush.bf16.msra.mxu0 %v10246
        %10421 = vmatpush.bf16.msra.mxu0 %v10244
        %10422 = vmatpush.bf16.msra.mxu0 %v10242
        %10423 = vmatmul.bf16.gmra.mxu0 %v10011
        %v10424 = vpop.f32.mrf.mxu0
        %v10425 = vadd.f32 %v10412, %v10424
        %v10426 = vpop.f32.mrf.mxu0
        %10427 = vdwg.mxu0
        %10428 = vmatpush.bf16.msra.mxu0 %v10272
        %10429 = vmatpush.bf16.msra.mxu0 %v10270
        %10430 = vmatpush.bf16.msra.mxu0 %v10268
        %10431 = vmatpush.bf16.msra.mxu0 %v10266
        %10432 = vmatpush.bf16.msra.mxu0 %v10264
        %10433 = vmatpush.bf16.msra.mxu0 %v10262
        %10434 = vmatpush.bf16.msra.mxu0 %v10260
        %10435 = vmatpush.bf16.msra.mxu0 %v10258
        %10436 = vmatmul.bf16.gmra.mxu0 %v10012
        %v10437 = vpop.f32.mrf.mxu0
        %v10438 = vadd.f32 %v10425, %v10437
        %v10439 = vpop.f32.mrf.mxu0
        %10440 = vdwg.mxu0
        %v10441 = vadd.f32 %v9090, %v9522
        %v10442 = vadd.f32 %v9142, %v9574
        %v10443 = vadd.f32 %v9954, %v10386
        %v10444 = vadd.f32 %v10006, %v10438
        %v10445 = vadd.f32 %v10441, %v10443
        %v10446 = vadd.f32 %v10442, %v10444
        %v10447 = vld [vmem:[#allocation18] sm:$0x3]
        %v10449 = vperm.slane %v10447, 0
        %v10450 = vperm.slane %v10447, 1
        %v10453 = vadd.f32 %v10445, %v10449
        %v10454 = vadd.f32 %v10446, %v10450
        %vm10455 = vcmp.gt.f32.partialorder %v10453, 0.0
        %vm10456 = vcmp.gt.f32.partialorder %v10454, 0.0
        %v10457 = vstv %s740
        %v10458 = vmul.f32 %v10457, %v10453
        %v10459 = vmul.f32 %v10457, %v10454
        %v10460 = vsel %vm10455, %v10453, %v10458
        %v10461 = vsel %vm10456, %v10454, %v10459
        %v10462 = vpack.c.bf16 %v10460, %v10460
        %v10463 = vpack.c.bf16 %v10461, %v10461
        %v10464 = vld [vmem:[#allocation20] sm:$0xff]
        %v10465 = vld [vmem:[#allocation20 + $0x8] sm:$0xff]
        %v10466 = vld [vmem:[#allocation20 + $0x10] sm:$0xff]
        %v10467 = vld [vmem:[#allocation20 + $0x18] sm:$0xff]
        %v10468 = vld [vmem:[#allocation20 + $0x20] sm:$0xff]
        %v10469 = vld [vmem:[#allocation20 + $0x28] sm:$0xff]
        %v10470 = vld [vmem:[#allocation20 + $0x30] sm:$0xff]
        %v10471 = vld [vmem:[#allocation20 + $0x38] sm:$0xff]
        %v10472 = vld [vmem:[#allocation20 + $0x40] sm:$0xff]
        %v10473 = vld [vmem:[#allocation20 + $0x48] sm:$0xff]
        %v10474 = vld [vmem:[#allocation20 + $0x50] sm:$0xff]
        %v10475 = vld [vmem:[#allocation20 + $0x58] sm:$0xff]
        %v10476 = vld [vmem:[#allocation20 + $0x60] sm:$0xff]
        %v10477 = vld [vmem:[#allocation20 + $0x68] sm:$0xff]
        %v10478 = vld [vmem:[#allocation20 + $0x70] sm:$0xff]
        %v10479 = vld [vmem:[#allocation20 + $0x78] sm:$0xff]
        %v10480 = vld [vmem:[#allocation20 + $0x80] sm:$0xff]
        %v10481 = vld [vmem:[#allocation20 + $0x88] sm:$0xff]
        %v10482 = vld [vmem:[#allocation20 + $0x90] sm:$0xff]
        %v10483 = vld [vmem:[#allocation20 + $0x98] sm:$0xff]
        %v10484 = vld [vmem:[#allocation20 + $0xa0] sm:$0xff]
        %v10485 = vld [vmem:[#allocation20 + $0xa8] sm:$0xff]
        %v10486 = vld [vmem:[#allocation20 + $0xb0] sm:$0xff]
        %v10487 = vld [vmem:[#allocation20 + $0xb8] sm:$0xff]
        %v10488 = vld [vmem:[#allocation20 + $0xc0] sm:$0xff]
        %v10489 = vld [vmem:[#allocation20 + $0xc8] sm:$0xff]
        %v10490 = vld [vmem:[#allocation20 + $0xd0] sm:$0xff]
        %v10491 = vld [vmem:[#allocation20 + $0xd8] sm:$0xff]
        %v10492 = vld [vmem:[#allocation20 + $0xe0] sm:$0xff]
        %v10493 = vld [vmem:[#allocation20 + $0xe8] sm:$0xff]
        %v10494 = vld [vmem:[#allocation20 + $0xf0] sm:$0xff]
        %v10495 = vld [vmem:[#allocation20 + $0xf8] sm:$0xff]
        %v10496 = vld [vmem:[#allocation21] sm:$0x3]
        %v10529 = vunpack.c.l.b16 %v10464
        %v10530 = vunpack.c.h.b16 %v10464
        %v10531 = vunpack.c.l.b16 %v10465
        %v10532 = vunpack.c.h.b16 %v10465
        %v10533 = vunpack.c.l.b16 %v10466
        %v10534 = vunpack.c.h.b16 %v10466
        %v10535 = vunpack.c.l.b16 %v10467
        %v10536 = vunpack.c.h.b16 %v10467
        %v10537 = vunpack.c.l.b16 %v10468
        %v10538 = vunpack.c.h.b16 %v10468
        %v10539 = vunpack.c.l.b16 %v10469
        %v10540 = vunpack.c.h.b16 %v10469
        %v10541 = vunpack.c.l.b16 %v10470
        %v10542 = vunpack.c.h.b16 %v10470
        %v10543 = vunpack.c.l.b16 %v10471
        %v10544 = vunpack.c.h.b16 %v10471
        %v10545 = vunpack.c.l.b16 %v10472
        %v10546 = vunpack.c.h.b16 %v10472
        %v10547 = vunpack.c.l.b16 %v10473
        %v10548 = vunpack.c.h.b16 %v10473
        %v10549 = vunpack.c.l.b16 %v10474
        %v10550 = vunpack.c.h.b16 %v10474
        %v10551 = vunpack.c.l.b16 %v10475
        %v10552 = vunpack.c.h.b16 %v10475
        %v10553 = vunpack.c.l.b16 %v10476
        %v10554 = vunpack.c.h.b16 %v10476
        %v10555 = vunpack.c.l.b16 %v10477
        %v10556 = vunpack.c.h.b16 %v10477
        %v10557 = vunpack.c.l.b16 %v10478
        %v10558 = vunpack.c.h.b16 %v10478
        %v10559 = vunpack.c.l.b16 %v10479
        %v10560 = vunpack.c.h.b16 %v10479
        %v10561 = vunpack.c.l.b16 %v10480
        %v10562 = vunpack.c.h.b16 %v10480
        %v10563 = vunpack.c.l.b16 %v10481
        %v10564 = vunpack.c.h.b16 %v10481
        %v10565 = vunpack.c.l.b16 %v10482
        %v10566 = vunpack.c.h.b16 %v10482
        %v10567 = vunpack.c.l.b16 %v10483
        %v10568 = vunpack.c.h.b16 %v10483
        %v10569 = vunpack.c.l.b16 %v10484
        %v10570 = vunpack.c.h.b16 %v10484
        %v10571 = vunpack.c.l.b16 %v10485
        %v10572 = vunpack.c.h.b16 %v10485
        %v10573 = vunpack.c.l.b16 %v10486
        %v10574 = vunpack.c.h.b16 %v10486
        %v10575 = vunpack.c.l.b16 %v10487
        %v10576 = vunpack.c.h.b16 %v10487
        %v10577 = vunpack.c.l.b16 %v10488
        %v10578 = vunpack.c.h.b16 %v10488
        %v10579 = vunpack.c.l.b16 %v10489
        %v10580 = vunpack.c.h.b16 %v10489
        %v10581 = vunpack.c.l.b16 %v10490
        %v10582 = vunpack.c.h.b16 %v10490
        %v10583 = vunpack.c.l.b16 %v10491
        %v10584 = vunpack.c.h.b16 %v10491
        %v10585 = vunpack.c.l.b16 %v10492
        %v10586 = vunpack.c.h.b16 %v10492
        %v10587 = vunpack.c.l.b16 %v10493
        %v10588 = vunpack.c.h.b16 %v10493
        %v10589 = vunpack.c.l.b16 %v10494
        %v10590 = vunpack.c.h.b16 %v10494
        %v10591 = vunpack.c.l.b16 %v10495
        %v10592 = vunpack.c.h.b16 %v10495
        %v10593 = vpack.c.b16 %v10531, %v10529
        %v10594 = vpack.c.b16 %v10532, %v10530
        %v10595 = vpack.c.b16 %v10535, %v10533
        %v10596 = vpack.c.b16 %v10536, %v10534
        %v10597 = vpack.c.b16 %v10539, %v10537
        %v10598 = vpack.c.b16 %v10540, %v10538
        %v10599 = vpack.c.b16 %v10543, %v10541
        %v10600 = vpack.c.b16 %v10544, %v10542
        %v10601 = vpack.c.b16 %v10547, %v10545
        %v10602 = vpack.c.b16 %v10548, %v10546
        %v10603 = vpack.c.b16 %v10551, %v10549
        %v10604 = vpack.c.b16 %v10552, %v10550
        %v10605 = vpack.c.b16 %v10555, %v10553
        %v10606 = vpack.c.b16 %v10556, %v10554
        %v10607 = vpack.c.b16 %v10559, %v10557
        %v10608 = vpack.c.b16 %v10560, %v10558
        %v10609 = vpack.c.b16 %v10563, %v10561
        %v10610 = vpack.c.b16 %v10564, %v10562
        %v10611 = vpack.c.b16 %v10567, %v10565
        %v10612 = vpack.c.b16 %v10568, %v10566
        %v10613 = vpack.c.b16 %v10571, %v10569
        %v10614 = vpack.c.b16 %v10572, %v10570
        %v10615 = vpack.c.b16 %v10575, %v10573
        %v10616 = vpack.c.b16 %v10576, %v10574
        %v10617 = vpack.c.b16 %v10579, %v10577
        %v10618 = vpack.c.b16 %v10580, %v10578
        %v10619 = vpack.c.b16 %v10583, %v10581
        %v10620 = vpack.c.b16 %v10584, %v10582
        %v10621 = vpack.c.b16 %v10587, %v10585
        %v10622 = vpack.c.b16 %v10588, %v10586
        %v10623 = vpack.c.b16 %v10591, %v10589
        %v10624 = vpack.c.b16 %v10592, %v10590
        %v10658 = vperm.slane %v10496, 0
        %v10659 = vperm.slane %v10496, 1
        %10662 = vmatpush.bf16.msra.mxu0 %v10607
        %10663 = vmatpush.bf16.msra.mxu0 %v10605
        %10664 = vmatpush.bf16.msra.mxu0 %v10603
        %10665 = vmatpush.bf16.msra.mxu0 %v10601
        %10666 = vmatpush.bf16.msra.mxu0 %v10599
        %10667 = vmatpush.bf16.msra.mxu0 %v10597
        %10668 = vmatpush.bf16.msra.mxu0 %v10595
        %10669 = vmatpush.bf16.msra.mxu0 %v10593
        %10670 = vmatmul.bf16.gmra.mxu0 %v10462
        %v10671 = vpop.f32.mrf.mxu0
        %v10672 = vadd.f32 %v10658, %v10671
        %v10673 = vpop.f32.mrf.mxu0
        %10674 = vdwg.mxu0
        %10675 = vmatpush.bf16.msra.mxu0 %v10623
        %10676 = vmatpush.bf16.msra.mxu0 %v10621
        %10677 = vmatpush.bf16.msra.mxu0 %v10619
        %10678 = vmatpush.bf16.msra.mxu0 %v10617
        %10679 = vmatpush.bf16.msra.mxu0 %v10615
        %10680 = vmatpush.bf16.msra.mxu0 %v10613
        %10681 = vmatpush.bf16.msra.mxu0 %v10611
        %10682 = vmatpush.bf16.msra.mxu0 %v10609
        %10683 = vmatmul.bf16.gmra.mxu0 %v10463
        %v10684 = vpop.f32.mrf.mxu0
        %v10685 = vadd.f32 %v10672, %v10684
        %v10686 = vpop.f32.mrf.mxu0
        %10687 = vdwg.mxu0
        %10688 = vmatpush.bf16.msra.mxu0 %v10608
        %10689 = vmatpush.bf16.msra.mxu0 %v10606
        %10690 = vmatpush.bf16.msra.mxu0 %v10604
        %10691 = vmatpush.bf16.msra.mxu0 %v10602
        %10692 = vmatpush.bf16.msra.mxu0 %v10600
        %10693 = vmatpush.bf16.msra.mxu0 %v10598
        %10694 = vmatpush.bf16.msra.mxu0 %v10596
        %10695 = vmatpush.bf16.msra.mxu0 %v10594
        %10696 = vmatmul.bf16.gmra.mxu0 %v10462
        %v10697 = vpop.f32.mrf.mxu0
        %v10698 = vadd.f32 %v10659, %v10697
        %v10699 = vpop.f32.mrf.mxu0
        %10700 = vdwg.mxu0
        %10701 = vmatpush.bf16.msra.mxu0 %v10624
        %10702 = vmatpush.bf16.msra.mxu0 %v10622
        %10703 = vmatpush.bf16.msra.mxu0 %v10620
        %10704 = vmatpush.bf16.msra.mxu0 %v10618
        %10705 = vmatpush.bf16.msra.mxu0 %v10616
        %10706 = vmatpush.bf16.msra.mxu0 %v10614
        %10707 = vmatpush.bf16.msra.mxu0 %v10612
        %10708 = vmatpush.bf16.msra.mxu0 %v10610
        %10709 = vmatmul.bf16.gmra.mxu0 %v10463
        %v10710 = vpop.f32.mrf.mxu0
        %v10711 = vadd.f32 %v10698, %v10710
        %v10712 = vpop.f32.mrf.mxu0
        %10713 = vdwg.mxu0
        %vm10714 = vcmp.gt.f32.partialorder %v10685, 0.0
        %vm10715 = vcmp.gt.f32.partialorder %v10711, 0.0
        %v10716 = vstv %s741
        %v10717 = vmul.f32 %v10716, %v10685
        %v10718 = vmul.f32 %v10716, %v10711
        %v10719 = vsel %vm10714, %v10685, %v10717
        %v10720 = vsel %vm10715, %v10711, %v10718
        %v10721 = vpack.c.bf16 %v10719, %v10719
        %v10722 = vpack.c.bf16 %v10720, %v10720
        %v10723 = vld [vmem:[%s13] sm:$0xf]
        %v10724 = vld [vmem:[%s13 + $0x4] sm:$0xf]
        %v10725 = vld [vmem:[%s13 + $0x8] sm:$0xf]
        %v10726 = vld [vmem:[%s13 + $0xc] sm:$0xf]
        %v10727 = vld [vmem:[%s13 + $0x10] sm:$0xf]
        %v10728 = vld [vmem:[%s13 + $0x14] sm:$0xf]
        %v10729 = vld [vmem:[%s13 + $0x18] sm:$0xf]
        %v10730 = vld [vmem:[%s13 + $0x1c] sm:$0xf]
        %v10731 = vld [vmem:[%s13 + $0x20] sm:$0xf]
        %v10732 = vld [vmem:[%s13 + $0x24] sm:$0xf]
        %v10733 = vld [vmem:[%s13 + $0x28] sm:$0xf]
        %v10734 = vld [vmem:[%s13 + $0x2c] sm:$0xf]
        %v10735 = vld [vmem:[%s13 + $0x30] sm:$0xf]
        %v10736 = vld [vmem:[%s13 + $0x34] sm:$0xf]
        %v10737 = vld [vmem:[%s13 + $0x38] sm:$0xf]
        %v10738 = vld [vmem:[%s13 + $0x3c] sm:$0xf]
        %v10739 = vld [vmem:[%s13 + $0x40] sm:$0xf]
        %v10740 = vld [vmem:[%s13 + $0x44] sm:$0xf]
        %v10741 = vld [vmem:[%s13 + $0x48] sm:$0xf]
        %v10742 = vld [vmem:[%s13 + $0x4c] sm:$0xf]
        %v10743 = vld [vmem:[%s13 + $0x50] sm:$0xf]
        %v10744 = vld [vmem:[%s13 + $0x54] sm:$0xf]
        %v10745 = vld [vmem:[%s13 + $0x58] sm:$0xf]
        %v10746 = vld [vmem:[%s13 + $0x5c] sm:$0xf]
        %v10747 = vld [vmem:[%s13 + $0x60] sm:$0xf]
        %v10748 = vld [vmem:[%s13 + $0x64] sm:$0xf]
        %v10749 = vld [vmem:[%s13 + $0x68] sm:$0xf]
        %v10750 = vld [vmem:[%s13 + $0x6c] sm:$0xf]
        %v10751 = vld [vmem:[%s13 + $0x70] sm:$0xf]
        %v10752 = vld [vmem:[%s13 + $0x74] sm:$0xf]
        %v10753 = vld [vmem:[%s13 + $0x78] sm:$0xf]
        %v10754 = vld [vmem:[%s13 + $0x7c] sm:$0xf]
        %v10755 = vld [vmem:[#allocation23] sm:$0x1]
        %v10788 = vunpack.c.l.b16 %v10723
        %v10789 = vunpack.c.l.b16 %v10724
        %v10790 = vunpack.c.l.b16 %v10725
        %v10791 = vunpack.c.l.b16 %v10726
        %v10792 = vunpack.c.l.b16 %v10727
        %v10793 = vunpack.c.l.b16 %v10728
        %v10794 = vunpack.c.l.b16 %v10729
        %v10795 = vunpack.c.l.b16 %v10730
        %v10796 = vunpack.c.l.b16 %v10731
        %v10797 = vunpack.c.l.b16 %v10732
        %v10798 = vunpack.c.l.b16 %v10733
        %v10799 = vunpack.c.l.b16 %v10734
        %v10800 = vunpack.c.l.b16 %v10735
        %v10801 = vunpack.c.l.b16 %v10736
        %v10802 = vunpack.c.l.b16 %v10737
        %v10803 = vunpack.c.l.b16 %v10738
        %v10804 = vunpack.c.l.b16 %v10739
        %v10805 = vunpack.c.l.b16 %v10740
        %v10806 = vunpack.c.l.b16 %v10741
        %v10807 = vunpack.c.l.b16 %v10742
        %v10808 = vunpack.c.l.b16 %v10743
        %v10809 = vunpack.c.l.b16 %v10744
        %v10810 = vunpack.c.l.b16 %v10745
        %v10811 = vunpack.c.l.b16 %v10746
        %v10812 = vunpack.c.l.b16 %v10747
        %v10813 = vunpack.c.l.b16 %v10748
        %v10814 = vunpack.c.l.b16 %v10749
        %v10815 = vunpack.c.l.b16 %v10750
        %v10816 = vunpack.c.l.b16 %v10751
        %v10817 = vunpack.c.l.b16 %v10752
        %v10818 = vunpack.c.l.b16 %v10753
        %v10819 = vunpack.c.l.b16 %v10754
        %v10820 = vpack.c.b16 %v10789, %v10788
        %v10821 = vpack.c.b16 %v10791, %v10790
        %v10822 = vpack.c.b16 %v10793, %v10792
        %v10823 = vpack.c.b16 %v10795, %v10794
        %v10824 = vpack.c.b16 %v10797, %v10796
        %v10825 = vpack.c.b16 %v10799, %v10798
        %v10826 = vpack.c.b16 %v10801, %v10800
        %v10827 = vpack.c.b16 %v10803, %v10802
        %v10828 = vpack.c.b16 %v10805, %v10804
        %v10829 = vpack.c.b16 %v10807, %v10806
        %v10830 = vpack.c.b16 %v10809, %v10808
        %v10831 = vpack.c.b16 %v10811, %v10810
        %v10832 = vpack.c.b16 %v10813, %v10812
        %v10833 = vpack.c.b16 %v10815, %v10814
        %v10834 = vpack.c.b16 %v10817, %v10816
        %v10835 = vpack.c.b16 %v10819, %v10818
        %10852 = vmatpush.bf16.msra.mxu0 %v10827
        %10853 = vmatpush.bf16.msra.mxu0 %v10826
        %10854 = vmatpush.bf16.msra.mxu0 %v10825
        %10855 = vmatpush.bf16.msra.mxu0 %v10824
        %10856 = vmatpush.bf16.msra.mxu0 %v10823
        %10857 = vmatpush.bf16.msra.mxu0 %v10822
        %10858 = vmatpush.bf16.msra.mxu0 %v10821
        %10859 = vmatpush.bf16.msra.mxu0 %v10820
        %10860 = vmatmul.bf16.gmra.mxu0 %v10721
        %v10861 = vpop.f32.mrf.mxu0
        %v10862 = vadd.f32 %v10755, %v10861
        %v10863 = vpop.f32.mrf.mxu0
        %10864 = vdwg.mxu0
        %10865 = vmatpush.bf16.msra.mxu0 %v10835
        %10866 = vmatpush.bf16.msra.mxu0 %v10834
        %10867 = vmatpush.bf16.msra.mxu0 %v10833
        %10868 = vmatpush.bf16.msra.mxu0 %v10832
        %10869 = vmatpush.bf16.msra.mxu0 %v10831
        %10870 = vmatpush.bf16.msra.mxu0 %v10830
        %10871 = vmatpush.bf16.msra.mxu0 %v10829
        %10872 = vmatpush.bf16.msra.mxu0 %v10828
        %10873 = vmatmul.bf16.gmra.mxu0 %v10722
        %v10874 = vpop.f32.mrf.mxu0
        %v10875 = vadd.f32 %v10862, %v10874
        %v10876 = vpop.f32.mrf.mxu0
        %10877 = vdwg.mxu0
        %vm10878 = vcmask 24576
        %10879 = vst.msk [vmem:[%s730] sm:$0x1] %vm10878, %v10875
        %s10880 = sand.u32 %s387, 1
        %s10881 = scalar_lea.sflag [#allocation4], %s10880
        %s10882 = sand.u32 %s387, 1
        %s10883 = scalar_lea.vmem [#allocation25], %s10882
        // Predicated region
        $region141: #{estimator_forward.1} parent=83 // pred_check
          %p10884 = pneg %p397
        $region142: #{estimator_forward.1} parent=83 // pred_check_branch
          %10886 = sbr.rel (%p10884) target = $region144
        $region143: #{estimator_forward.1} parent=83 // pred_region
          %10888 = vsyncadd %s10881, 0
          %s10889 = scalar_lea.hbm %s16, %s38
          %s10891 = sshll.u32 %s10883, 4
          %s10892 = int_to_ptr.vmem [resolvable:$true] %s10891
          %s10893 = sshll.u32 %s10889, 4
          %s10894 = int_to_ptr.hbm [resolvable:$true] %s10893
          %10896 = dma.vmem_to_hbm [thread:$0]  %s10892, 16, %s10894, %s10881
        $region144: #{estimator_forward.1} parent=83 // pred_fallthru
          _
      $region84: #{estimator_forward.1} parent=5 // pred_fallthru
        _
      %p10897 = scmp.le.s32.totalorder 2, %s33
      // Predicated region
      $region145: #{estimator_forward.1} parent=5 // pred_check
        %p10898 = pneg %p10897
      $region146: #{estimator_forward.1} parent=5 // pred_check_branch
        %10900 = sbr.rel (%p10898) target = $region148
      $region147: #{estimator_forward.1} parent=5 // pred_region
        %s10901 = ssub.s32 %s33, 2
        // Predicated region
        $region149: #{estimator_forward.1} parent=147 // pred_check
          %p10902 = pneg %p403
        $region150: #{estimator_forward.1} parent=147 // pred_check_branch
          %10904 = sbr.rel (%p10902) target = $region152
        $region151: #{estimator_forward.1} parent=147 // pred_region
          %s10905 = sand.u32 %s388, 1
          %s10906 = scalar_lea.sflag [#allocation4], %s10905
          %s10907 = sand.u32 %s388, 1
          %s10908 = scalar_lea.vmem [#allocation25], %s10907
          %10910 = dma.done %s10906, 16
        $region152: #{estimator_forward.1} parent=147 // pred_fallthru
          _
      $region148: #{estimator_forward.1} parent=5 // pred_fallthru
        _
    $region6: #{estimator_forward.1} parent=1 // loop_footer
      %s37 = sadd.s32 1, %s33
    $region7: #{estimator_forward.1} parent=1 // loop_footer_branch
      %32 = sbr.rel target = $region3
    $region8: #{estimator_forward.1} parent=1 // loop_exit
      _
    %10911 = vsyncpa [#allocation3], 1
    %s10912 = scalar_lea.sflag [#allocation3], 1
    %10913 = vsyncpa %s10912, 1
    %10914 = vsyncpa [#allocation7], 1
    %10915 = vsyncpa [#allocation10], 1
    %10916 = vsyncpa [#allocation13], 1
    %10917 = vsyncpa [#allocation16], 1
    %10918 = vsyncpa [#allocation19], 1
    %10919 = vsyncpa [#allocation22], 1
    %10920 = vsyncpa [#allocation4], 1
    %s10921 = scalar_lea.sflag [#allocation4], 1
    %10922 = vsyncpa %s10921, 1
    %10923 = vsyncpa [#allocation5], 1
    %s10924 = scalar_lea.sflag [#allocation5], 1
    %10925 = vsyncpa %s10924, 1

</llo_original>
